<compile_context>
chip_gen: v5e
topology: v5e:2x2
jax: 0.10.0
libtpu: 0.0.40
codegen_flags: <defaults>
</compile_context>

<pallas_src>
import math
import functools

import jax
import jax.numpy as jnp
from jax.experimental import pallas as pl
from jax.experimental.pallas import tpu as pltpu

NC = 4                     # num_classes (small synthetic config)
STRIDES = (8, 16, 32)      # detect strides, 3 head layers (num_layers = 3)


# ----------------------------------------------------------------------------
# Pallas kernel: fused matmul (Cout, K) @ (K, M) + bias + activation
# ----------------------------------------------------------------------------
def _fused_matmul_kernel(w_ref, x_ref, b_ref, o_ref, *, act, sigmoid_rows):
    # bf16 x bf16 -> f32 accumulation on the MXU.
    acc = jnp.dot(w_ref[...], x_ref[...], preferred_element_type=jnp.float32)
    y = acc + b_ref[...]                       # (Cout, 1) broadcast over lanes
    if act == "relu":
        y = jnp.maximum(y, 0.0)
    elif act == "sigmoid":
        y = jax.nn.sigmoid(y)
    elif act == "mixed":
        # sigmoid on the first `sigmoid_rows` output channels (cls), identity
        # on the rest (reg) -- used by the fused decoupled-head prediction.
        rows = jax.lax.broadcasted_iota(jnp.int32, y.shape, 0)
        y = jnp.where(rows < sigmoid_rows, jax.nn.sigmoid(y), y)
    o_ref[...] = y.astype(o_ref.dtype)


def fused_matmul(w, x, bias, act="relu", sigmoid_rows=0, out_dtype=jnp.bfloat16):
    """w: (Cout, K) bf16, x: (K, M) bf16, bias: (Cout, 1) f32 -> (Cout, M)."""
    cout, K = w.shape
    K2, M = x.shape
    assert K == K2
    # Tile the lane-dense M axis when it is large enough so the grid has >=2
    # parallel blocks (lets v7x's two TensorCores share the work).
    TM = M
    for cand in (256, 128):
        if M > cand and M % cand == 0:
            TM = cand
            break
    grid = (M // TM,)
    kernel = functools.partial(_fused_matmul_kernel, act=act,
                               sigmoid_rows=sigmoid_rows)
    return pl.pallas_call(
        kernel,
        out_shape=jax.ShapeDtypeStruct((cout, M), out_dtype),
        grid=grid,
        in_specs=[
            pl.BlockSpec((cout, K), lambda i: (0, 0)),   # weights (resident)
            pl.BlockSpec((K, TM), lambda i: (0, i)),     # patches tile
            pl.BlockSpec((cout, 1), lambda i: (0, 0)),   # bias
        ],
        out_specs=pl.BlockSpec((cout, TM), lambda i: (0, i)),
        compiler_params=pltpu.CompilerParams(
            dimension_semantics=("parallel",),
            # Whole model is < ~4 MiB resident; 32 MiB is safe on all of
            # v5e / v6e (128 MiB VMEM) and v7x (64 MiB VMEM).
            vmem_limit_bytes=32 * 1024 * 1024,
        ),
    )(w, x, bias)


# ----------------------------------------------------------------------------
# Conv glue (im2col in (C, N, H, W) layout, lane-dense M = N*Ho*Wo)
# ----------------------------------------------------------------------------
def _im2col_cnhw(x, kh, kw, stride, pad):
    c, n, h, w = x.shape
    xp = jnp.pad(x, ((0, 0), (0, 0), (pad, pad), (pad, pad)))
    ho = (h + 2 * pad - kh) // stride + 1
    wo = (w + 2 * pad - kw) // stride + 1
    taps = []
    for i in range(kh):
        for j in range(kw):
            taps.append(xp[:, :, i:i + stride * ho:stride,
                           j:j + stride * wo:stride])
    patches = jnp.stack(taps, axis=0)            # (kh*kw, c, n, ho, wo)
    return patches.reshape(kh * kw * c, n * ho * wo), (n, ho, wo)


def conv_bn_act(x, p, stride=1, act="relu", sigmoid_rows=0,
                out_dtype=jnp.bfloat16):
    w3, b = p["w"], p["b"]                        # w3: (Cout, KH*KW, Cin) bf16
    cout, taps, cin = w3.shape
    kh = int(round(math.sqrt(taps)))
    w = w3.reshape(cout, taps * cin)
    if kh == 1 and stride == 1:
        c, n, h, wd = x.shape
        cols, shp = x.reshape(c, n * h * wd), (n, h, wd)
    else:
        cols, shp = _im2col_cnhw(x, kh, kh, stride, kh // 2)
    out = fused_matmul(w, cols, b, act=act, sigmoid_rows=sigmoid_rows,
                       out_dtype=out_dtype)
    n, ho, wo = shp
    return out.reshape(cout, n, ho, wo)


# ----------------------------------------------------------------------------
# Deterministic parameter construction (synthetic init, BN folded into W)
# ----------------------------------------------------------------------------
def make_conv_params(key, k, cin, cout, bias_init=0.0, with_bn=True):
    fan_in = k * k * cin
    w = jax.random.normal(key, (cout, k * k, cin), jnp.float32)
    w = w * (1.0 / math.sqrt(fan_in))
    eps = 1e-3
    if with_bn:
        # BN folded (gamma=1, beta=0, mean=0, var=1): scale baked into weights.
        w = w * (1.0 / math.sqrt(1.0 + eps))
        b = jnp.zeros((cout, 1), jnp.float32)
    else:
        b = jnp.full((cout, 1), bias_init, jnp.float32)
    return {"w": w.astype(jnp.bfloat16), "b": b}


def make_head_params(keys, ch):
    prior = 0.01
    cls_bias = -math.log((1.0 - prior) / prior)   # Detect.initialize_biases
    stem = make_conv_params(next(keys), 1, ch, ch)
    cls_conv = make_conv_params(next(keys), 3, ch, ch)
    reg_conv = make_conv_params(next(keys), 3, ch, ch)
    # cls_conv + reg_conv share the same input -> one matmul, Cout = 2*ch.
    convs = {"w": jnp.concatenate([cls_conv["w"], reg_conv["w"]], axis=0),
             "b": jnp.concatenate([cls_conv["b"], reg_conv["b"]], axis=0)}
    cls_pred = make_conv_params(next(keys), 1, ch, NC,
                                bias_init=cls_bias, with_bn=False)
    reg_pred = make_conv_params(next(keys), 1, ch, 4,
                                bias_init=1.0, with_bn=False)
    # Block-diagonal fusion of cls_pred / reg_pred over [cls_feat ; reg_feat].
    wc = cls_pred["w"].reshape(NC, ch)
    wr = reg_pred["w"].reshape(4, ch)
    zc = jnp.zeros((NC, ch), jnp.bfloat16)
    zr = jnp.zeros((4, ch), jnp.bfloat16)
    wp = jnp.concatenate([jnp.concatenate([wc, zc], axis=1),
                          jnp.concatenate([zr, wr], axis=1)], axis=0)
    pred = {"w": wp.reshape(NC + 4, 1, 2 * ch),
            "b": jnp.concatenate([cls_pred["b"], reg_pred["b"]], axis=0)}
    return {"stem": stem, "convs": convs, "pred": pred}


def build_params(key):
    keys = iter(jax.random.split(key, 64))

    def conv(k, cin, cout):
        return make_conv_params(next(keys), k, cin, cout)

    p = {}
    # --- EfficientRep-style backbone (RepVGG blocks = Conv+BN+ReLU here) ---
    p["stem"] = conv(3, 3, 8)                             # stride 2
    p["erb2_down"] = conv(3, 8, 16);  p["erb2_rep"] = conv(3, 16, 16)
    p["erb3_down"] = conv(3, 16, 24); p["erb3_rep"] = conv(3, 24, 24)
    p["erb4_down"] = conv(3, 24, 32); p["erb4_rep"] = conv(3, 32, 32)
    p["erb5_down"] = conv(3, 32, 40); p["erb5_rep"] = conv(3, 40, 40)
    # --- Rep-PAN neck ---
    p["reduce0"] = conv(1, 40, 32)
    p["rep_p4"] = conv(3, 32 + 32, 32)
    p["reduce1"] = conv(1, 32, 24)
    p["rep_p3"] = conv(3, 24 + 24, 24)
    p["down0"] = conv(3, 24, 24)
    p["rep_n3"] = conv(3, 24 + 24, 32)
    p["down1"] = conv(3, 32, 32)
    p["rep_n4"] = conv(3, 32 + 32, 40)
    # --- Efficient decoupled head (use_dfl=False, reg_max=0, 1 anchor) ---
    p["head"] = [make_head_params(keys, ch) for ch in (24, 32, 40)]
    return p


# ----------------------------------------------------------------------------
# Forward passes (activations in (C, N, H, W) bf16 layout)
# ----------------------------------------------------------------------------
def backbone_forward(p, x):
    # TODO(synk): fuse each (down, rep) stage into one pallas_call with the
    # intermediate activation kept in VMEM scratch.
    x = conv_bn_act(x, p["stem"], stride=2)
    x = conv_bn_act(x, p["erb2_down"], stride=2)
    x = conv_bn_act(x, p["erb2_rep"])
    c3 = conv_bn_act(conv_bn_act(x, p["erb3_down"], stride=2), p["erb3_rep"])
    c4 = conv_bn_act(conv_bn_act(c3, p["erb4_down"], stride=2), p["erb4_rep"])
    c5 = conv_bn_act(conv_bn_act(c4, p["erb5_down"], stride=2), p["erb5_rep"])
    return c3, c4, c5


def _upsample2x(x):
    # Nearest-neighbor 2x via broadcast + reshape (no jnp.repeat round trips).
    c, n, h, w = x.shape
    y = jnp.broadcast_to(x[:, :, :, None, :, None], (c, n, h, 2, w, 2))
    return y.reshape(c, n, 2 * h, 2 * w)


def neck_forward(p, feats):
    c3, c4, c5 = feats
    r0 = conv_bn_act(c5, p["reduce0"])
    p4 = conv_bn_act(jnp.concatenate([_upsample2x(r0), c4], 0), p["rep_p4"])
    r1 = conv_bn_act(p4, p["reduce1"])
    out0 = conv_bn_act(jnp.concatenate([_upsample2x(r1), c3], 0), p["rep_p3"])
    d0 = conv_bn_act(out0, p["down0"], stride=2)
    out1 = conv_bn_act(jnp.concatenate([d0, r1], 0), p["rep_n3"])
    d1 = conv_bn_act(out1, p["down1"], stride=2)
    out2 = conv_bn_act(jnp.concatenate([d1, r0], 0), p["rep_n4"])
    return out0, out1, out2


def detect_forward(p, feats):
    # TODO(synk): the 2x2 / 4x4 levels are single-block matmuls; merging them
    # with the 8x8 level (padded channels) would remove a few more launches.
    cls_list, reg_list, anchors, strides = [], [], [], []
    for i, x in enumerate(feats):
        pi = p["head"][i]
        x = conv_bn_act(x, pi["stem"])                     # (ch, n, h, w)
        feat = conv_bn_act(x, pi["convs"])                 # [cls_feat ; reg_feat]
        pred = conv_bn_act(feat, pi["pred"], act="mixed",
                           sigmoid_rows=NC, out_dtype=jnp.float32)
        _, n, h, w = pred.shape
        cls_out = pred[:NC].reshape(NC, n, h * w).transpose(1, 2, 0)
        reg_out = pred[NC:].reshape(4, n, h * w).transpose(1, 2, 0)
        cls_list.append(cls_out)                           # (n, hw, nc)
        reg_list.append(reg_out)                           # (n, hw, 4)
        sx = jnp.arange(w, dtype=jnp.float32) + 0.5        # grid_cell_offset
        sy = jnp.arange(h, dtype=jnp.float32) + 0.5
        gy, gx = jnp.meshgrid(sy, sx, indexing="ij")
        anchors.append(jnp.stack([gx, gy], -1).reshape(h * w, 2))
        strides.append(jnp.full((h * w, 1), float(STRIDES[i]), jnp.float32))
    cls_score = jnp.concatenate(cls_list, axis=1)          # (b, A, nc)
    reg_dist = jnp.concatenate(reg_list, axis=1)           # (b, A, 4)
    anchor_points = jnp.concatenate(anchors, axis=0)       # (A, 2)
    stride_t = jnp.concatenate(strides, axis=0)            # (A, 1)
    # dist2bbox (xywh) + stride scaling
    lt, rb = reg_dist[..., :2], reg_dist[..., 2:]
    x1y1 = anchor_points[None] - lt
    x2y2 = anchor_points[None] + rb
    cxy = (x1y1 + x2y2) * 0.5
    wh = x2y2 - x1y1
    pred_bboxes = jnp.concatenate([cxy, wh], -1) * stride_t[None]
    b, a = cls_score.shape[0], cls_score.shape[1]
    conf = jnp.ones((b, a, 1), jnp.float32)
    return jnp.concatenate([pred_bboxes, conf, cls_score], -1)  # (b, A, 4+1+nc)


def model_forward(params, x_nchw):
    # TODO(synk): torch.onnx.is_in_onnx_export() export branch omitted; this is
    # the eval (non-export) path returning [detections, featmaps].
    x = jnp.transpose(x_nchw, (1, 0, 2, 3)).astype(jnp.bfloat16)   # -> (C,N,H,W)
    feats = backbone_forward(params, x)
    neck_out = neck_forward(params, feats)
    featmaps = [jnp.transpose(f, (1, 0, 2, 3)).astype(jnp.float32)
                for f in neck_out]                                 # NCHW f32
    det = detect_forward(params, neck_out)
    return det, featmaps


# ----------------------------------------------------------------------------
if __name__ == "__main__":
    key = jax.random.PRNGKey(0)
    pkey, xkey = jax.random.split(key)
    params = build_params(pkey)
    x = jax.random.normal(xkey, (1, 3, 64, 64), jnp.float32)   # NCHW input

    fwd = jax.jit(model_forward)
    det, featmaps = fwd(params, x)
    det = jax.block_until_ready(det)
    for f in featmaps:
        jax.block_until_ready(f)

    total_anchors = 8 * 8 + 4 * 4 + 2 * 2                 # 84
    assert det.shape == (1, total_anchors, 4 + 1 + NC), det.shape
    assert featmaps[0].shape == (1, 24, 8, 8)
    assert featmaps[1].shape == (1, 32, 4, 4)
    assert featmaps[2].shape == (1, 40, 2, 2)
    assert bool(jnp.all(jnp.isfinite(det)))
    print("KERNEL_OK")
</pallas_src>

<mosaic_0001>
module attributes {stable_mosaic.version = 11 : i64} {
  func.func @_fused_matmul_kernel(%arg0: i32, %arg1: memref<8x27xbf16, #tpu.memory_space<vmem>>, %arg2: memref<27x256xbf16, #tpu.memory_space<vmem>>, %arg3: memref<8x1xf32, #tpu.memory_space<vmem>>, %arg4: memref<8x256xbf16, #tpu.memory_space<vmem>>) attributes {dimension_semantics = [#tpu.dimension_semantics<parallel>], iteration_bounds = array<i64: 4>, scalar_prefetch = 0 : i64, scratch_operands = 0 : i64, tpu.core_type = #tpu.core_type<tc>, window_params = [{pipeline_mode = #tpu.pipeline_mode<synchronous>, transform_indices = @transform_0, window_bounds = array<i64: 8, 27>}, {transform_indices = @transform_1, window_bounds = array<i64: 27, 256>}, {pipeline_mode = #tpu.pipeline_mode<synchronous>, transform_indices = @transform_2, window_bounds = array<i64: 8, 1>}, {transform_indices = @transform_3, window_bounds = array<i64: 8, 256>}]} {
    %c0 = arith.constant 0 : index
    %c0_0 = arith.constant 0 : index
    %0 = vector.load %arg1[%c0, %c0_0] : memref<8x27xbf16, #tpu.memory_space<vmem>>, vector<8x27xbf16>
    %c0_1 = arith.constant 0 : index
    %c0_2 = arith.constant 0 : index
    %1 = vector.load %arg2[%c0_1, %c0_2] : memref<27x256xbf16, #tpu.memory_space<vmem>>, vector<27x256xbf16>
    %cst = arith.constant dense<0.000000e+00> : vector<8x256xf32>
    %2 = tpu.matmul %0, %1, %cst {dimension_numbers = #tpu.dot_dimension_numbers<[1], [0], [0], [1], [0, 0, 1, 1], [], []>} : vector<8x27xbf16>, vector<27x256xbf16>, vector<8x256xf32> -> vector<8x256xf32>
    %c0_3 = arith.constant 0 : index
    %c0_4 = arith.constant 0 : index
    %3 = vector.load %arg3[%c0_3, %c0_4] : memref<8x1xf32, #tpu.memory_space<vmem>>, vector<8x1xf32>
    %4 = vector.broadcast %3 : vector<8x1xf32> to vector<8x256xf32>
    %5 = arith.addf %2, %4 : vector<8x256xf32>
    %cst_5 = arith.constant 0.000000e+00 : f32
    %6 = vector.broadcast %cst_5 : f32 to vector<8x256xf32>
    %7 = arith.maximumf %5, %6 : vector<8x256xf32>
    %8 = arith.truncf %7 : vector<8x256xf32> to vector<8x256xbf16>
    %c0_6 = arith.constant 0 : index
    %c0_7 = arith.constant 0 : index
    %9 = vector.load %arg4[%c0_6, %c0_7] : memref<8x256xbf16, #tpu.memory_space<vmem>>, vector<8x256xbf16>
    tpu.vector_store %arg4[%c0_6, %c0_7], %8 {strides = array<i32>} : memref<8x256xbf16, #tpu.memory_space<vmem>>, vector<8x256xbf16>,
    return
  }
  func.func @transform_0(%arg0: i32) -> (i32, i32) {
    %c0_i32 = arith.constant 0 : i32
    %c0_i32_0 = arith.constant 0 : i32
    %c0_i32_1 = arith.constant 0 : i32
    return %c0_i32, %c0_i32_0 : i32, i32
  }
  func.func @transform_1(%arg0: i32) -> (i32, i32) {
    %c0_i32 = arith.constant 0 : i32
    %c0_i32_0 = arith.constant 0 : i32
    return %c0_i32, %arg0 : i32, i32
  }
  func.func @transform_2(%arg0: i32) -> (i32, i32) {
    %c0_i32 = arith.constant 0 : i32
    %c0_i32_0 = arith.constant 0 : i32
    %c0_i32_1 = arith.constant 0 : i32
    return %c0_i32, %c0_i32_0 : i32, i32
  }
  func.func @transform_3(%arg0: i32) -> (i32, i32) {
    %c0_i32 = arith.constant 0 : i32
    %c0_i32_0 = arith.constant 0 : i32
    return %c0_i32, %arg0 : i32, i32
  }
}

module attributes {stable_mosaic.version = 11 : i64} {
  func.func @_fused_matmul_kernel(%arg0: i32, %arg1: memref<16x72xbf16, #tpu.memory_space<vmem>>, %arg2: memref<72x128xbf16, #tpu.memory_space<vmem>>, %arg3: memref<16x1xf32, #tpu.memory_space<vmem>>, %arg4: memref<16x128xbf16, #tpu.memory_space<vmem>>) attributes {dimension_semantics = [#tpu.dimension_semantics<parallel>], iteration_bounds = array<i64: 2>, scalar_prefetch = 0 : i64, scratch_operands = 0 : i64, tpu.core_type = #tpu.core_type<tc>, window_params = [{pipeline_mode = #tpu.pipeline_mode<synchronous>, transform_indices = @transform_0, window_bounds = array<i64: 16, 72>}, {transform_indices = @transform_1, window_bounds = array<i64: 72, 128>}, {pipeline_mode = #tpu.pipeline_mode<synchronous>, transform_indices = @transform_2, window_bounds = array<i64: 16, 1>}, {transform_indices = @transform_3, window_bounds = array<i64: 16, 128>}]} {
    %c0 = arith.constant 0 : index
    %c0_0 = arith.constant 0 : index
    %0 = vector.load %arg1[%c0, %c0_0] : memref<16x72xbf16, #tpu.memory_space<vmem>>, vector<16x72xbf16>
    %c0_1 = arith.constant 0 : index
    %c0_2 = arith.constant 0 : index
    %1 = vector.load %arg2[%c0_1, %c0_2] : memref<72x128xbf16, #tpu.memory_space<vmem>>, vector<72x128xbf16>
    %cst = arith.constant dense<0.000000e+00> : vector<16x128xf32>
    %2 = tpu.matmul %0, %1, %cst {dimension_numbers = #tpu.dot_dimension_numbers<[1], [0], [0], [1], [0, 0, 1, 1], [], []>} : vector<16x72xbf16>, vector<72x128xbf16>, vector<16x128xf32> -> vector<16x128xf32>
    %c0_3 = arith.constant 0 : index
    %c0_4 = arith.constant 0 : index
    %3 = vector.load %arg3[%c0_3, %c0_4] : memref<16x1xf32, #tpu.memory_space<vmem>>, vector<16x1xf32>
    %4 = vector.broadcast %3 : vector<16x1xf32> to vector<16x128xf32>
    %5 = arith.addf %2, %4 : vector<16x128xf32>
    %cst_5 = arith.constant 0.000000e+00 : f32
    %6 = vector.broadcast %cst_5 : f32 to vector<16x128xf32>
    %7 = arith.maximumf %5, %6 : vector<16x128xf32>
    %8 = arith.truncf %7 : vector<16x128xf32> to vector<16x128xbf16>
    %c0_6 = arith.constant 0 : index
    %c0_7 = arith.constant 0 : index
    %9 = vector.load %arg4[%c0_6, %c0_7] : memref<16x128xbf16, #tpu.memory_space<vmem>>, vector<16x128xbf16>
    tpu.vector_store %arg4[%c0_6, %c0_7], %8 {strides = array<i32>} : memref<16x128xbf16, #tpu.memory_space<vmem>>, vector<16x128xbf16>,
    return
  }
  func.func @transform_0(%arg0: i32) -> (i32, i32) {
    %c0_i32 = arith.constant 0 : i32
    %c0_i32_0 = arith.constant 0 : i32
    %c0_i32_1 = arith.constant 0 : i32
    return %c0_i32, %c0_i32_0 : i32, i32
  }
  func.func @transform_1(%arg0: i32) -> (i32, i32) {
    %c0_i32 = arith.constant 0 : i32
    %c0_i32_0 = arith.constant 0 : i32
    return %c0_i32, %arg0 : i32, i32
  }
  func.func @transform_2(%arg0: i32) -> (i32, i32) {
    %c0_i32 = arith.constant 0 : i32
    %c0_i32_0 = arith.constant 0 : i32
    %c0_i32_1 = arith.constant 0 : i32
    return %c0_i32, %c0_i32_0 : i32, i32
  }
  func.func @transform_3(%arg0: i32) -> (i32, i32) {
    %c0_i32 = arith.constant 0 : i32
    %c0_i32_0 = arith.constant 0 : i32
    return %c0_i32, %arg0 : i32, i32
  }
}

module attributes {stable_mosaic.version = 11 : i64} {
  func.func @_fused_matmul_kernel(%arg0: i32, %arg1: memref<16x144xbf16, #tpu.memory_space<vmem>>, %arg2: memref<144x128xbf16, #tpu.memory_space<vmem>>, %arg3: memref<16x1xf32, #tpu.memory_space<vmem>>, %arg4: memref<16x128xbf16, #tpu.memory_space<vmem>>) attributes {dimension_semantics = [#tpu.dimension_semantics<parallel>], iteration_bounds = array<i64: 2>, scalar_prefetch = 0 : i64, scratch_operands = 0 : i64, tpu.core_type = #tpu.core_type<tc>, window_params = [{pipeline_mode = #tpu.pipeline_mode<synchronous>, transform_indices = @transform_0, window_bounds = array<i64: 16, 144>}, {transform_indices = @transform_1, window_bounds = array<i64: 144, 128>}, {pipeline_mode = #tpu.pipeline_mode<synchronous>, transform_indices = @transform_2, window_bounds = array<i64: 16, 1>}, {transform_indices = @transform_3, window_bounds = array<i64: 16, 128>}]} {
    %c0 = arith.constant 0 : index
    %c0_0 = arith.constant 0 : index
    %0 = vector.load %arg1[%c0, %c0_0] : memref<16x144xbf16, #tpu.memory_space<vmem>>, vector<16x144xbf16>
    %c0_1 = arith.constant 0 : index
    %c0_2 = arith.constant 0 : index
    %1 = vector.load %arg2[%c0_1, %c0_2] : memref<144x128xbf16, #tpu.memory_space<vmem>>, vector<144x128xbf16>
    %cst = arith.constant dense<0.000000e+00> : vector<16x128xf32>
    %2 = tpu.matmul %0, %1, %cst {dimension_numbers = #tpu.dot_dimension_numbers<[1], [0], [0], [1], [0, 0, 1, 1], [], []>} : vector<16x144xbf16>, vector<144x128xbf16>, vector<16x128xf32> -> vector<16x128xf32>
    %c0_3 = arith.constant 0 : index
    %c0_4 = arith.constant 0 : index
    %3 = vector.load %arg3[%c0_3, %c0_4] : memref<16x1xf32, #tpu.memory_space<vmem>>, vector<16x1xf32>
    %4 = vector.broadcast %3 : vector<16x1xf32> to vector<16x128xf32>
    %5 = arith.addf %2, %4 : vector<16x128xf32>
    %cst_5 = arith.constant 0.000000e+00 : f32
    %6 = vector.broadcast %cst_5 : f32 to vector<16x128xf32>
    %7 = arith.maximumf %5, %6 : vector<16x128xf32>
    %8 = arith.truncf %7 : vector<16x128xf32> to vector<16x128xbf16>
    %c0_6 = arith.constant 0 : index
    %c0_7 = arith.constant 0 : index
    %9 = vector.load %arg4[%c0_6, %c0_7] : memref<16x128xbf16, #tpu.memory_space<vmem>>, vector<16x128xbf16>
    tpu.vector_store %arg4[%c0_6, %c0_7], %8 {strides = array<i32>} : memref<16x128xbf16, #tpu.memory_space<vmem>>, vector<16x128xbf16>,
    return
  }
  func.func @transform_0(%arg0: i32) -> (i32, i32) {
    %c0_i32 = arith.constant 0 : i32
    %c0_i32_0 = arith.constant 0 : i32
    %c0_i32_1 = arith.constant 0 : i32
    return %c0_i32, %c0_i32_0 : i32, i32
  }
  func.func @transform_1(%arg0: i32) -> (i32, i32) {
    %c0_i32 = arith.constant 0 : i32
    %c0_i32_0 = arith.constant 0 : i32
    return %c0_i32, %arg0 : i32, i32
  }
  func.func @transform_2(%arg0: i32) -> (i32, i32) {
    %c0_i32 = arith.constant 0 : i32
    %c0_i32_0 = arith.constant 0 : i32
    %c0_i32_1 = arith.constant 0 : i32
    return %c0_i32, %c0_i32_0 : i32, i32
  }
  func.func @transform_3(%arg0: i32) -> (i32, i32) {
    %c0_i32 = arith.constant 0 : i32
    %c0_i32_0 = arith.constant 0 : i32
    return %c0_i32, %arg0 : i32, i32
  }
}

module attributes {stable_mosaic.version = 11 : i64} {
  func.func @_fused_matmul_kernel(%arg0: i32, %arg1: memref<24x144xbf16, #tpu.memory_space<vmem>>, %arg2: memref<144x64xbf16, #tpu.memory_space<vmem>>, %arg3: memref<24x1xf32, #tpu.memory_space<vmem>>, %arg4: memref<24x64xbf16, #tpu.memory_space<vmem>>) attributes {dimension_semantics = [#tpu.dimension_semantics<parallel>], iteration_bounds = array<i64: 1>, scalar_prefetch = 0 : i64, scratch_operands = 0 : i64, tpu.core_type = #tpu.core_type<tc>, window_params = [{pipeline_mode = #tpu.pipeline_mode<synchronous>, transform_indices = @transform_0, window_bounds = array<i64: 24, 144>}, {transform_indices = @transform_1, window_bounds = array<i64: 144, 64>}, {pipeline_mode = #tpu.pipeline_mode<synchronous>, transform_indices = @transform_2, window_bounds = array<i64: 24, 1>}, {transform_indices = @transform_3, window_bounds = array<i64: 24, 64>}]} {
    %c0 = arith.constant 0 : index
    %c0_0 = arith.constant 0 : index
    %0 = vector.load %arg1[%c0, %c0_0] : memref<24x144xbf16, #tpu.memory_space<vmem>>, vector<24x144xbf16>
    %c0_1 = arith.constant 0 : index
    %c0_2 = arith.constant 0 : index
    %1 = vector.load %arg2[%c0_1, %c0_2] : memref<144x64xbf16, #tpu.memory_space<vmem>>, vector<144x64xbf16>
    %cst = arith.constant dense<0.000000e+00> : vector<24x64xf32>
    %2 = tpu.matmul %0, %1, %cst {dimension_numbers = #tpu.dot_dimension_numbers<[1], [0], [0], [1], [0, 0, 1, 1], [], []>} : vector<24x144xbf16>, vector<144x64xbf16>, vector<24x64xf32> -> vector<24x64xf32>
    %c0_3 = arith.constant 0 : index
    %c0_4 = arith.constant 0 : index
    %3 = vector.load %arg3[%c0_3, %c0_4] : memref<24x1xf32, #tpu.memory_space<vmem>>, vector<24x1xf32>
    %4 = vector.broadcast %3 : vector<24x1xf32> to vector<24x64xf32>
    %5 = arith.addf %2, %4 : vector<24x64xf32>
    %cst_5 = arith.constant 0.000000e+00 : f32
    %6 = vector.broadcast %cst_5 : f32 to vector<24x64xf32>
    %7 = arith.maximumf %5, %6 : vector<24x64xf32>
    %8 = arith.truncf %7 : vector<24x64xf32> to vector<24x64xbf16>
    %c0_6 = arith.constant 0 : index
    %c0_7 = arith.constant 0 : index
    %9 = vector.load %arg4[%c0_6, %c0_7] : memref<24x64xbf16, #tpu.memory_space<vmem>>, vector<24x64xbf16>
    tpu.vector_store %arg4[%c0_6, %c0_7], %8 {strides = array<i32>} : memref<24x64xbf16, #tpu.memory_space<vmem>>, vector<24x64xbf16>,
    return
  }
  func.func @transform_0(%arg0: i32) -> (i32, i32) {
    %c0_i32 = arith.constant 0 : i32
    %c0_i32_0 = arith.constant 0 : i32
    %c0_i32_1 = arith.constant 0 : i32
    return %c0_i32, %c0_i32_0 : i32, i32
  }
  func.func @transform_1(%arg0: i32) -> (i32, i32) {
    %c0_i32 = arith.constant 0 : i32
    %c0_i32_0 = arith.constant 0 : i32
    return %c0_i32, %arg0 : i32, i32
  }
  func.func @transform_2(%arg0: i32) -> (i32, i32) {
    %c0_i32 = arith.constant 0 : i32
    %c0_i32_0 = arith.constant 0 : i32
    %c0_i32_1 = arith.constant 0 : i32
    return %c0_i32, %c0_i32_0 : i32, i32
  }
  func.func @transform_3(%arg0: i32) -> (i32, i32) {
    %c0_i32 = arith.constant 0 : i32
    %c0_i32_0 = arith.constant 0 : i32
    return %c0_i32, %arg0 : i32, i32
  }
}

module attributes {stable_mosaic.version = 11 : i64} {
  func.func @_fused_matmul_kernel(%arg0: i32, %arg1: memref<24x216xbf16, #tpu.memory_space<vmem>>, %arg2: memref<216x64xbf16, #tpu.memory_space<vmem>>, %arg3: memref<24x1xf32, #tpu.memory_space<vmem>>, %arg4: memref<24x64xbf16, #tpu.memory_space<vmem>>) attributes {dimension_semantics = [#tpu.dimension_semantics<parallel>], iteration_bounds = array<i64: 1>, scalar_prefetch = 0 : i64, scratch_operands = 0 : i64, tpu.core_type = #tpu.core_type<tc>, window_params = [{pipeline_mode = #tpu.pipeline_mode<synchronous>, transform_indices = @transform_0, window_bounds = array<i64: 24, 216>}, {transform_indices = @transform_1, window_bounds = array<i64: 216, 64>}, {pipeline_mode = #tpu.pipeline_mode<synchronous>, transform_indices = @transform_2, window_bounds = array<i64: 24, 1>}, {transform_indices = @transform_3, window_bounds = array<i64: 24, 64>}]} {
    %c0 = arith.constant 0 : index
    %c0_0 = arith.constant 0 : index
    %0 = vector.load %arg1[%c0, %c0_0] : memref<24x216xbf16, #tpu.memory_space<vmem>>, vector<24x216xbf16>
    %c0_1 = arith.constant 0 : index
    %c0_2 = arith.constant 0 : index
    %1 = vector.load %arg2[%c0_1, %c0_2] : memref<216x64xbf16, #tpu.memory_space<vmem>>, vector<216x64xbf16>
    %cst = arith.constant dense<0.000000e+00> : vector<24x64xf32>
    %2 = tpu.matmul %0, %1, %cst {dimension_numbers = #tpu.dot_dimension_numbers<[1], [0], [0], [1], [0, 0, 1, 1], [], []>} : vector<24x216xbf16>, vector<216x64xbf16>, vector<24x64xf32> -> vector<24x64xf32>
    %c0_3 = arith.constant 0 : index
    %c0_4 = arith.constant 0 : index
    %3 = vector.load %arg3[%c0_3, %c0_4] : memref<24x1xf32, #tpu.memory_space<vmem>>, vector<24x1xf32>
    %4 = vector.broadcast %3 : vector<24x1xf32> to vector<24x64xf32>
    %5 = arith.addf %2, %4 : vector<24x64xf32>
    %cst_5 = arith.constant 0.000000e+00 : f32
    %6 = vector.broadcast %cst_5 : f32 to vector<24x64xf32>
    %7 = arith.maximumf %5, %6 : vector<24x64xf32>
    %8 = arith.truncf %7 : vector<24x64xf32> to vector<24x64xbf16>
    %c0_6 = arith.constant 0 : index
    %c0_7 = arith.constant 0 : index
    %9 = vector.load %arg4[%c0_6, %c0_7] : memref<24x64xbf16, #tpu.memory_space<vmem>>, vector<24x64xbf16>
    tpu.vector_store %arg4[%c0_6, %c0_7], %8 {strides = array<i32>} : memref<24x64xbf16, #tpu.memory_space<vmem>>, vector<24x64xbf16>,
    return
  }
  func.func @transform_0(%arg0: i32) -> (i32, i32) {
    %c0_i32 = arith.constant 0 : i32
    %c0_i32_0 = arith.constant 0 : i32
    %c0_i32_1 = arith.constant 0 : i32
    return %c0_i32, %c0_i32_0 : i32, i32
  }
  func.func @transform_1(%arg0: i32) -> (i32, i32) {
    %c0_i32 = arith.constant 0 : i32
    %c0_i32_0 = arith.constant 0 : i32
    return %c0_i32, %arg0 : i32, i32
  }
  func.func @transform_2(%arg0: i32) -> (i32, i32) {
    %c0_i32 = arith.constant 0 : i32
    %c0_i32_0 = arith.constant 0 : i32
    %c0_i32_1 = arith.constant 0 : i32
    return %c0_i32, %c0_i32_0 : i32, i32
  }
  func.func @transform_3(%arg0: i32) -> (i32, i32) {
    %c0_i32 = arith.constant 0 : i32
    %c0_i32_0 = arith.constant 0 : i32
    return %c0_i32, %arg0 : i32, i32
  }
}

module attributes {stable_mosaic.version = 11 : i64} {
  func.func @_fused_matmul_kernel(%arg0: i32, %arg1: memref<32x216xbf16, #tpu.memory_space<vmem>>, %arg2: memref<216x16xbf16, #tpu.memory_space<vmem>>, %arg3: memref<32x1xf32, #tpu.memory_space<vmem>>, %arg4: memref<32x16xbf16, #tpu.memory_space<vmem>>) attributes {dimension_semantics = [#tpu.dimension_semantics<parallel>], iteration_bounds = array<i64: 1>, scalar_prefetch = 0 : i64, scratch_operands = 0 : i64, tpu.core_type = #tpu.core_type<tc>, window_params = [{pipeline_mode = #tpu.pipeline_mode<synchronous>, transform_indices = @transform_0, window_bounds = array<i64: 32, 216>}, {transform_indices = @transform_1, window_bounds = array<i64: 216, 16>}, {pipeline_mode = #tpu.pipeline_mode<synchronous>, transform_indices = @transform_2, window_bounds = array<i64: 32, 1>}, {transform_indices = @transform_3, window_bounds = array<i64: 32, 16>}]} {
    %c0 = arith.constant 0 : index
    %c0_0 = arith.constant 0 : index
    %0 = vector.load %arg1[%c0, %c0_0] : memref<32x216xbf16, #tpu.memory_space<vmem>>, vector<32x216xbf16>
    %c0_1 = arith.constant 0 : index
    %c0_2 = arith.constant 0 : index
    %1 = vector.load %arg2[%c0_1, %c0_2] : memref<216x16xbf16, #tpu.memory_space<vmem>>, vector<216x16xbf16>
    %cst = arith.constant dense<0.000000e+00> : vector<32x16xf32>
    %2 = tpu.matmul %0, %1, %cst {dimension_numbers = #tpu.dot_dimension_numbers<[1], [0], [0], [1], [0, 0, 1, 1], [], []>} : vector<32x216xbf16>, vector<216x16xbf16>, vector<32x16xf32> -> vector<32x16xf32>
    %c0_3 = arith.constant 0 : index
    %c0_4 = arith.constant 0 : index
    %3 = vector.load %arg3[%c0_3, %c0_4] : memref<32x1xf32, #tpu.memory_space<vmem>>, vector<32x1xf32>
    %4 = vector.broadcast %3 : vector<32x1xf32> to vector<32x16xf32>
    %5 = arith.addf %2, %4 : vector<32x16xf32>
    %cst_5 = arith.constant 0.000000e+00 : f32
    %6 = vector.broadcast %cst_5 : f32 to vector<32x16xf32>
    %7 = arith.maximumf %5, %6 : vector<32x16xf32>
    %8 = arith.truncf %7 : vector<32x16xf32> to vector<32x16xbf16>
    %c0_6 = arith.constant 0 : index
    %c0_7 = arith.constant 0 : index
    %9 = vector.load %arg4[%c0_6, %c0_7] : memref<32x16xbf16, #tpu.memory_space<vmem>>, vector<32x16xbf16>
    tpu.vector_store %arg4[%c0_6, %c0_7], %8 {strides = array<i32>} : memref<32x16xbf16, #tpu.memory_space<vmem>>, vector<32x16xbf16>,
    return
  }
  func.func @transform_0(%arg0: i32) -> (i32, i32) {
    %c0_i32 = arith.constant 0 : i32
    %c0_i32_0 = arith.constant 0 : i32
    %c0_i32_1 = arith.constant 0 : i32
    return %c0_i32, %c0_i32_0 : i32, i32
  }
  func.func @transform_1(%arg0: i32) -> (i32, i32) {
    %c0_i32 = arith.constant 0 : i32
    %c0_i32_0 = arith.constant 0 : i32
    return %c0_i32, %arg0 : i32, i32
  }
  func.func @transform_2(%arg0: i32) -> (i32, i32) {
    %c0_i32 = arith.constant 0 : i32
    %c0_i32_0 = arith.constant 0 : i32
    %c0_i32_1 = arith.constant 0 : i32
    return %c0_i32, %c0_i32_0 : i32, i32
  }
  func.func @transform_3(%arg0: i32) -> (i32, i32) {
    %c0_i32 = arith.constant 0 : i32
    %c0_i32_0 = arith.constant 0 : i32
    return %c0_i32, %arg0 : i32, i32
  }
}

module attributes {stable_mosaic.version = 11 : i64} {
  func.func @_fused_matmul_kernel(%arg0: i32, %arg1: memref<32x288xbf16, #tpu.memory_space<vmem>>, %arg2: memref<288x16xbf16, #tpu.memory_space<vmem>>, %arg3: memref<32x1xf32, #tpu.memory_space<vmem>>, %arg4: memref<32x16xbf16, #tpu.memory_space<vmem>>) attributes {dimension_semantics = [#tpu.dimension_semantics<parallel>], iteration_bounds = array<i64: 1>, scalar_prefetch = 0 : i64, scratch_operands = 0 : i64, tpu.core_type = #tpu.core_type<tc>, window_params = [{pipeline_mode = #tpu.pipeline_mode<synchronous>, transform_indices = @transform_0, window_bounds = array<i64: 32, 288>}, {transform_indices = @transform_1, window_bounds = array<i64: 288, 16>}, {pipeline_mode = #tpu.pipeline_mode<synchronous>, transform_indices = @transform_2, window_bounds = array<i64: 32, 1>}, {transform_indices = @transform_3, window_bounds = array<i64: 32, 16>}]} {
    %c0 = arith.constant 0 : index
    %c0_0 = arith.constant 0 : index
    %0 = vector.load %arg1[%c0, %c0_0] : memref<32x288xbf16, #tpu.memory_space<vmem>>, vector<32x288xbf16>
    %c0_1 = arith.constant 0 : index
    %c0_2 = arith.constant 0 : index
    %1 = vector.load %arg2[%c0_1, %c0_2] : memref<288x16xbf16, #tpu.memory_space<vmem>>, vector<288x16xbf16>
    %cst = arith.constant dense<0.000000e+00> : vector<32x16xf32>
    %2 = tpu.matmul %0, %1, %cst {dimension_numbers = #tpu.dot_dimension_numbers<[1], [0], [0], [1], [0, 0, 1, 1], [], []>} : vector<32x288xbf16>, vector<288x16xbf16>, vector<32x16xf32> -> vector<32x16xf32>
    %c0_3 = arith.constant 0 : index
    %c0_4 = arith.constant 0 : index
    %3 = vector.load %arg3[%c0_3, %c0_4] : memref<32x1xf32, #tpu.memory_space<vmem>>, vector<32x1xf32>
    %4 = vector.broadcast %3 : vector<32x1xf32> to vector<32x16xf32>
    %5 = arith.addf %2, %4 : vector<32x16xf32>
    %cst_5 = arith.constant 0.000000e+00 : f32
    %6 = vector.broadcast %cst_5 : f32 to vector<32x16xf32>
    %7 = arith.maximumf %5, %6 : vector<32x16xf32>
    %8 = arith.truncf %7 : vector<32x16xf32> to vector<32x16xbf16>
    %c0_6 = arith.constant 0 : index
    %c0_7 = arith.constant 0 : index
    %9 = vector.load %arg4[%c0_6, %c0_7] : memref<32x16xbf16, #tpu.memory_space<vmem>>, vector<32x16xbf16>
    tpu.vector_store %arg4[%c0_6, %c0_7], %8 {strides = array<i32>} : memref<32x16xbf16, #tpu.memory_space<vmem>>, vector<32x16xbf16>,
    return
  }
  func.func @transform_0(%arg0: i32) -> (i32, i32) {
    %c0_i32 = arith.constant 0 : i32
    %c0_i32_0 = arith.constant 0 : i32
    %c0_i32_1 = arith.constant 0 : i32
    return %c0_i32, %c0_i32_0 : i32, i32
  }
  func.func @transform_1(%arg0: i32) -> (i32, i32) {
    %c0_i32 = arith.constant 0 : i32
    %c0_i32_0 = arith.constant 0 : i32
    return %c0_i32, %arg0 : i32, i32
  }
  func.func @transform_2(%arg0: i32) -> (i32, i32) {
    %c0_i32 = arith.constant 0 : i32
    %c0_i32_0 = arith.constant 0 : i32
    %c0_i32_1 = arith.constant 0 : i32
    return %c0_i32, %c0_i32_0 : i32, i32
  }
  func.func @transform_3(%arg0: i32) -> (i32, i32) {
    %c0_i32 = arith.constant 0 : i32
    %c0_i32_0 = arith.constant 0 : i32
    return %c0_i32, %arg0 : i32, i32
  }
}

module attributes {stable_mosaic.version = 11 : i64} {
  func.func @_fused_matmul_kernel(%arg0: i32, %arg1: memref<40x288xbf16, #tpu.memory_space<vmem>>, %arg2: memref<288x4xbf16, #tpu.memory_space<vmem>>, %arg3: memref<40x1xf32, #tpu.memory_space<vmem>>, %arg4: memref<40x4xbf16, #tpu.memory_space<vmem>>) attributes {dimension_semantics = [#tpu.dimension_semantics<parallel>], iteration_bounds = array<i64: 1>, scalar_prefetch = 0 : i64, scratch_operands = 0 : i64, tpu.core_type = #tpu.core_type<tc>, window_params = [{pipeline_mode = #tpu.pipeline_mode<synchronous>, transform_indices = @transform_0, window_bounds = array<i64: 40, 288>}, {transform_indices = @transform_1, window_bounds = array<i64: 288, 4>}, {pipeline_mode = #tpu.pipeline_mode<synchronous>, transform_indices = @transform_2, window_bounds = array<i64: 40, 1>}, {transform_indices = @transform_3, window_bounds = array<i64: 40, 4>}]} {
    %c0 = arith.constant 0 : index
    %c0_0 = arith.constant 0 : index
    %0 = vector.load %arg1[%c0, %c0_0] : memref<40x288xbf16, #tpu.memory_space<vmem>>, vector<40x288xbf16>
    %c0_1 = arith.constant 0 : index
    %c0_2 = arith.constant 0 : index
    %1 = vector.load %arg2[%c0_1, %c0_2] : memref<288x4xbf16, #tpu.memory_space<vmem>>, vector<288x4xbf16>
    %cst = arith.constant dense<0.000000e+00> : vector<40x4xf32>
    %2 = tpu.matmul %0, %1, %cst {dimension_numbers = #tpu.dot_dimension_numbers<[1], [0], [0], [1], [0, 0, 1, 1], [], []>} : vector<40x288xbf16>, vector<288x4xbf16>, vector<40x4xf32> -> vector<40x4xf32>
    %c0_3 = arith.constant 0 : index
    %c0_4 = arith.constant 0 : index
    %3 = vector.load %arg3[%c0_3, %c0_4] : memref<40x1xf32, #tpu.memory_space<vmem>>, vector<40x1xf32>
    %4 = vector.broadcast %3 : vector<40x1xf32> to vector<40x4xf32>
    %5 = arith.addf %2, %4 : vector<40x4xf32>
    %cst_5 = arith.constant 0.000000e+00 : f32
    %6 = vector.broadcast %cst_5 : f32 to vector<40x4xf32>
    %7 = arith.maximumf %5, %6 : vector<40x4xf32>
    %8 = arith.truncf %7 : vector<40x4xf32> to vector<40x4xbf16>
    %c0_6 = arith.constant 0 : index
    %c0_7 = arith.constant 0 : index
    %9 = vector.load %arg4[%c0_6, %c0_7] : memref<40x4xbf16, #tpu.memory_space<vmem>>, vector<40x4xbf16>
    tpu.vector_store %arg4[%c0_6, %c0_7], %8 {strides = array<i32>} : memref<40x4xbf16, #tpu.memory_space<vmem>>, vector<40x4xbf16>,
    return
  }
  func.func @transform_0(%arg0: i32) -> (i32, i32) {
    %c0_i32 = arith.constant 0 : i32
    %c0_i32_0 = arith.constant 0 : i32
    %c0_i32_1 = arith.constant 0 : i32
    return %c0_i32, %c0_i32_0 : i32, i32
  }
  func.func @transform_1(%arg0: i32) -> (i32, i32) {
    %c0_i32 = arith.constant 0 : i32
    %c0_i32_0 = arith.constant 0 : i32
    return %c0_i32, %arg0 : i32, i32
  }
  func.func @transform_2(%arg0: i32) -> (i32, i32) {
    %c0_i32 = arith.constant 0 : i32
    %c0_i32_0 = arith.constant 0 : i32
    %c0_i32_1 = arith.constant 0 : i32
    return %c0_i32, %c0_i32_0 : i32, i32
  }
  func.func @transform_3(%arg0: i32) -> (i32, i32) {
    %c0_i32 = arith.constant 0 : i32
    %c0_i32_0 = arith.constant 0 : i32
    return %c0_i32, %arg0 : i32, i32
  }
}

module attributes {stable_mosaic.version = 11 : i64} {
  func.func @_fused_matmul_kernel(%arg0: i32, %arg1: memref<40x360xbf16, #tpu.memory_space<vmem>>, %arg2: memref<360x4xbf16, #tpu.memory_space<vmem>>, %arg3: memref<40x1xf32, #tpu.memory_space<vmem>>, %arg4: memref<40x4xbf16, #tpu.memory_space<vmem>>) attributes {dimension_semantics = [#tpu.dimension_semantics<parallel>], iteration_bounds = array<i64: 1>, scalar_prefetch = 0 : i64, scratch_operands = 0 : i64, tpu.core_type = #tpu.core_type<tc>, window_params = [{pipeline_mode = #tpu.pipeline_mode<synchronous>, transform_indices = @transform_0, window_bounds = array<i64: 40, 360>}, {transform_indices = @transform_1, window_bounds = array<i64: 360, 4>}, {pipeline_mode = #tpu.pipeline_mode<synchronous>, transform_indices = @transform_2, window_bounds = array<i64: 40, 1>}, {transform_indices = @transform_3, window_bounds = array<i64: 40, 4>}]} {
    %c0 = arith.constant 0 : index
    %c0_0 = arith.constant 0 : index
    %0 = vector.load %arg1[%c0, %c0_0] : memref<40x360xbf16, #tpu.memory_space<vmem>>, vector<40x360xbf16>
    %c0_1 = arith.constant 0 : index
    %c0_2 = arith.constant 0 : index
    %1 = vector.load %arg2[%c0_1, %c0_2] : memref<360x4xbf16, #tpu.memory_space<vmem>>, vector<360x4xbf16>
    %cst = arith.constant dense<0.000000e+00> : vector<40x4xf32>
    %2 = tpu.matmul %0, %1, %cst {dimension_numbers = #tpu.dot_dimension_numbers<[1], [0], [0], [1], [0, 0, 1, 1], [], []>} : vector<40x360xbf16>, vector<360x4xbf16>, vector<40x4xf32> -> vector<40x4xf32>
    %c0_3 = arith.constant 0 : index
    %c0_4 = arith.constant 0 : index
    %3 = vector.load %arg3[%c0_3, %c0_4] : memref<40x1xf32, #tpu.memory_space<vmem>>, vector<40x1xf32>
    %4 = vector.broadcast %3 : vector<40x1xf32> to vector<40x4xf32>
    %5 = arith.addf %2, %4 : vector<40x4xf32>
    %cst_5 = arith.constant 0.000000e+00 : f32
    %6 = vector.broadcast %cst_5 : f32 to vector<40x4xf32>
    %7 = arith.maximumf %5, %6 : vector<40x4xf32>
    %8 = arith.truncf %7 : vector<40x4xf32> to vector<40x4xbf16>
    %c0_6 = arith.constant 0 : index
    %c0_7 = arith.constant 0 : index
    %9 = vector.load %arg4[%c0_6, %c0_7] : memref<40x4xbf16, #tpu.memory_space<vmem>>, vector<40x4xbf16>
    tpu.vector_store %arg4[%c0_6, %c0_7], %8 {strides = array<i32>} : memref<40x4xbf16, #tpu.memory_space<vmem>>, vector<40x4xbf16>,
    return
  }
  func.func @transform_0(%arg0: i32) -> (i32, i32) {
    %c0_i32 = arith.constant 0 : i32
    %c0_i32_0 = arith.constant 0 : i32
    %c0_i32_1 = arith.constant 0 : i32
    return %c0_i32, %c0_i32_0 : i32, i32
  }
  func.func @transform_1(%arg0: i32) -> (i32, i32) {
    %c0_i32 = arith.constant 0 : i32
    %c0_i32_0 = arith.constant 0 : i32
    return %c0_i32, %arg0 : i32, i32
  }
  func.func @transform_2(%arg0: i32) -> (i32, i32) {
    %c0_i32 = arith.constant 0 : i32
    %c0_i32_0 = arith.constant 0 : i32
    %c0_i32_1 = arith.constant 0 : i32
    return %c0_i32, %c0_i32_0 : i32, i32
  }
  func.func @transform_3(%arg0: i32) -> (i32, i32) {
    %c0_i32 = arith.constant 0 : i32
    %c0_i32_0 = arith.constant 0 : i32
    return %c0_i32, %arg0 : i32, i32
  }
}

module attributes {stable_mosaic.version = 11 : i64} {
  func.func @_fused_matmul_kernel(%arg0: i32, %arg1: memref<32x40xbf16, #tpu.memory_space<vmem>>, %arg2: memref<40x4xbf16, #tpu.memory_space<vmem>>, %arg3: memref<32x1xf32, #tpu.memory_space<vmem>>, %arg4: memref<32x4xbf16, #tpu.memory_space<vmem>>) attributes {dimension_semantics = [#tpu.dimension_semantics<parallel>], iteration_bounds = array<i64: 1>, scalar_prefetch = 0 : i64, scratch_operands = 0 : i64, tpu.core_type = #tpu.core_type<tc>, window_params = [{pipeline_mode = #tpu.pipeline_mode<synchronous>, transform_indices = @transform_0, window_bounds = array<i64: 32, 40>}, {transform_indices = @transform_1, window_bounds = array<i64: 40, 4>}, {pipeline_mode = #tpu.pipeline_mode<synchronous>, transform_indices = @transform_2, window_bounds = array<i64: 32, 1>}, {transform_indices = @transform_3, window_bounds = array<i64: 32, 4>}]} {
    %c0 = arith.constant 0 : index
    %c0_0 = arith.constant 0 : index
    %0 = vector.load %arg1[%c0, %c0_0] : memref<32x40xbf16, #tpu.memory_space<vmem>>, vector<32x40xbf16>
    %c0_1 = arith.constant 0 : index
    %c0_2 = arith.constant 0 : index
    %1 = vector.load %arg2[%c0_1, %c0_2] : memref<40x4xbf16, #tpu.memory_space<vmem>>, vector<40x4xbf16>
    %cst = arith.constant dense<0.000000e+00> : vector<32x4xf32>
    %2 = tpu.matmul %0, %1, %cst {dimension_numbers = #tpu.dot_dimension_numbers<[1], [0], [0], [1], [0, 0, 1, 1], [], []>} : vector<32x40xbf16>, vector<40x4xbf16>, vector<32x4xf32> -> vector<32x4xf32>
    %c0_3 = arith.constant 0 : index
    %c0_4 = arith.constant 0 : index
    %3 = vector.load %arg3[%c0_3, %c0_4] : memref<32x1xf32, #tpu.memory_space<vmem>>, vector<32x1xf32>
    %4 = vector.broadcast %3 : vector<32x1xf32> to vector<32x4xf32>
    %5 = arith.addf %2, %4 : vector<32x4xf32>
    %cst_5 = arith.constant 0.000000e+00 : f32
    %6 = vector.broadcast %cst_5 : f32 to vector<32x4xf32>
    %7 = arith.maximumf %5, %6 : vector<32x4xf32>
    %8 = arith.truncf %7 : vector<32x4xf32> to vector<32x4xbf16>
    %c0_6 = arith.constant 0 : index
    %c0_7 = arith.constant 0 : index
    %9 = vector.load %arg4[%c0_6, %c0_7] : memref<32x4xbf16, #tpu.memory_space<vmem>>, vector<32x4xbf16>
    tpu.vector_store %arg4[%c0_6, %c0_7], %8 {strides = array<i32>} : memref<32x4xbf16, #tpu.memory_space<vmem>>, vector<32x4xbf16>,
    return
  }
  func.func @transform_0(%arg0: i32) -> (i32, i32) {
    %c0_i32 = arith.constant 0 : i32
    %c0_i32_0 = arith.constant 0 : i32
    %c0_i32_1 = arith.constant 0 : i32
    return %c0_i32, %c0_i32_0 : i32, i32
  }
  func.func @transform_1(%arg0: i32) -> (i32, i32) {
    %c0_i32 = arith.constant 0 : i32
    %c0_i32_0 = arith.constant 0 : i32
    return %c0_i32, %arg0 : i32, i32
  }
  func.func @transform_2(%arg0: i32) -> (i32, i32) {
    %c0_i32 = arith.constant 0 : i32
    %c0_i32_0 = arith.constant 0 : i32
    %c0_i32_1 = arith.constant 0 : i32
    return %c0_i32, %c0_i32_0 : i32, i32
  }
  func.func @transform_3(%arg0: i32) -> (i32, i32) {
    %c0_i32 = arith.constant 0 : i32
    %c0_i32_0 = arith.constant 0 : i32
    return %c0_i32, %arg0 : i32, i32
  }
}

module attributes {stable_mosaic.version = 11 : i64} {
  func.func @_fused_matmul_kernel(%arg0: i32, %arg1: memref<32x576xbf16, #tpu.memory_space<vmem>>, %arg2: memref<576x16xbf16, #tpu.memory_space<vmem>>, %arg3: memref<32x1xf32, #tpu.memory_space<vmem>>, %arg4: memref<32x16xbf16, #tpu.memory_space<vmem>>) attributes {dimension_semantics = [#tpu.dimension_semantics<parallel>], iteration_bounds = array<i64: 1>, scalar_prefetch = 0 : i64, scratch_operands = 0 : i64, tpu.core_type = #tpu.core_type<tc>, window_params = [{pipeline_mode = #tpu.pipeline_mode<synchronous>, transform_indices = @transform_0, window_bounds = array<i64: 32, 576>}, {transform_indices = @transform_1, window_bounds = array<i64: 576, 16>}, {pipeline_mode = #tpu.pipeline_mode<synchronous>, transform_indices = @transform_2, window_bounds = array<i64: 32, 1>}, {transform_indices = @transform_3, window_bounds = array<i64: 32, 16>}]} {
    %c0 = arith.constant 0 : index
    %c0_0 = arith.constant 0 : index
    %0 = vector.load %arg1[%c0, %c0_0] : memref<32x576xbf16, #tpu.memory_space<vmem>>, vector<32x576xbf16>
    %c0_1 = arith.constant 0 : index
    %c0_2 = arith.constant 0 : index
    %1 = vector.load %arg2[%c0_1, %c0_2] : memref<576x16xbf16, #tpu.memory_space<vmem>>, vector<576x16xbf16>
    %cst = arith.constant dense<0.000000e+00> : vector<32x16xf32>
    %2 = tpu.matmul %0, %1, %cst {dimension_numbers = #tpu.dot_dimension_numbers<[1], [0], [0], [1], [0, 0, 1, 1], [], []>} : vector<32x576xbf16>, vector<576x16xbf16>, vector<32x16xf32> -> vector<32x16xf32>
    %c0_3 = arith.constant 0 : index
    %c0_4 = arith.constant 0 : index
    %3 = vector.load %arg3[%c0_3, %c0_4] : memref<32x1xf32, #tpu.memory_space<vmem>>, vector<32x1xf32>
    %4 = vector.broadcast %3 : vector<32x1xf32> to vector<32x16xf32>
    %5 = arith.addf %2, %4 : vector<32x16xf32>
    %cst_5 = arith.constant 0.000000e+00 : f32
    %6 = vector.broadcast %cst_5 : f32 to vector<32x16xf32>
    %7 = arith.maximumf %5, %6 : vector<32x16xf32>
    %8 = arith.truncf %7 : vector<32x16xf32> to vector<32x16xbf16>
    %c0_6 = arith.constant 0 : index
    %c0_7 = arith.constant 0 : index
    %9 = vector.load %arg4[%c0_6, %c0_7] : memref<32x16xbf16, #tpu.memory_space<vmem>>, vector<32x16xbf16>
    tpu.vector_store %arg4[%c0_6, %c0_7], %8 {strides = array<i32>} : memref<32x16xbf16, #tpu.memory_space<vmem>>, vector<32x16xbf16>,
    return
  }
  func.func @transform_0(%arg0: i32) -> (i32, i32) {
    %c0_i32 = arith.constant 0 : i32
    %c0_i32_0 = arith.constant 0 : i32
    %c0_i32_1 = arith.constant 0 : i32
    return %c0_i32, %c0_i32_0 : i32, i32
  }
  func.func @transform_1(%arg0: i32) -> (i32, i32) {
    %c0_i32 = arith.constant 0 : i32
    %c0_i32_0 = arith.constant 0 : i32
    return %c0_i32, %arg0 : i32, i32
  }
  func.func @transform_2(%arg0: i32) -> (i32, i32) {
    %c0_i32 = arith.constant 0 : i32
    %c0_i32_0 = arith.constant 0 : i32
    %c0_i32_1 = arith.constant 0 : i32
    return %c0_i32, %c0_i32_0 : i32, i32
  }
  func.func @transform_3(%arg0: i32) -> (i32, i32) {
    %c0_i32 = arith.constant 0 : i32
    %c0_i32_0 = arith.constant 0 : i32
    return %c0_i32, %arg0 : i32, i32
  }
}

module attributes {stable_mosaic.version = 11 : i64} {
  func.func @_fused_matmul_kernel(%arg0: i32, %arg1: memref<24x32xbf16, #tpu.memory_space<vmem>>, %arg2: memref<32x16xbf16, #tpu.memory_space<vmem>>, %arg3: memref<24x1xf32, #tpu.memory_space<vmem>>, %arg4: memref<24x16xbf16, #tpu.memory_space<vmem>>) attributes {dimension_semantics = [#tpu.dimension_semantics<parallel>], iteration_bounds = array<i64: 1>, scalar_prefetch = 0 : i64, scratch_operands = 0 : i64, tpu.core_type = #tpu.core_type<tc>, window_params = [{pipeline_mode = #tpu.pipeline_mode<synchronous>, transform_indices = @transform_0, window_bounds = array<i64: 24, 32>}, {transform_indices = @transform_1, window_bounds = array<i64: 32, 16>}, {pipeline_mode = #tpu.pipeline_mode<synchronous>, transform_indices = @transform_2, window_bounds = array<i64: 24, 1>}, {transform_indices = @transform_3, window_bounds = array<i64: 24, 16>}]} {
    %c0 = arith.constant 0 : index
    %c0_0 = arith.constant 0 : index
    %0 = vector.load %arg1[%c0, %c0_0] : memref<24x32xbf16, #tpu.memory_space<vmem>>, vector<24x32xbf16>
    %c0_1 = arith.constant 0 : index
    %c0_2 = arith.constant 0 : index
    %1 = vector.load %arg2[%c0_1, %c0_2] : memref<32x16xbf16, #tpu.memory_space<vmem>>, vector<32x16xbf16>
    %cst = arith.constant dense<0.000000e+00> : vector<24x16xf32>
    %2 = tpu.matmul %0, %1, %cst {dimension_numbers = #tpu.dot_dimension_numbers<[1], [0], [0], [1], [0, 0, 1, 1], [], []>} : vector<24x32xbf16>, vector<32x16xbf16>, vector<24x16xf32> -> vector<24x16xf32>
    %c0_3 = arith.constant 0 : index
    %c0_4 = arith.constant 0 : index
    %3 = vector.load %arg3[%c0_3, %c0_4] : memref<24x1xf32, #tpu.memory_space<vmem>>, vector<24x1xf32>
    %4 = vector.broadcast %3 : vector<24x1xf32> to vector<24x16xf32>
    %5 = arith.addf %2, %4 : vector<24x16xf32>
    %cst_5 = arith.constant 0.000000e+00 : f32
    %6 = vector.broadcast %cst_5 : f32 to vector<24x16xf32>
    %7 = arith.maximumf %5, %6 : vector<24x16xf32>
    %8 = arith.truncf %7 : vector<24x16xf32> to vector<24x16xbf16>
    %c0_6 = arith.constant 0 : index
    %c0_7 = arith.constant 0 : index
    %9 = vector.load %arg4[%c0_6, %c0_7] : memref<24x16xbf16, #tpu.memory_space<vmem>>, vector<24x16xbf16>
    tpu.vector_store %arg4[%c0_6, %c0_7], %8 {strides = array<i32>} : memref<24x16xbf16, #tpu.memory_space<vmem>>, vector<24x16xbf16>,
    return
  }
  func.func @transform_0(%arg0: i32) -> (i32, i32) {
    %c0_i32 = arith.constant 0 : i32
    %c0_i32_0 = arith.constant 0 : i32
    %c0_i32_1 = arith.constant 0 : i32
    return %c0_i32, %c0_i32_0 : i32, i32
  }
  func.func @transform_1(%arg0: i32) -> (i32, i32) {
    %c0_i32 = arith.constant 0 : i32
    %c0_i32_0 = arith.constant 0 : i32
    return %c0_i32, %arg0 : i32, i32
  }
  func.func @transform_2(%arg0: i32) -> (i32, i32) {
    %c0_i32 = arith.constant 0 : i32
    %c0_i32_0 = arith.constant 0 : i32
    %c0_i32_1 = arith.constant 0 : i32
    return %c0_i32, %c0_i32_0 : i32, i32
  }
  func.func @transform_3(%arg0: i32) -> (i32, i32) {
    %c0_i32 = arith.constant 0 : i32
    %c0_i32_0 = arith.constant 0 : i32
    return %c0_i32, %arg0 : i32, i32
  }
}

module attributes {stable_mosaic.version = 11 : i64} {
  func.func @_fused_matmul_kernel(%arg0: i32, %arg1: memref<24x432xbf16, #tpu.memory_space<vmem>>, %arg2: memref<432x64xbf16, #tpu.memory_space<vmem>>, %arg3: memref<24x1xf32, #tpu.memory_space<vmem>>, %arg4: memref<24x64xbf16, #tpu.memory_space<vmem>>) attributes {dimension_semantics = [#tpu.dimension_semantics<parallel>], iteration_bounds = array<i64: 1>, scalar_prefetch = 0 : i64, scratch_operands = 0 : i64, tpu.core_type = #tpu.core_type<tc>, window_params = [{pipeline_mode = #tpu.pipeline_mode<synchronous>, transform_indices = @transform_0, window_bounds = array<i64: 24, 432>}, {transform_indices = @transform_1, window_bounds = array<i64: 432, 64>}, {pipeline_mode = #tpu.pipeline_mode<synchronous>, transform_indices = @transform_2, window_bounds = array<i64: 24, 1>}, {transform_indices = @transform_3, window_bounds = array<i64: 24, 64>}]} {
    %c0 = arith.constant 0 : index
    %c0_0 = arith.constant 0 : index
    %0 = vector.load %arg1[%c0, %c0_0] : memref<24x432xbf16, #tpu.memory_space<vmem>>, vector<24x432xbf16>
    %c0_1 = arith.constant 0 : index
    %c0_2 = arith.constant 0 : index
    %1 = vector.load %arg2[%c0_1, %c0_2] : memref<432x64xbf16, #tpu.memory_space<vmem>>, vector<432x64xbf16>
    %cst = arith.constant dense<0.000000e+00> : vector<24x64xf32>
    %2 = tpu.matmul %0, %1, %cst {dimension_numbers = #tpu.dot_dimension_numbers<[1], [0], [0], [1], [0, 0, 1, 1], [], []>} : vector<24x432xbf16>, vector<432x64xbf16>, vector<24x64xf32> -> vector<24x64xf32>
    %c0_3 = arith.constant 0 : index
    %c0_4 = arith.constant 0 : index
    %3 = vector.load %arg3[%c0_3, %c0_4] : memref<24x1xf32, #tpu.memory_space<vmem>>, vector<24x1xf32>
    %4 = vector.broadcast %3 : vector<24x1xf32> to vector<24x64xf32>
    %5 = arith.addf %2, %4 : vector<24x64xf32>
    %cst_5 = arith.constant 0.000000e+00 : f32
    %6 = vector.broadcast %cst_5 : f32 to vector<24x64xf32>
    %7 = arith.maximumf %5, %6 : vector<24x64xf32>
    %8 = arith.truncf %7 : vector<24x64xf32> to vector<24x64xbf16>
    %c0_6 = arith.constant 0 : index
    %c0_7 = arith.constant 0 : index
    %9 = vector.load %arg4[%c0_6, %c0_7] : memref<24x64xbf16, #tpu.memory_space<vmem>>, vector<24x64xbf16>
    tpu.vector_store %arg4[%c0_6, %c0_7], %8 {strides = array<i32>} : memref<24x64xbf16, #tpu.memory_space<vmem>>, vector<24x64xbf16>,
    return
  }
  func.func @transform_0(%arg0: i32) -> (i32, i32) {
    %c0_i32 = arith.constant 0 : i32
    %c0_i32_0 = arith.constant 0 : i32
    %c0_i32_1 = arith.constant 0 : i32
    return %c0_i32, %c0_i32_0 : i32, i32
  }
  func.func @transform_1(%arg0: i32) -> (i32, i32) {
    %c0_i32 = arith.constant 0 : i32
    %c0_i32_0 = arith.constant 0 : i32
    return %c0_i32, %arg0 : i32, i32
  }
  func.func @transform_2(%arg0: i32) -> (i32, i32) {
    %c0_i32 = arith.constant 0 : i32
    %c0_i32_0 = arith.constant 0 : i32
    %c0_i32_1 = arith.constant 0 : i32
    return %c0_i32, %c0_i32_0 : i32, i32
  }
  func.func @transform_3(%arg0: i32) -> (i32, i32) {
    %c0_i32 = arith.constant 0 : i32
    %c0_i32_0 = arith.constant 0 : i32
    return %c0_i32, %arg0 : i32, i32
  }
}

module attributes {stable_mosaic.version = 11 : i64} {
  func.func @_fused_matmul_kernel(%arg0: i32, %arg1: memref<24x24xbf16, #tpu.memory_space<vmem>>, %arg2: memref<24x64xbf16, #tpu.memory_space<vmem>>, %arg3: memref<24x1xf32, #tpu.memory_space<vmem>>, %arg4: memref<24x64xbf16, #tpu.memory_space<vmem>>) attributes {dimension_semantics = [#tpu.dimension_semantics<parallel>], iteration_bounds = array<i64: 1>, scalar_prefetch = 0 : i64, scratch_operands = 0 : i64, tpu.core_type = #tpu.core_type<tc>, window_params = [{pipeline_mode = #tpu.pipeline_mode<synchronous>, transform_indices = @transform_0, window_bounds = array<i64: 24, 24>}, {transform_indices = @transform_1, window_bounds = array<i64: 24, 64>}, {pipeline_mode = #tpu.pipeline_mode<synchronous>, transform_indices = @transform_2, window_bounds = array<i64: 24, 1>}, {transform_indices = @transform_3, window_bounds = array<i64: 24, 64>}]} {
    %c0 = arith.constant 0 : index
    %c0_0 = arith.constant 0 : index
    %0 = vector.load %arg1[%c0, %c0_0] : memref<24x24xbf16, #tpu.memory_space<vmem>>, vector<24x24xbf16>
    %c0_1 = arith.constant 0 : index
    %c0_2 = arith.constant 0 : index
    %1 = vector.load %arg2[%c0_1, %c0_2] : memref<24x64xbf16, #tpu.memory_space<vmem>>, vector<24x64xbf16>
    %cst = arith.constant dense<0.000000e+00> : vector<24x64xf32>
    %2 = tpu.matmul %0, %1, %cst {dimension_numbers = #tpu.dot_dimension_numbers<[1], [0], [0], [1], [0, 0, 1, 1], [], []>} : vector<24x24xbf16>, vector<24x64xbf16>, vector<24x64xf32> -> vector<24x64xf32>
    %c0_3 = arith.constant 0 : index
    %c0_4 = arith.constant 0 : index
    %3 = vector.load %arg3[%c0_3, %c0_4] : memref<24x1xf32, #tpu.memory_space<vmem>>, vector<24x1xf32>
    %4 = vector.broadcast %3 : vector<24x1xf32> to vector<24x64xf32>
    %5 = arith.addf %2, %4 : vector<24x64xf32>
    %cst_5 = arith.constant 0.000000e+00 : f32
    %6 = vector.broadcast %cst_5 : f32 to vector<24x64xf32>
    %7 = arith.maximumf %5, %6 : vector<24x64xf32>
    %8 = arith.truncf %7 : vector<24x64xf32> to vector<24x64xbf16>
    %c0_6 = arith.constant 0 : index
    %c0_7 = arith.constant 0 : index
    %9 = vector.load %arg4[%c0_6, %c0_7] : memref<24x64xbf16, #tpu.memory_space<vmem>>, vector<24x64xbf16>
    tpu.vector_store %arg4[%c0_6, %c0_7], %8 {strides = array<i32>} : memref<24x64xbf16, #tpu.memory_space<vmem>>, vector<24x64xbf16>,
    return
  }
  func.func @transform_0(%arg0: i32) -> (i32, i32) {
    %c0_i32 = arith.constant 0 : i32
    %c0_i32_0 = arith.constant 0 : i32
    %c0_i32_1 = arith.constant 0 : i32
    return %c0_i32, %c0_i32_0 : i32, i32
  }
  func.func @transform_1(%arg0: i32) -> (i32, i32) {
    %c0_i32 = arith.constant 0 : i32
    %c0_i32_0 = arith.constant 0 : i32
    return %c0_i32, %arg0 : i32, i32
  }
  func.func @transform_2(%arg0: i32) -> (i32, i32) {
    %c0_i32 = arith.constant 0 : i32
    %c0_i32_0 = arith.constant 0 : i32
    %c0_i32_1 = arith.constant 0 : i32
    return %c0_i32, %c0_i32_0 : i32, i32
  }
  func.func @transform_3(%arg0: i32) -> (i32, i32) {
    %c0_i32 = arith.constant 0 : i32
    %c0_i32_0 = arith.constant 0 : i32
    return %c0_i32, %arg0 : i32, i32
  }
}

module attributes {stable_mosaic.version = 11 : i64} {
  func.func @_fused_matmul_kernel(%arg0: i32, %arg1: memref<48x216xbf16, #tpu.memory_space<vmem>>, %arg2: memref<216x64xbf16, #tpu.memory_space<vmem>>, %arg3: memref<48x1xf32, #tpu.memory_space<vmem>>, %arg4: memref<48x64xbf16, #tpu.memory_space<vmem>>) attributes {dimension_semantics = [#tpu.dimension_semantics<parallel>], iteration_bounds = array<i64: 1>, scalar_prefetch = 0 : i64, scratch_operands = 0 : i64, tpu.core_type = #tpu.core_type<tc>, window_params = [{pipeline_mode = #tpu.pipeline_mode<synchronous>, transform_indices = @transform_0, window_bounds = array<i64: 48, 216>}, {transform_indices = @transform_1, window_bounds = array<i64: 216, 64>}, {pipeline_mode = #tpu.pipeline_mode<synchronous>, transform_indices = @transform_2, window_bounds = array<i64: 48, 1>}, {transform_indices = @transform_3, window_bounds = array<i64: 48, 64>}]} {
    %c0 = arith.constant 0 : index
    %c0_0 = arith.constant 0 : index
    %0 = vector.load %arg1[%c0, %c0_0] : memref<48x216xbf16, #tpu.memory_space<vmem>>, vector<48x216xbf16>
    %c0_1 = arith.constant 0 : index
    %c0_2 = arith.constant 0 : index
    %1 = vector.load %arg2[%c0_1, %c0_2] : memref<216x64xbf16, #tpu.memory_space<vmem>>, vector<216x64xbf16>
    %cst = arith.constant dense<0.000000e+00> : vector<48x64xf32>
    %2 = tpu.matmul %0, %1, %cst {dimension_numbers = #tpu.dot_dimension_numbers<[1], [0], [0], [1], [0, 0, 1, 1], [], []>} : vector<48x216xbf16>, vector<216x64xbf16>, vector<48x64xf32> -> vector<48x64xf32>
    %c0_3 = arith.constant 0 : index
    %c0_4 = arith.constant 0 : index
    %3 = vector.load %arg3[%c0_3, %c0_4] : memref<48x1xf32, #tpu.memory_space<vmem>>, vector<48x1xf32>
    %4 = vector.broadcast %3 : vector<48x1xf32> to vector<48x64xf32>
    %5 = arith.addf %2, %4 : vector<48x64xf32>
    %cst_5 = arith.constant 0.000000e+00 : f32
    %6 = vector.broadcast %cst_5 : f32 to vector<48x64xf32>
    %7 = arith.maximumf %5, %6 : vector<48x64xf32>
    %8 = arith.truncf %7 : vector<48x64xf32> to vector<48x64xbf16>
    %c0_6 = arith.constant 0 : index
    %c0_7 = arith.constant 0 : index
    %9 = vector.load %arg4[%c0_6, %c0_7] : memref<48x64xbf16, #tpu.memory_space<vmem>>, vector<48x64xbf16>
    tpu.vector_store %arg4[%c0_6, %c0_7], %8 {strides = array<i32>} : memref<48x64xbf16, #tpu.memory_space<vmem>>, vector<48x64xbf16>,
    return
  }
  func.func @transform_0(%arg0: i32) -> (i32, i32) {
    %c0_i32 = arith.constant 0 : i32
    %c0_i32_0 = arith.constant 0 : i32
    %c0_i32_1 = arith.constant 0 : i32
    return %c0_i32, %c0_i32_0 : i32, i32
  }
  func.func @transform_1(%arg0: i32) -> (i32, i32) {
    %c0_i32 = arith.constant 0 : i32
    %c0_i32_0 = arith.constant 0 : i32
    return %c0_i32, %arg0 : i32, i32
  }
  func.func @transform_2(%arg0: i32) -> (i32, i32) {
    %c0_i32 = arith.constant 0 : i32
    %c0_i32_0 = arith.constant 0 : i32
    %c0_i32_1 = arith.constant 0 : i32
    return %c0_i32, %c0_i32_0 : i32, i32
  }
  func.func @transform_3(%arg0: i32) -> (i32, i32) {
    %c0_i32 = arith.constant 0 : i32
    %c0_i32_0 = arith.constant 0 : i32
    return %c0_i32, %arg0 : i32, i32
  }
}

module attributes {stable_mosaic.version = 11 : i64} {
  func.func @_fused_matmul_kernel(%arg0: i32, %arg1: memref<8x48xbf16, #tpu.memory_space<vmem>>, %arg2: memref<48x64xbf16, #tpu.memory_space<vmem>>, %arg3: memref<8x1xf32, #tpu.memory_space<vmem>>, %arg4: memref<8x64xf32, #tpu.memory_space<vmem>>) attributes {dimension_semantics = [#tpu.dimension_semantics<parallel>], iteration_bounds = array<i64: 1>, scalar_prefetch = 0 : i64, scratch_operands = 0 : i64, tpu.core_type = #tpu.core_type<tc>, window_params = [{pipeline_mode = #tpu.pipeline_mode<synchronous>, transform_indices = @transform_0, window_bounds = array<i64: 8, 48>}, {transform_indices = @transform_1, window_bounds = array<i64: 48, 64>}, {pipeline_mode = #tpu.pipeline_mode<synchronous>, transform_indices = @transform_2, window_bounds = array<i64: 8, 1>}, {transform_indices = @transform_3, window_bounds = array<i64: 8, 64>}]} {
    %c0 = arith.constant 0 : index
    %c0_0 = arith.constant 0 : index
    %0 = vector.load %arg1[%c0, %c0_0] : memref<8x48xbf16, #tpu.memory_space<vmem>>, vector<8x48xbf16>
    %c0_1 = arith.constant 0 : index
    %c0_2 = arith.constant 0 : index
    %1 = vector.load %arg2[%c0_1, %c0_2] : memref<48x64xbf16, #tpu.memory_space<vmem>>, vector<48x64xbf16>
    %cst = arith.constant dense<0.000000e+00> : vector<8x64xf32>
    %2 = tpu.matmul %0, %1, %cst {dimension_numbers = #tpu.dot_dimension_numbers<[1], [0], [0], [1], [0, 0, 1, 1], [], []>} : vector<8x48xbf16>, vector<48x64xbf16>, vector<8x64xf32> -> vector<8x64xf32>
    %c0_3 = arith.constant 0 : index
    %c0_4 = arith.constant 0 : index
    %3 = vector.load %arg3[%c0_3, %c0_4] : memref<8x1xf32, #tpu.memory_space<vmem>>, vector<8x1xf32>
    %4 = vector.broadcast %3 : vector<8x1xf32> to vector<8x64xf32>
    %5 = arith.addf %2, %4 : vector<8x64xf32>
    %6 = tpu.iota {dimensions = array<i32: 0>} : vector<8x64xi32>
    %c4_i32 = arith.constant 4 : i32
    %7 = vector.broadcast %c4_i32 : i32 to vector<8x64xi32>
    %8 = arith.cmpi slt, %6, %7 : vector<8x64xi32>
    %9 = arith.negf %5 : vector<8x64xf32>
    %10 = math.exp %9 : vector<8x64xf32>
    %cst_5 = arith.constant 1.000000e+00 : f32
    %11 = vector.broadcast %cst_5 : f32 to vector<8x64xf32>
    %12 = arith.addf %11, %10 : vector<8x64xf32>
    %13 = arith.divf %11, %12 : vector<8x64xf32>
    %14 = arith.select %8, %13, %5 : vector<8x64xi1>, vector<8x64xf32>
    %c0_6 = arith.constant 0 : index
    %c0_7 = arith.constant 0 : index
    %15 = vector.load %arg4[%c0_6, %c0_7] : memref<8x64xf32, #tpu.memory_space<vmem>>, vector<8x64xf32>
    tpu.vector_store %arg4[%c0_6, %c0_7], %14 {strides = array<i32>} : memref<8x64xf32, #tpu.memory_space<vmem>>, vector<8x64xf32>,
    return
  }
  func.func @transform_0(%arg0: i32) -> (i32, i32) {
    %c0_i32 = arith.constant 0 : i32
    %c0_i32_0 = arith.constant 0 : i32
    %c0_i32_1 = arith.constant 0 : i32
    return %c0_i32, %c0_i32_0 : i32, i32
  }
  func.func @transform_1(%arg0: i32) -> (i32, i32) {
    %c0_i32 = arith.constant 0 : i32
    %c0_i32_0 = arith.constant 0 : i32
    return %c0_i32, %arg0 : i32, i32
  }
  func.func @transform_2(%arg0: i32) -> (i32, i32) {
    %c0_i32 = arith.constant 0 : i32
    %c0_i32_0 = arith.constant 0 : i32
    %c0_i32_1 = arith.constant 0 : i32
    return %c0_i32, %c0_i32_0 : i32, i32
  }
  func.func @transform_3(%arg0: i32) -> (i32, i32) {
    %c0_i32 = arith.constant 0 : i32
    %c0_i32_0 = arith.constant 0 : i32
    return %c0_i32, %arg0 : i32, i32
  }
}

module attributes {stable_mosaic.version = 11 : i64} {
  func.func @_fused_matmul_kernel(%arg0: i32, %arg1: memref<24x216xbf16, #tpu.memory_space<vmem>>, %arg2: memref<216x16xbf16, #tpu.memory_space<vmem>>, %arg3: memref<24x1xf32, #tpu.memory_space<vmem>>, %arg4: memref<24x16xbf16, #tpu.memory_space<vmem>>) attributes {dimension_semantics = [#tpu.dimension_semantics<parallel>], iteration_bounds = array<i64: 1>, scalar_prefetch = 0 : i64, scratch_operands = 0 : i64, tpu.core_type = #tpu.core_type<tc>, window_params = [{pipeline_mode = #tpu.pipeline_mode<synchronous>, transform_indices = @transform_0, window_bounds = array<i64: 24, 216>}, {transform_indices = @transform_1, window_bounds = array<i64: 216, 16>}, {pipeline_mode = #tpu.pipeline_mode<synchronous>, transform_indices = @transform_2, window_bounds = array<i64: 24, 1>}, {transform_indices = @transform_3, window_bounds = array<i64: 24, 16>}]} {
    %c0 = arith.constant 0 : index
    %c0_0 = arith.constant 0 : index
    %0 = vector.load %arg1[%c0, %c0_0] : memref<24x216xbf16, #tpu.memory_space<vmem>>, vector<24x216xbf16>
    %c0_1 = arith.constant 0 : index
    %c0_2 = arith.constant 0 : index
    %1 = vector.load %arg2[%c0_1, %c0_2] : memref<216x16xbf16, #tpu.memory_space<vmem>>, vector<216x16xbf16>
    %cst = arith.constant dense<0.000000e+00> : vector<24x16xf32>
    %2 = tpu.matmul %0, %1, %cst {dimension_numbers = #tpu.dot_dimension_numbers<[1], [0], [0], [1], [0, 0, 1, 1], [], []>} : vector<24x216xbf16>, vector<216x16xbf16>, vector<24x16xf32> -> vector<24x16xf32>
    %c0_3 = arith.constant 0 : index
    %c0_4 = arith.constant 0 : index
    %3 = vector.load %arg3[%c0_3, %c0_4] : memref<24x1xf32, #tpu.memory_space<vmem>>, vector<24x1xf32>
    %4 = vector.broadcast %3 : vector<24x1xf32> to vector<24x16xf32>
    %5 = arith.addf %2, %4 : vector<24x16xf32>
    %cst_5 = arith.constant 0.000000e+00 : f32
    %6 = vector.broadcast %cst_5 : f32 to vector<24x16xf32>
    %7 = arith.maximumf %5, %6 : vector<24x16xf32>
    %8 = arith.truncf %7 : vector<24x16xf32> to vector<24x16xbf16>
    %c0_6 = arith.constant 0 : index
    %c0_7 = arith.constant 0 : index
    %9 = vector.load %arg4[%c0_6, %c0_7] : memref<24x16xbf16, #tpu.memory_space<vmem>>, vector<24x16xbf16>
    tpu.vector_store %arg4[%c0_6, %c0_7], %8 {strides = array<i32>} : memref<24x16xbf16, #tpu.memory_space<vmem>>, vector<24x16xbf16>,
    return
  }
  func.func @transform_0(%arg0: i32) -> (i32, i32) {
    %c0_i32 = arith.constant 0 : i32
    %c0_i32_0 = arith.constant 0 : i32
    %c0_i32_1 = arith.constant 0 : i32
    return %c0_i32, %c0_i32_0 : i32, i32
  }
  func.func @transform_1(%arg0: i32) -> (i32, i32) {
    %c0_i32 = arith.constant 0 : i32
    %c0_i32_0 = arith.constant 0 : i32
    return %c0_i32, %arg0 : i32, i32
  }
  func.func @transform_2(%arg0: i32) -> (i32, i32) {
    %c0_i32 = arith.constant 0 : i32
    %c0_i32_0 = arith.constant 0 : i32
    %c0_i32_1 = arith.constant 0 : i32
    return %c0_i32, %c0_i32_0 : i32, i32
  }
  func.func @transform_3(%arg0: i32) -> (i32, i32) {
    %c0_i32 = arith.constant 0 : i32
    %c0_i32_0 = arith.constant 0 : i32
    return %c0_i32, %arg0 : i32, i32
  }
}

module attributes {stable_mosaic.version = 11 : i64} {
  func.func @_fused_matmul_kernel(%arg0: i32, %arg1: memref<32x432xbf16, #tpu.memory_space<vmem>>, %arg2: memref<432x16xbf16, #tpu.memory_space<vmem>>, %arg3: memref<32x1xf32, #tpu.memory_space<vmem>>, %arg4: memref<32x16xbf16, #tpu.memory_space<vmem>>) attributes {dimension_semantics = [#tpu.dimension_semantics<parallel>], iteration_bounds = array<i64: 1>, scalar_prefetch = 0 : i64, scratch_operands = 0 : i64, tpu.core_type = #tpu.core_type<tc>, window_params = [{pipeline_mode = #tpu.pipeline_mode<synchronous>, transform_indices = @transform_0, window_bounds = array<i64: 32, 432>}, {transform_indices = @transform_1, window_bounds = array<i64: 432, 16>}, {pipeline_mode = #tpu.pipeline_mode<synchronous>, transform_indices = @transform_2, window_bounds = array<i64: 32, 1>}, {transform_indices = @transform_3, window_bounds = array<i64: 32, 16>}]} {
    %c0 = arith.constant 0 : index
    %c0_0 = arith.constant 0 : index
    %0 = vector.load %arg1[%c0, %c0_0] : memref<32x432xbf16, #tpu.memory_space<vmem>>, vector<32x432xbf16>
    %c0_1 = arith.constant 0 : index
    %c0_2 = arith.constant 0 : index
    %1 = vector.load %arg2[%c0_1, %c0_2] : memref<432x16xbf16, #tpu.memory_space<vmem>>, vector<432x16xbf16>
    %cst = arith.constant dense<0.000000e+00> : vector<32x16xf32>
    %2 = tpu.matmul %0, %1, %cst {dimension_numbers = #tpu.dot_dimension_numbers<[1], [0], [0], [1], [0, 0, 1, 1], [], []>} : vector<32x432xbf16>, vector<432x16xbf16>, vector<32x16xf32> -> vector<32x16xf32>
    %c0_3 = arith.constant 0 : index
    %c0_4 = arith.constant 0 : index
    %3 = vector.load %arg3[%c0_3, %c0_4] : memref<32x1xf32, #tpu.memory_space<vmem>>, vector<32x1xf32>
    %4 = vector.broadcast %3 : vector<32x1xf32> to vector<32x16xf32>
    %5 = arith.addf %2, %4 : vector<32x16xf32>
    %cst_5 = arith.constant 0.000000e+00 : f32
    %6 = vector.broadcast %cst_5 : f32 to vector<32x16xf32>
    %7 = arith.maximumf %5, %6 : vector<32x16xf32>
    %8 = arith.truncf %7 : vector<32x16xf32> to vector<32x16xbf16>
    %c0_6 = arith.constant 0 : index
    %c0_7 = arith.constant 0 : index
    %9 = vector.load %arg4[%c0_6, %c0_7] : memref<32x16xbf16, #tpu.memory_space<vmem>>, vector<32x16xbf16>
    tpu.vector_store %arg4[%c0_6, %c0_7], %8 {strides = array<i32>} : memref<32x16xbf16, #tpu.memory_space<vmem>>, vector<32x16xbf16>,
    return
  }
  func.func @transform_0(%arg0: i32) -> (i32, i32) {
    %c0_i32 = arith.constant 0 : i32
    %c0_i32_0 = arith.constant 0 : i32
    %c0_i32_1 = arith.constant 0 : i32
    return %c0_i32, %c0_i32_0 : i32, i32
  }
  func.func @transform_1(%arg0: i32) -> (i32, i32) {
    %c0_i32 = arith.constant 0 : i32
    %c0_i32_0 = arith.constant 0 : i32
    return %c0_i32, %arg0 : i32, i32
  }
  func.func @transform_2(%arg0: i32) -> (i32, i32) {
    %c0_i32 = arith.constant 0 : i32
    %c0_i32_0 = arith.constant 0 : i32
    %c0_i32_1 = arith.constant 0 : i32
    return %c0_i32, %c0_i32_0 : i32, i32
  }
  func.func @transform_3(%arg0: i32) -> (i32, i32) {
    %c0_i32 = arith.constant 0 : i32
    %c0_i32_0 = arith.constant 0 : i32
    return %c0_i32, %arg0 : i32, i32
  }
}

module attributes {stable_mosaic.version = 11 : i64} {
  func.func @_fused_matmul_kernel(%arg0: i32, %arg1: memref<32x32xbf16, #tpu.memory_space<vmem>>, %arg2: memref<32x16xbf16, #tpu.memory_space<vmem>>, %arg3: memref<32x1xf32, #tpu.memory_space<vmem>>, %arg4: memref<32x16xbf16, #tpu.memory_space<vmem>>) attributes {dimension_semantics = [#tpu.dimension_semantics<parallel>], iteration_bounds = array<i64: 1>, scalar_prefetch = 0 : i64, scratch_operands = 0 : i64, tpu.core_type = #tpu.core_type<tc>, window_params = [{pipeline_mode = #tpu.pipeline_mode<synchronous>, transform_indices = @transform_0, window_bounds = array<i64: 32, 32>}, {transform_indices = @transform_1, window_bounds = array<i64: 32, 16>}, {pipeline_mode = #tpu.pipeline_mode<synchronous>, transform_indices = @transform_2, window_bounds = array<i64: 32, 1>}, {transform_indices = @transform_3, window_bounds = array<i64: 32, 16>}]} {
    %c0 = arith.constant 0 : index
    %c0_0 = arith.constant 0 : index
    %0 = vector.load %arg1[%c0, %c0_0] : memref<32x32xbf16, #tpu.memory_space<vmem>>, vector<32x32xbf16>
    %c0_1 = arith.constant 0 : index
    %c0_2 = arith.constant 0 : index
    %1 = vector.load %arg2[%c0_1, %c0_2] : memref<32x16xbf16, #tpu.memory_space<vmem>>, vector<32x16xbf16>
    %cst = arith.constant dense<0.000000e+00> : vector<32x16xf32>
    %2 = tpu.matmul %0, %1, %cst {dimension_numbers = #tpu.dot_dimension_numbers<[1], [0], [0], [1], [0, 0, 1, 1], [], []>} : vector<32x32xbf16>, vector<32x16xbf16>, vector<32x16xf32> -> vector<32x16xf32>
    %c0_3 = arith.constant 0 : index
    %c0_4 = arith.constant 0 : index
    %3 = vector.load %arg3[%c0_3, %c0_4] : memref<32x1xf32, #tpu.memory_space<vmem>>, vector<32x1xf32>
    %4 = vector.broadcast %3 : vector<32x1xf32> to vector<32x16xf32>
    %5 = arith.addf %2, %4 : vector<32x16xf32>
    %cst_5 = arith.constant 0.000000e+00 : f32
    %6 = vector.broadcast %cst_5 : f32 to vector<32x16xf32>
    %7 = arith.maximumf %5, %6 : vector<32x16xf32>
    %8 = arith.truncf %7 : vector<32x16xf32> to vector<32x16xbf16>
    %c0_6 = arith.constant 0 : index
    %c0_7 = arith.constant 0 : index
    %9 = vector.load %arg4[%c0_6, %c0_7] : memref<32x16xbf16, #tpu.memory_space<vmem>>, vector<32x16xbf16>
    tpu.vector_store %arg4[%c0_6, %c0_7], %8 {strides = array<i32>} : memref<32x16xbf16, #tpu.memory_space<vmem>>, vector<32x16xbf16>,
    return
  }
  func.func @transform_0(%arg0: i32) -> (i32, i32) {
    %c0_i32 = arith.constant 0 : i32
    %c0_i32_0 = arith.constant 0 : i32
    %c0_i32_1 = arith.constant 0 : i32
    return %c0_i32, %c0_i32_0 : i32, i32
  }
  func.func @transform_1(%arg0: i32) -> (i32, i32) {
    %c0_i32 = arith.constant 0 : i32
    %c0_i32_0 = arith.constant 0 : i32
    return %c0_i32, %arg0 : i32, i32
  }
  func.func @transform_2(%arg0: i32) -> (i32, i32) {
    %c0_i32 = arith.constant 0 : i32
    %c0_i32_0 = arith.constant 0 : i32
    %c0_i32_1 = arith.constant 0 : i32
    return %c0_i32, %c0_i32_0 : i32, i32
  }
  func.func @transform_3(%arg0: i32) -> (i32, i32) {
    %c0_i32 = arith.constant 0 : i32
    %c0_i32_0 = arith.constant 0 : i32
    return %c0_i32, %arg0 : i32, i32
  }
}

module attributes {stable_mosaic.version = 11 : i64} {
  func.func @_fused_matmul_kernel(%arg0: i32, %arg1: memref<8x64xbf16, #tpu.memory_space<vmem>>, %arg2: memref<64x16xbf16, #tpu.memory_space<vmem>>, %arg3: memref<8x1xf32, #tpu.memory_space<vmem>>, %arg4: memref<8x16xf32, #tpu.memory_space<vmem>>) attributes {dimension_semantics = [#tpu.dimension_semantics<parallel>], iteration_bounds = array<i64: 1>, scalar_prefetch = 0 : i64, scratch_operands = 0 : i64, tpu.core_type = #tpu.core_type<tc>, window_params = [{pipeline_mode = #tpu.pipeline_mode<synchronous>, transform_indices = @transform_0, window_bounds = array<i64: 8, 64>}, {transform_indices = @transform_1, window_bounds = array<i64: 64, 16>}, {pipeline_mode = #tpu.pipeline_mode<synchronous>, transform_indices = @transform_2, window_bounds = array<i64: 8, 1>}, {transform_indices = @transform_3, window_bounds = array<i64: 8, 16>}]} {
    %c0 = arith.constant 0 : index
    %c0_0 = arith.constant 0 : index
    %0 = vector.load %arg1[%c0, %c0_0] : memref<8x64xbf16, #tpu.memory_space<vmem>>, vector<8x64xbf16>
    %c0_1 = arith.constant 0 : index
    %c0_2 = arith.constant 0 : index
    %1 = vector.load %arg2[%c0_1, %c0_2] : memref<64x16xbf16, #tpu.memory_space<vmem>>, vector<64x16xbf16>
    %cst = arith.constant dense<0.000000e+00> : vector<8x16xf32>
    %2 = tpu.matmul %0, %1, %cst {dimension_numbers = #tpu.dot_dimension_numbers<[1], [0], [0], [1], [0, 0, 1, 1], [], []>} : vector<8x64xbf16>, vector<64x16xbf16>, vector<8x16xf32> -> vector<8x16xf32>
    %c0_3 = arith.constant 0 : index
    %c0_4 = arith.constant 0 : index
    %3 = vector.load %arg3[%c0_3, %c0_4] : memref<8x1xf32, #tpu.memory_space<vmem>>, vector<8x1xf32>
    %4 = vector.broadcast %3 : vector<8x1xf32> to vector<8x16xf32>
    %5 = arith.addf %2, %4 : vector<8x16xf32>
    %6 = tpu.iota {dimensions = array<i32: 0>} : vector<8x16xi32>
    %c4_i32 = arith.constant 4 : i32
    %7 = vector.broadcast %c4_i32 : i32 to vector<8x16xi32>
    %8 = arith.cmpi slt, %6, %7 : vector<8x16xi32>
    %9 = arith.negf %5 : vector<8x16xf32>
    %10 = math.exp %9 : vector<8x16xf32>
    %cst_5 = arith.constant 1.000000e+00 : f32
    %11 = vector.broadcast %cst_5 : f32 to vector<8x16xf32>
    %12 = arith.addf %11, %10 : vector<8x16xf32>
    %13 = arith.divf %11, %12 : vector<8x16xf32>
    %14 = arith.select %8, %13, %5 : vector<8x16xi1>, vector<8x16xf32>
    %c0_6 = arith.constant 0 : index
    %c0_7 = arith.constant 0 : index
    %15 = vector.load %arg4[%c0_6, %c0_7] : memref<8x16xf32, #tpu.memory_space<vmem>>, vector<8x16xf32>
    tpu.vector_store %arg4[%c0_6, %c0_7], %14 {strides = array<i32>} : memref<8x16xf32, #tpu.memory_space<vmem>>, vector<8x16xf32>,
    return
  }
  func.func @transform_0(%arg0: i32) -> (i32, i32) {
    %c0_i32 = arith.constant 0 : i32
    %c0_i32_0 = arith.constant 0 : i32
    %c0_i32_1 = arith.constant 0 : i32
    return %c0_i32, %c0_i32_0 : i32, i32
  }
  func.func @transform_1(%arg0: i32) -> (i32, i32) {
    %c0_i32 = arith.constant 0 : i32
    %c0_i32_0 = arith.constant 0 : i32
    return %c0_i32, %arg0 : i32, i32
  }
  func.func @transform_2(%arg0: i32) -> (i32, i32) {
    %c0_i32 = arith.constant 0 : i32
    %c0_i32_0 = arith.constant 0 : i32
    %c0_i32_1 = arith.constant 0 : i32
    return %c0_i32, %c0_i32_0 : i32, i32
  }
  func.func @transform_3(%arg0: i32) -> (i32, i32) {
    %c0_i32 = arith.constant 0 : i32
    %c0_i32_0 = arith.constant 0 : i32
    return %c0_i32, %arg0 : i32, i32
  }
}

module attributes {stable_mosaic.version = 11 : i64} {
  func.func @_fused_matmul_kernel(%arg0: i32, %arg1: memref<64x288xbf16, #tpu.memory_space<vmem>>, %arg2: memref<288x16xbf16, #tpu.memory_space<vmem>>, %arg3: memref<64x1xf32, #tpu.memory_space<vmem>>, %arg4: memref<64x16xbf16, #tpu.memory_space<vmem>>) attributes {dimension_semantics = [#tpu.dimension_semantics<parallel>], iteration_bounds = array<i64: 1>, scalar_prefetch = 0 : i64, scratch_operands = 0 : i64, tpu.core_type = #tpu.core_type<tc>, window_params = [{pipeline_mode = #tpu.pipeline_mode<synchronous>, transform_indices = @transform_0, window_bounds = array<i64: 64, 288>}, {transform_indices = @transform_1, window_bounds = array<i64: 288, 16>}, {pipeline_mode = #tpu.pipeline_mode<synchronous>, transform_indices = @transform_2, window_bounds = array<i64: 64, 1>}, {transform_indices = @transform_3, window_bounds = array<i64: 64, 16>}]} {
    %c0 = arith.constant 0 : index
    %c0_0 = arith.constant 0 : index
    %0 = vector.load %arg1[%c0, %c0_0] : memref<64x288xbf16, #tpu.memory_space<vmem>>, vector<64x288xbf16>
    %c0_1 = arith.constant 0 : index
    %c0_2 = arith.constant 0 : index
    %1 = vector.load %arg2[%c0_1, %c0_2] : memref<288x16xbf16, #tpu.memory_space<vmem>>, vector<288x16xbf16>
    %cst = arith.constant dense<0.000000e+00> : vector<64x16xf32>
    %2 = tpu.matmul %0, %1, %cst {dimension_numbers = #tpu.dot_dimension_numbers<[1], [0], [0], [1], [0, 0, 1, 1], [], []>} : vector<64x288xbf16>, vector<288x16xbf16>, vector<64x16xf32> -> vector<64x16xf32>
    %c0_3 = arith.constant 0 : index
    %c0_4 = arith.constant 0 : index
    %3 = vector.load %arg3[%c0_3, %c0_4] : memref<64x1xf32, #tpu.memory_space<vmem>>, vector<64x1xf32>
    %4 = vector.broadcast %3 : vector<64x1xf32> to vector<64x16xf32>
    %5 = arith.addf %2, %4 : vector<64x16xf32>
    %cst_5 = arith.constant 0.000000e+00 : f32
    %6 = vector.broadcast %cst_5 : f32 to vector<64x16xf32>
    %7 = arith.maximumf %5, %6 : vector<64x16xf32>
    %8 = arith.truncf %7 : vector<64x16xf32> to vector<64x16xbf16>
    %c0_6 = arith.constant 0 : index
    %c0_7 = arith.constant 0 : index
    %9 = vector.load %arg4[%c0_6, %c0_7] : memref<64x16xbf16, #tpu.memory_space<vmem>>, vector<64x16xbf16>
    tpu.vector_store %arg4[%c0_6, %c0_7], %8 {strides = array<i32>} : memref<64x16xbf16, #tpu.memory_space<vmem>>, vector<64x16xbf16>,
    return
  }
  func.func @transform_0(%arg0: i32) -> (i32, i32) {
    %c0_i32 = arith.constant 0 : i32
    %c0_i32_0 = arith.constant 0 : i32
    %c0_i32_1 = arith.constant 0 : i32
    return %c0_i32, %c0_i32_0 : i32, i32
  }
  func.func @transform_1(%arg0: i32) -> (i32, i32) {
    %c0_i32 = arith.constant 0 : i32
    %c0_i32_0 = arith.constant 0 : i32
    return %c0_i32, %arg0 : i32, i32
  }
  func.func @transform_2(%arg0: i32) -> (i32, i32) {
    %c0_i32 = arith.constant 0 : i32
    %c0_i32_0 = arith.constant 0 : i32
    %c0_i32_1 = arith.constant 0 : i32
    return %c0_i32, %c0_i32_0 : i32, i32
  }
  func.func @transform_3(%arg0: i32) -> (i32, i32) {
    %c0_i32 = arith.constant 0 : i32
    %c0_i32_0 = arith.constant 0 : i32
    return %c0_i32, %arg0 : i32, i32
  }
}

module attributes {stable_mosaic.version = 11 : i64} {
  func.func @_fused_matmul_kernel(%arg0: i32, %arg1: memref<32x288xbf16, #tpu.memory_space<vmem>>, %arg2: memref<288x4xbf16, #tpu.memory_space<vmem>>, %arg3: memref<32x1xf32, #tpu.memory_space<vmem>>, %arg4: memref<32x4xbf16, #tpu.memory_space<vmem>>) attributes {dimension_semantics = [#tpu.dimension_semantics<parallel>], iteration_bounds = array<i64: 1>, scalar_prefetch = 0 : i64, scratch_operands = 0 : i64, tpu.core_type = #tpu.core_type<tc>, window_params = [{pipeline_mode = #tpu.pipeline_mode<synchronous>, transform_indices = @transform_0, window_bounds = array<i64: 32, 288>}, {transform_indices = @transform_1, window_bounds = array<i64: 288, 4>}, {pipeline_mode = #tpu.pipeline_mode<synchronous>, transform_indices = @transform_2, window_bounds = array<i64: 32, 1>}, {transform_indices = @transform_3, window_bounds = array<i64: 32, 4>}]} {
    %c0 = arith.constant 0 : index
    %c0_0 = arith.constant 0 : index
    %0 = vector.load %arg1[%c0, %c0_0] : memref<32x288xbf16, #tpu.memory_space<vmem>>, vector<32x288xbf16>
    %c0_1 = arith.constant 0 : index
    %c0_2 = arith.constant 0 : index
    %1 = vector.load %arg2[%c0_1, %c0_2] : memref<288x4xbf16, #tpu.memory_space<vmem>>, vector<288x4xbf16>
    %cst = arith.constant dense<0.000000e+00> : vector<32x4xf32>
    %2 = tpu.matmul %0, %1, %cst {dimension_numbers = #tpu.dot_dimension_numbers<[1], [0], [0], [1], [0, 0, 1, 1], [], []>} : vector<32x288xbf16>, vector<288x4xbf16>, vector<32x4xf32> -> vector<32x4xf32>
    %c0_3 = arith.constant 0 : index
    %c0_4 = arith.constant 0 : index
    %3 = vector.load %arg3[%c0_3, %c0_4] : memref<32x1xf32, #tpu.memory_space<vmem>>, vector<32x1xf32>
    %4 = vector.broadcast %3 : vector<32x1xf32> to vector<32x4xf32>
    %5 = arith.addf %2, %4 : vector<32x4xf32>
    %cst_5 = arith.constant 0.000000e+00 : f32
    %6 = vector.broadcast %cst_5 : f32 to vector<32x4xf32>
    %7 = arith.maximumf %5, %6 : vector<32x4xf32>
    %8 = arith.truncf %7 : vector<32x4xf32> to vector<32x4xbf16>
    %c0_6 = arith.constant 0 : index
    %c0_7 = arith.constant 0 : index
    %9 = vector.load %arg4[%c0_6, %c0_7] : memref<32x4xbf16, #tpu.memory_space<vmem>>, vector<32x4xbf16>
    tpu.vector_store %arg4[%c0_6, %c0_7], %8 {strides = array<i32>} : memref<32x4xbf16, #tpu.memory_space<vmem>>, vector<32x4xbf16>,
    return
  }
  func.func @transform_0(%arg0: i32) -> (i32, i32) {
    %c0_i32 = arith.constant 0 : i32
    %c0_i32_0 = arith.constant 0 : i32
    %c0_i32_1 = arith.constant 0 : i32
    return %c0_i32, %c0_i32_0 : i32, i32
  }
  func.func @transform_1(%arg0: i32) -> (i32, i32) {
    %c0_i32 = arith.constant 0 : i32
    %c0_i32_0 = arith.constant 0 : i32
    return %c0_i32, %arg0 : i32, i32
  }
  func.func @transform_2(%arg0: i32) -> (i32, i32) {
    %c0_i32 = arith.constant 0 : i32
    %c0_i32_0 = arith.constant 0 : i32
    %c0_i32_1 = arith.constant 0 : i32
    return %c0_i32, %c0_i32_0 : i32, i32
  }
  func.func @transform_3(%arg0: i32) -> (i32, i32) {
    %c0_i32 = arith.constant 0 : i32
    %c0_i32_0 = arith.constant 0 : i32
    return %c0_i32, %arg0 : i32, i32
  }
}

module attributes {stable_mosaic.version = 11 : i64} {
  func.func @_fused_matmul_kernel(%arg0: i32, %arg1: memref<40x576xbf16, #tpu.memory_space<vmem>>, %arg2: memref<576x4xbf16, #tpu.memory_space<vmem>>, %arg3: memref<40x1xf32, #tpu.memory_space<vmem>>, %arg4: memref<40x4xbf16, #tpu.memory_space<vmem>>) attributes {dimension_semantics = [#tpu.dimension_semantics<parallel>], iteration_bounds = array<i64: 1>, scalar_prefetch = 0 : i64, scratch_operands = 0 : i64, tpu.core_type = #tpu.core_type<tc>, window_params = [{pipeline_mode = #tpu.pipeline_mode<synchronous>, transform_indices = @transform_0, window_bounds = array<i64: 40, 576>}, {transform_indices = @transform_1, window_bounds = array<i64: 576, 4>}, {pipeline_mode = #tpu.pipeline_mode<synchronous>, transform_indices = @transform_2, window_bounds = array<i64: 40, 1>}, {transform_indices = @transform_3, window_bounds = array<i64: 40, 4>}]} {
    %c0 = arith.constant 0 : index
    %c0_0 = arith.constant 0 : index
    %0 = vector.load %arg1[%c0, %c0_0] : memref<40x576xbf16, #tpu.memory_space<vmem>>, vector<40x576xbf16>
    %c0_1 = arith.constant 0 : index
    %c0_2 = arith.constant 0 : index
    %1 = vector.load %arg2[%c0_1, %c0_2] : memref<576x4xbf16, #tpu.memory_space<vmem>>, vector<576x4xbf16>
    %cst = arith.constant dense<0.000000e+00> : vector<40x4xf32>
    %2 = tpu.matmul %0, %1, %cst {dimension_numbers = #tpu.dot_dimension_numbers<[1], [0], [0], [1], [0, 0, 1, 1], [], []>} : vector<40x576xbf16>, vector<576x4xbf16>, vector<40x4xf32> -> vector<40x4xf32>
    %c0_3 = arith.constant 0 : index
    %c0_4 = arith.constant 0 : index
    %3 = vector.load %arg3[%c0_3, %c0_4] : memref<40x1xf32, #tpu.memory_space<vmem>>, vector<40x1xf32>
    %4 = vector.broadcast %3 : vector<40x1xf32> to vector<40x4xf32>
    %5 = arith.addf %2, %4 : vector<40x4xf32>
    %cst_5 = arith.constant 0.000000e+00 : f32
    %6 = vector.broadcast %cst_5 : f32 to vector<40x4xf32>
    %7 = arith.maximumf %5, %6 : vector<40x4xf32>
    %8 = arith.truncf %7 : vector<40x4xf32> to vector<40x4xbf16>
    %c0_6 = arith.constant 0 : index
    %c0_7 = arith.constant 0 : index
    %9 = vector.load %arg4[%c0_6, %c0_7] : memref<40x4xbf16, #tpu.memory_space<vmem>>, vector<40x4xbf16>
    tpu.vector_store %arg4[%c0_6, %c0_7], %8 {strides = array<i32>} : memref<40x4xbf16, #tpu.memory_space<vmem>>, vector<40x4xbf16>,
    return
  }
  func.func @transform_0(%arg0: i32) -> (i32, i32) {
    %c0_i32 = arith.constant 0 : i32
    %c0_i32_0 = arith.constant 0 : i32
    %c0_i32_1 = arith.constant 0 : i32
    return %c0_i32, %c0_i32_0 : i32, i32
  }
  func.func @transform_1(%arg0: i32) -> (i32, i32) {
    %c0_i32 = arith.constant 0 : i32
    %c0_i32_0 = arith.constant 0 : i32
    return %c0_i32, %arg0 : i32, i32
  }
  func.func @transform_2(%arg0: i32) -> (i32, i32) {
    %c0_i32 = arith.constant 0 : i32
    %c0_i32_0 = arith.constant 0 : i32
    %c0_i32_1 = arith.constant 0 : i32
    return %c0_i32, %c0_i32_0 : i32, i32
  }
  func.func @transform_3(%arg0: i32) -> (i32, i32) {
    %c0_i32 = arith.constant 0 : i32
    %c0_i32_0 = arith.constant 0 : i32
    return %c0_i32, %arg0 : i32, i32
  }
}

module attributes {stable_mosaic.version = 11 : i64} {
  func.func @_fused_matmul_kernel(%arg0: i32, %arg1: memref<40x40xbf16, #tpu.memory_space<vmem>>, %arg2: memref<40x4xbf16, #tpu.memory_space<vmem>>, %arg3: memref<40x1xf32, #tpu.memory_space<vmem>>, %arg4: memref<40x4xbf16, #tpu.memory_space<vmem>>) attributes {dimension_semantics = [#tpu.dimension_semantics<parallel>], iteration_bounds = array<i64: 1>, scalar_prefetch = 0 : i64, scratch_operands = 0 : i64, tpu.core_type = #tpu.core_type<tc>, window_params = [{pipeline_mode = #tpu.pipeline_mode<synchronous>, transform_indices = @transform_0, window_bounds = array<i64: 40, 40>}, {transform_indices = @transform_1, window_bounds = array<i64: 40, 4>}, {pipeline_mode = #tpu.pipeline_mode<synchronous>, transform_indices = @transform_2, window_bounds = array<i64: 40, 1>}, {transform_indices = @transform_3, window_bounds = array<i64: 40, 4>}]} {
    %c0 = arith.constant 0 : index
    %c0_0 = arith.constant 0 : index
    %0 = vector.load %arg1[%c0, %c0_0] : memref<40x40xbf16, #tpu.memory_space<vmem>>, vector<40x40xbf16>
    %c0_1 = arith.constant 0 : index
    %c0_2 = arith.constant 0 : index
    %1 = vector.load %arg2[%c0_1, %c0_2] : memref<40x4xbf16, #tpu.memory_space<vmem>>, vector<40x4xbf16>
    %cst = arith.constant dense<0.000000e+00> : vector<40x4xf32>
    %2 = tpu.matmul %0, %1, %cst {dimension_numbers = #tpu.dot_dimension_numbers<[1], [0], [0], [1], [0, 0, 1, 1], [], []>} : vector<40x40xbf16>, vector<40x4xbf16>, vector<40x4xf32> -> vector<40x4xf32>
    %c0_3 = arith.constant 0 : index
    %c0_4 = arith.constant 0 : index
    %3 = vector.load %arg3[%c0_3, %c0_4] : memref<40x1xf32, #tpu.memory_space<vmem>>, vector<40x1xf32>
    %4 = vector.broadcast %3 : vector<40x1xf32> to vector<40x4xf32>
    %5 = arith.addf %2, %4 : vector<40x4xf32>
    %cst_5 = arith.constant 0.000000e+00 : f32
    %6 = vector.broadcast %cst_5 : f32 to vector<40x4xf32>
    %7 = arith.maximumf %5, %6 : vector<40x4xf32>
    %8 = arith.truncf %7 : vector<40x4xf32> to vector<40x4xbf16>
    %c0_6 = arith.constant 0 : index
    %c0_7 = arith.constant 0 : index
    %9 = vector.load %arg4[%c0_6, %c0_7] : memref<40x4xbf16, #tpu.memory_space<vmem>>, vector<40x4xbf16>
    tpu.vector_store %arg4[%c0_6, %c0_7], %8 {strides = array<i32>} : memref<40x4xbf16, #tpu.memory_space<vmem>>, vector<40x4xbf16>,
    return
  }
  func.func @transform_0(%arg0: i32) -> (i32, i32) {
    %c0_i32 = arith.constant 0 : i32
    %c0_i32_0 = arith.constant 0 : i32
    %c0_i32_1 = arith.constant 0 : i32
    return %c0_i32, %c0_i32_0 : i32, i32
  }
  func.func @transform_1(%arg0: i32) -> (i32, i32) {
    %c0_i32 = arith.constant 0 : i32
    %c0_i32_0 = arith.constant 0 : i32
    return %c0_i32, %arg0 : i32, i32
  }
  func.func @transform_2(%arg0: i32) -> (i32, i32) {
    %c0_i32 = arith.constant 0 : i32
    %c0_i32_0 = arith.constant 0 : i32
    %c0_i32_1 = arith.constant 0 : i32
    return %c0_i32, %c0_i32_0 : i32, i32
  }
  func.func @transform_3(%arg0: i32) -> (i32, i32) {
    %c0_i32 = arith.constant 0 : i32
    %c0_i32_0 = arith.constant 0 : i32
    return %c0_i32, %arg0 : i32, i32
  }
}

module attributes {stable_mosaic.version = 11 : i64} {
  func.func @_fused_matmul_kernel(%arg0: i32, %arg1: memref<80x360xbf16, #tpu.memory_space<vmem>>, %arg2: memref<360x4xbf16, #tpu.memory_space<vmem>>, %arg3: memref<80x1xf32, #tpu.memory_space<vmem>>, %arg4: memref<80x4xbf16, #tpu.memory_space<vmem>>) attributes {dimension_semantics = [#tpu.dimension_semantics<parallel>], iteration_bounds = array<i64: 1>, scalar_prefetch = 0 : i64, scratch_operands = 0 : i64, tpu.core_type = #tpu.core_type<tc>, window_params = [{pipeline_mode = #tpu.pipeline_mode<synchronous>, transform_indices = @transform_0, window_bounds = array<i64: 80, 360>}, {transform_indices = @transform_1, window_bounds = array<i64: 360, 4>}, {pipeline_mode = #tpu.pipeline_mode<synchronous>, transform_indices = @transform_2, window_bounds = array<i64: 80, 1>}, {transform_indices = @transform_3, window_bounds = array<i64: 80, 4>}]} {
    %c0 = arith.constant 0 : index
    %c0_0 = arith.constant 0 : index
    %0 = vector.load %arg1[%c0, %c0_0] : memref<80x360xbf16, #tpu.memory_space<vmem>>, vector<80x360xbf16>
    %c0_1 = arith.constant 0 : index
    %c0_2 = arith.constant 0 : index
    %1 = vector.load %arg2[%c0_1, %c0_2] : memref<360x4xbf16, #tpu.memory_space<vmem>>, vector<360x4xbf16>
    %cst = arith.constant dense<0.000000e+00> : vector<80x4xf32>
    %2 = tpu.matmul %0, %1, %cst {dimension_numbers = #tpu.dot_dimension_numbers<[1], [0], [0], [1], [0, 0, 1, 1], [], []>} : vector<80x360xbf16>, vector<360x4xbf16>, vector<80x4xf32> -> vector<80x4xf32>
    %c0_3 = arith.constant 0 : index
    %c0_4 = arith.constant 0 : index
    %3 = vector.load %arg3[%c0_3, %c0_4] : memref<80x1xf32, #tpu.memory_space<vmem>>, vector<80x1xf32>
    %4 = vector.broadcast %3 : vector<80x1xf32> to vector<80x4xf32>
    %5 = arith.addf %2, %4 : vector<80x4xf32>
    %cst_5 = arith.constant 0.000000e+00 : f32
    %6 = vector.broadcast %cst_5 : f32 to vector<80x4xf32>
    %7 = arith.maximumf %5, %6 : vector<80x4xf32>
    %8 = arith.truncf %7 : vector<80x4xf32> to vector<80x4xbf16>
    %c0_6 = arith.constant 0 : index
    %c0_7 = arith.constant 0 : index
    %9 = vector.load %arg4[%c0_6, %c0_7] : memref<80x4xbf16, #tpu.memory_space<vmem>>, vector<80x4xbf16>
    tpu.vector_store %arg4[%c0_6, %c0_7], %8 {strides = array<i32>} : memref<80x4xbf16, #tpu.memory_space<vmem>>, vector<80x4xbf16>,
    return
  }
  func.func @transform_0(%arg0: i32) -> (i32, i32) {
    %c0_i32 = arith.constant 0 : i32
    %c0_i32_0 = arith.constant 0 : i32
    %c0_i32_1 = arith.constant 0 : i32
    return %c0_i32, %c0_i32_0 : i32, i32
  }
  func.func @transform_1(%arg0: i32) -> (i32, i32) {
    %c0_i32 = arith.constant 0 : i32
    %c0_i32_0 = arith.constant 0 : i32
    return %c0_i32, %arg0 : i32, i32
  }
  func.func @transform_2(%arg0: i32) -> (i32, i32) {
    %c0_i32 = arith.constant 0 : i32
    %c0_i32_0 = arith.constant 0 : i32
    %c0_i32_1 = arith.constant 0 : i32
    return %c0_i32, %c0_i32_0 : i32, i32
  }
  func.func @transform_3(%arg0: i32) -> (i32, i32) {
    %c0_i32 = arith.constant 0 : i32
    %c0_i32_0 = arith.constant 0 : i32
    return %c0_i32, %arg0 : i32, i32
  }
}

module attributes {stable_mosaic.version = 11 : i64} {
  func.func @_fused_matmul_kernel(%arg0: i32, %arg1: memref<8x80xbf16, #tpu.memory_space<vmem>>, %arg2: memref<80x4xbf16, #tpu.memory_space<vmem>>, %arg3: memref<8x1xf32, #tpu.memory_space<vmem>>, %arg4: memref<8x4xf32, #tpu.memory_space<vmem>>) attributes {dimension_semantics = [#tpu.dimension_semantics<parallel>], iteration_bounds = array<i64: 1>, scalar_prefetch = 0 : i64, scratch_operands = 0 : i64, tpu.core_type = #tpu.core_type<tc>, window_params = [{pipeline_mode = #tpu.pipeline_mode<synchronous>, transform_indices = @transform_0, window_bounds = array<i64: 8, 80>}, {transform_indices = @transform_1, window_bounds = array<i64: 80, 4>}, {pipeline_mode = #tpu.pipeline_mode<synchronous>, transform_indices = @transform_2, window_bounds = array<i64: 8, 1>}, {transform_indices = @transform_3, window_bounds = array<i64: 8, 4>}]} {
    %c0 = arith.constant 0 : index
    %c0_0 = arith.constant 0 : index
    %0 = vector.load %arg1[%c0, %c0_0] : memref<8x80xbf16, #tpu.memory_space<vmem>>, vector<8x80xbf16>
    %c0_1 = arith.constant 0 : index
    %c0_2 = arith.constant 0 : index
    %1 = vector.load %arg2[%c0_1, %c0_2] : memref<80x4xbf16, #tpu.memory_space<vmem>>, vector<80x4xbf16>
    %cst = arith.constant dense<0.000000e+00> : vector<8x4xf32>
    %2 = tpu.matmul %0, %1, %cst {dimension_numbers = #tpu.dot_dimension_numbers<[1], [0], [0], [1], [0, 0, 1, 1], [], []>} : vector<8x80xbf16>, vector<80x4xbf16>, vector<8x4xf32> -> vector<8x4xf32>
    %c0_3 = arith.constant 0 : index
    %c0_4 = arith.constant 0 : index
    %3 = vector.load %arg3[%c0_3, %c0_4] : memref<8x1xf32, #tpu.memory_space<vmem>>, vector<8x1xf32>
    %4 = vector.broadcast %3 : vector<8x1xf32> to vector<8x4xf32>
    %5 = arith.addf %2, %4 : vector<8x4xf32>
    %6 = tpu.iota {dimensions = array<i32: 0>} : vector<8x4xi32>
    %c4_i32 = arith.constant 4 : i32
    %7 = vector.broadcast %c4_i32 : i32 to vector<8x4xi32>
    %8 = arith.cmpi slt, %6, %7 : vector<8x4xi32>
    %9 = arith.negf %5 : vector<8x4xf32>
    %10 = math.exp %9 : vector<8x4xf32>
    %cst_5 = arith.constant 1.000000e+00 : f32
    %11 = vector.broadcast %cst_5 : f32 to vector<8x4xf32>
    %12 = arith.addf %11, %10 : vector<8x4xf32>
    %13 = arith.divf %11, %12 : vector<8x4xf32>
    %14 = arith.select %8, %13, %5 : vector<8x4xi1>, vector<8x4xf32>
    %c0_6 = arith.constant 0 : index
    %c0_7 = arith.constant 0 : index
    %15 = vector.load %arg4[%c0_6, %c0_7] : memref<8x4xf32, #tpu.memory_space<vmem>>, vector<8x4xf32>
    tpu.vector_store %arg4[%c0_6, %c0_7], %14 {strides = array<i32>} : memref<8x4xf32, #tpu.memory_space<vmem>>, vector<8x4xf32>,
    return
  }
  func.func @transform_0(%arg0: i32) -> (i32, i32) {
    %c0_i32 = arith.constant 0 : i32
    %c0_i32_0 = arith.constant 0 : i32
    %c0_i32_1 = arith.constant 0 : i32
    return %c0_i32, %c0_i32_0 : i32, i32
  }
  func.func @transform_1(%arg0: i32) -> (i32, i32) {
    %c0_i32 = arith.constant 0 : i32
    %c0_i32_0 = arith.constant 0 : i32
    return %c0_i32, %arg0 : i32, i32
  }
  func.func @transform_2(%arg0: i32) -> (i32, i32) {
    %c0_i32 = arith.constant 0 : i32
    %c0_i32_0 = arith.constant 0 : i32
    %c0_i32_1 = arith.constant 0 : i32
    return %c0_i32, %c0_i32_0 : i32, i32
  }
  func.func @transform_3(%arg0: i32) -> (i32, i32) {
    %c0_i32 = arith.constant 0 : i32
    %c0_i32_0 = arith.constant 0 : i32
    return %c0_i32, %arg0 : i32, i32
  }
}

</mosaic_0001>

<llo_original>
// kernel: model_forward.26
$region0: #{model_forward.26}
  #allocation0 [shape = 'u32[]', space=smem, size = 0x4, offset = 0x4, fixed_abs, tag = 'smem constant byte address 0x4 - core index']
  #allocation1 [shape = 'u32[72,128]{1,0:T(1,128)}', space=vmem, size = 0x9000, scoped, tag = 'internal scratch']
  %s0 = inlined_call_operand.vmem [shape: bf16[8,27], index: 0, kind: input, shape index: {}]
  %s1 = inlined_call_operand.vmem [shape: bf16[27,1024], index: 1, kind: input, shape index: {}]
  %s2 = inlined_call_operand.vmem [shape: f32[8,1], index: 2, kind: input, shape index: {}]
  %s3 = inlined_call_operand.vmem [shape: bf16[8,1024], index: 3, kind: output, shape index: {}]
  %s4 = sld [smem:[#allocation0]]
  $region83: #{model_forward.26} parent=0
    _
  %s6 = ssub.s32 1, %s4
  %s7 = scalar_select 0, %s6, %s4
  $region1: #{model_forward.26} parent=0
    #allocation2 [shape = 'u8[32768]{0}', space=vmem, size = 0x8000, scoped, tag = 'input window, operand 1']
    loop: start=0, step=1, limit=6
    $region2: #{model_forward.26} parent=1 // loop_pre_header
      _
    $region3: #{model_forward.26} parent=1 // loop_header
      %s9 = sphi 0, %s13
      %p10 = scmp.ge.s32.totalorder %s9, 6
      %s17 = sphi 0, %s17
      %s19 = sphi 0, %s17
      %s20 = sphi 0, %s19
      %s34 = sphi 0, %s20
      %s40 = sphi 0, %s42
      %s43 = sphi 0, %s40
      %s44 = sphi 0, %s43
      %s60 = sphi 0, %s44
      %s64 = sphi 0, %s64
      %s66 = sphi 0, %s64
      %s67 = sphi 0, %s66
      %s81 = sphi 0, %s67
      %s87 = sphi 0, %s89
      %s90 = sphi 0, %s87
      %s91 = sphi 0, %s90
      %s107 = sphi 0, %s91
    $region4: #{model_forward.26} parent=1 // loop_header_branch
      %12 = sbr.rel (%p10) target = $region8
    $region5: #{model_forward.26} parent=1 // loop_body
      %s14 = ssub.s32 %s9, 1
      %s15 = ssub.s32 %s9, 2
      %s16 = sadd.s32 %s9, 1
      %s18 = sadd.s32 %s17, 1
      %p21 = scmp.eq.s32.totalorder %s9, 3
      %p22 = scmp.ne.s32.totalorder %s17, %s19
      %p23 = scmp.eq.s32.totalorder %s9, 0
      %p24 = por %p22, %p23
      %p25 = scmp.ne.s32.totalorder %s17, %s19
      %p26 = scmp.eq.s32.totalorder %s14, 3
      %p27 = por %p25, %p26
      %p28 = scmp.ne.s32.totalorder %s19, %s20
      %p29 = scmp.eq.s32.totalorder %s14, 0
      %p30 = por %p28, %p29
      %p31 = scmp.ne.s32.totalorder %s19, %s20
      %p32 = scmp.eq.s32.totalorder %s15, 3
      %p33 = por %p31, %p32
      %p35 = scmp.ne.s32.totalorder %s20, %s34
      %p36 = scmp.eq.s32.totalorder %s15, 0
      %p37 = por %p35, %p36
      %s38 = ssub.s32 %s9, %s16
      %p39 = scmp.eq.s32.totalorder %s38, 0
      %s41 = sadd.s32 %s40, 1
      %s42 = scalar_select %p39, %s40, %s41
      %p45 = pneg %p39
      %p46 = scmp.eq.s32.totalorder %s9, 3
      %p47 = por %p45, %p46
      %p48 = scmp.ne.s32.totalorder %s40, %s43
      %p49 = scmp.eq.s32.totalorder %s9, 0
      %p50 = por %p48, %p49
      %p51 = scmp.ne.s32.totalorder %s40, %s43
      %p52 = scmp.eq.s32.totalorder %s14, 3
      %p53 = por %p51, %p52
      %p54 = scmp.ne.s32.totalorder %s43, %s44
      %p55 = scmp.eq.s32.totalorder %s14, 0
      %p56 = por %p54, %p55
      %p57 = scmp.ne.s32.totalorder %s43, %s44
      %p58 = scmp.eq.s32.totalorder %s15, 3
      %p59 = por %p57, %p58
      %p61 = scmp.ne.s32.totalorder %s44, %s60
      %p62 = scmp.eq.s32.totalorder %s15, 0
      %p63 = por %p61, %p62
      %s65 = sadd.s32 %s64, 1
      %p68 = scmp.eq.s32.totalorder %s9, 3
      %p69 = scmp.ne.s32.totalorder %s64, %s66
      %p70 = scmp.eq.s32.totalorder %s9, 0
      %p71 = por %p69, %p70
      %p72 = scmp.ne.s32.totalorder %s64, %s66
      %p73 = scmp.eq.s32.totalorder %s14, 3
      %p74 = por %p72, %p73
      %p75 = scmp.ne.s32.totalorder %s66, %s67
      %p76 = scmp.eq.s32.totalorder %s14, 0
      %p77 = por %p75, %p76
      %p78 = scmp.ne.s32.totalorder %s66, %s67
      %p79 = scmp.eq.s32.totalorder %s15, 3
      %p80 = por %p78, %p79
      %p82 = scmp.ne.s32.totalorder %s67, %s81
      %p83 = scmp.eq.s32.totalorder %s15, 0
      %p84 = por %p82, %p83
      %s85 = ssub.s32 %s9, %s16
      %p86 = scmp.eq.s32.totalorder %s85, 0
      %s88 = sadd.s32 %s87, 1
      %s89 = scalar_select %p86, %s87, %s88
      %p92 = pneg %p86
      %p93 = scmp.eq.s32.totalorder %s9, 3
      %p94 = por %p92, %p93
      %p95 = scmp.ne.s32.totalorder %s87, %s90
      %p96 = scmp.eq.s32.totalorder %s9, 0
      %p97 = por %p95, %p96
      %p98 = scmp.ne.s32.totalorder %s87, %s90
      %p99 = scmp.eq.s32.totalorder %s14, 3
      %p100 = por %p98, %p99
      %p101 = scmp.ne.s32.totalorder %s90, %s91
      %p102 = scmp.eq.s32.totalorder %s14, 0
      %p103 = por %p101, %p102
      %p104 = scmp.ne.s32.totalorder %s90, %s91
      %p105 = scmp.eq.s32.totalorder %s15, 3
      %p106 = por %p104, %p105
      %p108 = scmp.ne.s32.totalorder %s91, %s107
      %p109 = scmp.eq.s32.totalorder %s15, 0
      %p110 = por %p108, %p109
      %p111 = scmp.le.s32.totalorder 1, %s9
      %p112 = scmp.lt.s32.totalorder %s9, 5
      %p113 = pnand %p111, %p112
      %p114 = pneg %p113
      // Predicated region
      $region9: #{model_forward.26} parent=5 // pred_check
        _
      $region10: #{model_forward.26} parent=5 // pred_check_branch
        %116 = sbr.rel (%p113) target = $region12
      $region11: #{model_forward.26} parent=5 // pred_region
        %s117 = ssub.s32 %s9, 1
        // Predicated region
        $region13: #{model_forward.26} parent=11 // pred_check
          %p118 = pneg %p30
        $region14: #{model_forward.26} parent=11 // pred_check_branch
          %120 = sbr.rel (%p118) target = $region16
        $region15: #{model_forward.26} parent=11 // pred_region
          _
        $region16: #{model_forward.26} parent=11 // pred_fallthru
          _
        // Predicated region
        $region17: #{model_forward.26} parent=11 // pred_check
          %p121 = pneg %p77
        $region18: #{model_forward.26} parent=11 // pred_check_branch
          %123 = sbr.rel (%p121) target = $region20
        $region19: #{model_forward.26} parent=11 // pred_region
          _
        $region20: #{model_forward.26} parent=11 // pred_fallthru
          _
      $region12: #{model_forward.26} parent=5 // pred_fallthru
        _
      %p124 = scmp.lt.s32.totalorder %s9, 4
      // Predicated region
      $region21: #{model_forward.26} parent=5 // pred_check
        %p125 = pneg %p124
      $region22: #{model_forward.26} parent=5 // pred_check_branch
        %127 = sbr.rel (%p125) target = $region24
      $region23: #{model_forward.26} parent=5 // pred_region
        // Predicated region
        $region25: #{model_forward.26} parent=23 // pred_check
          %p128 = pneg %p50
        $region26: #{model_forward.26} parent=23 // pred_check_branch
          %130 = sbr.rel (%p128) target = $region28
        $region27: #{model_forward.26} parent=23 // pred_region
          %s131 = sand.u32 %s40, 1
          %s132 = sand.u32 %s40, 1
          %s133 = smul.addr %s132, 32
          %s134 = scalar_lea.vmem [#allocation2], %s133
          %s135 = smul.u32 2, %s9
          %s136 = smul.addr %s135, 4
          %s137 = scalar_lea.vmem %s1, %s136
          // Predicated region
          $region29: #{model_forward.26} parent=27 // pred_check
            _
          $region30: #{model_forward.26} parent=27 // pred_check_branch
            %139 = sbr.rel (0) target = $region32
          $region31: #{model_forward.26} parent=27 // pred_region
            // Predicated region
            $region33: #{model_forward.26} parent=31 // pred_check
              _
            $region34: #{model_forward.26} parent=31 // pred_check_branch
              %141 = sbr.rel (0) target = $region36
            $region35: #{model_forward.26} parent=31 // pred_region
              // Predicated region
              $region48: #{model_forward.26} parent=35 // pred_check
                _
              $region49: #{model_forward.26} parent=35 // pred_check_branch
                %163 = sbr.rel (0) target = $region51
              $region50: #{model_forward.26} parent=35 // pred_region
                loop: start=0, step=1, limit=1
                $region52: #{model_forward.26} parent=50 // loop_pre_header
                  _
                $region53: #{model_forward.26} parent=50 // loop_header
                  %s165 = sphi 0, %s169
                  %p166 = scmp.ge.s32.totalorder %s165, 1
                  %s170 = sphi %s137, %s137
                  %s171 = sphi %s134, %s134
                $region54: #{model_forward.26} parent=50 // loop_header_branch
                  %168 = sbr.rel (%p166) target = $region58
                $region55: #{model_forward.26} parent=50 // loop_body
                  %v172 = vld [vmem:[%s170] sm:$0xff]
                  %173 = vst [vmem:[%s171] sm:$0xff] %v172
                  %v174 = vld [vmem:[%s170 + $0x20] sm:$0xff]
                  %175 = vst [vmem:[%s171 + $0x8] sm:$0xff] %v174
                  %v176 = vld [vmem:[%s170 + $0x40] sm:$0xff]
                  %177 = vst [vmem:[%s171 + $0x10] sm:$0xff] %v176
                  %v178 = vld [vmem:[%s170 + $0x60] sm:$0xff]
                  %179 = vst [vmem:[%s171 + $0x18] sm:$0xff] %v178
                $region56: #{model_forward.26} parent=50 // loop_footer
                  %s169 = sadd.s32 1, %s165
                $region57: #{model_forward.26} parent=50 // loop_footer_branch
                  %164 = sbr.rel target = $region53
                $region58: #{model_forward.26} parent=50 // loop_exit
                  _
              $region51: #{model_forward.26} parent=35 // pred_fallthru
                _
              // Predicated region
              $region59: #{model_forward.26} parent=35 // pred_check
                _
              $region60: #{model_forward.26} parent=35 // pred_check_branch
                %181 = sbr.rel target = $region62
              $region61: #{model_forward.26} parent=35 // pred_region
                _
              $region62: #{model_forward.26} parent=35 // pred_fallthru
                _
            $region36: #{model_forward.26} parent=31 // pred_fallthru
              _
            // Predicated region
            $region37: #{model_forward.26} parent=31 // pred_check
              _
            $region38: #{model_forward.26} parent=31 // pred_check_branch
              %143 = sbr.rel target = $region40
            $region39: #{model_forward.26} parent=31 // pred_region
              %s145 = ssub.s32 256, 1
              loop: start=0, step=1, limit=1
              $region41: #{model_forward.26} parent=39 // loop_pre_header
                _
              $region42: #{model_forward.26} parent=39 // loop_header
                %s147 = sphi 0, %s151
                %p148 = scmp.ge.s32.totalorder %s147, 1
                %s152 = sphi %s137, %s137
                %s153 = sphi %s134, %s134
              $region43: #{model_forward.26} parent=39 // loop_header_branch
                %150 = sbr.rel (%p148) target = $region47
              $region44: #{model_forward.26} parent=39 // loop_body
                %v154 = vld [vmem:[%s152] sm:%s145]
                %155 = vst [vmem:[%s153] sm:%s145] %v154
                %v156 = vld [vmem:[%s152 + $0x20] sm:%s145]
                %157 = vst [vmem:[%s153 + $0x8] sm:%s145] %v156
                %v158 = vld [vmem:[%s152 + $0x40] sm:%s145]
                %159 = vst [vmem:[%s153 + $0x10] sm:%s145] %v158
                %v160 = vld [vmem:[%s152 + $0x60] sm:%s145]
                %161 = vst [vmem:[%s153 + $0x18] sm:%s145] %v160
              $region45: #{model_forward.26} parent=39 // loop_footer
                %s151 = sadd.s32 1, %s147
              $region46: #{model_forward.26} parent=39 // loop_footer_branch
                %146 = sbr.rel target = $region42
              $region47: #{model_forward.26} parent=39 // loop_exit
                _
            $region40: #{model_forward.26} parent=31 // pred_fallthru
              _
          $region32: #{model_forward.26} parent=27 // pred_fallthru
            _
          %182 = vnop
        $region28: #{model_forward.26} parent=23 // pred_fallthru
          _
      $region24: #{model_forward.26} parent=5 // pred_fallthru
        _
      %p183 = scmp.le.s32.totalorder 1, %s9
      %p184 = scmp.lt.s32.totalorder %s9, 5
      %p185 = pnand %p183, %p184
      %p186 = pneg %p185
      // Predicated region
      $region63: #{model_forward.26} parent=5 // pred_check
        _
      $region64: #{model_forward.26} parent=5 // pred_check_branch
        %188 = sbr.rel (%p185) target = $region66
      $region65: #{model_forward.26} parent=5 // pred_region
        %s189 = ssub.s32 %s9, 1
        %s190 = sand.u32 %s43, 1
        %s191 = sand.u32 %s43, 1
        %s192 = smul.addr %s191, 32
        %s193 = scalar_lea.vmem [#allocation2], %s192
        // Predicated region
        $region67: #{model_forward.26} parent=65 // pred_check
          %p194 = pneg %p56
        $region68: #{model_forward.26} parent=65 // pred_check_branch
          %196 = sbr.rel (%p194) target = $region70
        $region69: #{model_forward.26} parent=65 // pred_region
          _
        $region70: #{model_forward.26} parent=65 // pred_fallthru
          _
        %p197 = pneg %p30
        %p198 = pneg %p27
        %s199 = sand.u32 %s43, 1
        %s200 = sand.u32 %s43, 1
        %s201 = smul.addr %s200, 32
        %s202 = scalar_lea.vmem [#allocation2], %s201
        %p203 = pneg %p56
        %p204 = pneg %p53
        %p205 = pneg %p77
        %p206 = pneg %p74
        %p207 = pneg %p103
        %p208 = pneg %p100
        %s209 = smul.u32 2, %s14
        %p210 = scmp.lt.s32.totalorder %s209, 7
        %s211 = scalar_select %p210, %s209, 7
        %s212 = smul.addr %s211, 4
        %s213 = scalar_lea.vmem %s3, %s212
        %s214 = smul.u32 2, %s14
        %s215 = smul.u32 2, %s14
        %p216 = scmp.lt.s32.totalorder %s215, 7
        %s217 = scalar_select %p216, %s215, 7
        %s218 = smul.addr %s217, 4
        %s219 = scalar_lea.vmem %s3, %s218
        %s220 = smul.u32 2, %s14
        %v222 = vld [vmem:[%s0] sm:$0xf]
        %v223 = vld [vmem:[%s193] sm:$0xff]
        %v224 = vld [vmem:[%s193 + $0x8] sm:$0xff]
        %v225 = vld [vmem:[%s193 + $0x10] sm:$0xff]
        %v226 = vld [vmem:[%s193 + $0x18] sm:$0x33]
        %v227 = vld [vmem:[%s2] sm:$0xff]
        %229 = vset.pattern.permute.xlu0 0
        %230 = vperm.xlu0 %229, %v227
        %v231 = vpop.permute.xlu0 %230
        %v237 = vunpack.c.l.b16 %v223
        %v238 = vunpack.c.h.b16 %v223
        %v239 = vunpack.c.l.b16 %v224
        %v240 = vunpack.c.h.b16 %v224
        %v241 = vunpack.c.l.b16 %v225
        %v242 = vunpack.c.h.b16 %v225
        %v243 = vunpack.c.l.b16 %v226
        %v244 = vunpack.c.h.b16 %v226
        %v245 = vpack.c.b16 %v239, %v237
        %v246 = vpack.c.b16 %v240, %v238
        %v247 = vpack.c.b16 %v243, %v241
        %v248 = vpack.c.b16 %v244, %v242
        %vm251 = vcmask 220160
        %v253 = vsel %vm251, %v222, 0
        %vm255 = vcmask 1044480
        %vm256 = vcmask 1045504
        %v257 = vsel %vm255, 4294967295, 65535
        %v258 = vsel %vm256, %v257, 0
        %v260 = vand.u32 %v247, %v258
        %v263 = vand.u32 %v248, %v258
        %265 = vmatpush.bf16.msra.mxu0 0
        %266 = vmatpush.bf16.msra.mxu0 0
        %267 = vmatpush.bf16.msra.mxu0 0
        %268 = vmatpush.bf16.msra.mxu0 0
        %269 = vmatpush.bf16.msra.mxu0 0
        %270 = vmatpush.bf16.msra.mxu0 0
        %271 = vmatpush.bf16.msra.mxu0 %v260
        %272 = vmatpush.bf16.msra.mxu0 %v245
        %273 = vmatmul.bf16.gmra.mxu0 %v253
        %v274 = vpop.f32.mrf.mxu0
        %v275 = vadd.f32 %v231, %v274
        %v276 = vpop.f32.mrf.mxu0
        %277 = vdwg.mxu0
        %278 = vmatpush.bf16.msra.mxu0 0
        %279 = vmatpush.bf16.msra.mxu0 0
        %280 = vmatpush.bf16.msra.mxu0 0
        %281 = vmatpush.bf16.msra.mxu0 0
        %282 = vmatpush.bf16.msra.mxu0 0
        %283 = vmatpush.bf16.msra.mxu0 0
        %284 = vmatpush.bf16.msra.mxu0 %v263
        %285 = vmatpush.bf16.msra.mxu0 %v246
        %286 = vmatmul.bf16.gmra.mxu0 %v253
        %v287 = vpop.f32.mrf.mxu0
        %v288 = vadd.f32 %v231, %v287
        %v289 = vpop.f32.mrf.mxu0
        %290 = vdwg.mxu0
        %v291 = vmax.f32 %v275, 0.0
        %v292 = vmax.f32 %v288, 0.0
        %v293 = vpack.c.bf16 %v292, %v291
        %294 = vst [vmem:[%s219] sm:$0xff] %v293
        %s295 = smul.u32 2, %s14
        %p296 = scmp.lt.s32.totalorder %s295, 7
        %s297 = scalar_select %p296, %s295, 7
        %s298 = smul.addr %s297, 4
        %s299 = scalar_lea.vmem %s3, %s298
        // Predicated region
        $region71: #{model_forward.26} parent=65 // pred_check
          %p300 = pneg %p100
        $region72: #{model_forward.26} parent=65 // pred_check_branch
          %302 = sbr.rel (%p300) target = $region74
        $region73: #{model_forward.26} parent=65 // pred_region
          %s303 = smul.u32 2, %s14
        $region74: #{model_forward.26} parent=65 // pred_fallthru
          _
      $region66: #{model_forward.26} parent=5 // pred_fallthru
        _
      %p304 = scmp.le.s32.totalorder 2, %s9
      // Predicated region
      $region75: #{model_forward.26} parent=5 // pred_check
        %p305 = pneg %p304
      $region76: #{model_forward.26} parent=5 // pred_check_branch
        %307 = sbr.rel (%p305) target = $region78
      $region77: #{model_forward.26} parent=5 // pred_region
        %s308 = ssub.s32 %s9, 2
        // Predicated region
        $region79: #{model_forward.26} parent=77 // pred_check
          %p309 = pneg %p106
        $region80: #{model_forward.26} parent=77 // pred_check_branch
          %311 = sbr.rel (%p309) target = $region82
        $region81: #{model_forward.26} parent=77 // pred_region
          %s312 = smul.u32 2, %s15
          %p313 = scmp.lt.s32.totalorder %s312, 7
          %s314 = scalar_select %p313, %s312, 7
          %s315 = smul.addr %s314, 4
          %s316 = scalar_lea.vmem %s3, %s315
        $region82: #{model_forward.26} parent=77 // pred_fallthru
          _
      $region78: #{model_forward.26} parent=5 // pred_fallthru
        _
    $region6: #{model_forward.26} parent=1 // loop_footer
      %s13 = sadd.s32 1, %s9
    $region7: #{model_forward.26} parent=1 // loop_footer_branch
      %8 = sbr.rel target = $region3
    $region8: #{model_forward.26} parent=1 // loop_exit
      _

// kernel: model_forward.27
$region0: #{model_forward.27}
  #allocation0 [shape = 'u32[]', space=smem, size = 0x4, offset = 0x4, fixed_abs, tag = 'smem constant byte address 0x4 - core index']
  #allocation1 [shape = 'u32[72,128]{1,0:T(1,128)}', space=vmem, size = 0x9000, scoped, tag = 'internal scratch']
  %s0 = inlined_call_operand.vmem [shape: bf16[16,72], index: 0, kind: input, shape index: {}]
  %s1 = inlined_call_operand.vmem [shape: bf16[72,256], index: 1, kind: input, shape index: {}]
  %s2 = inlined_call_operand.vmem [shape: f32[16,1], index: 2, kind: input, shape index: {}]
  %s3 = inlined_call_operand.vmem [shape: bf16[16,256], index: 3, kind: output, shape index: {}]
  %s4 = sld [smem:[#allocation0]]
  $region123: #{model_forward.27} parent=0
    _
  %s6 = ssub.s32 1, %s4
  %s7 = scalar_select 0, %s6, %s4
  $region1: #{model_forward.27} parent=0
    #allocation2 [shape = 'u8[36864]{0}', space=vmem, size = 0x9000, scoped, tag = 'input window, operand 1']
    #allocation3 [shape = 'u8[8192]{0}', space=vmem, size = 0x2000, scoped, tag = 'output window, operand 0']
    loop: start=0, step=1, limit=4
    $region2: #{model_forward.27} parent=1 // loop_pre_header
      _
    $region3: #{model_forward.27} parent=1 // loop_header
      %s9 = sphi 0, %s13
      %p10 = scmp.ge.s32.totalorder %s9, 4
      %s17 = sphi 0, %s17
      %s19 = sphi 0, %s17
      %s20 = sphi 0, %s19
      %s34 = sphi 0, %s20
      %s40 = sphi 0, %s42
      %s43 = sphi 0, %s40
      %s44 = sphi 0, %s43
      %s60 = sphi 0, %s44
      %s64 = sphi 0, %s64
      %s66 = sphi 0, %s64
      %s67 = sphi 0, %s66
      %s81 = sphi 0, %s67
      %s87 = sphi 0, %s89
      %s90 = sphi 0, %s87
      %s91 = sphi 0, %s90
      %s107 = sphi 0, %s91
    $region4: #{model_forward.27} parent=1 // loop_header_branch
      %12 = sbr.rel (%p10) target = $region8
    $region5: #{model_forward.27} parent=1 // loop_body
      %s14 = ssub.s32 %s9, 1
      %s15 = ssub.s32 %s9, 2
      %s16 = sadd.s32 %s9, 1
      %s18 = sadd.s32 %s17, 1
      %p21 = scmp.eq.s32.totalorder %s9, 1
      %p22 = scmp.ne.s32.totalorder %s17, %s19
      %p23 = scmp.eq.s32.totalorder %s9, 0
      %p24 = por %p22, %p23
      %p25 = scmp.ne.s32.totalorder %s17, %s19
      %p26 = scmp.eq.s32.totalorder %s14, 1
      %p27 = por %p25, %p26
      %p28 = scmp.ne.s32.totalorder %s19, %s20
      %p29 = scmp.eq.s32.totalorder %s14, 0
      %p30 = por %p28, %p29
      %p31 = scmp.ne.s32.totalorder %s19, %s20
      %p32 = scmp.eq.s32.totalorder %s15, 1
      %p33 = por %p31, %p32
      %p35 = scmp.ne.s32.totalorder %s20, %s34
      %p36 = scmp.eq.s32.totalorder %s15, 0
      %p37 = por %p35, %p36
      %s38 = ssub.s32 %s9, %s16
      %p39 = scmp.eq.s32.totalorder %s38, 0
      %s41 = sadd.s32 %s40, 1
      %s42 = scalar_select %p39, %s40, %s41
      %p45 = pneg %p39
      %p46 = scmp.eq.s32.totalorder %s9, 1
      %p47 = por %p45, %p46
      %p48 = scmp.ne.s32.totalorder %s40, %s43
      %p49 = scmp.eq.s32.totalorder %s9, 0
      %p50 = por %p48, %p49
      %p51 = scmp.ne.s32.totalorder %s40, %s43
      %p52 = scmp.eq.s32.totalorder %s14, 1
      %p53 = por %p51, %p52
      %p54 = scmp.ne.s32.totalorder %s43, %s44
      %p55 = scmp.eq.s32.totalorder %s14, 0
      %p56 = por %p54, %p55
      %p57 = scmp.ne.s32.totalorder %s43, %s44
      %p58 = scmp.eq.s32.totalorder %s15, 1
      %p59 = por %p57, %p58
      %p61 = scmp.ne.s32.totalorder %s44, %s60
      %p62 = scmp.eq.s32.totalorder %s15, 0
      %p63 = por %p61, %p62
      %s65 = sadd.s32 %s64, 1
      %p68 = scmp.eq.s32.totalorder %s9, 1
      %p69 = scmp.ne.s32.totalorder %s64, %s66
      %p70 = scmp.eq.s32.totalorder %s9, 0
      %p71 = por %p69, %p70
      %p72 = scmp.ne.s32.totalorder %s64, %s66
      %p73 = scmp.eq.s32.totalorder %s14, 1
      %p74 = por %p72, %p73
      %p75 = scmp.ne.s32.totalorder %s66, %s67
      %p76 = scmp.eq.s32.totalorder %s14, 0
      %p77 = por %p75, %p76
      %p78 = scmp.ne.s32.totalorder %s66, %s67
      %p79 = scmp.eq.s32.totalorder %s15, 1
      %p80 = por %p78, %p79
      %p82 = scmp.ne.s32.totalorder %s67, %s81
      %p83 = scmp.eq.s32.totalorder %s15, 0
      %p84 = por %p82, %p83
      %s85 = ssub.s32 %s9, %s16
      %p86 = scmp.eq.s32.totalorder %s85, 0
      %s88 = sadd.s32 %s87, 1
      %s89 = scalar_select %p86, %s87, %s88
      %p92 = pneg %p86
      %p93 = scmp.eq.s32.totalorder %s9, 1
      %p94 = por %p92, %p93
      %p95 = scmp.ne.s32.totalorder %s87, %s90
      %p96 = scmp.eq.s32.totalorder %s9, 0
      %p97 = por %p95, %p96
      %p98 = scmp.ne.s32.totalorder %s87, %s90
      %p99 = scmp.eq.s32.totalorder %s14, 1
      %p100 = por %p98, %p99
      %p101 = scmp.ne.s32.totalorder %s90, %s91
      %p102 = scmp.eq.s32.totalorder %s14, 0
      %p103 = por %p101, %p102
      %p104 = scmp.ne.s32.totalorder %s90, %s91
      %p105 = scmp.eq.s32.totalorder %s15, 1
      %p106 = por %p104, %p105
      %p108 = scmp.ne.s32.totalorder %s91, %s107
      %p109 = scmp.eq.s32.totalorder %s15, 0
      %p110 = por %p108, %p109
      %p111 = scmp.le.s32.totalorder 1, %s9
      %p112 = scmp.lt.s32.totalorder %s9, 3
      %p113 = pnand %p111, %p112
      %p114 = pneg %p113
      // Predicated region
      $region9: #{model_forward.27} parent=5 // pred_check
        _
      $region10: #{model_forward.27} parent=5 // pred_check_branch
        %116 = sbr.rel (%p113) target = $region12
      $region11: #{model_forward.27} parent=5 // pred_region
        %s117 = ssub.s32 %s9, 1
        // Predicated region
        $region13: #{model_forward.27} parent=11 // pred_check
          %p118 = pneg %p30
        $region14: #{model_forward.27} parent=11 // pred_check_branch
          %120 = sbr.rel (%p118) target = $region16
        $region15: #{model_forward.27} parent=11 // pred_region
          _
        $region16: #{model_forward.27} parent=11 // pred_fallthru
          _
        // Predicated region
        $region17: #{model_forward.27} parent=11 // pred_check
          %p121 = pneg %p77
        $region18: #{model_forward.27} parent=11 // pred_check_branch
          %123 = sbr.rel (%p121) target = $region20
        $region19: #{model_forward.27} parent=11 // pred_region
          _
        $region20: #{model_forward.27} parent=11 // pred_fallthru
          _
      $region12: #{model_forward.27} parent=5 // pred_fallthru
        _
      %p124 = scmp.lt.s32.totalorder %s9, 2
      // Predicated region
      $region21: #{model_forward.27} parent=5 // pred_check
        %p125 = pneg %p124
      $region22: #{model_forward.27} parent=5 // pred_check_branch
        %127 = sbr.rel (%p125) target = $region24
      $region23: #{model_forward.27} parent=5 // pred_region
        // Predicated region
        $region25: #{model_forward.27} parent=23 // pred_check
          %p128 = pneg %p50
        $region26: #{model_forward.27} parent=23 // pred_check_branch
          %130 = sbr.rel (%p128) target = $region28
        $region27: #{model_forward.27} parent=23 // pred_region
          %s131 = sand.u32 %s40, 1
          %s132 = sand.u32 %s40, 1
          %s133 = smul.addr %s132, 36
          %s134 = scalar_lea.vmem [#allocation2], %s133
          %s135 = smul.addr %s9, 4
          %s136 = scalar_lea.vmem %s1, %s135
          // Predicated region
          $region29: #{model_forward.27} parent=27 // pred_check
            _
          $region30: #{model_forward.27} parent=27 // pred_check_branch
            %138 = sbr.rel (0) target = $region32
          $region31: #{model_forward.27} parent=27 // pred_region
            // Predicated region
            $region33: #{model_forward.27} parent=31 // pred_check
              _
            $region34: #{model_forward.27} parent=31 // pred_check_branch
              %140 = sbr.rel target = $region36
            $region35: #{model_forward.27} parent=31 // pred_region
              // Predicated region
              $region48: #{model_forward.27} parent=35 // pred_check
                _
              $region49: #{model_forward.27} parent=35 // pred_check_branch
                %172 = sbr.rel (0) target = $region51
              $region50: #{model_forward.27} parent=35 // pred_region
                loop: start=0, step=1, limit=1
                $region52: #{model_forward.27} parent=50 // loop_pre_header
                  _
                $region53: #{model_forward.27} parent=50 // loop_header
                  %s174 = sphi 0, %s178
                  %p175 = scmp.ge.s32.totalorder %s174, 1
                  %s179 = sphi %s136, %s136
                  %s180 = sphi %s134, %s134
                $region54: #{model_forward.27} parent=50 // loop_header_branch
                  %177 = sbr.rel (%p175) target = $region58
                $region55: #{model_forward.27} parent=50 // loop_body
                  _
                $region56: #{model_forward.27} parent=50 // loop_footer
                  %s178 = sadd.s32 1, %s174
                $region57: #{model_forward.27} parent=50 // loop_footer_branch
                  %173 = sbr.rel target = $region53
                $region58: #{model_forward.27} parent=50 // loop_exit
                  _
                %s182 = ssub.s32 16, 1
                loop: start=0, step=1, limit=1
                $region59: #{model_forward.27} parent=50 // loop_pre_header
                  _
                $region60: #{model_forward.27} parent=50 // loop_header
                  %s184 = sphi 0, %s188
                  %p185 = scmp.ge.s32.totalorder %s184, 1
                  %s189 = sphi %s136, %s136
                  %s190 = sphi %s134, %s134
                $region61: #{model_forward.27} parent=50 // loop_header_branch
                  %187 = sbr.rel (%p185) target = $region65
                $region62: #{model_forward.27} parent=50 // loop_body
                  %v191 = vld [vmem:[%s189] sm:%s182]
                  %192 = vst [vmem:[%s190] sm:%s182] %v191
                  %v193 = vld [vmem:[%s189 + $0x8] sm:%s182]
                  %194 = vst [vmem:[%s190 + $0x4] sm:%s182] %v193
                  %v195 = vld [vmem:[%s189 + $0x10] sm:%s182]
                  %196 = vst [vmem:[%s190 + $0x8] sm:%s182] %v195
                  %v197 = vld [vmem:[%s189 + $0x18] sm:%s182]
                  %198 = vst [vmem:[%s190 + $0xc] sm:%s182] %v197
                  %v199 = vld [vmem:[%s189 + $0x20] sm:%s182]
                  %200 = vst [vmem:[%s190 + $0x10] sm:%s182] %v199
                  %v201 = vld [vmem:[%s189 + $0x28] sm:%s182]
                  %202 = vst [vmem:[%s190 + $0x14] sm:%s182] %v201
                  %v203 = vld [vmem:[%s189 + $0x30] sm:%s182]
                  %204 = vst [vmem:[%s190 + $0x18] sm:%s182] %v203
                  %v205 = vld [vmem:[%s189 + $0x38] sm:%s182]
                  %206 = vst [vmem:[%s190 + $0x1c] sm:%s182] %v205
                  %v207 = vld [vmem:[%s189 + $0x40] sm:%s182]
                  %208 = vst [vmem:[%s190 + $0x20] sm:%s182] %v207
                $region63: #{model_forward.27} parent=50 // loop_footer
                  %s188 = sadd.s32 1, %s184
                $region64: #{model_forward.27} parent=50 // loop_footer_branch
                  %183 = sbr.rel target = $region60
                $region65: #{model_forward.27} parent=50 // loop_exit
                  _
              $region51: #{model_forward.27} parent=35 // pred_fallthru
                _
            $region36: #{model_forward.27} parent=31 // pred_fallthru
              _
            // Predicated region
            $region37: #{model_forward.27} parent=31 // pred_check
              _
            $region38: #{model_forward.27} parent=31 // pred_check_branch
              %142 = sbr.rel (0) target = $region40
            $region39: #{model_forward.27} parent=31 // pred_region
              %s144 = ssub.s32 16, 1
              loop: start=0, step=1, limit=1
              $region41: #{model_forward.27} parent=39 // loop_pre_header
                _
              $region42: #{model_forward.27} parent=39 // loop_header
                %s146 = sphi 0, %s150
                %p147 = scmp.ge.s32.totalorder %s146, 1
                %s151 = sphi %s136, %s136
                %s152 = sphi %s134, %s134
              $region43: #{model_forward.27} parent=39 // loop_header_branch
                %149 = sbr.rel (%p147) target = $region47
              $region44: #{model_forward.27} parent=39 // loop_body
                %v153 = vld [vmem:[%s151] sm:%s144]
                %154 = vst [vmem:[%s152] sm:%s144] %v153
                %v155 = vld [vmem:[%s151 + $0x8] sm:%s144]
                %156 = vst [vmem:[%s152 + $0x4] sm:%s144] %v155
                %v157 = vld [vmem:[%s151 + $0x10] sm:%s144]
                %158 = vst [vmem:[%s152 + $0x8] sm:%s144] %v157
                %v159 = vld [vmem:[%s151 + $0x18] sm:%s144]
                %160 = vst [vmem:[%s152 + $0xc] sm:%s144] %v159
                %v161 = vld [vmem:[%s151 + $0x20] sm:%s144]
                %162 = vst [vmem:[%s152 + $0x10] sm:%s144] %v161
                %v163 = vld [vmem:[%s151 + $0x28] sm:%s144]
                %164 = vst [vmem:[%s152 + $0x14] sm:%s144] %v163
                %v165 = vld [vmem:[%s151 + $0x30] sm:%s144]
                %166 = vst [vmem:[%s152 + $0x18] sm:%s144] %v165
                %v167 = vld [vmem:[%s151 + $0x38] sm:%s144]
                %168 = vst [vmem:[%s152 + $0x1c] sm:%s144] %v167
                %v169 = vld [vmem:[%s151 + $0x40] sm:%s144]
                %170 = vst [vmem:[%s152 + $0x20] sm:%s144] %v169
              $region45: #{model_forward.27} parent=39 // loop_footer
                %s150 = sadd.s32 1, %s146
              $region46: #{model_forward.27} parent=39 // loop_footer_branch
                %145 = sbr.rel target = $region42
              $region47: #{model_forward.27} parent=39 // loop_exit
                _
            $region40: #{model_forward.27} parent=31 // pred_fallthru
              _
          $region32: #{model_forward.27} parent=27 // pred_fallthru
            _
          %209 = vnop
        $region28: #{model_forward.27} parent=23 // pred_fallthru
          _
      $region24: #{model_forward.27} parent=5 // pred_fallthru
        _
      %p210 = scmp.le.s32.totalorder 1, %s9
      %p211 = scmp.lt.s32.totalorder %s9, 3
      %p212 = pnand %p210, %p211
      %p213 = pneg %p212
      // Predicated region
      $region66: #{model_forward.27} parent=5 // pred_check
        _
      $region67: #{model_forward.27} parent=5 // pred_check_branch
        %215 = sbr.rel (%p212) target = $region69
      $region68: #{model_forward.27} parent=5 // pred_region
        %s216 = ssub.s32 %s9, 1
        %s217 = sand.u32 %s43, 1
        %s218 = sand.u32 %s43, 1
        %s219 = smul.addr %s218, 36
        %s220 = scalar_lea.vmem [#allocation2], %s219
        // Predicated region
        $region70: #{model_forward.27} parent=68 // pred_check
          %p221 = pneg %p56
        $region71: #{model_forward.27} parent=68 // pred_check_branch
          %223 = sbr.rel (%p221) target = $region73
        $region72: #{model_forward.27} parent=68 // pred_region
          _
        $region73: #{model_forward.27} parent=68 // pred_fallthru
          _
        %p224 = pneg %p30
        %p225 = pneg %p27
        %s226 = sand.u32 %s43, 1
        %s227 = sand.u32 %s43, 1
        %s228 = smul.addr %s227, 36
        %s229 = scalar_lea.vmem [#allocation2], %s228
        %p230 = pneg %p56
        %p231 = pneg %p53
        %p232 = pneg %p77
        %p233 = pneg %p74
        %p234 = pneg %p103
        %p235 = pneg %p100
        %s236 = sand.u32 %s90, 1
        %s237 = sand.u32 %s90, 1
        %s238 = smul.addr %s237, 8
        %s239 = scalar_lea.vmem [#allocation3], %s238
        %v241 = vld [vmem:[%s0] sm:$0xf]
        %v242 = vld [vmem:[%s0 + $0x4] sm:$0xf]
        %v243 = vld [vmem:[%s220] sm:$0xf]
        %v244 = vld [vmem:[%s220 + $0x4] sm:$0xf]
        %v245 = vld [vmem:[%s220 + $0x8] sm:$0xf]
        %v246 = vld [vmem:[%s220 + $0xc] sm:$0xf]
        %v247 = vld [vmem:[%s220 + $0x10] sm:$0xf]
        %v248 = vld [vmem:[%s220 + $0x14] sm:$0xf]
        %v249 = vld [vmem:[%s220 + $0x18] sm:$0xf]
        %v250 = vld [vmem:[%s220 + $0x1c] sm:$0xf]
        %v251 = vld [vmem:[%s220 + $0x20] sm:$0xf]
        %v252 = vld [vmem:[%s2] sm:$0xff]
        %v253 = vld [vmem:[%s2 + $0x8] sm:$0xff]
        %255 = vset.pattern.permute.xlu0 0
        %256 = vperm.xlu0 %255, %v252
        %v257 = vpop.permute.xlu0 %256
        %260 = vset.pattern.permute.xlu0 0
        %261 = vperm.xlu0 %260, %v253
        %v262 = vpop.permute.xlu0 %261
        %v266 = vunpack.c.l.b16 %v241
        %v267 = vunpack.c.l.b16 %v242
        %v268 = vpack.c.b16 %v267, %v266
        %v278 = vunpack.c.l.b16 %v243
        %v279 = vunpack.c.l.b16 %v244
        %v280 = vunpack.c.l.b16 %v245
        %v281 = vunpack.c.l.b16 %v246
        %v282 = vunpack.c.l.b16 %v247
        %v283 = vunpack.c.l.b16 %v248
        %v284 = vunpack.c.l.b16 %v249
        %v285 = vunpack.c.l.b16 %v250
        %v286 = vunpack.c.l.b16 %v251
        %v287 = vpack.c.b16 %v279, %v278
        %v288 = vpack.c.b16 %v281, %v280
        %v289 = vpack.c.b16 %v283, %v282
        %v290 = vpack.c.b16 %v285, %v284
        %v291 = vpack.c.b16 %v286, %v286
        %vm296 = vcmask 588800
        %v298 = vsel %vm296, %v268, 0
        %vm300 = vcmask 1043456
        %v302 = vsel %vm300, %v291, 0
        %304 = vmatpush.bf16.msra.mxu0 0
        %305 = vmatpush.bf16.msra.mxu0 0
        %306 = vmatpush.bf16.msra.mxu0 0
        %307 = vmatpush.bf16.msra.mxu0 %v302
        %308 = vmatpush.bf16.msra.mxu0 %v290
        %309 = vmatpush.bf16.msra.mxu0 %v289
        %310 = vmatpush.bf16.msra.mxu0 %v288
        %311 = vmatpush.bf16.msra.mxu0 %v287
        %312 = vmatmul.bf16.gmra.mxu0 %v298
        %v313 = vpop.f32.mrf.mxu0
        %v314 = vadd.f32 %v257, %v313
        %v315 = vpop.f32.mrf.mxu0
        %v316 = vadd.f32 %v262, %v315
        %317 = vdwg.mxu0
        %v318 = vmax.f32 %v314, 0.0
        %v319 = vmax.f32 %v316, 0.0
        %v320 = vpack.c.bf16 %v318, %v318
        %v321 = vpack.c.bf16 %v319, %v319
        %322 = vst [vmem:[%s239] sm:$0xf] %v320
        %323 = vst [vmem:[%s239 + $0x4] sm:$0xf] %v321
        %s324 = sand.u32 %s90, 1
        %s325 = sand.u32 %s90, 1
        %s326 = smul.addr %s325, 8
        %s327 = scalar_lea.vmem [#allocation3], %s326
        // Predicated region
        $region74: #{model_forward.27} parent=68 // pred_check
          %p328 = pneg %p100
        $region75: #{model_forward.27} parent=68 // pred_check_branch
          %330 = sbr.rel (%p328) target = $region77
        $region76: #{model_forward.27} parent=68 // pred_region
          %s331 = smul.addr %s14, 4
          %s332 = scalar_lea.vmem %s3, %s331
          // Predicated region
          $region78: #{model_forward.27} parent=76 // pred_check
            _
          $region79: #{model_forward.27} parent=76 // pred_check_branch
            %334 = sbr.rel (0) target = $region81
          $region80: #{model_forward.27} parent=76 // pred_region
            // Predicated region
            $region82: #{model_forward.27} parent=80 // pred_check
              _
            $region83: #{model_forward.27} parent=80 // pred_check_branch
              %336 = sbr.rel target = $region85
            $region84: #{model_forward.27} parent=80 // pred_region
              // Predicated region
              $region97: #{model_forward.27} parent=84 // pred_check
                _
              $region98: #{model_forward.27} parent=84 // pred_check_branch
                %354 = sbr.rel (0) target = $region100
              $region99: #{model_forward.27} parent=84 // pred_region
                loop: start=0, step=1, limit=1
                $region101: #{model_forward.27} parent=99 // loop_pre_header
                  _
                $region102: #{model_forward.27} parent=99 // loop_header
                  %s356 = sphi 0, %s360
                  %p357 = scmp.ge.s32.totalorder %s356, 1
                  %s361 = sphi %s327, %s327
                  %s362 = sphi %s332, %s332
                $region103: #{model_forward.27} parent=99 // loop_header_branch
                  %359 = sbr.rel (%p357) target = $region107
                $region104: #{model_forward.27} parent=99 // loop_body
                  _
                $region105: #{model_forward.27} parent=99 // loop_footer
                  %s360 = sadd.s32 1, %s356
                $region106: #{model_forward.27} parent=99 // loop_footer_branch
                  %355 = sbr.rel target = $region102
                $region107: #{model_forward.27} parent=99 // loop_exit
                  _
                %s364 = ssub.s32 16, 1
                loop: start=0, step=1, limit=1
                $region108: #{model_forward.27} parent=99 // loop_pre_header
                  _
                $region109: #{model_forward.27} parent=99 // loop_header
                  %s366 = sphi 0, %s370
                  %p367 = scmp.ge.s32.totalorder %s366, 1
                  %s371 = sphi %s327, %s327
                  %s372 = sphi %s332, %s332
                $region110: #{model_forward.27} parent=99 // loop_header_branch
                  %369 = sbr.rel (%p367) target = $region114
                $region111: #{model_forward.27} parent=99 // loop_body
                  %v373 = vld [vmem:[%s371] sm:%s364]
                  %374 = vst [vmem:[%s372] sm:%s364] %v373
                  %v375 = vld [vmem:[%s371 + $0x4] sm:%s364]
                  %376 = vst [vmem:[%s372 + $0x8] sm:%s364] %v375
                $region112: #{model_forward.27} parent=99 // loop_footer
                  %s370 = sadd.s32 1, %s366
                $region113: #{model_forward.27} parent=99 // loop_footer_branch
                  %365 = sbr.rel target = $region109
                $region114: #{model_forward.27} parent=99 // loop_exit
                  _
              $region100: #{model_forward.27} parent=84 // pred_fallthru
                _
            $region85: #{model_forward.27} parent=80 // pred_fallthru
              _
            // Predicated region
            $region86: #{model_forward.27} parent=80 // pred_check
              _
            $region87: #{model_forward.27} parent=80 // pred_check_branch
              %338 = sbr.rel (0) target = $region89
            $region88: #{model_forward.27} parent=80 // pred_region
              %s340 = ssub.s32 16, 1
              loop: start=0, step=1, limit=1
              $region90: #{model_forward.27} parent=88 // loop_pre_header
                _
              $region91: #{model_forward.27} parent=88 // loop_header
                %s342 = sphi 0, %s346
                %p343 = scmp.ge.s32.totalorder %s342, 1
                %s347 = sphi %s327, %s327
                %s348 = sphi %s332, %s332
              $region92: #{model_forward.27} parent=88 // loop_header_branch
                %345 = sbr.rel (%p343) target = $region96
              $region93: #{model_forward.27} parent=88 // loop_body
                %v349 = vld [vmem:[%s347] sm:%s340]
                %350 = vst [vmem:[%s348] sm:%s340] %v349
                %v351 = vld [vmem:[%s347 + $0x4] sm:%s340]
                %352 = vst [vmem:[%s348 + $0x8] sm:%s340] %v351
              $region94: #{model_forward.27} parent=88 // loop_footer
                %s346 = sadd.s32 1, %s342
              $region95: #{model_forward.27} parent=88 // loop_footer_branch
                %341 = sbr.rel target = $region91
              $region96: #{model_forward.27} parent=88 // loop_exit
                _
            $region89: #{model_forward.27} parent=80 // pred_fallthru
              _
          $region81: #{model_forward.27} parent=76 // pred_fallthru
            _
          %377 = vnop
        $region77: #{model_forward.27} parent=68 // pred_fallthru
          _
      $region69: #{model_forward.27} parent=5 // pred_fallthru
        _
      %p378 = scmp.le.s32.totalorder 2, %s9
      // Predicated region
      $region115: #{model_forward.27} parent=5 // pred_check
        %p379 = pneg %p378
      $region116: #{model_forward.27} parent=5 // pred_check_branch
        %381 = sbr.rel (%p379) target = $region118
      $region117: #{model_forward.27} parent=5 // pred_region
        %s382 = ssub.s32 %s9, 2
        // Predicated region
        $region119: #{model_forward.27} parent=117 // pred_check
          %p383 = pneg %p106
        $region120: #{model_forward.27} parent=117 // pred_check_branch
          %385 = sbr.rel (%p383) target = $region122
        $region121: #{model_forward.27} parent=117 // pred_region
          %s386 = sand.u32 %s91, 1
          %s387 = sand.u32 %s91, 1
          %s388 = smul.addr %s387, 8
          %s389 = scalar_lea.vmem [#allocation3], %s388
        $region122: #{model_forward.27} parent=117 // pred_fallthru
          _
      $region118: #{model_forward.27} parent=5 // pred_fallthru
        _
    $region6: #{model_forward.27} parent=1 // loop_footer
      %s13 = sadd.s32 1, %s9
    $region7: #{model_forward.27} parent=1 // loop_footer_branch
      %8 = sbr.rel target = $region3
    $region8: #{model_forward.27} parent=1 // loop_exit
      _

// kernel: model_forward.28
$region0: #{model_forward.28}
  #allocation0 [shape = 'u32[]', space=smem, size = 0x4, offset = 0x4, fixed_abs, tag = 'smem constant byte address 0x4 - core index']
  #allocation1 [shape = 'u32[72,128]{1,0:T(1,128)}', space=vmem, size = 0x9000, scoped, tag = 'internal scratch']
  %s0 = inlined_call_operand.vmem [shape: bf16[16,144], index: 0, kind: input, shape index: {}]
  %s1 = inlined_call_operand.vmem [shape: bf16[144,256], index: 1, kind: input, shape index: {}]
  %s2 = inlined_call_operand.vmem [shape: f32[16,1], index: 2, kind: input, shape index: {}]
  %s3 = inlined_call_operand.vmem [shape: bf16[16,256], index: 3, kind: output, shape index: {}]
  %s4 = sld [smem:[#allocation0]]
  $region123: #{model_forward.28} parent=0
    _
  %s6 = ssub.s32 1, %s4
  %s7 = scalar_select 0, %s6, %s4
  $region1: #{model_forward.28} parent=0
    #allocation2 [shape = 'u8[73728]{0}', space=vmem, size = 0x12000, scoped, tag = 'input window, operand 1']
    #allocation3 [shape = 'u8[8192]{0}', space=vmem, size = 0x2000, scoped, tag = 'output window, operand 0']
    loop: start=0, step=1, limit=4
    $region2: #{model_forward.28} parent=1 // loop_pre_header
      _
    $region3: #{model_forward.28} parent=1 // loop_header
      %s9 = sphi 0, %s13
      %p10 = scmp.ge.s32.totalorder %s9, 4
      %s17 = sphi 0, %s17
      %s19 = sphi 0, %s17
      %s20 = sphi 0, %s19
      %s34 = sphi 0, %s20
      %s40 = sphi 0, %s42
      %s43 = sphi 0, %s40
      %s44 = sphi 0, %s43
      %s60 = sphi 0, %s44
      %s64 = sphi 0, %s64
      %s66 = sphi 0, %s64
      %s67 = sphi 0, %s66
      %s81 = sphi 0, %s67
      %s87 = sphi 0, %s89
      %s90 = sphi 0, %s87
      %s91 = sphi 0, %s90
      %s107 = sphi 0, %s91
    $region4: #{model_forward.28} parent=1 // loop_header_branch
      %12 = sbr.rel (%p10) target = $region8
    $region5: #{model_forward.28} parent=1 // loop_body
      %s14 = ssub.s32 %s9, 1
      %s15 = ssub.s32 %s9, 2
      %s16 = sadd.s32 %s9, 1
      %s18 = sadd.s32 %s17, 1
      %p21 = scmp.eq.s32.totalorder %s9, 1
      %p22 = scmp.ne.s32.totalorder %s17, %s19
      %p23 = scmp.eq.s32.totalorder %s9, 0
      %p24 = por %p22, %p23
      %p25 = scmp.ne.s32.totalorder %s17, %s19
      %p26 = scmp.eq.s32.totalorder %s14, 1
      %p27 = por %p25, %p26
      %p28 = scmp.ne.s32.totalorder %s19, %s20
      %p29 = scmp.eq.s32.totalorder %s14, 0
      %p30 = por %p28, %p29
      %p31 = scmp.ne.s32.totalorder %s19, %s20
      %p32 = scmp.eq.s32.totalorder %s15, 1
      %p33 = por %p31, %p32
      %p35 = scmp.ne.s32.totalorder %s20, %s34
      %p36 = scmp.eq.s32.totalorder %s15, 0
      %p37 = por %p35, %p36
      %s38 = ssub.s32 %s9, %s16
      %p39 = scmp.eq.s32.totalorder %s38, 0
      %s41 = sadd.s32 %s40, 1
      %s42 = scalar_select %p39, %s40, %s41
      %p45 = pneg %p39
      %p46 = scmp.eq.s32.totalorder %s9, 1
      %p47 = por %p45, %p46
      %p48 = scmp.ne.s32.totalorder %s40, %s43
      %p49 = scmp.eq.s32.totalorder %s9, 0
      %p50 = por %p48, %p49
      %p51 = scmp.ne.s32.totalorder %s40, %s43
      %p52 = scmp.eq.s32.totalorder %s14, 1
      %p53 = por %p51, %p52
      %p54 = scmp.ne.s32.totalorder %s43, %s44
      %p55 = scmp.eq.s32.totalorder %s14, 0
      %p56 = por %p54, %p55
      %p57 = scmp.ne.s32.totalorder %s43, %s44
      %p58 = scmp.eq.s32.totalorder %s15, 1
      %p59 = por %p57, %p58
      %p61 = scmp.ne.s32.totalorder %s44, %s60
      %p62 = scmp.eq.s32.totalorder %s15, 0
      %p63 = por %p61, %p62
      %s65 = sadd.s32 %s64, 1
      %p68 = scmp.eq.s32.totalorder %s9, 1
      %p69 = scmp.ne.s32.totalorder %s64, %s66
      %p70 = scmp.eq.s32.totalorder %s9, 0
      %p71 = por %p69, %p70
      %p72 = scmp.ne.s32.totalorder %s64, %s66
      %p73 = scmp.eq.s32.totalorder %s14, 1
      %p74 = por %p72, %p73
      %p75 = scmp.ne.s32.totalorder %s66, %s67
      %p76 = scmp.eq.s32.totalorder %s14, 0
      %p77 = por %p75, %p76
      %p78 = scmp.ne.s32.totalorder %s66, %s67
      %p79 = scmp.eq.s32.totalorder %s15, 1
      %p80 = por %p78, %p79
      %p82 = scmp.ne.s32.totalorder %s67, %s81
      %p83 = scmp.eq.s32.totalorder %s15, 0
      %p84 = por %p82, %p83
      %s85 = ssub.s32 %s9, %s16
      %p86 = scmp.eq.s32.totalorder %s85, 0
      %s88 = sadd.s32 %s87, 1
      %s89 = scalar_select %p86, %s87, %s88
      %p92 = pneg %p86
      %p93 = scmp.eq.s32.totalorder %s9, 1
      %p94 = por %p92, %p93
      %p95 = scmp.ne.s32.totalorder %s87, %s90
      %p96 = scmp.eq.s32.totalorder %s9, 0
      %p97 = por %p95, %p96
      %p98 = scmp.ne.s32.totalorder %s87, %s90
      %p99 = scmp.eq.s32.totalorder %s14, 1
      %p100 = por %p98, %p99
      %p101 = scmp.ne.s32.totalorder %s90, %s91
      %p102 = scmp.eq.s32.totalorder %s14, 0
      %p103 = por %p101, %p102
      %p104 = scmp.ne.s32.totalorder %s90, %s91
      %p105 = scmp.eq.s32.totalorder %s15, 1
      %p106 = por %p104, %p105
      %p108 = scmp.ne.s32.totalorder %s91, %s107
      %p109 = scmp.eq.s32.totalorder %s15, 0
      %p110 = por %p108, %p109
      %p111 = scmp.le.s32.totalorder 1, %s9
      %p112 = scmp.lt.s32.totalorder %s9, 3
      %p113 = pnand %p111, %p112
      %p114 = pneg %p113
      // Predicated region
      $region9: #{model_forward.28} parent=5 // pred_check
        _
      $region10: #{model_forward.28} parent=5 // pred_check_branch
        %116 = sbr.rel (%p113) target = $region12
      $region11: #{model_forward.28} parent=5 // pred_region
        %s117 = ssub.s32 %s9, 1
        // Predicated region
        $region13: #{model_forward.28} parent=11 // pred_check
          %p118 = pneg %p30
        $region14: #{model_forward.28} parent=11 // pred_check_branch
          %120 = sbr.rel (%p118) target = $region16
        $region15: #{model_forward.28} parent=11 // pred_region
          _
        $region16: #{model_forward.28} parent=11 // pred_fallthru
          _
        // Predicated region
        $region17: #{model_forward.28} parent=11 // pred_check
          %p121 = pneg %p77
        $region18: #{model_forward.28} parent=11 // pred_check_branch
          %123 = sbr.rel (%p121) target = $region20
        $region19: #{model_forward.28} parent=11 // pred_region
          _
        $region20: #{model_forward.28} parent=11 // pred_fallthru
          _
      $region12: #{model_forward.28} parent=5 // pred_fallthru
        _
      %p124 = scmp.lt.s32.totalorder %s9, 2
      // Predicated region
      $region21: #{model_forward.28} parent=5 // pred_check
        %p125 = pneg %p124
      $region22: #{model_forward.28} parent=5 // pred_check_branch
        %127 = sbr.rel (%p125) target = $region24
      $region23: #{model_forward.28} parent=5 // pred_region
        // Predicated region
        $region25: #{model_forward.28} parent=23 // pred_check
          %p128 = pneg %p50
        $region26: #{model_forward.28} parent=23 // pred_check_branch
          %130 = sbr.rel (%p128) target = $region28
        $region27: #{model_forward.28} parent=23 // pred_region
          %s131 = sand.u32 %s40, 1
          %s132 = sand.u32 %s40, 1
          %s133 = smul.addr %s132, 72
          %s134 = scalar_lea.vmem [#allocation2], %s133
          %s135 = smul.addr %s9, 4
          %s136 = scalar_lea.vmem %s1, %s135
          // Predicated region
          $region29: #{model_forward.28} parent=27 // pred_check
            _
          $region30: #{model_forward.28} parent=27 // pred_check_branch
            %138 = sbr.rel (0) target = $region32
          $region31: #{model_forward.28} parent=27 // pred_region
            // Predicated region
            $region33: #{model_forward.28} parent=31 // pred_check
              _
            $region34: #{model_forward.28} parent=31 // pred_check_branch
              %140 = sbr.rel target = $region36
            $region35: #{model_forward.28} parent=31 // pred_region
              // Predicated region
              $region48: #{model_forward.28} parent=35 // pred_check
                _
              $region49: #{model_forward.28} parent=35 // pred_check_branch
                %190 = sbr.rel (0) target = $region51
              $region50: #{model_forward.28} parent=35 // pred_region
                loop: start=0, step=1, limit=1
                $region52: #{model_forward.28} parent=50 // loop_pre_header
                  _
                $region53: #{model_forward.28} parent=50 // loop_header
                  %s192 = sphi 0, %s196
                  %p193 = scmp.ge.s32.totalorder %s192, 1
                  %s197 = sphi %s136, %s136
                  %s198 = sphi %s134, %s134
                $region54: #{model_forward.28} parent=50 // loop_header_branch
                  %195 = sbr.rel (%p193) target = $region58
                $region55: #{model_forward.28} parent=50 // loop_body
                  _
                $region56: #{model_forward.28} parent=50 // loop_footer
                  %s196 = sadd.s32 1, %s192
                $region57: #{model_forward.28} parent=50 // loop_footer_branch
                  %191 = sbr.rel target = $region53
                $region58: #{model_forward.28} parent=50 // loop_exit
                  _
                %s200 = ssub.s32 16, 1
                loop: start=0, step=1, limit=1
                $region59: #{model_forward.28} parent=50 // loop_pre_header
                  _
                $region60: #{model_forward.28} parent=50 // loop_header
                  %s202 = sphi 0, %s206
                  %p203 = scmp.ge.s32.totalorder %s202, 1
                  %s207 = sphi %s136, %s136
                  %s208 = sphi %s134, %s134
                $region61: #{model_forward.28} parent=50 // loop_header_branch
                  %205 = sbr.rel (%p203) target = $region65
                $region62: #{model_forward.28} parent=50 // loop_body
                  %v209 = vld [vmem:[%s207] sm:%s200]
                  %210 = vst [vmem:[%s208] sm:%s200] %v209
                  %v211 = vld [vmem:[%s207 + $0x8] sm:%s200]
                  %212 = vst [vmem:[%s208 + $0x4] sm:%s200] %v211
                  %v213 = vld [vmem:[%s207 + $0x10] sm:%s200]
                  %214 = vst [vmem:[%s208 + $0x8] sm:%s200] %v213
                  %v215 = vld [vmem:[%s207 + $0x18] sm:%s200]
                  %216 = vst [vmem:[%s208 + $0xc] sm:%s200] %v215
                  %v217 = vld [vmem:[%s207 + $0x20] sm:%s200]
                  %218 = vst [vmem:[%s208 + $0x10] sm:%s200] %v217
                  %v219 = vld [vmem:[%s207 + $0x28] sm:%s200]
                  %220 = vst [vmem:[%s208 + $0x14] sm:%s200] %v219
                  %v221 = vld [vmem:[%s207 + $0x30] sm:%s200]
                  %222 = vst [vmem:[%s208 + $0x18] sm:%s200] %v221
                  %v223 = vld [vmem:[%s207 + $0x38] sm:%s200]
                  %224 = vst [vmem:[%s208 + $0x1c] sm:%s200] %v223
                  %v225 = vld [vmem:[%s207 + $0x40] sm:%s200]
                  %226 = vst [vmem:[%s208 + $0x20] sm:%s200] %v225
                  %v227 = vld [vmem:[%s207 + $0x48] sm:%s200]
                  %228 = vst [vmem:[%s208 + $0x24] sm:%s200] %v227
                  %v229 = vld [vmem:[%s207 + $0x50] sm:%s200]
                  %230 = vst [vmem:[%s208 + $0x28] sm:%s200] %v229
                  %v231 = vld [vmem:[%s207 + $0x58] sm:%s200]
                  %232 = vst [vmem:[%s208 + $0x2c] sm:%s200] %v231
                  %v233 = vld [vmem:[%s207 + $0x60] sm:%s200]
                  %234 = vst [vmem:[%s208 + $0x30] sm:%s200] %v233
                  %v235 = vld [vmem:[%s207 + $0x68] sm:%s200]
                  %236 = vst [vmem:[%s208 + $0x34] sm:%s200] %v235
                  %v237 = vld [vmem:[%s207 + $0x70] sm:%s200]
                  %238 = vst [vmem:[%s208 + $0x38] sm:%s200] %v237
                  %v239 = vld [vmem:[%s207 + $0x78] sm:%s200]
                  %240 = vst [vmem:[%s208 + $0x3c] sm:%s200] %v239
                  %v241 = vld [vmem:[%s207 + $0x80] sm:%s200]
                  %242 = vst [vmem:[%s208 + $0x40] sm:%s200] %v241
                  %v243 = vld [vmem:[%s207 + $0x88] sm:%s200]
                  %244 = vst [vmem:[%s208 + $0x44] sm:%s200] %v243
                $region63: #{model_forward.28} parent=50 // loop_footer
                  %s206 = sadd.s32 1, %s202
                $region64: #{model_forward.28} parent=50 // loop_footer_branch
                  %201 = sbr.rel target = $region60
                $region65: #{model_forward.28} parent=50 // loop_exit
                  _
              $region51: #{model_forward.28} parent=35 // pred_fallthru
                _
            $region36: #{model_forward.28} parent=31 // pred_fallthru
              _
            // Predicated region
            $region37: #{model_forward.28} parent=31 // pred_check
              _
            $region38: #{model_forward.28} parent=31 // pred_check_branch
              %142 = sbr.rel (0) target = $region40
            $region39: #{model_forward.28} parent=31 // pred_region
              %s144 = ssub.s32 16, 1
              loop: start=0, step=1, limit=1
              $region41: #{model_forward.28} parent=39 // loop_pre_header
                _
              $region42: #{model_forward.28} parent=39 // loop_header
                %s146 = sphi 0, %s150
                %p147 = scmp.ge.s32.totalorder %s146, 1
                %s151 = sphi %s136, %s136
                %s152 = sphi %s134, %s134
              $region43: #{model_forward.28} parent=39 // loop_header_branch
                %149 = sbr.rel (%p147) target = $region47
              $region44: #{model_forward.28} parent=39 // loop_body
                %v153 = vld [vmem:[%s151] sm:%s144]
                %154 = vst [vmem:[%s152] sm:%s144] %v153
                %v155 = vld [vmem:[%s151 + $0x8] sm:%s144]
                %156 = vst [vmem:[%s152 + $0x4] sm:%s144] %v155
                %v157 = vld [vmem:[%s151 + $0x10] sm:%s144]
                %158 = vst [vmem:[%s152 + $0x8] sm:%s144] %v157
                %v159 = vld [vmem:[%s151 + $0x18] sm:%s144]
                %160 = vst [vmem:[%s152 + $0xc] sm:%s144] %v159
                %v161 = vld [vmem:[%s151 + $0x20] sm:%s144]
                %162 = vst [vmem:[%s152 + $0x10] sm:%s144] %v161
                %v163 = vld [vmem:[%s151 + $0x28] sm:%s144]
                %164 = vst [vmem:[%s152 + $0x14] sm:%s144] %v163
                %v165 = vld [vmem:[%s151 + $0x30] sm:%s144]
                %166 = vst [vmem:[%s152 + $0x18] sm:%s144] %v165
                %v167 = vld [vmem:[%s151 + $0x38] sm:%s144]
                %168 = vst [vmem:[%s152 + $0x1c] sm:%s144] %v167
                %v169 = vld [vmem:[%s151 + $0x40] sm:%s144]
                %170 = vst [vmem:[%s152 + $0x20] sm:%s144] %v169
                %v171 = vld [vmem:[%s151 + $0x48] sm:%s144]
                %172 = vst [vmem:[%s152 + $0x24] sm:%s144] %v171
                %v173 = vld [vmem:[%s151 + $0x50] sm:%s144]
                %174 = vst [vmem:[%s152 + $0x28] sm:%s144] %v173
                %v175 = vld [vmem:[%s151 + $0x58] sm:%s144]
                %176 = vst [vmem:[%s152 + $0x2c] sm:%s144] %v175
                %v177 = vld [vmem:[%s151 + $0x60] sm:%s144]
                %178 = vst [vmem:[%s152 + $0x30] sm:%s144] %v177
                %v179 = vld [vmem:[%s151 + $0x68] sm:%s144]
                %180 = vst [vmem:[%s152 + $0x34] sm:%s144] %v179
                %v181 = vld [vmem:[%s151 + $0x70] sm:%s144]
                %182 = vst [vmem:[%s152 + $0x38] sm:%s144] %v181
                %v183 = vld [vmem:[%s151 + $0x78] sm:%s144]
                %184 = vst [vmem:[%s152 + $0x3c] sm:%s144] %v183
                %v185 = vld [vmem:[%s151 + $0x80] sm:%s144]
                %186 = vst [vmem:[%s152 + $0x40] sm:%s144] %v185
                %v187 = vld [vmem:[%s151 + $0x88] sm:%s144]
                %188 = vst [vmem:[%s152 + $0x44] sm:%s144] %v187
              $region45: #{model_forward.28} parent=39 // loop_footer
                %s150 = sadd.s32 1, %s146
              $region46: #{model_forward.28} parent=39 // loop_footer_branch
                %145 = sbr.rel target = $region42
              $region47: #{model_forward.28} parent=39 // loop_exit
                _
            $region40: #{model_forward.28} parent=31 // pred_fallthru
              _
          $region32: #{model_forward.28} parent=27 // pred_fallthru
            _
          %245 = vnop
        $region28: #{model_forward.28} parent=23 // pred_fallthru
          _
      $region24: #{model_forward.28} parent=5 // pred_fallthru
        _
      %p246 = scmp.le.s32.totalorder 1, %s9
      %p247 = scmp.lt.s32.totalorder %s9, 3
      %p248 = pnand %p246, %p247
      %p249 = pneg %p248
      // Predicated region
      $region66: #{model_forward.28} parent=5 // pred_check
        _
      $region67: #{model_forward.28} parent=5 // pred_check_branch
        %251 = sbr.rel (%p248) target = $region69
      $region68: #{model_forward.28} parent=5 // pred_region
        %s252 = ssub.s32 %s9, 1
        %s253 = sand.u32 %s43, 1
        %s254 = sand.u32 %s43, 1
        %s255 = smul.addr %s254, 72
        %s256 = scalar_lea.vmem [#allocation2], %s255
        // Predicated region
        $region70: #{model_forward.28} parent=68 // pred_check
          %p257 = pneg %p56
        $region71: #{model_forward.28} parent=68 // pred_check_branch
          %259 = sbr.rel (%p257) target = $region73
        $region72: #{model_forward.28} parent=68 // pred_region
          _
        $region73: #{model_forward.28} parent=68 // pred_fallthru
          _
        %p260 = pneg %p30
        %p261 = pneg %p27
        %s262 = sand.u32 %s43, 1
        %s263 = sand.u32 %s43, 1
        %s264 = smul.addr %s263, 72
        %s265 = scalar_lea.vmem [#allocation2], %s264
        %p266 = pneg %p56
        %p267 = pneg %p53
        %p268 = pneg %p77
        %p269 = pneg %p74
        %p270 = pneg %p103
        %p271 = pneg %p100
        %s272 = sand.u32 %s90, 1
        %s273 = sand.u32 %s90, 1
        %s274 = smul.addr %s273, 8
        %s275 = scalar_lea.vmem [#allocation3], %s274
        %v277 = vld [vmem:[%s0] sm:$0xff]
        %v278 = vld [vmem:[%s0 + $0x8] sm:$0xff]
        %v279 = vld [vmem:[%s256] sm:$0xf]
        %v280 = vld [vmem:[%s256 + $0x4] sm:$0xf]
        %v281 = vld [vmem:[%s256 + $0x8] sm:$0xf]
        %v282 = vld [vmem:[%s256 + $0xc] sm:$0xf]
        %v283 = vld [vmem:[%s256 + $0x10] sm:$0xf]
        %v284 = vld [vmem:[%s256 + $0x14] sm:$0xf]
        %v285 = vld [vmem:[%s256 + $0x18] sm:$0xf]
        %v286 = vld [vmem:[%s256 + $0x1c] sm:$0xf]
        %v287 = vld [vmem:[%s256 + $0x20] sm:$0xf]
        %v288 = vld [vmem:[%s256 + $0x24] sm:$0xf]
        %v289 = vld [vmem:[%s256 + $0x28] sm:$0xf]
        %v290 = vld [vmem:[%s256 + $0x2c] sm:$0xf]
        %v291 = vld [vmem:[%s256 + $0x30] sm:$0xf]
        %v292 = vld [vmem:[%s256 + $0x34] sm:$0xf]
        %v293 = vld [vmem:[%s256 + $0x38] sm:$0xf]
        %v294 = vld [vmem:[%s256 + $0x3c] sm:$0xf]
        %v295 = vld [vmem:[%s256 + $0x40] sm:$0xf]
        %v296 = vld [vmem:[%s256 + $0x44] sm:$0xf]
        %v297 = vld [vmem:[%s2] sm:$0xff]
        %v298 = vld [vmem:[%s2 + $0x8] sm:$0xff]
        %300 = vset.pattern.permute.xlu0 0
        %301 = vperm.xlu0 %300, %v297
        %v302 = vpop.permute.xlu0 %301
        %305 = vset.pattern.permute.xlu0 0
        %306 = vperm.xlu0 %305, %v298
        %v307 = vpop.permute.xlu0 %306
        %v311 = vunpack.c.l.b16 %v277
        %v312 = vunpack.c.h.b16 %v277
        %v313 = vunpack.c.l.b16 %v278
        %v314 = vunpack.c.h.b16 %v278
        %v315 = vpack.c.b16 %v313, %v311
        %v316 = vpack.c.b16 %v314, %v312
        %v336 = vunpack.c.l.b16 %v279
        %v337 = vunpack.c.l.b16 %v280
        %v338 = vunpack.c.l.b16 %v281
        %v339 = vunpack.c.l.b16 %v282
        %v340 = vunpack.c.l.b16 %v283
        %v341 = vunpack.c.l.b16 %v284
        %v342 = vunpack.c.l.b16 %v285
        %v343 = vunpack.c.l.b16 %v286
        %v344 = vunpack.c.l.b16 %v287
        %v345 = vunpack.c.l.b16 %v288
        %v346 = vunpack.c.l.b16 %v289
        %v347 = vunpack.c.l.b16 %v290
        %v348 = vunpack.c.l.b16 %v291
        %v349 = vunpack.c.l.b16 %v292
        %v350 = vunpack.c.l.b16 %v293
        %v351 = vunpack.c.l.b16 %v294
        %v352 = vunpack.c.l.b16 %v295
        %v353 = vunpack.c.l.b16 %v296
        %v354 = vpack.c.b16 %v337, %v336
        %v355 = vpack.c.b16 %v339, %v338
        %v356 = vpack.c.b16 %v341, %v340
        %v357 = vpack.c.b16 %v343, %v342
        %v358 = vpack.c.b16 %v345, %v344
        %v359 = vpack.c.b16 %v347, %v346
        %v360 = vpack.c.b16 %v349, %v348
        %v361 = vpack.c.b16 %v351, %v350
        %v362 = vpack.c.b16 %v353, %v352
        %vm372 = vcmask 130048
        %v374 = vsel %vm372, %v316, 0
        %376 = vmatpush.bf16.msra.mxu0 %v361
        %377 = vmatpush.bf16.msra.mxu0 %v360
        %378 = vmatpush.bf16.msra.mxu0 %v359
        %379 = vmatpush.bf16.msra.mxu0 %v358
        %380 = vmatpush.bf16.msra.mxu0 %v357
        %381 = vmatpush.bf16.msra.mxu0 %v356
        %382 = vmatpush.bf16.msra.mxu0 %v355
        %383 = vmatpush.bf16.msra.mxu0 %v354
        %384 = vmatmul.bf16.gmra.mxu0 %v315
        %v385 = vpop.f32.mrf.mxu0
        %v386 = vadd.f32 %v302, %v385
        %v387 = vpop.f32.mrf.mxu0
        %v388 = vadd.f32 %v307, %v387
        %389 = vdwg.mxu0
        %390 = vmatpush.bf16.msra.mxu0 0
        %391 = vmatpush.bf16.msra.mxu0 0
        %392 = vmatpush.bf16.msra.mxu0 0
        %393 = vmatpush.bf16.msra.mxu0 0
        %394 = vmatpush.bf16.msra.mxu0 0
        %395 = vmatpush.bf16.msra.mxu0 0
        %396 = vmatpush.bf16.msra.mxu0 0
        %397 = vmatpush.bf16.msra.mxu0 %v362
        %398 = vmatmul.bf16.gmra.mxu0 %v374
        %v399 = vpop.f32.mrf.mxu0
        %v400 = vadd.f32 %v386, %v399
        %v401 = vpop.f32.mrf.mxu0
        %v402 = vadd.f32 %v388, %v401
        %403 = vdwg.mxu0
        %v404 = vmax.f32 %v400, 0.0
        %v405 = vmax.f32 %v402, 0.0
        %v406 = vpack.c.bf16 %v404, %v404
        %v407 = vpack.c.bf16 %v405, %v405
        %408 = vst [vmem:[%s275] sm:$0xf] %v406
        %409 = vst [vmem:[%s275 + $0x4] sm:$0xf] %v407
        %s410 = sand.u32 %s90, 1
        %s411 = sand.u32 %s90, 1
        %s412 = smul.addr %s411, 8
        %s413 = scalar_lea.vmem [#allocation3], %s412
        // Predicated region
        $region74: #{model_forward.28} parent=68 // pred_check
          %p414 = pneg %p100
        $region75: #{model_forward.28} parent=68 // pred_check_branch
          %416 = sbr.rel (%p414) target = $region77
        $region76: #{model_forward.28} parent=68 // pred_region
          %s417 = smul.addr %s14, 4
          %s418 = scalar_lea.vmem %s3, %s417
          // Predicated region
          $region78: #{model_forward.28} parent=76 // pred_check
            _
          $region79: #{model_forward.28} parent=76 // pred_check_branch
            %420 = sbr.rel (0) target = $region81
          $region80: #{model_forward.28} parent=76 // pred_region
            // Predicated region
            $region82: #{model_forward.28} parent=80 // pred_check
              _
            $region83: #{model_forward.28} parent=80 // pred_check_branch
              %422 = sbr.rel target = $region85
            $region84: #{model_forward.28} parent=80 // pred_region
              // Predicated region
              $region97: #{model_forward.28} parent=84 // pred_check
                _
              $region98: #{model_forward.28} parent=84 // pred_check_branch
                %440 = sbr.rel (0) target = $region100
              $region99: #{model_forward.28} parent=84 // pred_region
                loop: start=0, step=1, limit=1
                $region101: #{model_forward.28} parent=99 // loop_pre_header
                  _
                $region102: #{model_forward.28} parent=99 // loop_header
                  %s442 = sphi 0, %s446
                  %p443 = scmp.ge.s32.totalorder %s442, 1
                  %s447 = sphi %s413, %s413
                  %s448 = sphi %s418, %s418
                $region103: #{model_forward.28} parent=99 // loop_header_branch
                  %445 = sbr.rel (%p443) target = $region107
                $region104: #{model_forward.28} parent=99 // loop_body
                  _
                $region105: #{model_forward.28} parent=99 // loop_footer
                  %s446 = sadd.s32 1, %s442
                $region106: #{model_forward.28} parent=99 // loop_footer_branch
                  %441 = sbr.rel target = $region102
                $region107: #{model_forward.28} parent=99 // loop_exit
                  _
                %s450 = ssub.s32 16, 1
                loop: start=0, step=1, limit=1
                $region108: #{model_forward.28} parent=99 // loop_pre_header
                  _
                $region109: #{model_forward.28} parent=99 // loop_header
                  %s452 = sphi 0, %s456
                  %p453 = scmp.ge.s32.totalorder %s452, 1
                  %s457 = sphi %s413, %s413
                  %s458 = sphi %s418, %s418
                $region110: #{model_forward.28} parent=99 // loop_header_branch
                  %455 = sbr.rel (%p453) target = $region114
                $region111: #{model_forward.28} parent=99 // loop_body
                  %v459 = vld [vmem:[%s457] sm:%s450]
                  %460 = vst [vmem:[%s458] sm:%s450] %v459
                  %v461 = vld [vmem:[%s457 + $0x4] sm:%s450]
                  %462 = vst [vmem:[%s458 + $0x8] sm:%s450] %v461
                $region112: #{model_forward.28} parent=99 // loop_footer
                  %s456 = sadd.s32 1, %s452
                $region113: #{model_forward.28} parent=99 // loop_footer_branch
                  %451 = sbr.rel target = $region109
                $region114: #{model_forward.28} parent=99 // loop_exit
                  _
              $region100: #{model_forward.28} parent=84 // pred_fallthru
                _
            $region85: #{model_forward.28} parent=80 // pred_fallthru
              _
            // Predicated region
            $region86: #{model_forward.28} parent=80 // pred_check
              _
            $region87: #{model_forward.28} parent=80 // pred_check_branch
              %424 = sbr.rel (0) target = $region89
            $region88: #{model_forward.28} parent=80 // pred_region
              %s426 = ssub.s32 16, 1
              loop: start=0, step=1, limit=1
              $region90: #{model_forward.28} parent=88 // loop_pre_header
                _
              $region91: #{model_forward.28} parent=88 // loop_header
                %s428 = sphi 0, %s432
                %p429 = scmp.ge.s32.totalorder %s428, 1
                %s433 = sphi %s413, %s413
                %s434 = sphi %s418, %s418
              $region92: #{model_forward.28} parent=88 // loop_header_branch
                %431 = sbr.rel (%p429) target = $region96
              $region93: #{model_forward.28} parent=88 // loop_body
                %v435 = vld [vmem:[%s433] sm:%s426]
                %436 = vst [vmem:[%s434] sm:%s426] %v435
                %v437 = vld [vmem:[%s433 + $0x4] sm:%s426]
                %438 = vst [vmem:[%s434 + $0x8] sm:%s426] %v437
              $region94: #{model_forward.28} parent=88 // loop_footer
                %s432 = sadd.s32 1, %s428
              $region95: #{model_forward.28} parent=88 // loop_footer_branch
                %427 = sbr.rel target = $region91
              $region96: #{model_forward.28} parent=88 // loop_exit
                _
            $region89: #{model_forward.28} parent=80 // pred_fallthru
              _
          $region81: #{model_forward.28} parent=76 // pred_fallthru
            _
          %463 = vnop
        $region77: #{model_forward.28} parent=68 // pred_fallthru
          _
      $region69: #{model_forward.28} parent=5 // pred_fallthru
        _
      %p464 = scmp.le.s32.totalorder 2, %s9
      // Predicated region
      $region115: #{model_forward.28} parent=5 // pred_check
        %p465 = pneg %p464
      $region116: #{model_forward.28} parent=5 // pred_check_branch
        %467 = sbr.rel (%p465) target = $region118
      $region117: #{model_forward.28} parent=5 // pred_region
        %s468 = ssub.s32 %s9, 2
        // Predicated region
        $region119: #{model_forward.28} parent=117 // pred_check
          %p469 = pneg %p106
        $region120: #{model_forward.28} parent=117 // pred_check_branch
          %471 = sbr.rel (%p469) target = $region122
        $region121: #{model_forward.28} parent=117 // pred_region
          %s472 = sand.u32 %s91, 1
          %s473 = sand.u32 %s91, 1
          %s474 = smul.addr %s473, 8
          %s475 = scalar_lea.vmem [#allocation3], %s474
        $region122: #{model_forward.28} parent=117 // pred_fallthru
          _
      $region118: #{model_forward.28} parent=5 // pred_fallthru
        _
    $region6: #{model_forward.28} parent=1 // loop_footer
      %s13 = sadd.s32 1, %s9
    $region7: #{model_forward.28} parent=1 // loop_footer_branch
      %8 = sbr.rel target = $region3
    $region8: #{model_forward.28} parent=1 // loop_exit
      _

// kernel: model_forward.29
$region0: #{model_forward.29}
  #allocation0 [shape = 'u32[]', space=smem, size = 0x4, offset = 0x4, fixed_abs, tag = 'smem constant byte address 0x4 - core index']
  #allocation1 [shape = 'u32[72,128]{1,0:T(1,128)}', space=vmem, size = 0x9000, scoped, tag = 'internal scratch']
  %s0 = inlined_call_operand.vmem [shape: bf16[24,144], index: 0, kind: input, shape index: {}]
  %s1 = inlined_call_operand.vmem [shape: bf16[144,64], index: 1, kind: input, shape index: {}]
  %s2 = inlined_call_operand.vmem [shape: f32[24,1], index: 2, kind: input, shape index: {}]
  %s3 = inlined_call_operand.vmem [shape: bf16[24,64], index: 3, kind: output, shape index: {}]
  %s4 = sld [smem:[#allocation0]]
  $region22: #{model_forward.29} parent=0
    _
  %s6 = ssub.s32 1, %s4
  %s7 = scalar_select 0, %s6, %s4
  // Predicated region
  $region2: #{model_forward.29} parent=0 // pred_check
    _
  $region3: #{model_forward.29} parent=0 // pred_check_branch
    %9 = sbr.rel (0) target = $region5
  $region4: #{model_forward.29} parent=0 // pred_region
    _
  $region5: #{model_forward.29} parent=0 // pred_fallthru
    _
  // Predicated region
  $region6: #{model_forward.29} parent=0 // pred_check
    _
  $region7: #{model_forward.29} parent=0 // pred_check_branch
    %11 = sbr.rel (0) target = $region9
  $region8: #{model_forward.29} parent=0 // pred_region
    _
  $region9: #{model_forward.29} parent=0 // pred_fallthru
    _
  // Predicated region
  $region10: #{model_forward.29} parent=0 // pred_check
    _
  $region11: #{model_forward.29} parent=0 // pred_check_branch
    %13 = sbr.rel (0) target = $region13
  $region12: #{model_forward.29} parent=0 // pred_region
    _
  $region13: #{model_forward.29} parent=0 // pred_fallthru
    _
  %v15 = vld [vmem:[%s0] sm:$0xff]
  %v16 = vld [vmem:[%s0 + $0x8] sm:$0xff]
  %v17 = vld [vmem:[%s0 + $0x10] sm:$0xff]
  %v18 = vld [vmem:[%s1] sm:$0xf]
  %v19 = vld [vmem:[%s1 + $0x4] sm:$0xf]
  %v20 = vld [vmem:[%s1 + $0x8] sm:$0xf]
  %v21 = vld [vmem:[%s1 + $0xc] sm:$0xf]
  %v22 = vld [vmem:[%s1 + $0x10] sm:$0xf]
  %v23 = vld [vmem:[%s1 + $0x14] sm:$0xf]
  %v24 = vld [vmem:[%s1 + $0x18] sm:$0xf]
  %v25 = vld [vmem:[%s1 + $0x1c] sm:$0xf]
  %v26 = vld [vmem:[%s1 + $0x20] sm:$0xf]
  %v27 = vld [vmem:[%s1 + $0x24] sm:$0xf]
  %v28 = vld [vmem:[%s1 + $0x28] sm:$0xf]
  %v29 = vld [vmem:[%s1 + $0x2c] sm:$0xf]
  %v30 = vld [vmem:[%s1 + $0x30] sm:$0xf]
  %v31 = vld [vmem:[%s1 + $0x34] sm:$0xf]
  %v32 = vld [vmem:[%s1 + $0x38] sm:$0xf]
  %v33 = vld [vmem:[%s1 + $0x3c] sm:$0xf]
  %v34 = vld [vmem:[%s1 + $0x40] sm:$0xf]
  %v35 = vld [vmem:[%s1 + $0x44] sm:$0xf]
  %v36 = vld [vmem:[%s2] sm:$0xff]
  %v37 = vld [vmem:[%s2 + $0x8] sm:$0xff]
  %v38 = vld [vmem:[%s2 + $0x10] sm:$0xff]
  %40 = vset.pattern.permute.xlu0 0
  %41 = vperm.xlu0 %40, %v36
  %v42 = vpop.permute.xlu0 %41
  %45 = vset.pattern.permute.xlu0 0
  %46 = vperm.xlu0 %45, %v37
  %v47 = vpop.permute.xlu0 %46
  %50 = vset.pattern.permute.xlu0 0
  %51 = vperm.xlu0 %50, %v38
  %v52 = vpop.permute.xlu0 %51
  %v57 = vunpack.c.l.b16 %v15
  %v58 = vunpack.c.h.b16 %v15
  %v59 = vunpack.c.l.b16 %v16
  %v60 = vunpack.c.h.b16 %v16
  %v61 = vunpack.c.l.b16 %v17
  %v62 = vunpack.c.h.b16 %v17
  %v63 = vpack.c.b16 %v59, %v57
  %v64 = vpack.c.b16 %v60, %v58
  %v65 = vpack.c.b16 %v61, %v61
  %v66 = vpack.c.b16 %v62, %v62
  %v87 = vunpack.c.l.b16 %v18
  %v88 = vunpack.c.l.b16 %v19
  %v89 = vunpack.c.l.b16 %v20
  %v90 = vunpack.c.l.b16 %v21
  %v91 = vunpack.c.l.b16 %v22
  %v92 = vunpack.c.l.b16 %v23
  %v93 = vunpack.c.l.b16 %v24
  %v94 = vunpack.c.l.b16 %v25
  %v95 = vunpack.c.l.b16 %v26
  %v96 = vunpack.c.l.b16 %v27
  %v97 = vunpack.c.l.b16 %v28
  %v98 = vunpack.c.l.b16 %v29
  %v99 = vunpack.c.l.b16 %v30
  %v100 = vunpack.c.l.b16 %v31
  %v101 = vunpack.c.l.b16 %v32
  %v102 = vunpack.c.l.b16 %v33
  %v103 = vunpack.c.l.b16 %v34
  %v104 = vunpack.c.l.b16 %v35
  %v105 = vpack.c.b16 %v88, %v87
  %v106 = vpack.c.b16 %v90, %v89
  %v107 = vpack.c.b16 %v92, %v91
  %v108 = vpack.c.b16 %v94, %v93
  %v109 = vpack.c.b16 %v96, %v95
  %v110 = vpack.c.b16 %v98, %v97
  %v111 = vpack.c.b16 %v100, %v99
  %v112 = vpack.c.b16 %v102, %v101
  %v113 = vpack.c.b16 %v104, %v103
  %vm123 = vcmask 130048
  %v125 = vsel %vm123, %v64, 0
  %v128 = vsel %vm123, %v66, 0
  %130 = vmatpush.bf16.msra.mxu0 %v112
  %131 = vmatpush.bf16.msra.mxu0 %v111
  %132 = vmatpush.bf16.msra.mxu0 %v110
  %133 = vmatpush.bf16.msra.mxu0 %v109
  %134 = vmatpush.bf16.msra.mxu0 %v108
  %135 = vmatpush.bf16.msra.mxu0 %v107
  %136 = vmatpush.bf16.msra.mxu0 %v106
  %137 = vmatpush.bf16.msra.mxu0 %v105
  %138 = vmatmul.bf16.gmra.mxu0 %v63
  %v139 = vpop.f32.mrf.mxu0
  %v140 = vadd.f32 %v42, %v139
  %v141 = vpop.f32.mrf.mxu0
  %v142 = vadd.f32 %v47, %v141
  %143 = vmatmul.bf16.gmra.mxu0 %v65
  %v144 = vpop.f32.mrf.mxu0
  %v145 = vadd.f32 %v52, %v144
  %v146 = vpop.f32.mrf.mxu0
  %147 = vdwg.mxu0
  %148 = vmatpush.bf16.msra.mxu0 0
  %149 = vmatpush.bf16.msra.mxu0 0
  %150 = vmatpush.bf16.msra.mxu0 0
  %151 = vmatpush.bf16.msra.mxu0 0
  %152 = vmatpush.bf16.msra.mxu0 0
  %153 = vmatpush.bf16.msra.mxu0 0
  %154 = vmatpush.bf16.msra.mxu0 0
  %155 = vmatpush.bf16.msra.mxu0 %v113
  %156 = vmatmul.bf16.gmra.mxu0 %v125
  %v157 = vpop.f32.mrf.mxu0
  %v158 = vadd.f32 %v140, %v157
  %v159 = vpop.f32.mrf.mxu0
  %v160 = vadd.f32 %v142, %v159
  %161 = vmatmul.bf16.gmra.mxu0 %v128
  %v162 = vpop.f32.mrf.mxu0
  %v163 = vadd.f32 %v145, %v162
  %v164 = vpop.f32.mrf.mxu0
  %165 = vdwg.mxu0
  %v166 = vmax.f32 %v158, 0.0
  %v167 = vmax.f32 %v160, 0.0
  %v168 = vmax.f32 %v163, 0.0
  %v169 = vpack.c.bf16 %v166, %v166
  %v170 = vpack.c.bf16 %v167, %v167
  %v171 = vpack.c.bf16 %v168, %v168
  %vm172 = vcmask 519168
  %173 = vst.msk [vmem:[%s3] sm:$0xf] %vm172, %v169
  %174 = vst.msk [vmem:[%s3 + $0x4] sm:$0xf] %vm172, %v170
  %175 = vst.msk [vmem:[%s3 + $0x8] sm:$0xf] %vm172, %v171
  // Predicated region
  $region14: #{model_forward.29} parent=0 // pred_check
    _
  $region15: #{model_forward.29} parent=0 // pred_check_branch
    %177 = sbr.rel (0) target = $region17
  $region16: #{model_forward.29} parent=0 // pred_region
    _
  $region17: #{model_forward.29} parent=0 // pred_fallthru
    _
  // Predicated region
  $region18: #{model_forward.29} parent=0 // pred_check
    _
  $region19: #{model_forward.29} parent=0 // pred_check_branch
    %179 = sbr.rel (0) target = $region21
  $region20: #{model_forward.29} parent=0 // pred_region
    _
  $region21: #{model_forward.29} parent=0 // pred_fallthru
    _

// kernel: model_forward.30
$region0: #{model_forward.30}
  #allocation0 [shape = 'u32[]', space=smem, size = 0x4, offset = 0x4, fixed_abs, tag = 'smem constant byte address 0x4 - core index']
  #allocation1 [shape = 'u32[72,128]{1,0:T(1,128)}', space=vmem, size = 0x9000, scoped, tag = 'internal scratch']
  %s0 = inlined_call_operand.vmem [shape: bf16[24,216], index: 0, kind: input, shape index: {}]
  %s1 = inlined_call_operand.vmem [shape: bf16[216,64], index: 1, kind: input, shape index: {}]
  %s2 = inlined_call_operand.vmem [shape: f32[24,1], index: 2, kind: input, shape index: {}]
  %s3 = inlined_call_operand.vmem [shape: bf16[24,64], index: 3, kind: output, shape index: {}]
  %s4 = sld [smem:[#allocation0]]
  $region22: #{model_forward.30} parent=0
    _
  %s6 = ssub.s32 1, %s4
  %s7 = scalar_select 0, %s6, %s4
  // Predicated region
  $region2: #{model_forward.30} parent=0 // pred_check
    _
  $region3: #{model_forward.30} parent=0 // pred_check_branch
    %9 = sbr.rel (0) target = $region5
  $region4: #{model_forward.30} parent=0 // pred_region
    _
  $region5: #{model_forward.30} parent=0 // pred_fallthru
    _
  // Predicated region
  $region6: #{model_forward.30} parent=0 // pred_check
    _
  $region7: #{model_forward.30} parent=0 // pred_check_branch
    %11 = sbr.rel (0) target = $region9
  $region8: #{model_forward.30} parent=0 // pred_region
    _
  $region9: #{model_forward.30} parent=0 // pred_fallthru
    _
  // Predicated region
  $region10: #{model_forward.30} parent=0 // pred_check
    _
  $region11: #{model_forward.30} parent=0 // pred_check_branch
    %13 = sbr.rel (0) target = $region13
  $region12: #{model_forward.30} parent=0 // pred_region
    _
  $region13: #{model_forward.30} parent=0 // pred_fallthru
    _
  %v15 = vld [vmem:[%s0] sm:$0xff]
  %v16 = vld [vmem:[%s0 + $0x8] sm:$0xff]
  %v17 = vld [vmem:[%s0 + $0x10] sm:$0xff]
  %v18 = vld [vmem:[%s1] sm:$0xf]
  %v19 = vld [vmem:[%s1 + $0x4] sm:$0xf]
  %v20 = vld [vmem:[%s1 + $0x8] sm:$0xf]
  %v21 = vld [vmem:[%s1 + $0xc] sm:$0xf]
  %v22 = vld [vmem:[%s1 + $0x10] sm:$0xf]
  %v23 = vld [vmem:[%s1 + $0x14] sm:$0xf]
  %v24 = vld [vmem:[%s1 + $0x18] sm:$0xf]
  %v25 = vld [vmem:[%s1 + $0x1c] sm:$0xf]
  %v26 = vld [vmem:[%s1 + $0x20] sm:$0xf]
  %v27 = vld [vmem:[%s1 + $0x24] sm:$0xf]
  %v28 = vld [vmem:[%s1 + $0x28] sm:$0xf]
  %v29 = vld [vmem:[%s1 + $0x2c] sm:$0xf]
  %v30 = vld [vmem:[%s1 + $0x30] sm:$0xf]
  %v31 = vld [vmem:[%s1 + $0x34] sm:$0xf]
  %v32 = vld [vmem:[%s1 + $0x38] sm:$0xf]
  %v33 = vld [vmem:[%s1 + $0x3c] sm:$0xf]
  %v34 = vld [vmem:[%s1 + $0x40] sm:$0xf]
  %v35 = vld [vmem:[%s1 + $0x44] sm:$0xf]
  %v36 = vld [vmem:[%s1 + $0x48] sm:$0xf]
  %v37 = vld [vmem:[%s1 + $0x4c] sm:$0xf]
  %v38 = vld [vmem:[%s1 + $0x50] sm:$0xf]
  %v39 = vld [vmem:[%s1 + $0x54] sm:$0xf]
  %v40 = vld [vmem:[%s1 + $0x58] sm:$0xf]
  %v41 = vld [vmem:[%s1 + $0x5c] sm:$0xf]
  %v42 = vld [vmem:[%s1 + $0x60] sm:$0xf]
  %v43 = vld [vmem:[%s1 + $0x64] sm:$0xf]
  %v44 = vld [vmem:[%s1 + $0x68] sm:$0xf]
  %v45 = vld [vmem:[%s2] sm:$0xff]
  %v46 = vld [vmem:[%s2 + $0x8] sm:$0xff]
  %v47 = vld [vmem:[%s2 + $0x10] sm:$0xff]
  %49 = vset.pattern.permute.xlu0 0
  %50 = vperm.xlu0 %49, %v45
  %v51 = vpop.permute.xlu0 %50
  %54 = vset.pattern.permute.xlu0 0
  %55 = vperm.xlu0 %54, %v46
  %v56 = vpop.permute.xlu0 %55
  %59 = vset.pattern.permute.xlu0 0
  %60 = vperm.xlu0 %59, %v47
  %v61 = vpop.permute.xlu0 %60
  %v66 = vunpack.c.l.b16 %v15
  %v67 = vunpack.c.h.b16 %v15
  %v68 = vunpack.c.l.b16 %v16
  %v69 = vunpack.c.h.b16 %v16
  %v70 = vunpack.c.l.b16 %v17
  %v71 = vunpack.c.h.b16 %v17
  %v72 = vpack.c.b16 %v68, %v66
  %v73 = vpack.c.b16 %v69, %v67
  %v74 = vpack.c.b16 %v70, %v70
  %v75 = vpack.c.b16 %v71, %v71
  %v105 = vunpack.c.l.b16 %v18
  %v106 = vunpack.c.l.b16 %v19
  %v107 = vunpack.c.l.b16 %v20
  %v108 = vunpack.c.l.b16 %v21
  %v109 = vunpack.c.l.b16 %v22
  %v110 = vunpack.c.l.b16 %v23
  %v111 = vunpack.c.l.b16 %v24
  %v112 = vunpack.c.l.b16 %v25
  %v113 = vunpack.c.l.b16 %v26
  %v114 = vunpack.c.l.b16 %v27
  %v115 = vunpack.c.l.b16 %v28
  %v116 = vunpack.c.l.b16 %v29
  %v117 = vunpack.c.l.b16 %v30
  %v118 = vunpack.c.l.b16 %v31
  %v119 = vunpack.c.l.b16 %v32
  %v120 = vunpack.c.l.b16 %v33
  %v121 = vunpack.c.l.b16 %v34
  %v122 = vunpack.c.l.b16 %v35
  %v123 = vunpack.c.l.b16 %v36
  %v124 = vunpack.c.l.b16 %v37
  %v125 = vunpack.c.l.b16 %v38
  %v126 = vunpack.c.l.b16 %v39
  %v127 = vunpack.c.l.b16 %v40
  %v128 = vunpack.c.l.b16 %v41
  %v129 = vunpack.c.l.b16 %v42
  %v130 = vunpack.c.l.b16 %v43
  %v131 = vunpack.c.l.b16 %v44
  %v132 = vpack.c.b16 %v106, %v105
  %v133 = vpack.c.b16 %v108, %v107
  %v134 = vpack.c.b16 %v110, %v109
  %v135 = vpack.c.b16 %v112, %v111
  %v136 = vpack.c.b16 %v114, %v113
  %v137 = vpack.c.b16 %v116, %v115
  %v138 = vpack.c.b16 %v118, %v117
  %v139 = vpack.c.b16 %v120, %v119
  %v140 = vpack.c.b16 %v122, %v121
  %v141 = vpack.c.b16 %v124, %v123
  %v142 = vpack.c.b16 %v126, %v125
  %v143 = vpack.c.b16 %v128, %v127
  %v144 = vpack.c.b16 %v130, %v129
  %v145 = vpack.c.b16 %v131, %v131
  %vm159 = vcmask 719872
  %v161 = vsel %vm159, %v73, 0
  %v164 = vsel %vm159, %v75, 0
  %vm166 = vcmask 1043456
  %v168 = vsel %vm166, %v145, 0
  %170 = vmatpush.bf16.msra.mxu0 %v139
  %171 = vmatpush.bf16.msra.mxu0 %v138
  %172 = vmatpush.bf16.msra.mxu0 %v137
  %173 = vmatpush.bf16.msra.mxu0 %v136
  %174 = vmatpush.bf16.msra.mxu0 %v135
  %175 = vmatpush.bf16.msra.mxu0 %v134
  %176 = vmatpush.bf16.msra.mxu0 %v133
  %177 = vmatpush.bf16.msra.mxu0 %v132
  %178 = vmatmul.bf16.gmra.mxu0 %v72
  %v179 = vpop.f32.mrf.mxu0
  %v180 = vadd.f32 %v51, %v179
  %v181 = vpop.f32.mrf.mxu0
  %v182 = vadd.f32 %v56, %v181
  %183 = vmatmul.bf16.gmra.mxu0 %v74
  %v184 = vpop.f32.mrf.mxu0
  %v185 = vadd.f32 %v61, %v184
  %v186 = vpop.f32.mrf.mxu0
  %187 = vdwg.mxu0
  %188 = vmatpush.bf16.msra.mxu0 0
  %189 = vmatpush.bf16.msra.mxu0 0
  %190 = vmatpush.bf16.msra.mxu0 %v168
  %191 = vmatpush.bf16.msra.mxu0 %v144
  %192 = vmatpush.bf16.msra.mxu0 %v143
  %193 = vmatpush.bf16.msra.mxu0 %v142
  %194 = vmatpush.bf16.msra.mxu0 %v141
  %195 = vmatpush.bf16.msra.mxu0 %v140
  %196 = vmatmul.bf16.gmra.mxu0 %v161
  %v197 = vpop.f32.mrf.mxu0
  %v198 = vadd.f32 %v180, %v197
  %v199 = vpop.f32.mrf.mxu0
  %v200 = vadd.f32 %v182, %v199
  %201 = vmatmul.bf16.gmra.mxu0 %v164
  %v202 = vpop.f32.mrf.mxu0
  %v203 = vadd.f32 %v185, %v202
  %v204 = vpop.f32.mrf.mxu0
  %205 = vdwg.mxu0
  %v206 = vmax.f32 %v198, 0.0
  %v207 = vmax.f32 %v200, 0.0
  %v208 = vmax.f32 %v203, 0.0
  %v209 = vpack.c.bf16 %v206, %v206
  %v210 = vpack.c.bf16 %v207, %v207
  %v211 = vpack.c.bf16 %v208, %v208
  %vm212 = vcmask 519168
  %213 = vst.msk [vmem:[%s3] sm:$0xf] %vm212, %v209
  %214 = vst.msk [vmem:[%s3 + $0x4] sm:$0xf] %vm212, %v210
  %215 = vst.msk [vmem:[%s3 + $0x8] sm:$0xf] %vm212, %v211
  // Predicated region
  $region14: #{model_forward.30} parent=0 // pred_check
    _
  $region15: #{model_forward.30} parent=0 // pred_check_branch
    %217 = sbr.rel (0) target = $region17
  $region16: #{model_forward.30} parent=0 // pred_region
    _
  $region17: #{model_forward.30} parent=0 // pred_fallthru
    _
  // Predicated region
  $region18: #{model_forward.30} parent=0 // pred_check
    _
  $region19: #{model_forward.30} parent=0 // pred_check_branch
    %219 = sbr.rel (0) target = $region21
  $region20: #{model_forward.30} parent=0 // pred_region
    _
  $region21: #{model_forward.30} parent=0 // pred_fallthru
    _

// kernel: model_forward.31
$region0: #{model_forward.31}
  #allocation0 [shape = 'u32[]', space=smem, size = 0x4, offset = 0x4, fixed_abs, tag = 'smem constant byte address 0x4 - core index']
  #allocation1 [shape = 'u32[72,128]{1,0:T(1,128)}', space=vmem, size = 0x9000, scoped, tag = 'internal scratch']
  %s0 = inlined_call_operand.vmem [shape: bf16[32,216], index: 0, kind: input, shape index: {}]
  %s1 = inlined_call_operand.vmem [shape: bf16[216,16], index: 1, kind: input, shape index: {}]
  %s2 = inlined_call_operand.vmem [shape: f32[32,1], index: 2, kind: input, shape index: {}]
  %s3 = inlined_call_operand.vmem [shape: bf16[32,16], index: 3, kind: output, shape index: {}]
  %s4 = sld [smem:[#allocation0]]
  $region22: #{model_forward.31} parent=0
    _
  %s6 = ssub.s32 1, %s4
  %s7 = scalar_select 0, %s6, %s4
  // Predicated region
  $region2: #{model_forward.31} parent=0 // pred_check
    _
  $region3: #{model_forward.31} parent=0 // pred_check_branch
    %9 = sbr.rel (0) target = $region5
  $region4: #{model_forward.31} parent=0 // pred_region
    _
  $region5: #{model_forward.31} parent=0 // pred_fallthru
    _
  // Predicated region
  $region6: #{model_forward.31} parent=0 // pred_check
    _
  $region7: #{model_forward.31} parent=0 // pred_check_branch
    %11 = sbr.rel (0) target = $region9
  $region8: #{model_forward.31} parent=0 // pred_region
    _
  $region9: #{model_forward.31} parent=0 // pred_fallthru
    _
  // Predicated region
  $region10: #{model_forward.31} parent=0 // pred_check
    _
  $region11: #{model_forward.31} parent=0 // pred_check_branch
    %13 = sbr.rel (0) target = $region13
  $region12: #{model_forward.31} parent=0 // pred_region
    _
  $region13: #{model_forward.31} parent=0 // pred_fallthru
    _
  %v15 = vld [vmem:[%s0] sm:$0xff]
  %v16 = vld [vmem:[%s0 + $0x8] sm:$0xff]
  %v17 = vld [vmem:[%s0 + $0x10] sm:$0xff]
  %v18 = vld [vmem:[%s0 + $0x18] sm:$0xff]
  %v19 = vld [vmem:[%s1] sm:$0xf]
  %v20 = vld [vmem:[%s1 + $0x4] sm:$0xf]
  %v21 = vld [vmem:[%s1 + $0x8] sm:$0xf]
  %v22 = vld [vmem:[%s1 + $0xc] sm:$0xf]
  %v23 = vld [vmem:[%s1 + $0x10] sm:$0xf]
  %v24 = vld [vmem:[%s1 + $0x14] sm:$0xf]
  %v25 = vld [vmem:[%s1 + $0x18] sm:$0xf]
  %v26 = vld [vmem:[%s1 + $0x1c] sm:$0xf]
  %v27 = vld [vmem:[%s1 + $0x20] sm:$0xf]
  %v28 = vld [vmem:[%s1 + $0x24] sm:$0xf]
  %v29 = vld [vmem:[%s1 + $0x28] sm:$0xf]
  %v30 = vld [vmem:[%s1 + $0x2c] sm:$0xf]
  %v31 = vld [vmem:[%s1 + $0x30] sm:$0xf]
  %v32 = vld [vmem:[%s1 + $0x34] sm:$0xf]
  %v33 = vld [vmem:[%s1 + $0x38] sm:$0xf]
  %v34 = vld [vmem:[%s1 + $0x3c] sm:$0xf]
  %v35 = vld [vmem:[%s1 + $0x40] sm:$0xf]
  %v36 = vld [vmem:[%s1 + $0x44] sm:$0xf]
  %v37 = vld [vmem:[%s1 + $0x48] sm:$0xf]
  %v38 = vld [vmem:[%s1 + $0x4c] sm:$0xf]
  %v39 = vld [vmem:[%s1 + $0x50] sm:$0xf]
  %v40 = vld [vmem:[%s1 + $0x54] sm:$0xf]
  %v41 = vld [vmem:[%s1 + $0x58] sm:$0xf]
  %v42 = vld [vmem:[%s1 + $0x5c] sm:$0xf]
  %v43 = vld [vmem:[%s1 + $0x60] sm:$0xf]
  %v44 = vld [vmem:[%s1 + $0x64] sm:$0xf]
  %v45 = vld [vmem:[%s1 + $0x68] sm:$0xf]
  %v46 = vld [vmem:[%s2] sm:$0xff]
  %v47 = vld [vmem:[%s2 + $0x8] sm:$0xff]
  %v48 = vld [vmem:[%s2 + $0x10] sm:$0xff]
  %v49 = vld [vmem:[%s2 + $0x18] sm:$0xff]
  %51 = vset.pattern.permute.xlu0 0
  %52 = vperm.xlu0 %51, %v46
  %v53 = vpop.permute.xlu0 %52
  %56 = vset.pattern.permute.xlu0 0
  %57 = vperm.xlu0 %56, %v47
  %v58 = vpop.permute.xlu0 %57
  %61 = vset.pattern.permute.xlu0 0
  %62 = vperm.xlu0 %61, %v48
  %v63 = vpop.permute.xlu0 %62
  %66 = vset.pattern.permute.xlu0 0
  %67 = vperm.xlu0 %66, %v49
  %v68 = vpop.permute.xlu0 %67
  %v74 = vunpack.c.l.b16 %v15
  %v75 = vunpack.c.h.b16 %v15
  %v76 = vunpack.c.l.b16 %v16
  %v77 = vunpack.c.h.b16 %v16
  %v78 = vunpack.c.l.b16 %v17
  %v79 = vunpack.c.h.b16 %v17
  %v80 = vunpack.c.l.b16 %v18
  %v81 = vunpack.c.h.b16 %v18
  %v82 = vpack.c.b16 %v76, %v74
  %v83 = vpack.c.b16 %v77, %v75
  %v84 = vpack.c.b16 %v80, %v78
  %v85 = vpack.c.b16 %v81, %v79
  %v115 = vunpack.c.l.b16 %v19
  %v116 = vunpack.c.l.b16 %v20
  %v117 = vunpack.c.l.b16 %v21
  %v118 = vunpack.c.l.b16 %v22
  %v119 = vunpack.c.l.b16 %v23
  %v120 = vunpack.c.l.b16 %v24
  %v121 = vunpack.c.l.b16 %v25
  %v122 = vunpack.c.l.b16 %v26
  %v123 = vunpack.c.l.b16 %v27
  %v124 = vunpack.c.l.b16 %v28
  %v125 = vunpack.c.l.b16 %v29
  %v126 = vunpack.c.l.b16 %v30
  %v127 = vunpack.c.l.b16 %v31
  %v128 = vunpack.c.l.b16 %v32
  %v129 = vunpack.c.l.b16 %v33
  %v130 = vunpack.c.l.b16 %v34
  %v131 = vunpack.c.l.b16 %v35
  %v132 = vunpack.c.l.b16 %v36
  %v133 = vunpack.c.l.b16 %v37
  %v134 = vunpack.c.l.b16 %v38
  %v135 = vunpack.c.l.b16 %v39
  %v136 = vunpack.c.l.b16 %v40
  %v137 = vunpack.c.l.b16 %v41
  %v138 = vunpack.c.l.b16 %v42
  %v139 = vunpack.c.l.b16 %v43
  %v140 = vunpack.c.l.b16 %v44
  %v141 = vunpack.c.l.b16 %v45
  %v142 = vpack.c.b16 %v116, %v115
  %v143 = vpack.c.b16 %v118, %v117
  %v144 = vpack.c.b16 %v120, %v119
  %v145 = vpack.c.b16 %v122, %v121
  %v146 = vpack.c.b16 %v124, %v123
  %v147 = vpack.c.b16 %v126, %v125
  %v148 = vpack.c.b16 %v128, %v127
  %v149 = vpack.c.b16 %v130, %v129
  %v150 = vpack.c.b16 %v132, %v131
  %v151 = vpack.c.b16 %v134, %v133
  %v152 = vpack.c.b16 %v136, %v135
  %v153 = vpack.c.b16 %v138, %v137
  %v154 = vpack.c.b16 %v140, %v139
  %v155 = vpack.c.b16 %v141, %v141
  %vm169 = vcmask 719872
  %v171 = vsel %vm169, %v83, 0
  %v174 = vsel %vm169, %v85, 0
  %vm176 = vcmask 1043456
  %v178 = vsel %vm176, %v155, 0
  %180 = vmatpush.bf16.msra.mxu0 %v149
  %181 = vmatpush.bf16.msra.mxu0 %v148
  %182 = vmatpush.bf16.msra.mxu0 %v147
  %183 = vmatpush.bf16.msra.mxu0 %v146
  %184 = vmatpush.bf16.msra.mxu0 %v145
  %185 = vmatpush.bf16.msra.mxu0 %v144
  %186 = vmatpush.bf16.msra.mxu0 %v143
  %187 = vmatpush.bf16.msra.mxu0 %v142
  %188 = vmatmul.bf16.gmra.mxu0 %v82
  %v189 = vpop.f32.mrf.mxu0
  %v190 = vadd.f32 %v53, %v189
  %v191 = vpop.f32.mrf.mxu0
  %v192 = vadd.f32 %v58, %v191
  %193 = vmatmul.bf16.gmra.mxu0 %v84
  %v194 = vpop.f32.mrf.mxu0
  %v195 = vadd.f32 %v63, %v194
  %v196 = vpop.f32.mrf.mxu0
  %v197 = vadd.f32 %v68, %v196
  %198 = vdwg.mxu0
  %199 = vmatpush.bf16.msra.mxu0 0
  %200 = vmatpush.bf16.msra.mxu0 0
  %201 = vmatpush.bf16.msra.mxu0 %v178
  %202 = vmatpush.bf16.msra.mxu0 %v154
  %203 = vmatpush.bf16.msra.mxu0 %v153
  %204 = vmatpush.bf16.msra.mxu0 %v152
  %205 = vmatpush.bf16.msra.mxu0 %v151
  %206 = vmatpush.bf16.msra.mxu0 %v150
  %207 = vmatmul.bf16.gmra.mxu0 %v171
  %v208 = vpop.f32.mrf.mxu0
  %v209 = vadd.f32 %v190, %v208
  %v210 = vpop.f32.mrf.mxu0
  %v211 = vadd.f32 %v192, %v210
  %212 = vmatmul.bf16.gmra.mxu0 %v174
  %v213 = vpop.f32.mrf.mxu0
  %v214 = vadd.f32 %v195, %v213
  %v215 = vpop.f32.mrf.mxu0
  %v216 = vadd.f32 %v197, %v215
  %217 = vdwg.mxu0
  %v218 = vmax.f32 %v209, 0.0
  %v219 = vmax.f32 %v211, 0.0
  %v220 = vmax.f32 %v214, 0.0
  %v221 = vmax.f32 %v216, 0.0
  %v222 = vpack.c.bf16 %v218, %v218
  %v223 = vpack.c.bf16 %v219, %v219
  %v224 = vpack.c.bf16 %v220, %v220
  %v225 = vpack.c.bf16 %v221, %v221
  %vm226 = vcmask 125952
  %227 = vst.msk [vmem:[%s3] sm:$0xf] %vm226, %v222
  %228 = vst.msk [vmem:[%s3 + $0x4] sm:$0xf] %vm226, %v223
  %229 = vst.msk [vmem:[%s3 + $0x8] sm:$0xf] %vm226, %v224
  %230 = vst.msk [vmem:[%s3 + $0xc] sm:$0xf] %vm226, %v225
  // Predicated region
  $region14: #{model_forward.31} parent=0 // pred_check
    _
  $region15: #{model_forward.31} parent=0 // pred_check_branch
    %232 = sbr.rel (0) target = $region17
  $region16: #{model_forward.31} parent=0 // pred_region
    _
  $region17: #{model_forward.31} parent=0 // pred_fallthru
    _
  // Predicated region
  $region18: #{model_forward.31} parent=0 // pred_check
    _
  $region19: #{model_forward.31} parent=0 // pred_check_branch
    %234 = sbr.rel (0) target = $region21
  $region20: #{model_forward.31} parent=0 // pred_region
    _
  $region21: #{model_forward.31} parent=0 // pred_fallthru
    _

// kernel: model_forward.32
$region0: #{model_forward.32}
  #allocation0 [shape = 'u32[]', space=smem, size = 0x4, offset = 0x4, fixed_abs, tag = 'smem constant byte address 0x4 - core index']
  #allocation1 [shape = 'u32[72,128]{1,0:T(1,128)}', space=vmem, size = 0x9000, scoped, tag = 'internal scratch']
  %s0 = inlined_call_operand.vmem [shape: bf16[32,288], index: 0, kind: input, shape index: {}]
  %s1 = inlined_call_operand.vmem [shape: bf16[288,16], index: 1, kind: input, shape index: {}]
  %s2 = inlined_call_operand.vmem [shape: f32[32,1], index: 2, kind: input, shape index: {}]
  %s3 = inlined_call_operand.vmem [shape: bf16[32,16], index: 3, kind: output, shape index: {}]
  %s4 = sld [smem:[#allocation0]]
  $region22: #{model_forward.32} parent=0
    _
  %s6 = ssub.s32 1, %s4
  %s7 = scalar_select 0, %s6, %s4
  // Predicated region
  $region2: #{model_forward.32} parent=0 // pred_check
    _
  $region3: #{model_forward.32} parent=0 // pred_check_branch
    %9 = sbr.rel (0) target = $region5
  $region4: #{model_forward.32} parent=0 // pred_region
    _
  $region5: #{model_forward.32} parent=0 // pred_fallthru
    _
  // Predicated region
  $region6: #{model_forward.32} parent=0 // pred_check
    _
  $region7: #{model_forward.32} parent=0 // pred_check_branch
    %11 = sbr.rel (0) target = $region9
  $region8: #{model_forward.32} parent=0 // pred_region
    _
  $region9: #{model_forward.32} parent=0 // pred_fallthru
    _
  // Predicated region
  $region10: #{model_forward.32} parent=0 // pred_check
    _
  $region11: #{model_forward.32} parent=0 // pred_check_branch
    %13 = sbr.rel (0) target = $region13
  $region12: #{model_forward.32} parent=0 // pred_region
    _
  $region13: #{model_forward.32} parent=0 // pred_fallthru
    _
  %v15 = vld [vmem:[%s0] sm:$0xff]
  %v16 = vld [vmem:[%s0 + $0x8] sm:$0xf]
  %v17 = vld [vmem:[%s0 + $0xc] sm:$0xff]
  %v18 = vld [vmem:[%s0 + $0x14] sm:$0xf]
  %v19 = vld [vmem:[%s0 + $0x18] sm:$0xff]
  %v20 = vld [vmem:[%s0 + $0x20] sm:$0xf]
  %v21 = vld [vmem:[%s0 + $0x24] sm:$0xff]
  %v22 = vld [vmem:[%s0 + $0x2c] sm:$0xf]
  %v23 = vld [vmem:[%s1] sm:$0xf]
  %v24 = vld [vmem:[%s1 + $0x4] sm:$0xf]
  %v25 = vld [vmem:[%s1 + $0x8] sm:$0xf]
  %v26 = vld [vmem:[%s1 + $0xc] sm:$0xf]
  %v27 = vld [vmem:[%s1 + $0x10] sm:$0xf]
  %v28 = vld [vmem:[%s1 + $0x14] sm:$0xf]
  %v29 = vld [vmem:[%s1 + $0x18] sm:$0xf]
  %v30 = vld [vmem:[%s1 + $0x1c] sm:$0xf]
  %v31 = vld [vmem:[%s1 + $0x20] sm:$0xf]
  %v32 = vld [vmem:[%s1 + $0x24] sm:$0xf]
  %v33 = vld [vmem:[%s1 + $0x28] sm:$0xf]
  %v34 = vld [vmem:[%s1 + $0x2c] sm:$0xf]
  %v35 = vld [vmem:[%s1 + $0x30] sm:$0xf]
  %v36 = vld [vmem:[%s1 + $0x34] sm:$0xf]
  %v37 = vld [vmem:[%s1 + $0x38] sm:$0xf]
  %v38 = vld [vmem:[%s1 + $0x3c] sm:$0xf]
  %v39 = vld [vmem:[%s1 + $0x40] sm:$0xf]
  %v40 = vld [vmem:[%s1 + $0x44] sm:$0xf]
  %v41 = vld [vmem:[%s1 + $0x48] sm:$0xf]
  %v42 = vld [vmem:[%s1 + $0x4c] sm:$0xf]
  %v43 = vld [vmem:[%s1 + $0x50] sm:$0xf]
  %v44 = vld [vmem:[%s1 + $0x54] sm:$0xf]
  %v45 = vld [vmem:[%s1 + $0x58] sm:$0xf]
  %v46 = vld [vmem:[%s1 + $0x5c] sm:$0xf]
  %v47 = vld [vmem:[%s1 + $0x60] sm:$0xf]
  %v48 = vld [vmem:[%s1 + $0x64] sm:$0xf]
  %v49 = vld [vmem:[%s1 + $0x68] sm:$0xf]
  %v50 = vld [vmem:[%s1 + $0x6c] sm:$0xf]
  %v51 = vld [vmem:[%s1 + $0x70] sm:$0xf]
  %v52 = vld [vmem:[%s1 + $0x74] sm:$0xf]
  %v53 = vld [vmem:[%s1 + $0x78] sm:$0xf]
  %v54 = vld [vmem:[%s1 + $0x7c] sm:$0xf]
  %v55 = vld [vmem:[%s1 + $0x80] sm:$0xf]
  %v56 = vld [vmem:[%s1 + $0x84] sm:$0xf]
  %v57 = vld [vmem:[%s1 + $0x88] sm:$0xf]
  %v58 = vld [vmem:[%s1 + $0x8c] sm:$0xf]
  %v59 = vld [vmem:[%s2] sm:$0xff]
  %v60 = vld [vmem:[%s2 + $0x8] sm:$0xff]
  %v61 = vld [vmem:[%s2 + $0x10] sm:$0xff]
  %v62 = vld [vmem:[%s2 + $0x18] sm:$0xff]
  %64 = vset.pattern.permute.xlu0 0
  %65 = vperm.xlu0 %64, %v59
  %v66 = vpop.permute.xlu0 %65
  %69 = vset.pattern.permute.xlu0 0
  %70 = vperm.xlu0 %69, %v60
  %v71 = vpop.permute.xlu0 %70
  %74 = vset.pattern.permute.xlu0 0
  %75 = vperm.xlu0 %74, %v61
  %v76 = vpop.permute.xlu0 %75
  %79 = vset.pattern.permute.xlu0 0
  %80 = vperm.xlu0 %79, %v62
  %v81 = vpop.permute.xlu0 %80
  %v91 = vunpack.c.l.b16 %v15
  %v92 = vunpack.c.h.b16 %v15
  %v93 = vunpack.c.l.b16 %v16
  %v94 = vunpack.c.l.b16 %v17
  %v95 = vunpack.c.h.b16 %v17
  %v96 = vunpack.c.l.b16 %v18
  %v97 = vunpack.c.l.b16 %v19
  %v98 = vunpack.c.h.b16 %v19
  %v99 = vunpack.c.l.b16 %v20
  %v100 = vunpack.c.l.b16 %v21
  %v101 = vunpack.c.h.b16 %v21
  %v102 = vunpack.c.l.b16 %v22
  %v103 = vpack.c.b16 %v94, %v91
  %v104 = vpack.c.b16 %v95, %v92
  %v105 = vpack.c.b16 %v96, %v93
  %v106 = vpack.c.b16 %v100, %v97
  %v107 = vpack.c.b16 %v101, %v98
  %v108 = vpack.c.b16 %v102, %v99
  %v149 = vunpack.c.l.b16 %v23
  %v150 = vunpack.c.l.b16 %v24
  %v151 = vunpack.c.l.b16 %v25
  %v152 = vunpack.c.l.b16 %v26
  %v153 = vunpack.c.l.b16 %v27
  %v154 = vunpack.c.l.b16 %v28
  %v155 = vunpack.c.l.b16 %v29
  %v156 = vunpack.c.l.b16 %v30
  %v157 = vunpack.c.l.b16 %v31
  %v158 = vunpack.c.l.b16 %v32
  %v159 = vunpack.c.l.b16 %v33
  %v160 = vunpack.c.l.b16 %v34
  %v161 = vunpack.c.l.b16 %v35
  %v162 = vunpack.c.l.b16 %v36
  %v163 = vunpack.c.l.b16 %v37
  %v164 = vunpack.c.l.b16 %v38
  %v165 = vunpack.c.l.b16 %v39
  %v166 = vunpack.c.l.b16 %v40
  %v167 = vunpack.c.l.b16 %v41
  %v168 = vunpack.c.l.b16 %v42
  %v169 = vunpack.c.l.b16 %v43
  %v170 = vunpack.c.l.b16 %v44
  %v171 = vunpack.c.l.b16 %v45
  %v172 = vunpack.c.l.b16 %v46
  %v173 = vunpack.c.l.b16 %v47
  %v174 = vunpack.c.l.b16 %v48
  %v175 = vunpack.c.l.b16 %v49
  %v176 = vunpack.c.l.b16 %v50
  %v177 = vunpack.c.l.b16 %v51
  %v178 = vunpack.c.l.b16 %v52
  %v179 = vunpack.c.l.b16 %v53
  %v180 = vunpack.c.l.b16 %v54
  %v181 = vunpack.c.l.b16 %v55
  %v182 = vunpack.c.l.b16 %v56
  %v183 = vunpack.c.l.b16 %v57
  %v184 = vunpack.c.l.b16 %v58
  %v185 = vpack.c.b16 %v150, %v149
  %v186 = vpack.c.b16 %v152, %v151
  %v187 = vpack.c.b16 %v154, %v153
  %v188 = vpack.c.b16 %v156, %v155
  %v189 = vpack.c.b16 %v158, %v157
  %v190 = vpack.c.b16 %v160, %v159
  %v191 = vpack.c.b16 %v162, %v161
  %v192 = vpack.c.b16 %v164, %v163
  %v193 = vpack.c.b16 %v166, %v165
  %v194 = vpack.c.b16 %v168, %v167
  %v195 = vpack.c.b16 %v170, %v169
  %v196 = vpack.c.b16 %v172, %v171
  %v197 = vpack.c.b16 %v174, %v173
  %v198 = vpack.c.b16 %v176, %v175
  %v199 = vpack.c.b16 %v178, %v177
  %v200 = vpack.c.b16 %v180, %v179
  %v201 = vpack.c.b16 %v182, %v181
  %v202 = vpack.c.b16 %v184, %v183
  %vm221 = vcmask 261120
  %v223 = vsel %vm221, %v105, 0
  %v226 = vsel %vm221, %v108, 0
  %228 = vmatpush.bf16.msra.mxu0 %v192
  %229 = vmatpush.bf16.msra.mxu0 %v191
  %230 = vmatpush.bf16.msra.mxu0 %v190
  %231 = vmatpush.bf16.msra.mxu0 %v189
  %232 = vmatpush.bf16.msra.mxu0 %v188
  %233 = vmatpush.bf16.msra.mxu0 %v187
  %234 = vmatpush.bf16.msra.mxu0 %v186
  %235 = vmatpush.bf16.msra.mxu0 %v185
  %236 = vmatmul.bf16.gmra.mxu0 %v103
  %v237 = vpop.f32.mrf.mxu0
  %v238 = vadd.f32 %v66, %v237
  %v239 = vpop.f32.mrf.mxu0
  %v240 = vadd.f32 %v71, %v239
  %241 = vmatmul.bf16.gmra.mxu0 %v106
  %v242 = vpop.f32.mrf.mxu0
  %v243 = vadd.f32 %v76, %v242
  %v244 = vpop.f32.mrf.mxu0
  %v245 = vadd.f32 %v81, %v244
  %246 = vdwg.mxu0
  %247 = vmatpush.bf16.msra.mxu0 %v200
  %248 = vmatpush.bf16.msra.mxu0 %v199
  %249 = vmatpush.bf16.msra.mxu0 %v198
  %250 = vmatpush.bf16.msra.mxu0 %v197
  %251 = vmatpush.bf16.msra.mxu0 %v196
  %252 = vmatpush.bf16.msra.mxu0 %v195
  %253 = vmatpush.bf16.msra.mxu0 %v194
  %254 = vmatpush.bf16.msra.mxu0 %v193
  %255 = vmatmul.bf16.gmra.mxu0 %v104
  %v256 = vpop.f32.mrf.mxu0
  %v257 = vadd.f32 %v238, %v256
  %v258 = vpop.f32.mrf.mxu0
  %v259 = vadd.f32 %v240, %v258
  %260 = vmatmul.bf16.gmra.mxu0 %v107
  %v261 = vpop.f32.mrf.mxu0
  %v262 = vadd.f32 %v243, %v261
  %v263 = vpop.f32.mrf.mxu0
  %v264 = vadd.f32 %v245, %v263
  %265 = vdwg.mxu0
  %266 = vmatpush.bf16.msra.mxu0 0
  %267 = vmatpush.bf16.msra.mxu0 0
  %268 = vmatpush.bf16.msra.mxu0 0
  %269 = vmatpush.bf16.msra.mxu0 0
  %270 = vmatpush.bf16.msra.mxu0 0
  %271 = vmatpush.bf16.msra.mxu0 0
  %272 = vmatpush.bf16.msra.mxu0 %v202
  %273 = vmatpush.bf16.msra.mxu0 %v201
  %274 = vmatmul.bf16.gmra.mxu0 %v223
  %v275 = vpop.f32.mrf.mxu0
  %v276 = vadd.f32 %v257, %v275
  %v277 = vpop.f32.mrf.mxu0
  %v278 = vadd.f32 %v259, %v277
  %279 = vmatmul.bf16.gmra.mxu0 %v226
  %v280 = vpop.f32.mrf.mxu0
  %v281 = vadd.f32 %v262, %v280
  %v282 = vpop.f32.mrf.mxu0
  %v283 = vadd.f32 %v264, %v282
  %284 = vdwg.mxu0
  %v285 = vmax.f32 %v276, 0.0
  %v286 = vmax.f32 %v278, 0.0
  %v287 = vmax.f32 %v281, 0.0
  %v288 = vmax.f32 %v283, 0.0
  %v289 = vpack.c.bf16 %v285, %v285
  %v290 = vpack.c.bf16 %v286, %v286
  %v291 = vpack.c.bf16 %v287, %v287
  %v292 = vpack.c.bf16 %v288, %v288
  %vm293 = vcmask 125952
  %294 = vst.msk [vmem:[%s3] sm:$0xf] %vm293, %v289
  %295 = vst.msk [vmem:[%s3 + $0x4] sm:$0xf] %vm293, %v290
  %296 = vst.msk [vmem:[%s3 + $0x8] sm:$0xf] %vm293, %v291
  %297 = vst.msk [vmem:[%s3 + $0xc] sm:$0xf] %vm293, %v292
  // Predicated region
  $region14: #{model_forward.32} parent=0 // pred_check
    _
  $region15: #{model_forward.32} parent=0 // pred_check_branch
    %299 = sbr.rel (0) target = $region17
  $region16: #{model_forward.32} parent=0 // pred_region
    _
  $region17: #{model_forward.32} parent=0 // pred_fallthru
    _
  // Predicated region
  $region18: #{model_forward.32} parent=0 // pred_check
    _
  $region19: #{model_forward.32} parent=0 // pred_check_branch
    %301 = sbr.rel (0) target = $region21
  $region20: #{model_forward.32} parent=0 // pred_region
    _
  $region21: #{model_forward.32} parent=0 // pred_fallthru
    _

// kernel: model_forward.33
$region0: #{model_forward.33}
  #allocation0 [shape = 'u32[]', space=smem, size = 0x4, offset = 0x4, fixed_abs, tag = 'smem constant byte address 0x4 - core index']
  #allocation1 [shape = 'u32[72,128]{1,0:T(1,128)}', space=vmem, size = 0x9000, scoped, tag = 'internal scratch']
  %s0 = inlined_call_operand.vmem [shape: bf16[40,288], index: 0, kind: input, shape index: {}]
  %s1 = inlined_call_operand.vmem [shape: bf16[288,4], index: 1, kind: input, shape index: {}]
  %s2 = inlined_call_operand.vmem [shape: f32[40,1], index: 2, kind: input, shape index: {}]
  %s3 = inlined_call_operand.vmem [shape: bf16[40,4], index: 3, kind: output, shape index: {}]
  %s4 = sld [smem:[#allocation0]]
  $region22: #{model_forward.33} parent=0
    _
  %s6 = ssub.s32 1, %s4
  %s7 = scalar_select 0, %s6, %s4
  // Predicated region
  $region2: #{model_forward.33} parent=0 // pred_check
    _
  $region3: #{model_forward.33} parent=0 // pred_check_branch
    %9 = sbr.rel (0) target = $region5
  $region4: #{model_forward.33} parent=0 // pred_region
    _
  $region5: #{model_forward.33} parent=0 // pred_fallthru
    _
  // Predicated region
  $region6: #{model_forward.33} parent=0 // pred_check
    _
  $region7: #{model_forward.33} parent=0 // pred_check_branch
    %11 = sbr.rel (0) target = $region9
  $region8: #{model_forward.33} parent=0 // pred_region
    _
  $region9: #{model_forward.33} parent=0 // pred_fallthru
    _
  // Predicated region
  $region10: #{model_forward.33} parent=0 // pred_check
    _
  $region11: #{model_forward.33} parent=0 // pred_check_branch
    %13 = sbr.rel (0) target = $region13
  $region12: #{model_forward.33} parent=0 // pred_region
    _
  $region13: #{model_forward.33} parent=0 // pred_fallthru
    _
  %v15 = vld [vmem:[%s0] sm:$0xff]
  %v16 = vld [vmem:[%s0 + $0x8] sm:$0xf]
  %v17 = vld [vmem:[%s0 + $0xc] sm:$0xff]
  %v18 = vld [vmem:[%s0 + $0x14] sm:$0xf]
  %v19 = vld [vmem:[%s0 + $0x18] sm:$0xff]
  %v20 = vld [vmem:[%s0 + $0x20] sm:$0xf]
  %v21 = vld [vmem:[%s0 + $0x24] sm:$0xff]
  %v22 = vld [vmem:[%s0 + $0x2c] sm:$0xf]
  %v23 = vld [vmem:[%s0 + $0x30] sm:$0xff]
  %v24 = vld [vmem:[%s0 + $0x38] sm:$0xf]
  %v25 = vld [vmem:[%s1] sm:$0xf]
  %v26 = vld [vmem:[%s1 + $0x4] sm:$0xf]
  %v27 = vld [vmem:[%s1 + $0x8] sm:$0xf]
  %v28 = vld [vmem:[%s1 + $0xc] sm:$0xf]
  %v29 = vld [vmem:[%s1 + $0x10] sm:$0xf]
  %v30 = vld [vmem:[%s1 + $0x14] sm:$0xf]
  %v31 = vld [vmem:[%s1 + $0x18] sm:$0xf]
  %v32 = vld [vmem:[%s1 + $0x1c] sm:$0xf]
  %v33 = vld [vmem:[%s1 + $0x20] sm:$0xf]
  %v34 = vld [vmem:[%s1 + $0x24] sm:$0xf]
  %v35 = vld [vmem:[%s1 + $0x28] sm:$0xf]
  %v36 = vld [vmem:[%s1 + $0x2c] sm:$0xf]
  %v37 = vld [vmem:[%s1 + $0x30] sm:$0xf]
  %v38 = vld [vmem:[%s1 + $0x34] sm:$0xf]
  %v39 = vld [vmem:[%s1 + $0x38] sm:$0xf]
  %v40 = vld [vmem:[%s1 + $0x3c] sm:$0xf]
  %v41 = vld [vmem:[%s1 + $0x40] sm:$0xf]
  %v42 = vld [vmem:[%s1 + $0x44] sm:$0xf]
  %v43 = vld [vmem:[%s1 + $0x48] sm:$0xf]
  %v44 = vld [vmem:[%s1 + $0x4c] sm:$0xf]
  %v45 = vld [vmem:[%s1 + $0x50] sm:$0xf]
  %v46 = vld [vmem:[%s1 + $0x54] sm:$0xf]
  %v47 = vld [vmem:[%s1 + $0x58] sm:$0xf]
  %v48 = vld [vmem:[%s1 + $0x5c] sm:$0xf]
  %v49 = vld [vmem:[%s1 + $0x60] sm:$0xf]
  %v50 = vld [vmem:[%s1 + $0x64] sm:$0xf]
  %v51 = vld [vmem:[%s1 + $0x68] sm:$0xf]
  %v52 = vld [vmem:[%s1 + $0x6c] sm:$0xf]
  %v53 = vld [vmem:[%s1 + $0x70] sm:$0xf]
  %v54 = vld [vmem:[%s1 + $0x74] sm:$0xf]
  %v55 = vld [vmem:[%s1 + $0x78] sm:$0xf]
  %v56 = vld [vmem:[%s1 + $0x7c] sm:$0xf]
  %v57 = vld [vmem:[%s1 + $0x80] sm:$0xf]
  %v58 = vld [vmem:[%s1 + $0x84] sm:$0xf]
  %v59 = vld [vmem:[%s1 + $0x88] sm:$0xf]
  %v60 = vld [vmem:[%s1 + $0x8c] sm:$0xf]
  %v61 = vld [vmem:[%s2] sm:$0xff]
  %v62 = vld [vmem:[%s2 + $0x8] sm:$0xff]
  %v63 = vld [vmem:[%s2 + $0x10] sm:$0xff]
  %v64 = vld [vmem:[%s2 + $0x18] sm:$0xff]
  %v65 = vld [vmem:[%s2 + $0x20] sm:$0xff]
  %67 = vset.pattern.permute.xlu0 0
  %68 = vperm.xlu0 %67, %v61
  %v69 = vpop.permute.xlu0 %68
  %72 = vset.pattern.permute.xlu0 0
  %73 = vperm.xlu0 %72, %v62
  %v74 = vpop.permute.xlu0 %73
  %77 = vset.pattern.permute.xlu0 0
  %78 = vperm.xlu0 %77, %v63
  %v79 = vpop.permute.xlu0 %78
  %82 = vset.pattern.permute.xlu0 0
  %83 = vperm.xlu0 %82, %v64
  %v84 = vpop.permute.xlu0 %83
  %87 = vset.pattern.permute.xlu0 0
  %88 = vperm.xlu0 %87, %v65
  %v89 = vpop.permute.xlu0 %88
  %v101 = vunpack.c.l.b16 %v15
  %v102 = vunpack.c.h.b16 %v15
  %v103 = vunpack.c.l.b16 %v16
  %v104 = vunpack.c.l.b16 %v17
  %v105 = vunpack.c.h.b16 %v17
  %v106 = vunpack.c.l.b16 %v18
  %v107 = vunpack.c.l.b16 %v19
  %v108 = vunpack.c.h.b16 %v19
  %v109 = vunpack.c.l.b16 %v20
  %v110 = vunpack.c.l.b16 %v21
  %v111 = vunpack.c.h.b16 %v21
  %v112 = vunpack.c.l.b16 %v22
  %v113 = vunpack.c.l.b16 %v23
  %v114 = vunpack.c.h.b16 %v23
  %v115 = vunpack.c.l.b16 %v24
  %v116 = vpack.c.b16 %v104, %v101
  %v117 = vpack.c.b16 %v105, %v102
  %v118 = vpack.c.b16 %v106, %v103
  %v119 = vpack.c.b16 %v110, %v107
  %v120 = vpack.c.b16 %v111, %v108
  %v121 = vpack.c.b16 %v112, %v109
  %v122 = vpack.c.b16 %v113, %v113
  %v123 = vpack.c.b16 %v114, %v114
  %v124 = vpack.c.b16 %v115, %v115
  %v167 = vunpack.c.l.b16 %v25
  %v168 = vunpack.c.l.b16 %v26
  %v169 = vunpack.c.l.b16 %v27
  %v170 = vunpack.c.l.b16 %v28
  %v171 = vunpack.c.l.b16 %v29
  %v172 = vunpack.c.l.b16 %v30
  %v173 = vunpack.c.l.b16 %v31
  %v174 = vunpack.c.l.b16 %v32
  %v175 = vunpack.c.l.b16 %v33
  %v176 = vunpack.c.l.b16 %v34
  %v177 = vunpack.c.l.b16 %v35
  %v178 = vunpack.c.l.b16 %v36
  %v179 = vunpack.c.l.b16 %v37
  %v180 = vunpack.c.l.b16 %v38
  %v181 = vunpack.c.l.b16 %v39
  %v182 = vunpack.c.l.b16 %v40
  %v183 = vunpack.c.l.b16 %v41
  %v184 = vunpack.c.l.b16 %v42
  %v185 = vunpack.c.l.b16 %v43
  %v186 = vunpack.c.l.b16 %v44
  %v187 = vunpack.c.l.b16 %v45
  %v188 = vunpack.c.l.b16 %v46
  %v189 = vunpack.c.l.b16 %v47
  %v190 = vunpack.c.l.b16 %v48
  %v191 = vunpack.c.l.b16 %v49
  %v192 = vunpack.c.l.b16 %v50
  %v193 = vunpack.c.l.b16 %v51
  %v194 = vunpack.c.l.b16 %v52
  %v195 = vunpack.c.l.b16 %v53
  %v196 = vunpack.c.l.b16 %v54
  %v197 = vunpack.c.l.b16 %v55
  %v198 = vunpack.c.l.b16 %v56
  %v199 = vunpack.c.l.b16 %v57
  %v200 = vunpack.c.l.b16 %v58
  %v201 = vunpack.c.l.b16 %v59
  %v202 = vunpack.c.l.b16 %v60
  %v203 = vpack.c.b16 %v168, %v167
  %v204 = vpack.c.b16 %v170, %v169
  %v205 = vpack.c.b16 %v172, %v171
  %v206 = vpack.c.b16 %v174, %v173
  %v207 = vpack.c.b16 %v176, %v175
  %v208 = vpack.c.b16 %v178, %v177
  %v209 = vpack.c.b16 %v180, %v179
  %v210 = vpack.c.b16 %v182, %v181
  %v211 = vpack.c.b16 %v184, %v183
  %v212 = vpack.c.b16 %v186, %v185
  %v213 = vpack.c.b16 %v188, %v187
  %v214 = vpack.c.b16 %v190, %v189
  %v215 = vpack.c.b16 %v192, %v191
  %v216 = vpack.c.b16 %v194, %v193
  %v217 = vpack.c.b16 %v196, %v195
  %v218 = vpack.c.b16 %v198, %v197
  %v219 = vpack.c.b16 %v200, %v199
  %v220 = vpack.c.b16 %v202, %v201
  %vm239 = vcmask 261120
  %v241 = vsel %vm239, %v118, 0
  %v244 = vsel %vm239, %v121, 0
  %v247 = vsel %vm239, %v124, 0
  %249 = vmatpush.bf16.msra.mxu0 %v210
  %250 = vmatpush.bf16.msra.mxu0 %v209
  %251 = vmatpush.bf16.msra.mxu0 %v208
  %252 = vmatpush.bf16.msra.mxu0 %v207
  %253 = vmatpush.bf16.msra.mxu0 %v206
  %254 = vmatpush.bf16.msra.mxu0 %v205
  %255 = vmatpush.bf16.msra.mxu0 %v204
  %256 = vmatpush.bf16.msra.mxu0 %v203
  %257 = vmatmul.bf16.gmra.mxu0 %v116
  %v258 = vpop.f32.mrf.mxu0
  %v259 = vadd.f32 %v69, %v258
  %v260 = vpop.f32.mrf.mxu0
  %v261 = vadd.f32 %v74, %v260
  %262 = vmatmul.bf16.gmra.mxu0 %v119
  %v263 = vpop.f32.mrf.mxu0
  %v264 = vadd.f32 %v79, %v263
  %v265 = vpop.f32.mrf.mxu0
  %v266 = vadd.f32 %v84, %v265
  %267 = vmatmul.bf16.gmra.mxu0 %v122
  %v268 = vpop.f32.mrf.mxu0
  %v269 = vadd.f32 %v89, %v268
  %v270 = vpop.f32.mrf.mxu0
  %271 = vdwg.mxu0
  %272 = vmatpush.bf16.msra.mxu0 %v218
  %273 = vmatpush.bf16.msra.mxu0 %v217
  %274 = vmatpush.bf16.msra.mxu0 %v216
  %275 = vmatpush.bf16.msra.mxu0 %v215
  %276 = vmatpush.bf16.msra.mxu0 %v214
  %277 = vmatpush.bf16.msra.mxu0 %v213
  %278 = vmatpush.bf16.msra.mxu0 %v212
  %279 = vmatpush.bf16.msra.mxu0 %v211
  %280 = vmatmul.bf16.gmra.mxu0 %v117
  %v281 = vpop.f32.mrf.mxu0
  %v282 = vadd.f32 %v259, %v281
  %v283 = vpop.f32.mrf.mxu0
  %v284 = vadd.f32 %v261, %v283
  %285 = vmatmul.bf16.gmra.mxu0 %v120
  %v286 = vpop.f32.mrf.mxu0
  %v287 = vadd.f32 %v264, %v286
  %v288 = vpop.f32.mrf.mxu0
  %v289 = vadd.f32 %v266, %v288
  %290 = vmatmul.bf16.gmra.mxu0 %v123
  %v291 = vpop.f32.mrf.mxu0
  %v292 = vadd.f32 %v269, %v291
  %v293 = vpop.f32.mrf.mxu0
  %294 = vdwg.mxu0
  %295 = vmatpush.bf16.msra.mxu0 0
  %296 = vmatpush.bf16.msra.mxu0 0
  %297 = vmatpush.bf16.msra.mxu0 0
  %298 = vmatpush.bf16.msra.mxu0 0
  %299 = vmatpush.bf16.msra.mxu0 0
  %300 = vmatpush.bf16.msra.mxu0 0
  %301 = vmatpush.bf16.msra.mxu0 %v220
  %302 = vmatpush.bf16.msra.mxu0 %v219
  %303 = vmatmul.bf16.gmra.mxu0 %v241
  %v304 = vpop.f32.mrf.mxu0
  %v305 = vadd.f32 %v282, %v304
  %v306 = vpop.f32.mrf.mxu0
  %v307 = vadd.f32 %v284, %v306
  %308 = vmatmul.bf16.gmra.mxu0 %v244
  %v309 = vpop.f32.mrf.mxu0
  %v310 = vadd.f32 %v287, %v309
  %v311 = vpop.f32.mrf.mxu0
  %v312 = vadd.f32 %v289, %v311
  %313 = vmatmul.bf16.gmra.mxu0 %v247
  %v314 = vpop.f32.mrf.mxu0
  %v315 = vadd.f32 %v292, %v314
  %v316 = vpop.f32.mrf.mxu0
  %317 = vdwg.mxu0
  %v318 = vmax.f32 %v305, 0.0
  %v319 = vmax.f32 %v307, 0.0
  %v320 = vmax.f32 %v310, 0.0
  %v321 = vmax.f32 %v312, 0.0
  %v322 = vmax.f32 %v315, 0.0
  %v323 = vpack.c.bf16 %v318, %v318
  %v324 = vpack.c.bf16 %v319, %v319
  %v325 = vpack.c.bf16 %v320, %v320
  %v326 = vpack.c.bf16 %v321, %v321
  %v327 = vpack.c.bf16 %v322, %v322
  %vm328 = vcmask 27648
  %329 = vst.msk [vmem:[%s3] sm:$0xf] %vm328, %v323
  %330 = vst.msk [vmem:[%s3 + $0x4] sm:$0xf] %vm328, %v324
  %331 = vst.msk [vmem:[%s3 + $0x8] sm:$0xf] %vm328, %v325
  %332 = vst.msk [vmem:[%s3 + $0xc] sm:$0xf] %vm328, %v326
  %333 = vst.msk [vmem:[%s3 + $0x10] sm:$0xf] %vm328, %v327
  // Predicated region
  $region14: #{model_forward.33} parent=0 // pred_check
    _
  $region15: #{model_forward.33} parent=0 // pred_check_branch
    %335 = sbr.rel (0) target = $region17
  $region16: #{model_forward.33} parent=0 // pred_region
    _
  $region17: #{model_forward.33} parent=0 // pred_fallthru
    _
  // Predicated region
  $region18: #{model_forward.33} parent=0 // pred_check
    _
  $region19: #{model_forward.33} parent=0 // pred_check_branch
    %337 = sbr.rel (0) target = $region21
  $region20: #{model_forward.33} parent=0 // pred_region
    _
  $region21: #{model_forward.33} parent=0 // pred_fallthru
    _

// kernel: model_forward.35
$region0: #{model_forward.35}
  #allocation0 [shape = 'u32[]', space=smem, size = 0x4, offset = 0x4, fixed_abs, tag = 'smem constant byte address 0x4 - core index']
  #allocation1 [shape = 'u32[72,128]{1,0:T(1,128)}', space=vmem, size = 0x9000, scoped, tag = 'internal scratch']
  %s0 = inlined_call_operand.vmem [shape: bf16[32,40], index: 0, kind: input, shape index: {}]
  %s1 = inlined_call_operand.vmem [shape: bf16[40,4], index: 1, kind: input, shape index: {}]
  %s2 = inlined_call_operand.vmem [shape: f32[32,1], index: 2, kind: input, shape index: {}]
  %s3 = inlined_call_operand.vmem [shape: bf16[32,4], index: 3, kind: output, shape index: {}]
  %s4 = sld [smem:[#allocation0]]
  $region22: #{model_forward.35} parent=0
    _
  %s6 = ssub.s32 1, %s4
  %s7 = scalar_select 0, %s6, %s4
  // Predicated region
  $region2: #{model_forward.35} parent=0 // pred_check
    _
  $region3: #{model_forward.35} parent=0 // pred_check_branch
    %9 = sbr.rel (0) target = $region5
  $region4: #{model_forward.35} parent=0 // pred_region
    _
  $region5: #{model_forward.35} parent=0 // pred_fallthru
    _
  // Predicated region
  $region6: #{model_forward.35} parent=0 // pred_check
    _
  $region7: #{model_forward.35} parent=0 // pred_check_branch
    %11 = sbr.rel (0) target = $region9
  $region8: #{model_forward.35} parent=0 // pred_region
    _
  $region9: #{model_forward.35} parent=0 // pred_fallthru
    _
  // Predicated region
  $region10: #{model_forward.35} parent=0 // pred_check
    _
  $region11: #{model_forward.35} parent=0 // pred_check_branch
    %13 = sbr.rel (0) target = $region13
  $region12: #{model_forward.35} parent=0 // pred_region
    _
  $region13: #{model_forward.35} parent=0 // pred_fallthru
    _
  %v15 = vld [vmem:[%s0] sm:$0xf]
  %v16 = vld [vmem:[%s0 + $0x4] sm:$0xf]
  %v17 = vld [vmem:[%s0 + $0x8] sm:$0xf]
  %v18 = vld [vmem:[%s0 + $0xc] sm:$0xf]
  %v19 = vld [vmem:[%s1] sm:$0xf]
  %v20 = vld [vmem:[%s1 + $0x4] sm:$0xf]
  %v21 = vld [vmem:[%s1 + $0x8] sm:$0xf]
  %v22 = vld [vmem:[%s1 + $0xc] sm:$0xf]
  %v23 = vld [vmem:[%s1 + $0x10] sm:$0xf]
  %v24 = vld [vmem:[%s2] sm:$0xff]
  %v25 = vld [vmem:[%s2 + $0x8] sm:$0xff]
  %v26 = vld [vmem:[%s2 + $0x10] sm:$0xff]
  %v27 = vld [vmem:[%s2 + $0x18] sm:$0xff]
  %29 = vset.pattern.permute.xlu0 0
  %30 = vperm.xlu0 %29, %v24
  %v31 = vpop.permute.xlu0 %30
  %34 = vset.pattern.permute.xlu0 0
  %35 = vperm.xlu0 %34, %v25
  %v36 = vpop.permute.xlu0 %35
  %39 = vset.pattern.permute.xlu0 0
  %40 = vperm.xlu0 %39, %v26
  %v41 = vpop.permute.xlu0 %40
  %44 = vset.pattern.permute.xlu0 0
  %45 = vperm.xlu0 %44, %v27
  %v46 = vpop.permute.xlu0 %45
  %v52 = vunpack.c.l.b16 %v15
  %v53 = vunpack.c.l.b16 %v16
  %v54 = vunpack.c.l.b16 %v17
  %v55 = vunpack.c.l.b16 %v18
  %v56 = vpack.c.b16 %v53, %v52
  %v57 = vpack.c.b16 %v55, %v54
  %v63 = vunpack.c.l.b16 %v19
  %v64 = vunpack.c.l.b16 %v20
  %v65 = vunpack.c.l.b16 %v21
  %v66 = vunpack.c.l.b16 %v22
  %v67 = vunpack.c.l.b16 %v23
  %v68 = vpack.c.b16 %v64, %v63
  %v69 = vpack.c.b16 %v66, %v65
  %v70 = vpack.c.b16 %v67, %v67
  %vm73 = vcmask 326656
  %v75 = vsel %vm73, %v56, 0
  %v78 = vsel %vm73, %v57, 0
  %vm80 = vcmask 1043456
  %v82 = vsel %vm80, %v70, 0
  %84 = vmatpush.bf16.msra.mxu0 0
  %85 = vmatpush.bf16.msra.mxu0 0
  %86 = vmatpush.bf16.msra.mxu0 0
  %87 = vmatpush.bf16.msra.mxu0 0
  %88 = vmatpush.bf16.msra.mxu0 0
  %89 = vmatpush.bf16.msra.mxu0 %v82
  %90 = vmatpush.bf16.msra.mxu0 %v69
  %91 = vmatpush.bf16.msra.mxu0 %v68
  %92 = vmatmul.bf16.gmra.mxu0 %v75
  %v93 = vpop.f32.mrf.mxu0
  %v94 = vadd.f32 %v31, %v93
  %v95 = vpop.f32.mrf.mxu0
  %v96 = vadd.f32 %v36, %v95
  %97 = vmatmul.bf16.gmra.mxu0 %v78
  %v98 = vpop.f32.mrf.mxu0
  %v99 = vadd.f32 %v41, %v98
  %v100 = vpop.f32.mrf.mxu0
  %v101 = vadd.f32 %v46, %v100
  %102 = vdwg.mxu0
  %v103 = vmax.f32 %v94, 0.0
  %v104 = vmax.f32 %v96, 0.0
  %v105 = vmax.f32 %v99, 0.0
  %v106 = vmax.f32 %v101, 0.0
  %v107 = vpack.c.bf16 %v103, %v103
  %v108 = vpack.c.bf16 %v104, %v104
  %v109 = vpack.c.bf16 %v105, %v105
  %v110 = vpack.c.bf16 %v106, %v106
  %vm111 = vcmask 27648
  %112 = vst.msk [vmem:[%s3] sm:$0xf] %vm111, %v107
  %113 = vst.msk [vmem:[%s3 + $0x4] sm:$0xf] %vm111, %v108
  %114 = vst.msk [vmem:[%s3 + $0x8] sm:$0xf] %vm111, %v109
  %115 = vst.msk [vmem:[%s3 + $0xc] sm:$0xf] %vm111, %v110
  // Predicated region
  $region14: #{model_forward.35} parent=0 // pred_check
    _
  $region15: #{model_forward.35} parent=0 // pred_check_branch
    %117 = sbr.rel (0) target = $region17
  $region16: #{model_forward.35} parent=0 // pred_region
    _
  $region17: #{model_forward.35} parent=0 // pred_fallthru
    _
  // Predicated region
  $region18: #{model_forward.35} parent=0 // pred_check
    _
  $region19: #{model_forward.35} parent=0 // pred_check_branch
    %119 = sbr.rel (0) target = $region21
  $region20: #{model_forward.35} parent=0 // pred_region
    _
  $region21: #{model_forward.35} parent=0 // pred_fallthru
    _

// kernel: model_forward.34
$region0: #{model_forward.34}
  #allocation0 [shape = 'u32[]', space=smem, size = 0x4, offset = 0x4, fixed_abs, tag = 'smem constant byte address 0x4 - core index']
  #allocation1 [shape = 'u32[72,128]{1,0:T(1,128)}', space=vmem, size = 0x9000, scoped, tag = 'internal scratch']
  %s0 = inlined_call_operand.vmem [shape: bf16[40,360], index: 0, kind: input, shape index: {}]
  %s1 = inlined_call_operand.vmem [shape: bf16[360,4], index: 1, kind: input, shape index: {}]
  %s2 = inlined_call_operand.vmem [shape: f32[40,1], index: 2, kind: input, shape index: {}]
  %s3 = inlined_call_operand.vmem [shape: bf16[40,4], index: 3, kind: output, shape index: {}]
  %s4 = sld [smem:[#allocation0]]
  $region22: #{model_forward.34} parent=0
    _
  %s6 = ssub.s32 1, %s4
  %s7 = scalar_select 0, %s6, %s4
  // Predicated region
  $region2: #{model_forward.34} parent=0 // pred_check
    _
  $region3: #{model_forward.34} parent=0 // pred_check_branch
    %9 = sbr.rel (0) target = $region5
  $region4: #{model_forward.34} parent=0 // pred_region
    _
  $region5: #{model_forward.34} parent=0 // pred_fallthru
    _
  // Predicated region
  $region6: #{model_forward.34} parent=0 // pred_check
    _
  $region7: #{model_forward.34} parent=0 // pred_check_branch
    %11 = sbr.rel (0) target = $region9
  $region8: #{model_forward.34} parent=0 // pred_region
    _
  $region9: #{model_forward.34} parent=0 // pred_fallthru
    _
  // Predicated region
  $region10: #{model_forward.34} parent=0 // pred_check
    _
  $region11: #{model_forward.34} parent=0 // pred_check_branch
    %13 = sbr.rel (0) target = $region13
  $region12: #{model_forward.34} parent=0 // pred_region
    _
  $region13: #{model_forward.34} parent=0 // pred_fallthru
    _
  %v15 = vld [vmem:[%s0] sm:$0xff]
  %v16 = vld [vmem:[%s0 + $0x8] sm:$0xf]
  %v17 = vld [vmem:[%s0 + $0xc] sm:$0xff]
  %v18 = vld [vmem:[%s0 + $0x14] sm:$0xf]
  %v19 = vld [vmem:[%s0 + $0x18] sm:$0xff]
  %v20 = vld [vmem:[%s0 + $0x20] sm:$0xf]
  %v21 = vld [vmem:[%s0 + $0x24] sm:$0xff]
  %v22 = vld [vmem:[%s0 + $0x2c] sm:$0xf]
  %v23 = vld [vmem:[%s0 + $0x30] sm:$0xff]
  %v24 = vld [vmem:[%s0 + $0x38] sm:$0xf]
  %v25 = vld [vmem:[%s1] sm:$0xf]
  %v26 = vld [vmem:[%s1 + $0x4] sm:$0xf]
  %v27 = vld [vmem:[%s1 + $0x8] sm:$0xf]
  %v28 = vld [vmem:[%s1 + $0xc] sm:$0xf]
  %v29 = vld [vmem:[%s1 + $0x10] sm:$0xf]
  %v30 = vld [vmem:[%s1 + $0x14] sm:$0xf]
  %v31 = vld [vmem:[%s1 + $0x18] sm:$0xf]
  %v32 = vld [vmem:[%s1 + $0x1c] sm:$0xf]
  %v33 = vld [vmem:[%s1 + $0x20] sm:$0xf]
  %v34 = vld [vmem:[%s1 + $0x24] sm:$0xf]
  %v35 = vld [vmem:[%s1 + $0x28] sm:$0xf]
  %v36 = vld [vmem:[%s1 + $0x2c] sm:$0xf]
  %v37 = vld [vmem:[%s1 + $0x30] sm:$0xf]
  %v38 = vld [vmem:[%s1 + $0x34] sm:$0xf]
  %v39 = vld [vmem:[%s1 + $0x38] sm:$0xf]
  %v40 = vld [vmem:[%s1 + $0x3c] sm:$0xf]
  %v41 = vld [vmem:[%s1 + $0x40] sm:$0xf]
  %v42 = vld [vmem:[%s1 + $0x44] sm:$0xf]
  %v43 = vld [vmem:[%s1 + $0x48] sm:$0xf]
  %v44 = vld [vmem:[%s1 + $0x4c] sm:$0xf]
  %v45 = vld [vmem:[%s1 + $0x50] sm:$0xf]
  %v46 = vld [vmem:[%s1 + $0x54] sm:$0xf]
  %v47 = vld [vmem:[%s1 + $0x58] sm:$0xf]
  %v48 = vld [vmem:[%s1 + $0x5c] sm:$0xf]
  %v49 = vld [vmem:[%s1 + $0x60] sm:$0xf]
  %v50 = vld [vmem:[%s1 + $0x64] sm:$0xf]
  %v51 = vld [vmem:[%s1 + $0x68] sm:$0xf]
  %v52 = vld [vmem:[%s1 + $0x6c] sm:$0xf]
  %v53 = vld [vmem:[%s1 + $0x70] sm:$0xf]
  %v54 = vld [vmem:[%s1 + $0x74] sm:$0xf]
  %v55 = vld [vmem:[%s1 + $0x78] sm:$0xf]
  %v56 = vld [vmem:[%s1 + $0x7c] sm:$0xf]
  %v57 = vld [vmem:[%s1 + $0x80] sm:$0xf]
  %v58 = vld [vmem:[%s1 + $0x84] sm:$0xf]
  %v59 = vld [vmem:[%s1 + $0x88] sm:$0xf]
  %v60 = vld [vmem:[%s1 + $0x8c] sm:$0xf]
  %v61 = vld [vmem:[%s1 + $0x90] sm:$0xf]
  %v62 = vld [vmem:[%s1 + $0x94] sm:$0xf]
  %v63 = vld [vmem:[%s1 + $0x98] sm:$0xf]
  %v64 = vld [vmem:[%s1 + $0x9c] sm:$0xf]
  %v65 = vld [vmem:[%s1 + $0xa0] sm:$0xf]
  %v66 = vld [vmem:[%s1 + $0xa4] sm:$0xf]
  %v67 = vld [vmem:[%s1 + $0xa8] sm:$0xf]
  %v68 = vld [vmem:[%s1 + $0xac] sm:$0xf]
  %v69 = vld [vmem:[%s1 + $0xb0] sm:$0xf]
  %v70 = vld [vmem:[%s2] sm:$0xff]
  %v71 = vld [vmem:[%s2 + $0x8] sm:$0xff]
  %v72 = vld [vmem:[%s2 + $0x10] sm:$0xff]
  %v73 = vld [vmem:[%s2 + $0x18] sm:$0xff]
  %v74 = vld [vmem:[%s2 + $0x20] sm:$0xff]
  %76 = vset.pattern.permute.xlu0 0
  %77 = vperm.xlu0 %76, %v70
  %v78 = vpop.permute.xlu0 %77
  %81 = vset.pattern.permute.xlu0 0
  %82 = vperm.xlu0 %81, %v71
  %v83 = vpop.permute.xlu0 %82
  %86 = vset.pattern.permute.xlu0 0
  %87 = vperm.xlu0 %86, %v72
  %v88 = vpop.permute.xlu0 %87
  %91 = vset.pattern.permute.xlu0 0
  %92 = vperm.xlu0 %91, %v73
  %v93 = vpop.permute.xlu0 %92
  %96 = vset.pattern.permute.xlu0 0
  %97 = vperm.xlu0 %96, %v74
  %v98 = vpop.permute.xlu0 %97
  %v110 = vunpack.c.l.b16 %v15
  %v111 = vunpack.c.h.b16 %v15
  %v112 = vunpack.c.l.b16 %v16
  %v113 = vunpack.c.l.b16 %v17
  %v114 = vunpack.c.h.b16 %v17
  %v115 = vunpack.c.l.b16 %v18
  %v116 = vunpack.c.l.b16 %v19
  %v117 = vunpack.c.h.b16 %v19
  %v118 = vunpack.c.l.b16 %v20
  %v119 = vunpack.c.l.b16 %v21
  %v120 = vunpack.c.h.b16 %v21
  %v121 = vunpack.c.l.b16 %v22
  %v122 = vunpack.c.l.b16 %v23
  %v123 = vunpack.c.h.b16 %v23
  %v124 = vunpack.c.l.b16 %v24
  %v125 = vpack.c.b16 %v113, %v110
  %v126 = vpack.c.b16 %v114, %v111
  %v127 = vpack.c.b16 %v115, %v112
  %v128 = vpack.c.b16 %v119, %v116
  %v129 = vpack.c.b16 %v120, %v117
  %v130 = vpack.c.b16 %v121, %v118
  %v131 = vpack.c.b16 %v122, %v122
  %v132 = vpack.c.b16 %v123, %v123
  %v133 = vpack.c.b16 %v124, %v124
  %v185 = vunpack.c.l.b16 %v25
  %v186 = vunpack.c.l.b16 %v26
  %v187 = vunpack.c.l.b16 %v27
  %v188 = vunpack.c.l.b16 %v28
  %v189 = vunpack.c.l.b16 %v29
  %v190 = vunpack.c.l.b16 %v30
  %v191 = vunpack.c.l.b16 %v31
  %v192 = vunpack.c.l.b16 %v32
  %v193 = vunpack.c.l.b16 %v33
  %v194 = vunpack.c.l.b16 %v34
  %v195 = vunpack.c.l.b16 %v35
  %v196 = vunpack.c.l.b16 %v36
  %v197 = vunpack.c.l.b16 %v37
  %v198 = vunpack.c.l.b16 %v38
  %v199 = vunpack.c.l.b16 %v39
  %v200 = vunpack.c.l.b16 %v40
  %v201 = vunpack.c.l.b16 %v41
  %v202 = vunpack.c.l.b16 %v42
  %v203 = vunpack.c.l.b16 %v43
  %v204 = vunpack.c.l.b16 %v44
  %v205 = vunpack.c.l.b16 %v45
  %v206 = vunpack.c.l.b16 %v46
  %v207 = vunpack.c.l.b16 %v47
  %v208 = vunpack.c.l.b16 %v48
  %v209 = vunpack.c.l.b16 %v49
  %v210 = vunpack.c.l.b16 %v50
  %v211 = vunpack.c.l.b16 %v51
  %v212 = vunpack.c.l.b16 %v52
  %v213 = vunpack.c.l.b16 %v53
  %v214 = vunpack.c.l.b16 %v54
  %v215 = vunpack.c.l.b16 %v55
  %v216 = vunpack.c.l.b16 %v56
  %v217 = vunpack.c.l.b16 %v57
  %v218 = vunpack.c.l.b16 %v58
  %v219 = vunpack.c.l.b16 %v59
  %v220 = vunpack.c.l.b16 %v60
  %v221 = vunpack.c.l.b16 %v61
  %v222 = vunpack.c.l.b16 %v62
  %v223 = vunpack.c.l.b16 %v63
  %v224 = vunpack.c.l.b16 %v64
  %v225 = vunpack.c.l.b16 %v65
  %v226 = vunpack.c.l.b16 %v66
  %v227 = vunpack.c.l.b16 %v67
  %v228 = vunpack.c.l.b16 %v68
  %v229 = vunpack.c.l.b16 %v69
  %v230 = vpack.c.b16 %v186, %v185
  %v231 = vpack.c.b16 %v188, %v187
  %v232 = vpack.c.b16 %v190, %v189
  %v233 = vpack.c.b16 %v192, %v191
  %v234 = vpack.c.b16 %v194, %v193
  %v235 = vpack.c.b16 %v196, %v195
  %v236 = vpack.c.b16 %v198, %v197
  %v237 = vpack.c.b16 %v200, %v199
  %v238 = vpack.c.b16 %v202, %v201
  %v239 = vpack.c.b16 %v204, %v203
  %v240 = vpack.c.b16 %v206, %v205
  %v241 = vpack.c.b16 %v208, %v207
  %v242 = vpack.c.b16 %v210, %v209
  %v243 = vpack.c.b16 %v212, %v211
  %v244 = vpack.c.b16 %v214, %v213
  %v245 = vpack.c.b16 %v216, %v215
  %v246 = vpack.c.b16 %v218, %v217
  %v247 = vpack.c.b16 %v220, %v219
  %v248 = vpack.c.b16 %v222, %v221
  %v249 = vpack.c.b16 %v224, %v223
  %v250 = vpack.c.b16 %v226, %v225
  %v251 = vpack.c.b16 %v228, %v227
  %v252 = vpack.c.b16 %v229, %v229
  %vm275 = vcmask 850944
  %v277 = vsel %vm275, %v127, 0
  %v280 = vsel %vm275, %v130, 0
  %v283 = vsel %vm275, %v133, 0
  %vm285 = vcmask 1043456
  %v287 = vsel %vm285, %v252, 0
  %289 = vmatpush.bf16.msra.mxu0 %v237
  %290 = vmatpush.bf16.msra.mxu0 %v236
  %291 = vmatpush.bf16.msra.mxu0 %v235
  %292 = vmatpush.bf16.msra.mxu0 %v234
  %293 = vmatpush.bf16.msra.mxu0 %v233
  %294 = vmatpush.bf16.msra.mxu0 %v232
  %295 = vmatpush.bf16.msra.mxu0 %v231
  %296 = vmatpush.bf16.msra.mxu0 %v230
  %297 = vmatmul.bf16.gmra.mxu0 %v125
  %v298 = vpop.f32.mrf.mxu0
  %v299 = vadd.f32 %v78, %v298
  %v300 = vpop.f32.mrf.mxu0
  %v301 = vadd.f32 %v83, %v300
  %302 = vmatmul.bf16.gmra.mxu0 %v128
  %v303 = vpop.f32.mrf.mxu0
  %v304 = vadd.f32 %v88, %v303
  %v305 = vpop.f32.mrf.mxu0
  %v306 = vadd.f32 %v93, %v305
  %307 = vmatmul.bf16.gmra.mxu0 %v131
  %v308 = vpop.f32.mrf.mxu0
  %v309 = vadd.f32 %v98, %v308
  %v310 = vpop.f32.mrf.mxu0
  %311 = vdwg.mxu0
  %312 = vmatpush.bf16.msra.mxu0 %v245
  %313 = vmatpush.bf16.msra.mxu0 %v244
  %314 = vmatpush.bf16.msra.mxu0 %v243
  %315 = vmatpush.bf16.msra.mxu0 %v242
  %316 = vmatpush.bf16.msra.mxu0 %v241
  %317 = vmatpush.bf16.msra.mxu0 %v240
  %318 = vmatpush.bf16.msra.mxu0 %v239
  %319 = vmatpush.bf16.msra.mxu0 %v238
  %320 = vmatmul.bf16.gmra.mxu0 %v126
  %v321 = vpop.f32.mrf.mxu0
  %v322 = vadd.f32 %v299, %v321
  %v323 = vpop.f32.mrf.mxu0
  %v324 = vadd.f32 %v301, %v323
  %325 = vmatmul.bf16.gmra.mxu0 %v129
  %v326 = vpop.f32.mrf.mxu0
  %v327 = vadd.f32 %v304, %v326
  %v328 = vpop.f32.mrf.mxu0
  %v329 = vadd.f32 %v306, %v328
  %330 = vmatmul.bf16.gmra.mxu0 %v132
  %v331 = vpop.f32.mrf.mxu0
  %v332 = vadd.f32 %v309, %v331
  %v333 = vpop.f32.mrf.mxu0
  %334 = vdwg.mxu0
  %335 = vmatpush.bf16.msra.mxu0 0
  %336 = vmatpush.bf16.msra.mxu0 %v287
  %337 = vmatpush.bf16.msra.mxu0 %v251
  %338 = vmatpush.bf16.msra.mxu0 %v250
  %339 = vmatpush.bf16.msra.mxu0 %v249
  %340 = vmatpush.bf16.msra.mxu0 %v248
  %341 = vmatpush.bf16.msra.mxu0 %v247
  %342 = vmatpush.bf16.msra.mxu0 %v246
  %343 = vmatmul.bf16.gmra.mxu0 %v277
  %v344 = vpop.f32.mrf.mxu0
  %v345 = vadd.f32 %v322, %v344
  %v346 = vpop.f32.mrf.mxu0
  %v347 = vadd.f32 %v324, %v346
  %348 = vmatmul.bf16.gmra.mxu0 %v280
  %v349 = vpop.f32.mrf.mxu0
  %v350 = vadd.f32 %v327, %v349
  %v351 = vpop.f32.mrf.mxu0
  %v352 = vadd.f32 %v329, %v351
  %353 = vmatmul.bf16.gmra.mxu0 %v283
  %v354 = vpop.f32.mrf.mxu0
  %v355 = vadd.f32 %v332, %v354
  %v356 = vpop.f32.mrf.mxu0
  %357 = vdwg.mxu0
  %v358 = vmax.f32 %v345, 0.0
  %v359 = vmax.f32 %v347, 0.0
  %v360 = vmax.f32 %v350, 0.0
  %v361 = vmax.f32 %v352, 0.0
  %v362 = vmax.f32 %v355, 0.0
  %v363 = vpack.c.bf16 %v358, %v358
  %v364 = vpack.c.bf16 %v359, %v359
  %v365 = vpack.c.bf16 %v360, %v360
  %v366 = vpack.c.bf16 %v361, %v361
  %v367 = vpack.c.bf16 %v362, %v362
  %vm368 = vcmask 27648
  %369 = vst.msk [vmem:[%s3] sm:$0xf] %vm368, %v363
  %370 = vst.msk [vmem:[%s3 + $0x4] sm:$0xf] %vm368, %v364
  %371 = vst.msk [vmem:[%s3 + $0x8] sm:$0xf] %vm368, %v365
  %372 = vst.msk [vmem:[%s3 + $0xc] sm:$0xf] %vm368, %v366
  %373 = vst.msk [vmem:[%s3 + $0x10] sm:$0xf] %vm368, %v367
  // Predicated region
  $region14: #{model_forward.34} parent=0 // pred_check
    _
  $region15: #{model_forward.34} parent=0 // pred_check_branch
    %375 = sbr.rel (0) target = $region17
  $region16: #{model_forward.34} parent=0 // pred_region
    _
  $region17: #{model_forward.34} parent=0 // pred_fallthru
    _
  // Predicated region
  $region18: #{model_forward.34} parent=0 // pred_check
    _
  $region19: #{model_forward.34} parent=0 // pred_check_branch
    %377 = sbr.rel (0) target = $region21
  $region20: #{model_forward.34} parent=0 // pred_region
    _
  $region21: #{model_forward.34} parent=0 // pred_fallthru
    _

// kernel: model_forward.37
$region0: #{model_forward.37}
  #allocation0 [shape = 'u32[]', space=smem, size = 0x4, offset = 0x4, fixed_abs, tag = 'smem constant byte address 0x4 - core index']
  #allocation1 [shape = 'u32[72,128]{1,0:T(1,128)}', space=vmem, size = 0x9000, scoped, tag = 'internal scratch']
  %s0 = inlined_call_operand.vmem [shape: bf16[24,32], index: 0, kind: input, shape index: {}]
  %s1 = inlined_call_operand.vmem [shape: bf16[32,16], index: 1, kind: input, shape index: {}]
  %s2 = inlined_call_operand.vmem [shape: f32[24,1], index: 2, kind: input, shape index: {}]
  %s3 = inlined_call_operand.vmem [shape: bf16[24,16], index: 3, kind: output, shape index: {}]
  %s4 = sld [smem:[#allocation0]]
  $region22: #{model_forward.37} parent=0
    _
  %s6 = ssub.s32 1, %s4
  %s7 = scalar_select 0, %s6, %s4
  // Predicated region
  $region2: #{model_forward.37} parent=0 // pred_check
    _
  $region3: #{model_forward.37} parent=0 // pred_check_branch
    %9 = sbr.rel (0) target = $region5
  $region4: #{model_forward.37} parent=0 // pred_region
    _
  $region5: #{model_forward.37} parent=0 // pred_fallthru
    _
  // Predicated region
  $region6: #{model_forward.37} parent=0 // pred_check
    _
  $region7: #{model_forward.37} parent=0 // pred_check_branch
    %11 = sbr.rel (0) target = $region9
  $region8: #{model_forward.37} parent=0 // pred_region
    _
  $region9: #{model_forward.37} parent=0 // pred_fallthru
    _
  // Predicated region
  $region10: #{model_forward.37} parent=0 // pred_check
    _
  $region11: #{model_forward.37} parent=0 // pred_check_branch
    %13 = sbr.rel (0) target = $region13
  $region12: #{model_forward.37} parent=0 // pred_region
    _
  $region13: #{model_forward.37} parent=0 // pred_fallthru
    _
  %v15 = vld [vmem:[%s0] sm:$0xf]
  %v16 = vld [vmem:[%s0 + $0x4] sm:$0xf]
  %v17 = vld [vmem:[%s0 + $0x8] sm:$0xf]
  %v18 = vld [vmem:[%s1] sm:$0xf]
  %v19 = vld [vmem:[%s1 + $0x4] sm:$0xf]
  %v20 = vld [vmem:[%s1 + $0x8] sm:$0xf]
  %v21 = vld [vmem:[%s1 + $0xc] sm:$0xf]
  %v22 = vld [vmem:[%s2] sm:$0xff]
  %v23 = vld [vmem:[%s2 + $0x8] sm:$0xff]
  %v24 = vld [vmem:[%s2 + $0x10] sm:$0xff]
  %26 = vset.pattern.permute.xlu0 0
  %27 = vperm.xlu0 %26, %v22
  %v28 = vpop.permute.xlu0 %27
  %31 = vset.pattern.permute.xlu0 0
  %32 = vperm.xlu0 %31, %v23
  %v33 = vpop.permute.xlu0 %32
  %36 = vset.pattern.permute.xlu0 0
  %37 = vperm.xlu0 %36, %v24
  %v38 = vpop.permute.xlu0 %37
  %v43 = vunpack.c.l.b16 %v15
  %v44 = vunpack.c.l.b16 %v16
  %v45 = vunpack.c.l.b16 %v17
  %v46 = vpack.c.b16 %v44, %v43
  %v47 = vpack.c.b16 %v45, %v45
  %v52 = vunpack.c.l.b16 %v18
  %v53 = vunpack.c.l.b16 %v19
  %v54 = vunpack.c.l.b16 %v20
  %v55 = vunpack.c.l.b16 %v21
  %v56 = vpack.c.b16 %v53, %v52
  %v57 = vpack.c.b16 %v55, %v54
  %vm60 = vcmask 261120
  %v62 = vsel %vm60, %v46, 0
  %v65 = vsel %vm60, %v47, 0
  %67 = vmatpush.bf16.msra.mxu0 0
  %68 = vmatpush.bf16.msra.mxu0 0
  %69 = vmatpush.bf16.msra.mxu0 0
  %70 = vmatpush.bf16.msra.mxu0 0
  %71 = vmatpush.bf16.msra.mxu0 0
  %72 = vmatpush.bf16.msra.mxu0 0
  %73 = vmatpush.bf16.msra.mxu0 %v57
  %74 = vmatpush.bf16.msra.mxu0 %v56
  %75 = vmatmul.bf16.gmra.mxu0 %v62
  %v76 = vpop.f32.mrf.mxu0
  %v77 = vadd.f32 %v28, %v76
  %v78 = vpop.f32.mrf.mxu0
  %v79 = vadd.f32 %v33, %v78
  %80 = vmatmul.bf16.gmra.mxu0 %v65
  %v81 = vpop.f32.mrf.mxu0
  %v82 = vadd.f32 %v38, %v81
  %v83 = vpop.f32.mrf.mxu0
  %84 = vdwg.mxu0
  %v85 = vmax.f32 %v77, 0.0
  %v86 = vmax.f32 %v79, 0.0
  %v87 = vmax.f32 %v82, 0.0
  %v88 = vpack.c.bf16 %v85, %v85
  %v89 = vpack.c.bf16 %v86, %v86
  %v90 = vpack.c.bf16 %v87, %v87
  %vm91 = vcmask 125952
  %92 = vst.msk [vmem:[%s3] sm:$0xf] %vm91, %v88
  %93 = vst.msk [vmem:[%s3 + $0x4] sm:$0xf] %vm91, %v89
  %94 = vst.msk [vmem:[%s3 + $0x8] sm:$0xf] %vm91, %v90
  // Predicated region
  $region14: #{model_forward.37} parent=0 // pred_check
    _
  $region15: #{model_forward.37} parent=0 // pred_check_branch
    %96 = sbr.rel (0) target = $region17
  $region16: #{model_forward.37} parent=0 // pred_region
    _
  $region17: #{model_forward.37} parent=0 // pred_fallthru
    _
  // Predicated region
  $region18: #{model_forward.37} parent=0 // pred_check
    _
  $region19: #{model_forward.37} parent=0 // pred_check_branch
    %98 = sbr.rel (0) target = $region21
  $region20: #{model_forward.37} parent=0 // pred_region
    _
  $region21: #{model_forward.37} parent=0 // pred_fallthru
    _

// kernel: model_forward.36
$region0: #{model_forward.36}
  #allocation0 [shape = 'u32[]', space=smem, size = 0x4, offset = 0x4, fixed_abs, tag = 'smem constant byte address 0x4 - core index']
  #allocation1 [shape = 'u32[72,128]{1,0:T(1,128)}', space=vmem, size = 0x9000, scoped, tag = 'internal scratch']
  %s0 = inlined_call_operand.vmem [shape: bf16[32,576], index: 0, kind: input, shape index: {}]
  %s1 = inlined_call_operand.vmem [shape: bf16[576,16], index: 1, kind: input, shape index: {}]
  %s2 = inlined_call_operand.vmem [shape: f32[32,1], index: 2, kind: input, shape index: {}]
  %s3 = inlined_call_operand.vmem [shape: bf16[32,16], index: 3, kind: output, shape index: {}]
  %s4 = sld [smem:[#allocation0]]
  $region22: #{model_forward.36} parent=0
    _
  %s6 = ssub.s32 1, %s4
  %s7 = scalar_select 0, %s6, %s4
  // Predicated region
  $region2: #{model_forward.36} parent=0 // pred_check
    _
  $region3: #{model_forward.36} parent=0 // pred_check_branch
    %9 = sbr.rel (0) target = $region5
  $region4: #{model_forward.36} parent=0 // pred_region
    _
  $region5: #{model_forward.36} parent=0 // pred_fallthru
    _
  // Predicated region
  $region6: #{model_forward.36} parent=0 // pred_check
    _
  $region7: #{model_forward.36} parent=0 // pred_check_branch
    %11 = sbr.rel (0) target = $region9
  $region8: #{model_forward.36} parent=0 // pred_region
    _
  $region9: #{model_forward.36} parent=0 // pred_fallthru
    _
  // Predicated region
  $region10: #{model_forward.36} parent=0 // pred_check
    _
  $region11: #{model_forward.36} parent=0 // pred_check_branch
    %13 = sbr.rel (0) target = $region13
  $region12: #{model_forward.36} parent=0 // pred_region
    _
  $region13: #{model_forward.36} parent=0 // pred_fallthru
    _
  %v15 = vld [vmem:[%s0] sm:$0xff]
  %v16 = vld [vmem:[%s0 + $0x8] sm:$0xff]
  %v17 = vld [vmem:[%s0 + $0x10] sm:$0xf]
  %v18 = vld [vmem:[%s0 + $0x14] sm:$0xff]
  %v19 = vld [vmem:[%s0 + $0x1c] sm:$0xff]
  %v20 = vld [vmem:[%s0 + $0x24] sm:$0xf]
  %v21 = vld [vmem:[%s0 + $0x28] sm:$0xff]
  %v22 = vld [vmem:[%s0 + $0x30] sm:$0xff]
  %v23 = vld [vmem:[%s0 + $0x38] sm:$0xf]
  %v24 = vld [vmem:[%s0 + $0x3c] sm:$0xff]
  %v25 = vld [vmem:[%s0 + $0x44] sm:$0xff]
  %v26 = vld [vmem:[%s0 + $0x4c] sm:$0xf]
  %v27 = vld [vmem:[%s1] sm:$0xf]
  %v28 = vld [vmem:[%s1 + $0x4] sm:$0xf]
  %v29 = vld [vmem:[%s1 + $0x8] sm:$0xf]
  %v30 = vld [vmem:[%s1 + $0xc] sm:$0xf]
  %v31 = vld [vmem:[%s1 + $0x10] sm:$0xf]
  %v32 = vld [vmem:[%s1 + $0x14] sm:$0xf]
  %v33 = vld [vmem:[%s1 + $0x18] sm:$0xf]
  %v34 = vld [vmem:[%s1 + $0x1c] sm:$0xf]
  %v35 = vld [vmem:[%s1 + $0x20] sm:$0xf]
  %v36 = vld [vmem:[%s1 + $0x24] sm:$0xf]
  %v37 = vld [vmem:[%s1 + $0x28] sm:$0xf]
  %v38 = vld [vmem:[%s1 + $0x2c] sm:$0xf]
  %v39 = vld [vmem:[%s1 + $0x30] sm:$0xf]
  %v40 = vld [vmem:[%s1 + $0x34] sm:$0xf]
  %v41 = vld [vmem:[%s1 + $0x38] sm:$0xf]
  %v42 = vld [vmem:[%s1 + $0x3c] sm:$0xf]
  %v43 = vld [vmem:[%s1 + $0x40] sm:$0xf]
  %v44 = vld [vmem:[%s1 + $0x44] sm:$0xf]
  %v45 = vld [vmem:[%s1 + $0x48] sm:$0xf]
  %v46 = vld [vmem:[%s1 + $0x4c] sm:$0xf]
  %v47 = vld [vmem:[%s1 + $0x50] sm:$0xf]
  %v48 = vld [vmem:[%s1 + $0x54] sm:$0xf]
  %v49 = vld [vmem:[%s1 + $0x58] sm:$0xf]
  %v50 = vld [vmem:[%s1 + $0x5c] sm:$0xf]
  %v51 = vld [vmem:[%s1 + $0x60] sm:$0xf]
  %v52 = vld [vmem:[%s1 + $0x64] sm:$0xf]
  %v53 = vld [vmem:[%s1 + $0x68] sm:$0xf]
  %v54 = vld [vmem:[%s1 + $0x6c] sm:$0xf]
  %v55 = vld [vmem:[%s1 + $0x70] sm:$0xf]
  %v56 = vld [vmem:[%s1 + $0x74] sm:$0xf]
  %v57 = vld [vmem:[%s1 + $0x78] sm:$0xf]
  %v58 = vld [vmem:[%s1 + $0x7c] sm:$0xf]
  %v59 = vld [vmem:[%s1 + $0x80] sm:$0xf]
  %v60 = vld [vmem:[%s1 + $0x84] sm:$0xf]
  %v61 = vld [vmem:[%s1 + $0x88] sm:$0xf]
  %v62 = vld [vmem:[%s1 + $0x8c] sm:$0xf]
  %v63 = vld [vmem:[%s1 + $0x90] sm:$0xf]
  %v64 = vld [vmem:[%s1 + $0x94] sm:$0xf]
  %v65 = vld [vmem:[%s1 + $0x98] sm:$0xf]
  %v66 = vld [vmem:[%s1 + $0x9c] sm:$0xf]
  %v67 = vld [vmem:[%s1 + $0xa0] sm:$0xf]
  %v68 = vld [vmem:[%s1 + $0xa4] sm:$0xf]
  %v69 = vld [vmem:[%s1 + $0xa8] sm:$0xf]
  %v70 = vld [vmem:[%s1 + $0xac] sm:$0xf]
  %v71 = vld [vmem:[%s1 + $0xb0] sm:$0xf]
  %v72 = vld [vmem:[%s1 + $0xb4] sm:$0xf]
  %v73 = vld [vmem:[%s1 + $0xb8] sm:$0xf]
  %v74 = vld [vmem:[%s1 + $0xbc] sm:$0xf]
  %v75 = vld [vmem:[%s1 + $0xc0] sm:$0xf]
  %v76 = vld [vmem:[%s1 + $0xc4] sm:$0xf]
  %v77 = vld [vmem:[%s1 + $0xc8] sm:$0xf]
  %v78 = vld [vmem:[%s1 + $0xcc] sm:$0xf]
  %v79 = vld [vmem:[%s1 + $0xd0] sm:$0xf]
  %v80 = vld [vmem:[%s1 + $0xd4] sm:$0xf]
  %v81 = vld [vmem:[%s1 + $0xd8] sm:$0xf]
  %v82 = vld [vmem:[%s1 + $0xdc] sm:$0xf]
  %v83 = vld [vmem:[%s1 + $0xe0] sm:$0xf]
  %v84 = vld [vmem:[%s1 + $0xe4] sm:$0xf]
  %v85 = vld [vmem:[%s1 + $0xe8] sm:$0xf]
  %v86 = vld [vmem:[%s1 + $0xec] sm:$0xf]
  %v87 = vld [vmem:[%s1 + $0xf0] sm:$0xf]
  %v88 = vld [vmem:[%s1 + $0xf4] sm:$0xf]
  %v89 = vld [vmem:[%s1 + $0xf8] sm:$0xf]
  %v90 = vld [vmem:[%s1 + $0xfc] sm:$0xf]
  %v91 = vld [vmem:[%s1 + $0x100] sm:$0xf]
  %v92 = vld [vmem:[%s1 + $0x104] sm:$0xf]
  %v93 = vld [vmem:[%s1 + $0x108] sm:$0xf]
  %v94 = vld [vmem:[%s1 + $0x10c] sm:$0xf]
  %v95 = vld [vmem:[%s1 + $0x110] sm:$0xf]
  %v96 = vld [vmem:[%s1 + $0x114] sm:$0xf]
  %v97 = vld [vmem:[%s1 + $0x118] sm:$0xf]
  %v98 = vld [vmem:[%s1 + $0x11c] sm:$0xf]
  %v99 = vld [vmem:[%s2] sm:$0xff]
  %v100 = vld [vmem:[%s2 + $0x8] sm:$0xff]
  %v101 = vld [vmem:[%s2 + $0x10] sm:$0xff]
  %v102 = vld [vmem:[%s2 + $0x18] sm:$0xff]
  %104 = vset.pattern.permute.xlu0 0
  %105 = vperm.xlu0 %104, %v99
  %v106 = vpop.permute.xlu0 %105
  %109 = vset.pattern.permute.xlu0 0
  %110 = vperm.xlu0 %109, %v100
  %v111 = vpop.permute.xlu0 %110
  %114 = vset.pattern.permute.xlu0 0
  %115 = vperm.xlu0 %114, %v101
  %v116 = vpop.permute.xlu0 %115
  %119 = vset.pattern.permute.xlu0 0
  %120 = vperm.xlu0 %119, %v102
  %v121 = vpop.permute.xlu0 %120
  %v135 = vunpack.c.l.b16 %v15
  %v136 = vunpack.c.h.b16 %v15
  %v137 = vunpack.c.l.b16 %v16
  %v138 = vunpack.c.h.b16 %v16
  %v139 = vunpack.c.l.b16 %v17
  %v140 = vunpack.c.l.b16 %v18
  %v141 = vunpack.c.h.b16 %v18
  %v142 = vunpack.c.l.b16 %v19
  %v143 = vunpack.c.h.b16 %v19
  %v144 = vunpack.c.l.b16 %v20
  %v145 = vunpack.c.l.b16 %v21
  %v146 = vunpack.c.h.b16 %v21
  %v147 = vunpack.c.l.b16 %v22
  %v148 = vunpack.c.h.b16 %v22
  %v149 = vunpack.c.l.b16 %v23
  %v150 = vunpack.c.l.b16 %v24
  %v151 = vunpack.c.h.b16 %v24
  %v152 = vunpack.c.l.b16 %v25
  %v153 = vunpack.c.h.b16 %v25
  %v154 = vunpack.c.l.b16 %v26
  %v155 = vpack.c.b16 %v140, %v135
  %v156 = vpack.c.b16 %v141, %v136
  %v157 = vpack.c.b16 %v142, %v137
  %v158 = vpack.c.b16 %v143, %v138
  %v159 = vpack.c.b16 %v144, %v139
  %v160 = vpack.c.b16 %v150, %v145
  %v161 = vpack.c.b16 %v151, %v146
  %v162 = vpack.c.b16 %v152, %v147
  %v163 = vpack.c.b16 %v153, %v148
  %v164 = vpack.c.b16 %v154, %v149
  %v245 = vunpack.c.l.b16 %v27
  %v246 = vunpack.c.l.b16 %v28
  %v247 = vunpack.c.l.b16 %v29
  %v248 = vunpack.c.l.b16 %v30
  %v249 = vunpack.c.l.b16 %v31
  %v250 = vunpack.c.l.b16 %v32
  %v251 = vunpack.c.l.b16 %v33
  %v252 = vunpack.c.l.b16 %v34
  %v253 = vunpack.c.l.b16 %v35
  %v254 = vunpack.c.l.b16 %v36
  %v255 = vunpack.c.l.b16 %v37
  %v256 = vunpack.c.l.b16 %v38
  %v257 = vunpack.c.l.b16 %v39
  %v258 = vunpack.c.l.b16 %v40
  %v259 = vunpack.c.l.b16 %v41
  %v260 = vunpack.c.l.b16 %v42
  %v261 = vunpack.c.l.b16 %v43
  %v262 = vunpack.c.l.b16 %v44
  %v263 = vunpack.c.l.b16 %v45
  %v264 = vunpack.c.l.b16 %v46
  %v265 = vunpack.c.l.b16 %v47
  %v266 = vunpack.c.l.b16 %v48
  %v267 = vunpack.c.l.b16 %v49
  %v268 = vunpack.c.l.b16 %v50
  %v269 = vunpack.c.l.b16 %v51
  %v270 = vunpack.c.l.b16 %v52
  %v271 = vunpack.c.l.b16 %v53
  %v272 = vunpack.c.l.b16 %v54
  %v273 = vunpack.c.l.b16 %v55
  %v274 = vunpack.c.l.b16 %v56
  %v275 = vunpack.c.l.b16 %v57
  %v276 = vunpack.c.l.b16 %v58
  %v277 = vunpack.c.l.b16 %v59
  %v278 = vunpack.c.l.b16 %v60
  %v279 = vunpack.c.l.b16 %v61
  %v280 = vunpack.c.l.b16 %v62
  %v281 = vunpack.c.l.b16 %v63
  %v282 = vunpack.c.l.b16 %v64
  %v283 = vunpack.c.l.b16 %v65
  %v284 = vunpack.c.l.b16 %v66
  %v285 = vunpack.c.l.b16 %v67
  %v286 = vunpack.c.l.b16 %v68
  %v287 = vunpack.c.l.b16 %v69
  %v288 = vunpack.c.l.b16 %v70
  %v289 = vunpack.c.l.b16 %v71
  %v290 = vunpack.c.l.b16 %v72
  %v291 = vunpack.c.l.b16 %v73
  %v292 = vunpack.c.l.b16 %v74
  %v293 = vunpack.c.l.b16 %v75
  %v294 = vunpack.c.l.b16 %v76
  %v295 = vunpack.c.l.b16 %v77
  %v296 = vunpack.c.l.b16 %v78
  %v297 = vunpack.c.l.b16 %v79
  %v298 = vunpack.c.l.b16 %v80
  %v299 = vunpack.c.l.b16 %v81
  %v300 = vunpack.c.l.b16 %v82
  %v301 = vunpack.c.l.b16 %v83
  %v302 = vunpack.c.l.b16 %v84
  %v303 = vunpack.c.l.b16 %v85
  %v304 = vunpack.c.l.b16 %v86
  %v305 = vunpack.c.l.b16 %v87
  %v306 = vunpack.c.l.b16 %v88
  %v307 = vunpack.c.l.b16 %v89
  %v308 = vunpack.c.l.b16 %v90
  %v309 = vunpack.c.l.b16 %v91
  %v310 = vunpack.c.l.b16 %v92
  %v311 = vunpack.c.l.b16 %v93
  %v312 = vunpack.c.l.b16 %v94
  %v313 = vunpack.c.l.b16 %v95
  %v314 = vunpack.c.l.b16 %v96
  %v315 = vunpack.c.l.b16 %v97
  %v316 = vunpack.c.l.b16 %v98
  %v317 = vpack.c.b16 %v246, %v245
  %v318 = vpack.c.b16 %v248, %v247
  %v319 = vpack.c.b16 %v250, %v249
  %v320 = vpack.c.b16 %v252, %v251
  %v321 = vpack.c.b16 %v254, %v253
  %v322 = vpack.c.b16 %v256, %v255
  %v323 = vpack.c.b16 %v258, %v257
  %v324 = vpack.c.b16 %v260, %v259
  %v325 = vpack.c.b16 %v262, %v261
  %v326 = vpack.c.b16 %v264, %v263
  %v327 = vpack.c.b16 %v266, %v265
  %v328 = vpack.c.b16 %v268, %v267
  %v329 = vpack.c.b16 %v270, %v269
  %v330 = vpack.c.b16 %v272, %v271
  %v331 = vpack.c.b16 %v274, %v273
  %v332 = vpack.c.b16 %v276, %v275
  %v333 = vpack.c.b16 %v278, %v277
  %v334 = vpack.c.b16 %v280, %v279
  %v335 = vpack.c.b16 %v282, %v281
  %v336 = vpack.c.b16 %v284, %v283
  %v337 = vpack.c.b16 %v286, %v285
  %v338 = vpack.c.b16 %v288, %v287
  %v339 = vpack.c.b16 %v290, %v289
  %v340 = vpack.c.b16 %v292, %v291
  %v341 = vpack.c.b16 %v294, %v293
  %v342 = vpack.c.b16 %v296, %v295
  %v343 = vpack.c.b16 %v298, %v297
  %v344 = vpack.c.b16 %v300, %v299
  %v345 = vpack.c.b16 %v302, %v301
  %v346 = vpack.c.b16 %v304, %v303
  %v347 = vpack.c.b16 %v306, %v305
  %v348 = vpack.c.b16 %v308, %v307
  %v349 = vpack.c.b16 %v310, %v309
  %v350 = vpack.c.b16 %v312, %v311
  %v351 = vpack.c.b16 %v314, %v313
  %v352 = vpack.c.b16 %v316, %v315
  %vm389 = vcmask 523264
  %v391 = vsel %vm389, %v159, 0
  %v394 = vsel %vm389, %v164, 0
  %396 = vmatpush.bf16.msra.mxu0 %v324
  %397 = vmatpush.bf16.msra.mxu0 %v323
  %398 = vmatpush.bf16.msra.mxu0 %v322
  %399 = vmatpush.bf16.msra.mxu0 %v321
  %400 = vmatpush.bf16.msra.mxu0 %v320
  %401 = vmatpush.bf16.msra.mxu0 %v319
  %402 = vmatpush.bf16.msra.mxu0 %v318
  %403 = vmatpush.bf16.msra.mxu0 %v317
  %404 = vmatmul.bf16.gmra.mxu0 %v155
  %v405 = vpop.f32.mrf.mxu0
  %v406 = vadd.f32 %v106, %v405
  %v407 = vpop.f32.mrf.mxu0
  %v408 = vadd.f32 %v111, %v407
  %409 = vmatmul.bf16.gmra.mxu0 %v160
  %v410 = vpop.f32.mrf.mxu0
  %v411 = vadd.f32 %v116, %v410
  %v412 = vpop.f32.mrf.mxu0
  %v413 = vadd.f32 %v121, %v412
  %414 = vdwg.mxu0
  %415 = vmatpush.bf16.msra.mxu0 %v332
  %416 = vmatpush.bf16.msra.mxu0 %v331
  %417 = vmatpush.bf16.msra.mxu0 %v330
  %418 = vmatpush.bf16.msra.mxu0 %v329
  %419 = vmatpush.bf16.msra.mxu0 %v328
  %420 = vmatpush.bf16.msra.mxu0 %v327
  %421 = vmatpush.bf16.msra.mxu0 %v326
  %422 = vmatpush.bf16.msra.mxu0 %v325
  %423 = vmatmul.bf16.gmra.mxu0 %v156
  %v424 = vpop.f32.mrf.mxu0
  %v425 = vadd.f32 %v406, %v424
  %v426 = vpop.f32.mrf.mxu0
  %v427 = vadd.f32 %v408, %v426
  %428 = vmatmul.bf16.gmra.mxu0 %v161
  %v429 = vpop.f32.mrf.mxu0
  %v430 = vadd.f32 %v411, %v429
  %v431 = vpop.f32.mrf.mxu0
  %v432 = vadd.f32 %v413, %v431
  %433 = vdwg.mxu0
  %434 = vmatpush.bf16.msra.mxu0 %v340
  %435 = vmatpush.bf16.msra.mxu0 %v339
  %436 = vmatpush.bf16.msra.mxu0 %v338
  %437 = vmatpush.bf16.msra.mxu0 %v337
  %438 = vmatpush.bf16.msra.mxu0 %v336
  %439 = vmatpush.bf16.msra.mxu0 %v335
  %440 = vmatpush.bf16.msra.mxu0 %v334
  %441 = vmatpush.bf16.msra.mxu0 %v333
  %442 = vmatmul.bf16.gmra.mxu0 %v157
  %v443 = vpop.f32.mrf.mxu0
  %v444 = vadd.f32 %v425, %v443
  %v445 = vpop.f32.mrf.mxu0
  %v446 = vadd.f32 %v427, %v445
  %447 = vmatmul.bf16.gmra.mxu0 %v162
  %v448 = vpop.f32.mrf.mxu0
  %v449 = vadd.f32 %v430, %v448
  %v450 = vpop.f32.mrf.mxu0
  %v451 = vadd.f32 %v432, %v450
  %452 = vdwg.mxu0
  %453 = vmatpush.bf16.msra.mxu0 %v348
  %454 = vmatpush.bf16.msra.mxu0 %v347
  %455 = vmatpush.bf16.msra.mxu0 %v346
  %456 = vmatpush.bf16.msra.mxu0 %v345
  %457 = vmatpush.bf16.msra.mxu0 %v344
  %458 = vmatpush.bf16.msra.mxu0 %v343
  %459 = vmatpush.bf16.msra.mxu0 %v342
  %460 = vmatpush.bf16.msra.mxu0 %v341
  %461 = vmatmul.bf16.gmra.mxu0 %v158
  %v462 = vpop.f32.mrf.mxu0
  %v463 = vadd.f32 %v444, %v462
  %v464 = vpop.f32.mrf.mxu0
  %v465 = vadd.f32 %v446, %v464
  %466 = vmatmul.bf16.gmra.mxu0 %v163
  %v467 = vpop.f32.mrf.mxu0
  %v468 = vadd.f32 %v449, %v467
  %v469 = vpop.f32.mrf.mxu0
  %v470 = vadd.f32 %v451, %v469
  %471 = vdwg.mxu0
  %472 = vmatpush.bf16.msra.mxu0 0
  %473 = vmatpush.bf16.msra.mxu0 0
  %474 = vmatpush.bf16.msra.mxu0 0
  %475 = vmatpush.bf16.msra.mxu0 0
  %476 = vmatpush.bf16.msra.mxu0 %v352
  %477 = vmatpush.bf16.msra.mxu0 %v351
  %478 = vmatpush.bf16.msra.mxu0 %v350
  %479 = vmatpush.bf16.msra.mxu0 %v349
  %480 = vmatmul.bf16.gmra.mxu0 %v391
  %v481 = vpop.f32.mrf.mxu0
  %v482 = vadd.f32 %v463, %v481
  %v483 = vpop.f32.mrf.mxu0
  %v484 = vadd.f32 %v465, %v483
  %485 = vmatmul.bf16.gmra.mxu0 %v394
  %v486 = vpop.f32.mrf.mxu0
  %v487 = vadd.f32 %v468, %v486
  %v488 = vpop.f32.mrf.mxu0
  %v489 = vadd.f32 %v470, %v488
  %490 = vdwg.mxu0
  %v491 = vmax.f32 %v482, 0.0
  %v492 = vmax.f32 %v484, 0.0
  %v493 = vmax.f32 %v487, 0.0
  %v494 = vmax.f32 %v489, 0.0
  %v495 = vpack.c.bf16 %v491, %v491
  %v496 = vpack.c.bf16 %v492, %v492
  %v497 = vpack.c.bf16 %v493, %v493
  %v498 = vpack.c.bf16 %v494, %v494
  %vm499 = vcmask 125952
  %500 = vst.msk [vmem:[%s3] sm:$0xf] %vm499, %v495
  %501 = vst.msk [vmem:[%s3 + $0x4] sm:$0xf] %vm499, %v496
  %502 = vst.msk [vmem:[%s3 + $0x8] sm:$0xf] %vm499, %v497
  %503 = vst.msk [vmem:[%s3 + $0xc] sm:$0xf] %vm499, %v498
  // Predicated region
  $region14: #{model_forward.36} parent=0 // pred_check
    _
  $region15: #{model_forward.36} parent=0 // pred_check_branch
    %505 = sbr.rel (0) target = $region17
  $region16: #{model_forward.36} parent=0 // pred_region
    _
  $region17: #{model_forward.36} parent=0 // pred_fallthru
    _
  // Predicated region
  $region18: #{model_forward.36} parent=0 // pred_check
    _
  $region19: #{model_forward.36} parent=0 // pred_check_branch
    %507 = sbr.rel (0) target = $region21
  $region20: #{model_forward.36} parent=0 // pred_region
    _
  $region21: #{model_forward.36} parent=0 // pred_fallthru
    _

// kernel: model_forward.43
$region0: #{model_forward.43}
  #allocation0 [shape = 'u32[]', space=smem, size = 0x4, offset = 0x4, fixed_abs, tag = 'smem constant byte address 0x4 - core index']
  #allocation1 [shape = 'u32[72,128]{1,0:T(1,128)}', space=vmem, size = 0x9000, scoped, tag = 'internal scratch']
  %s0 = inlined_call_operand.vmem [shape: bf16[24,24], index: 0, kind: input, shape index: {}]
  %s1 = inlined_call_operand.vmem [shape: bf16[24,64], index: 1, kind: input, shape index: {}]
  %s2 = inlined_call_operand.vmem [shape: f32[24,1], index: 2, kind: input, shape index: {}]
  %s3 = inlined_call_operand.vmem [shape: bf16[24,64], index: 3, kind: output, shape index: {}]
  %s4 = sld [smem:[#allocation0]]
  $region22: #{model_forward.43} parent=0
    _
  %s6 = ssub.s32 1, %s4
  %s7 = scalar_select 0, %s6, %s4
  // Predicated region
  $region2: #{model_forward.43} parent=0 // pred_check
    _
  $region3: #{model_forward.43} parent=0 // pred_check_branch
    %9 = sbr.rel (0) target = $region5
  $region4: #{model_forward.43} parent=0 // pred_region
    _
  $region5: #{model_forward.43} parent=0 // pred_fallthru
    _
  // Predicated region
  $region6: #{model_forward.43} parent=0 // pred_check
    _
  $region7: #{model_forward.43} parent=0 // pred_check_branch
    %11 = sbr.rel (0) target = $region9
  $region8: #{model_forward.43} parent=0 // pred_region
    _
  $region9: #{model_forward.43} parent=0 // pred_fallthru
    _
  // Predicated region
  $region10: #{model_forward.43} parent=0 // pred_check
    _
  $region11: #{model_forward.43} parent=0 // pred_check_branch
    %13 = sbr.rel (0) target = $region13
  $region12: #{model_forward.43} parent=0 // pred_region
    _
  $region13: #{model_forward.43} parent=0 // pred_fallthru
    _
  %v15 = vld [vmem:[%s0] sm:$0xf]
  %v16 = vld [vmem:[%s0 + $0x4] sm:$0xf]
  %v17 = vld [vmem:[%s0 + $0x8] sm:$0xf]
  %v18 = vld [vmem:[%s1] sm:$0xf]
  %v19 = vld [vmem:[%s1 + $0x4] sm:$0xf]
  %v20 = vld [vmem:[%s1 + $0x8] sm:$0xf]
  %v21 = vld [vmem:[%s2] sm:$0xff]
  %v22 = vld [vmem:[%s2 + $0x8] sm:$0xff]
  %v23 = vld [vmem:[%s2 + $0x10] sm:$0xff]
  %25 = vset.pattern.permute.xlu0 0
  %26 = vperm.xlu0 %25, %v21
  %v27 = vpop.permute.xlu0 %26
  %30 = vset.pattern.permute.xlu0 0
  %31 = vperm.xlu0 %30, %v22
  %v32 = vpop.permute.xlu0 %31
  %35 = vset.pattern.permute.xlu0 0
  %36 = vperm.xlu0 %35, %v23
  %v37 = vpop.permute.xlu0 %36
  %v42 = vunpack.c.l.b16 %v15
  %v43 = vunpack.c.l.b16 %v16
  %v44 = vunpack.c.l.b16 %v17
  %v45 = vpack.c.b16 %v43, %v42
  %v46 = vpack.c.b16 %v44, %v44
  %v50 = vunpack.c.l.b16 %v18
  %v51 = vunpack.c.l.b16 %v19
  %v52 = vunpack.c.l.b16 %v20
  %v53 = vpack.c.b16 %v51, %v50
  %v54 = vpack.c.b16 %v52, %v52
  %vm56 = vcmask 195584
  %v58 = vsel %vm56, %v45, 0
  %v61 = vsel %vm56, %v46, 0
  %vm63 = vcmask 1043456
  %v65 = vsel %vm63, %v54, 0
  %67 = vmatpush.bf16.msra.mxu0 0
  %68 = vmatpush.bf16.msra.mxu0 0
  %69 = vmatpush.bf16.msra.mxu0 0
  %70 = vmatpush.bf16.msra.mxu0 0
  %71 = vmatpush.bf16.msra.mxu0 0
  %72 = vmatpush.bf16.msra.mxu0 0
  %73 = vmatpush.bf16.msra.mxu0 %v65
  %74 = vmatpush.bf16.msra.mxu0 %v53
  %75 = vmatmul.bf16.gmra.mxu0 %v58
  %v76 = vpop.f32.mrf.mxu0
  %v77 = vadd.f32 %v27, %v76
  %v78 = vpop.f32.mrf.mxu0
  %v79 = vadd.f32 %v32, %v78
  %80 = vmatmul.bf16.gmra.mxu0 %v61
  %v81 = vpop.f32.mrf.mxu0
  %v82 = vadd.f32 %v37, %v81
  %v83 = vpop.f32.mrf.mxu0
  %84 = vdwg.mxu0
  %v85 = vmax.f32 %v77, 0.0
  %v86 = vmax.f32 %v79, 0.0
  %v87 = vmax.f32 %v82, 0.0
  %v88 = vpack.c.bf16 %v85, %v85
  %v89 = vpack.c.bf16 %v86, %v86
  %v90 = vpack.c.bf16 %v87, %v87
  %vm91 = vcmask 519168
  %92 = vst.msk [vmem:[%s3] sm:$0xf] %vm91, %v88
  %93 = vst.msk [vmem:[%s3 + $0x4] sm:$0xf] %vm91, %v89
  %94 = vst.msk [vmem:[%s3 + $0x8] sm:$0xf] %vm91, %v90
  // Predicated region
  $region14: #{model_forward.43} parent=0 // pred_check
    _
  $region15: #{model_forward.43} parent=0 // pred_check_branch
    %96 = sbr.rel (0) target = $region17
  $region16: #{model_forward.43} parent=0 // pred_region
    _
  $region17: #{model_forward.43} parent=0 // pred_fallthru
    _
  // Predicated region
  $region18: #{model_forward.43} parent=0 // pred_check
    _
  $region19: #{model_forward.43} parent=0 // pred_check_branch
    %98 = sbr.rel (0) target = $region21
  $region20: #{model_forward.43} parent=0 // pred_region
    _
  $region21: #{model_forward.43} parent=0 // pred_fallthru
    _

// kernel: model_forward.38
$region0: #{model_forward.38}
  #allocation0 [shape = 'u32[]', space=smem, size = 0x4, offset = 0x4, fixed_abs, tag = 'smem constant byte address 0x4 - core index']
  #allocation1 [shape = 'u32[72,128]{1,0:T(1,128)}', space=vmem, size = 0x9000, scoped, tag = 'internal scratch']
  %s0 = inlined_call_operand.vmem [shape: bf16[24,432], index: 0, kind: input, shape index: {}]
  %s1 = inlined_call_operand.vmem [shape: bf16[432,64], index: 1, kind: input, shape index: {}]
  %s2 = inlined_call_operand.vmem [shape: f32[24,1], index: 2, kind: input, shape index: {}]
  %s3 = inlined_call_operand.vmem [shape: bf16[24,64], index: 3, kind: output, shape index: {}]
  %s4 = sld [smem:[#allocation0]]
  $region22: #{model_forward.38} parent=0
    _
  %s6 = ssub.s32 1, %s4
  %s7 = scalar_select 0, %s6, %s4
  // Predicated region
  $region2: #{model_forward.38} parent=0 // pred_check
    _
  $region3: #{model_forward.38} parent=0 // pred_check_branch
    %9 = sbr.rel (0) target = $region5
  $region4: #{model_forward.38} parent=0 // pred_region
    _
  $region5: #{model_forward.38} parent=0 // pred_fallthru
    _
  // Predicated region
  $region6: #{model_forward.38} parent=0 // pred_check
    _
  $region7: #{model_forward.38} parent=0 // pred_check_branch
    %11 = sbr.rel (0) target = $region9
  $region8: #{model_forward.38} parent=0 // pred_region
    _
  $region9: #{model_forward.38} parent=0 // pred_fallthru
    _
  // Predicated region
  $region10: #{model_forward.38} parent=0 // pred_check
    _
  $region11: #{model_forward.38} parent=0 // pred_check_branch
    %13 = sbr.rel (0) target = $region13
  $region12: #{model_forward.38} parent=0 // pred_region
    _
  $region13: #{model_forward.38} parent=0 // pred_fallthru
    _
  %v15 = vld [vmem:[%s0] sm:$0xff]
  %v16 = vld [vmem:[%s0 + $0x8] sm:$0xff]
  %v17 = vld [vmem:[%s0 + $0x10] sm:$0xff]
  %v18 = vld [vmem:[%s0 + $0x18] sm:$0xff]
  %v19 = vld [vmem:[%s0 + $0x20] sm:$0xff]
  %v20 = vld [vmem:[%s0 + $0x28] sm:$0xff]
  %v21 = vld [vmem:[%s1] sm:$0xf]
  %v22 = vld [vmem:[%s1 + $0x4] sm:$0xf]
  %v23 = vld [vmem:[%s1 + $0x8] sm:$0xf]
  %v24 = vld [vmem:[%s1 + $0xc] sm:$0xf]
  %v25 = vld [vmem:[%s1 + $0x10] sm:$0xf]
  %v26 = vld [vmem:[%s1 + $0x14] sm:$0xf]
  %v27 = vld [vmem:[%s1 + $0x18] sm:$0xf]
  %v28 = vld [vmem:[%s1 + $0x1c] sm:$0xf]
  %v29 = vld [vmem:[%s1 + $0x20] sm:$0xf]
  %v30 = vld [vmem:[%s1 + $0x24] sm:$0xf]
  %v31 = vld [vmem:[%s1 + $0x28] sm:$0xf]
  %v32 = vld [vmem:[%s1 + $0x2c] sm:$0xf]
  %v33 = vld [vmem:[%s1 + $0x30] sm:$0xf]
  %v34 = vld [vmem:[%s1 + $0x34] sm:$0xf]
  %v35 = vld [vmem:[%s1 + $0x38] sm:$0xf]
  %v36 = vld [vmem:[%s1 + $0x3c] sm:$0xf]
  %v37 = vld [vmem:[%s1 + $0x40] sm:$0xf]
  %v38 = vld [vmem:[%s1 + $0x44] sm:$0xf]
  %v39 = vld [vmem:[%s1 + $0x48] sm:$0xf]
  %v40 = vld [vmem:[%s1 + $0x4c] sm:$0xf]
  %v41 = vld [vmem:[%s1 + $0x50] sm:$0xf]
  %v42 = vld [vmem:[%s1 + $0x54] sm:$0xf]
  %v43 = vld [vmem:[%s1 + $0x58] sm:$0xf]
  %v44 = vld [vmem:[%s1 + $0x5c] sm:$0xf]
  %v45 = vld [vmem:[%s1 + $0x60] sm:$0xf]
  %v46 = vld [vmem:[%s1 + $0x64] sm:$0xf]
  %v47 = vld [vmem:[%s1 + $0x68] sm:$0xf]
  %v48 = vld [vmem:[%s1 + $0x6c] sm:$0xf]
  %v49 = vld [vmem:[%s1 + $0x70] sm:$0xf]
  %v50 = vld [vmem:[%s1 + $0x74] sm:$0xf]
  %v51 = vld [vmem:[%s1 + $0x78] sm:$0xf]
  %v52 = vld [vmem:[%s1 + $0x7c] sm:$0xf]
  %v53 = vld [vmem:[%s1 + $0x80] sm:$0xf]
  %v54 = vld [vmem:[%s1 + $0x84] sm:$0xf]
  %v55 = vld [vmem:[%s1 + $0x88] sm:$0xf]
  %v56 = vld [vmem:[%s1 + $0x8c] sm:$0xf]
  %v57 = vld [vmem:[%s1 + $0x90] sm:$0xf]
  %v58 = vld [vmem:[%s1 + $0x94] sm:$0xf]
  %v59 = vld [vmem:[%s1 + $0x98] sm:$0xf]
  %v60 = vld [vmem:[%s1 + $0x9c] sm:$0xf]
  %v61 = vld [vmem:[%s1 + $0xa0] sm:$0xf]
  %v62 = vld [vmem:[%s1 + $0xa4] sm:$0xf]
  %v63 = vld [vmem:[%s1 + $0xa8] sm:$0xf]
  %v64 = vld [vmem:[%s1 + $0xac] sm:$0xf]
  %v65 = vld [vmem:[%s1 + $0xb0] sm:$0xf]
  %v66 = vld [vmem:[%s1 + $0xb4] sm:$0xf]
  %v67 = vld [vmem:[%s1 + $0xb8] sm:$0xf]
  %v68 = vld [vmem:[%s1 + $0xbc] sm:$0xf]
  %v69 = vld [vmem:[%s1 + $0xc0] sm:$0xf]
  %v70 = vld [vmem:[%s1 + $0xc4] sm:$0xf]
  %v71 = vld [vmem:[%s1 + $0xc8] sm:$0xf]
  %v72 = vld [vmem:[%s1 + $0xcc] sm:$0xf]
  %v73 = vld [vmem:[%s1 + $0xd0] sm:$0xf]
  %v74 = vld [vmem:[%s1 + $0xd4] sm:$0xf]
  %v75 = vld [vmem:[%s2] sm:$0xff]
  %v76 = vld [vmem:[%s2 + $0x8] sm:$0xff]
  %v77 = vld [vmem:[%s2 + $0x10] sm:$0xff]
  %79 = vset.pattern.permute.xlu0 0
  %80 = vperm.xlu0 %79, %v75
  %v81 = vpop.permute.xlu0 %80
  %84 = vset.pattern.permute.xlu0 0
  %85 = vperm.xlu0 %84, %v76
  %v86 = vpop.permute.xlu0 %85
  %89 = vset.pattern.permute.xlu0 0
  %90 = vperm.xlu0 %89, %v77
  %v91 = vpop.permute.xlu0 %90
  %v99 = vunpack.c.l.b16 %v15
  %v100 = vunpack.c.h.b16 %v15
  %v101 = vunpack.c.l.b16 %v16
  %v102 = vunpack.c.h.b16 %v16
  %v103 = vunpack.c.l.b16 %v17
  %v104 = vunpack.c.h.b16 %v17
  %v105 = vunpack.c.l.b16 %v18
  %v106 = vunpack.c.h.b16 %v18
  %v107 = vunpack.c.l.b16 %v19
  %v108 = vunpack.c.h.b16 %v19
  %v109 = vunpack.c.l.b16 %v20
  %v110 = vunpack.c.h.b16 %v20
  %v111 = vpack.c.b16 %v103, %v99
  %v112 = vpack.c.b16 %v104, %v100
  %v113 = vpack.c.b16 %v105, %v101
  %v114 = vpack.c.b16 %v106, %v102
  %v115 = vpack.c.b16 %v107, %v107
  %v116 = vpack.c.b16 %v108, %v108
  %v117 = vpack.c.b16 %v109, %v109
  %v118 = vpack.c.b16 %v110, %v110
  %v179 = vunpack.c.l.b16 %v21
  %v180 = vunpack.c.l.b16 %v22
  %v181 = vunpack.c.l.b16 %v23
  %v182 = vunpack.c.l.b16 %v24
  %v183 = vunpack.c.l.b16 %v25
  %v184 = vunpack.c.l.b16 %v26
  %v185 = vunpack.c.l.b16 %v27
  %v186 = vunpack.c.l.b16 %v28
  %v187 = vunpack.c.l.b16 %v29
  %v188 = vunpack.c.l.b16 %v30
  %v189 = vunpack.c.l.b16 %v31
  %v190 = vunpack.c.l.b16 %v32
  %v191 = vunpack.c.l.b16 %v33
  %v192 = vunpack.c.l.b16 %v34
  %v193 = vunpack.c.l.b16 %v35
  %v194 = vunpack.c.l.b16 %v36
  %v195 = vunpack.c.l.b16 %v37
  %v196 = vunpack.c.l.b16 %v38
  %v197 = vunpack.c.l.b16 %v39
  %v198 = vunpack.c.l.b16 %v40
  %v199 = vunpack.c.l.b16 %v41
  %v200 = vunpack.c.l.b16 %v42
  %v201 = vunpack.c.l.b16 %v43
  %v202 = vunpack.c.l.b16 %v44
  %v203 = vunpack.c.l.b16 %v45
  %v204 = vunpack.c.l.b16 %v46
  %v205 = vunpack.c.l.b16 %v47
  %v206 = vunpack.c.l.b16 %v48
  %v207 = vunpack.c.l.b16 %v49
  %v208 = vunpack.c.l.b16 %v50
  %v209 = vunpack.c.l.b16 %v51
  %v210 = vunpack.c.l.b16 %v52
  %v211 = vunpack.c.l.b16 %v53
  %v212 = vunpack.c.l.b16 %v54
  %v213 = vunpack.c.l.b16 %v55
  %v214 = vunpack.c.l.b16 %v56
  %v215 = vunpack.c.l.b16 %v57
  %v216 = vunpack.c.l.b16 %v58
  %v217 = vunpack.c.l.b16 %v59
  %v218 = vunpack.c.l.b16 %v60
  %v219 = vunpack.c.l.b16 %v61
  %v220 = vunpack.c.l.b16 %v62
  %v221 = vunpack.c.l.b16 %v63
  %v222 = vunpack.c.l.b16 %v64
  %v223 = vunpack.c.l.b16 %v65
  %v224 = vunpack.c.l.b16 %v66
  %v225 = vunpack.c.l.b16 %v67
  %v226 = vunpack.c.l.b16 %v68
  %v227 = vunpack.c.l.b16 %v69
  %v228 = vunpack.c.l.b16 %v70
  %v229 = vunpack.c.l.b16 %v71
  %v230 = vunpack.c.l.b16 %v72
  %v231 = vunpack.c.l.b16 %v73
  %v232 = vunpack.c.l.b16 %v74
  %v233 = vpack.c.b16 %v180, %v179
  %v234 = vpack.c.b16 %v182, %v181
  %v235 = vpack.c.b16 %v184, %v183
  %v236 = vpack.c.b16 %v186, %v185
  %v237 = vpack.c.b16 %v188, %v187
  %v238 = vpack.c.b16 %v190, %v189
  %v239 = vpack.c.b16 %v192, %v191
  %v240 = vpack.c.b16 %v194, %v193
  %v241 = vpack.c.b16 %v196, %v195
  %v242 = vpack.c.b16 %v198, %v197
  %v243 = vpack.c.b16 %v200, %v199
  %v244 = vpack.c.b16 %v202, %v201
  %v245 = vpack.c.b16 %v204, %v203
  %v246 = vpack.c.b16 %v206, %v205
  %v247 = vpack.c.b16 %v208, %v207
  %v248 = vpack.c.b16 %v210, %v209
  %v249 = vpack.c.b16 %v212, %v211
  %v250 = vpack.c.b16 %v214, %v213
  %v251 = vpack.c.b16 %v216, %v215
  %v252 = vpack.c.b16 %v218, %v217
  %v253 = vpack.c.b16 %v220, %v219
  %v254 = vpack.c.b16 %v222, %v221
  %v255 = vpack.c.b16 %v224, %v223
  %v256 = vpack.c.b16 %v226, %v225
  %v257 = vpack.c.b16 %v228, %v227
  %v258 = vpack.c.b16 %v230, %v229
  %v259 = vpack.c.b16 %v232, %v231
  %vm287 = vcmask 392192
  %v289 = vsel %vm287, %v114, 0
  %v292 = vsel %vm287, %v118, 0
  %294 = vmatpush.bf16.msra.mxu0 %v240
  %295 = vmatpush.bf16.msra.mxu0 %v239
  %296 = vmatpush.bf16.msra.mxu0 %v238
  %297 = vmatpush.bf16.msra.mxu0 %v237
  %298 = vmatpush.bf16.msra.mxu0 %v236
  %299 = vmatpush.bf16.msra.mxu0 %v235
  %300 = vmatpush.bf16.msra.mxu0 %v234
  %301 = vmatpush.bf16.msra.mxu0 %v233
  %302 = vmatmul.bf16.gmra.mxu0 %v111
  %v303 = vpop.f32.mrf.mxu0
  %v304 = vadd.f32 %v81, %v303
  %v305 = vpop.f32.mrf.mxu0
  %v306 = vadd.f32 %v86, %v305
  %307 = vmatmul.bf16.gmra.mxu0 %v115
  %v308 = vpop.f32.mrf.mxu0
  %v309 = vadd.f32 %v91, %v308
  %v310 = vpop.f32.mrf.mxu0
  %311 = vdwg.mxu0
  %312 = vmatpush.bf16.msra.mxu0 %v248
  %313 = vmatpush.bf16.msra.mxu0 %v247
  %314 = vmatpush.bf16.msra.mxu0 %v246
  %315 = vmatpush.bf16.msra.mxu0 %v245
  %316 = vmatpush.bf16.msra.mxu0 %v244
  %317 = vmatpush.bf16.msra.mxu0 %v243
  %318 = vmatpush.bf16.msra.mxu0 %v242
  %319 = vmatpush.bf16.msra.mxu0 %v241
  %320 = vmatmul.bf16.gmra.mxu0 %v112
  %v321 = vpop.f32.mrf.mxu0
  %v322 = vadd.f32 %v304, %v321
  %v323 = vpop.f32.mrf.mxu0
  %v324 = vadd.f32 %v306, %v323
  %325 = vmatmul.bf16.gmra.mxu0 %v116
  %v326 = vpop.f32.mrf.mxu0
  %v327 = vadd.f32 %v309, %v326
  %v328 = vpop.f32.mrf.mxu0
  %329 = vdwg.mxu0
  %330 = vmatpush.bf16.msra.mxu0 %v256
  %331 = vmatpush.bf16.msra.mxu0 %v255
  %332 = vmatpush.bf16.msra.mxu0 %v254
  %333 = vmatpush.bf16.msra.mxu0 %v253
  %334 = vmatpush.bf16.msra.mxu0 %v252
  %335 = vmatpush.bf16.msra.mxu0 %v251
  %336 = vmatpush.bf16.msra.mxu0 %v250
  %337 = vmatpush.bf16.msra.mxu0 %v249
  %338 = vmatmul.bf16.gmra.mxu0 %v113
  %v339 = vpop.f32.mrf.mxu0
  %v340 = vadd.f32 %v322, %v339
  %v341 = vpop.f32.mrf.mxu0
  %v342 = vadd.f32 %v324, %v341
  %343 = vmatmul.bf16.gmra.mxu0 %v117
  %v344 = vpop.f32.mrf.mxu0
  %v345 = vadd.f32 %v327, %v344
  %v346 = vpop.f32.mrf.mxu0
  %347 = vdwg.mxu0
  %348 = vmatpush.bf16.msra.mxu0 0
  %349 = vmatpush.bf16.msra.mxu0 0
  %350 = vmatpush.bf16.msra.mxu0 0
  %351 = vmatpush.bf16.msra.mxu0 0
  %352 = vmatpush.bf16.msra.mxu0 0
  %353 = vmatpush.bf16.msra.mxu0 %v259
  %354 = vmatpush.bf16.msra.mxu0 %v258
  %355 = vmatpush.bf16.msra.mxu0 %v257
  %356 = vmatmul.bf16.gmra.mxu0 %v289
  %v357 = vpop.f32.mrf.mxu0
  %v358 = vadd.f32 %v340, %v357
  %v359 = vpop.f32.mrf.mxu0
  %v360 = vadd.f32 %v342, %v359
  %361 = vmatmul.bf16.gmra.mxu0 %v292
  %v362 = vpop.f32.mrf.mxu0
  %v363 = vadd.f32 %v345, %v362
  %v364 = vpop.f32.mrf.mxu0
  %365 = vdwg.mxu0
  %v366 = vmax.f32 %v358, 0.0
  %v367 = vmax.f32 %v360, 0.0
  %v368 = vmax.f32 %v363, 0.0
  %v369 = vpack.c.bf16 %v366, %v366
  %v370 = vpack.c.bf16 %v367, %v367
  %v371 = vpack.c.bf16 %v368, %v368
  %vm372 = vcmask 519168
  %373 = vst.msk [vmem:[%s3] sm:$0xf] %vm372, %v369
  %374 = vst.msk [vmem:[%s3 + $0x4] sm:$0xf] %vm372, %v370
  %375 = vst.msk [vmem:[%s3 + $0x8] sm:$0xf] %vm372, %v371
  // Predicated region
  $region14: #{model_forward.38} parent=0 // pred_check
    _
  $region15: #{model_forward.38} parent=0 // pred_check_branch
    %377 = sbr.rel (0) target = $region17
  $region16: #{model_forward.38} parent=0 // pred_region
    _
  $region17: #{model_forward.38} parent=0 // pred_fallthru
    _
  // Predicated region
  $region18: #{model_forward.38} parent=0 // pred_check
    _
  $region19: #{model_forward.38} parent=0 // pred_check_branch
    %379 = sbr.rel (0) target = $region21
  $region20: #{model_forward.38} parent=0 // pred_region
    _
  $region21: #{model_forward.38} parent=0 // pred_fallthru
    _

// kernel: model_forward.44
$region0: #{model_forward.44}
  #allocation0 [shape = 'u32[]', space=smem, size = 0x4, offset = 0x4, fixed_abs, tag = 'smem constant byte address 0x4 - core index']
  #allocation1 [shape = 'u32[72,128]{1,0:T(1,128)}', space=vmem, size = 0x9000, scoped, tag = 'internal scratch']
  %s0 = inlined_call_operand.vmem [shape: bf16[48,216], index: 0, kind: input, shape index: {}]
  %s1 = inlined_call_operand.vmem [shape: bf16[216,64], index: 1, kind: input, shape index: {}]
  %s2 = inlined_call_operand.vmem [shape: f32[48,1], index: 2, kind: input, shape index: {}]
  %s3 = inlined_call_operand.vmem [shape: bf16[48,64], index: 3, kind: output, shape index: {}]
  %s4 = sld [smem:[#allocation0]]
  $region22: #{model_forward.44} parent=0
    _
  %s6 = ssub.s32 1, %s4
  %s7 = scalar_select 0, %s6, %s4
  // Predicated region
  $region2: #{model_forward.44} parent=0 // pred_check
    _
  $region3: #{model_forward.44} parent=0 // pred_check_branch
    %9 = sbr.rel (0) target = $region5
  $region4: #{model_forward.44} parent=0 // pred_region
    _
  $region5: #{model_forward.44} parent=0 // pred_fallthru
    _
  // Predicated region
  $region6: #{model_forward.44} parent=0 // pred_check
    _
  $region7: #{model_forward.44} parent=0 // pred_check_branch
    %11 = sbr.rel (0) target = $region9
  $region8: #{model_forward.44} parent=0 // pred_region
    _
  $region9: #{model_forward.44} parent=0 // pred_fallthru
    _
  // Predicated region
  $region10: #{model_forward.44} parent=0 // pred_check
    _
  $region11: #{model_forward.44} parent=0 // pred_check_branch
    %13 = sbr.rel (0) target = $region13
  $region12: #{model_forward.44} parent=0 // pred_region
    _
  $region13: #{model_forward.44} parent=0 // pred_fallthru
    _
  %v15 = vld [vmem:[%s0] sm:$0xff]
  %v16 = vld [vmem:[%s0 + $0x8] sm:$0xff]
  %v17 = vld [vmem:[%s0 + $0x10] sm:$0xff]
  %v18 = vld [vmem:[%s0 + $0x18] sm:$0xff]
  %v19 = vld [vmem:[%s0 + $0x20] sm:$0xff]
  %v20 = vld [vmem:[%s0 + $0x28] sm:$0xff]
  %v21 = vld [vmem:[%s1] sm:$0xf]
  %v22 = vld [vmem:[%s1 + $0x4] sm:$0xf]
  %v23 = vld [vmem:[%s1 + $0x8] sm:$0xf]
  %v24 = vld [vmem:[%s1 + $0xc] sm:$0xf]
  %v25 = vld [vmem:[%s1 + $0x10] sm:$0xf]
  %v26 = vld [vmem:[%s1 + $0x14] sm:$0xf]
  %v27 = vld [vmem:[%s1 + $0x18] sm:$0xf]
  %v28 = vld [vmem:[%s1 + $0x1c] sm:$0xf]
  %v29 = vld [vmem:[%s1 + $0x20] sm:$0xf]
  %v30 = vld [vmem:[%s1 + $0x24] sm:$0xf]
  %v31 = vld [vmem:[%s1 + $0x28] sm:$0xf]
  %v32 = vld [vmem:[%s1 + $0x2c] sm:$0xf]
  %v33 = vld [vmem:[%s1 + $0x30] sm:$0xf]
  %v34 = vld [vmem:[%s1 + $0x34] sm:$0xf]
  %v35 = vld [vmem:[%s1 + $0x38] sm:$0xf]
  %v36 = vld [vmem:[%s1 + $0x3c] sm:$0xf]
  %v37 = vld [vmem:[%s1 + $0x40] sm:$0xf]
  %v38 = vld [vmem:[%s1 + $0x44] sm:$0xf]
  %v39 = vld [vmem:[%s1 + $0x48] sm:$0xf]
  %v40 = vld [vmem:[%s1 + $0x4c] sm:$0xf]
  %v41 = vld [vmem:[%s1 + $0x50] sm:$0xf]
  %v42 = vld [vmem:[%s1 + $0x54] sm:$0xf]
  %v43 = vld [vmem:[%s1 + $0x58] sm:$0xf]
  %v44 = vld [vmem:[%s1 + $0x5c] sm:$0xf]
  %v45 = vld [vmem:[%s1 + $0x60] sm:$0xf]
  %v46 = vld [vmem:[%s1 + $0x64] sm:$0xf]
  %v47 = vld [vmem:[%s1 + $0x68] sm:$0xf]
  %v48 = vld [vmem:[%s2] sm:$0xff]
  %v49 = vld [vmem:[%s2 + $0x8] sm:$0xff]
  %v50 = vld [vmem:[%s2 + $0x10] sm:$0xff]
  %v51 = vld [vmem:[%s2 + $0x18] sm:$0xff]
  %v52 = vld [vmem:[%s2 + $0x20] sm:$0xff]
  %v53 = vld [vmem:[%s2 + $0x28] sm:$0xff]
  %55 = vset.pattern.permute.xlu0 0
  %56 = vperm.xlu0 %55, %v48
  %v57 = vpop.permute.xlu0 %56
  %60 = vset.pattern.permute.xlu0 0
  %61 = vperm.xlu0 %60, %v49
  %v62 = vpop.permute.xlu0 %61
  %65 = vset.pattern.permute.xlu0 0
  %66 = vperm.xlu0 %65, %v50
  %v67 = vpop.permute.xlu0 %66
  %70 = vset.pattern.permute.xlu0 0
  %71 = vperm.xlu0 %70, %v51
  %v72 = vpop.permute.xlu0 %71
  %75 = vset.pattern.permute.xlu0 0
  %76 = vperm.xlu0 %75, %v52
  %v77 = vpop.permute.xlu0 %76
  %80 = vset.pattern.permute.xlu0 0
  %81 = vperm.xlu0 %80, %v53
  %v82 = vpop.permute.xlu0 %81
  %v90 = vunpack.c.l.b16 %v15
  %v91 = vunpack.c.h.b16 %v15
  %v92 = vunpack.c.l.b16 %v16
  %v93 = vunpack.c.h.b16 %v16
  %v94 = vunpack.c.l.b16 %v17
  %v95 = vunpack.c.h.b16 %v17
  %v96 = vunpack.c.l.b16 %v18
  %v97 = vunpack.c.h.b16 %v18
  %v98 = vunpack.c.l.b16 %v19
  %v99 = vunpack.c.h.b16 %v19
  %v100 = vunpack.c.l.b16 %v20
  %v101 = vunpack.c.h.b16 %v20
  %v102 = vpack.c.b16 %v92, %v90
  %v103 = vpack.c.b16 %v93, %v91
  %v104 = vpack.c.b16 %v96, %v94
  %v105 = vpack.c.b16 %v97, %v95
  %v106 = vpack.c.b16 %v100, %v98
  %v107 = vpack.c.b16 %v101, %v99
  %v138 = vunpack.c.l.b16 %v21
  %v139 = vunpack.c.l.b16 %v22
  %v140 = vunpack.c.l.b16 %v23
  %v141 = vunpack.c.l.b16 %v24
  %v142 = vunpack.c.l.b16 %v25
  %v143 = vunpack.c.l.b16 %v26
  %v144 = vunpack.c.l.b16 %v27
  %v145 = vunpack.c.l.b16 %v28
  %v146 = vunpack.c.l.b16 %v29
  %v147 = vunpack.c.l.b16 %v30
  %v148 = vunpack.c.l.b16 %v31
  %v149 = vunpack.c.l.b16 %v32
  %v150 = vunpack.c.l.b16 %v33
  %v151 = vunpack.c.l.b16 %v34
  %v152 = vunpack.c.l.b16 %v35
  %v153 = vunpack.c.l.b16 %v36
  %v154 = vunpack.c.l.b16 %v37
  %v155 = vunpack.c.l.b16 %v38
  %v156 = vunpack.c.l.b16 %v39
  %v157 = vunpack.c.l.b16 %v40
  %v158 = vunpack.c.l.b16 %v41
  %v159 = vunpack.c.l.b16 %v42
  %v160 = vunpack.c.l.b16 %v43
  %v161 = vunpack.c.l.b16 %v44
  %v162 = vunpack.c.l.b16 %v45
  %v163 = vunpack.c.l.b16 %v46
  %v164 = vunpack.c.l.b16 %v47
  %v165 = vpack.c.b16 %v139, %v138
  %v166 = vpack.c.b16 %v141, %v140
  %v167 = vpack.c.b16 %v143, %v142
  %v168 = vpack.c.b16 %v145, %v144
  %v169 = vpack.c.b16 %v147, %v146
  %v170 = vpack.c.b16 %v149, %v148
  %v171 = vpack.c.b16 %v151, %v150
  %v172 = vpack.c.b16 %v153, %v152
  %v173 = vpack.c.b16 %v155, %v154
  %v174 = vpack.c.b16 %v157, %v156
  %v175 = vpack.c.b16 %v159, %v158
  %v176 = vpack.c.b16 %v161, %v160
  %v177 = vpack.c.b16 %v163, %v162
  %v178 = vpack.c.b16 %v164, %v164
  %vm192 = vcmask 719872
  %v194 = vsel %vm192, %v103, 0
  %v197 = vsel %vm192, %v105, 0
  %v200 = vsel %vm192, %v107, 0
  %vm202 = vcmask 1043456
  %v204 = vsel %vm202, %v178, 0
  %206 = vmatpush.bf16.msra.mxu0 %v172
  %207 = vmatpush.bf16.msra.mxu0 %v171
  %208 = vmatpush.bf16.msra.mxu0 %v170
  %209 = vmatpush.bf16.msra.mxu0 %v169
  %210 = vmatpush.bf16.msra.mxu0 %v168
  %211 = vmatpush.bf16.msra.mxu0 %v167
  %212 = vmatpush.bf16.msra.mxu0 %v166
  %213 = vmatpush.bf16.msra.mxu0 %v165
  %214 = vmatmul.bf16.gmra.mxu0 %v102
  %v215 = vpop.f32.mrf.mxu0
  %v216 = vadd.f32 %v57, %v215
  %v217 = vpop.f32.mrf.mxu0
  %v218 = vadd.f32 %v62, %v217
  %219 = vmatmul.bf16.gmra.mxu0 %v104
  %v220 = vpop.f32.mrf.mxu0
  %v221 = vadd.f32 %v67, %v220
  %v222 = vpop.f32.mrf.mxu0
  %v223 = vadd.f32 %v72, %v222
  %224 = vmatmul.bf16.gmra.mxu0 %v106
  %v225 = vpop.f32.mrf.mxu0
  %v226 = vadd.f32 %v77, %v225
  %v227 = vpop.f32.mrf.mxu0
  %v228 = vadd.f32 %v82, %v227
  %229 = vdwg.mxu0
  %230 = vmatpush.bf16.msra.mxu0 0
  %231 = vmatpush.bf16.msra.mxu0 0
  %232 = vmatpush.bf16.msra.mxu0 %v204
  %233 = vmatpush.bf16.msra.mxu0 %v177
  %234 = vmatpush.bf16.msra.mxu0 %v176
  %235 = vmatpush.bf16.msra.mxu0 %v175
  %236 = vmatpush.bf16.msra.mxu0 %v174
  %237 = vmatpush.bf16.msra.mxu0 %v173
  %238 = vmatmul.bf16.gmra.mxu0 %v194
  %v239 = vpop.f32.mrf.mxu0
  %v240 = vadd.f32 %v216, %v239
  %v241 = vpop.f32.mrf.mxu0
  %v242 = vadd.f32 %v218, %v241
  %243 = vmatmul.bf16.gmra.mxu0 %v197
  %v244 = vpop.f32.mrf.mxu0
  %v245 = vadd.f32 %v221, %v244
  %v246 = vpop.f32.mrf.mxu0
  %v247 = vadd.f32 %v223, %v246
  %248 = vmatmul.bf16.gmra.mxu0 %v200
  %v249 = vpop.f32.mrf.mxu0
  %v250 = vadd.f32 %v226, %v249
  %v251 = vpop.f32.mrf.mxu0
  %v252 = vadd.f32 %v228, %v251
  %253 = vdwg.mxu0
  %v254 = vmax.f32 %v240, 0.0
  %v255 = vmax.f32 %v242, 0.0
  %v256 = vmax.f32 %v245, 0.0
  %v257 = vmax.f32 %v247, 0.0
  %v258 = vmax.f32 %v250, 0.0
  %v259 = vmax.f32 %v252, 0.0
  %v260 = vpack.c.bf16 %v254, %v254
  %v261 = vpack.c.bf16 %v255, %v255
  %v262 = vpack.c.bf16 %v256, %v256
  %v263 = vpack.c.bf16 %v257, %v257
  %v264 = vpack.c.bf16 %v258, %v258
  %v265 = vpack.c.bf16 %v259, %v259
  %vm266 = vcmask 519168
  %267 = vst.msk [vmem:[%s3] sm:$0xf] %vm266, %v260
  %268 = vst.msk [vmem:[%s3 + $0x4] sm:$0xf] %vm266, %v261
  %269 = vst.msk [vmem:[%s3 + $0x8] sm:$0xf] %vm266, %v262
  %270 = vst.msk [vmem:[%s3 + $0xc] sm:$0xf] %vm266, %v263
  %271 = vst.msk [vmem:[%s3 + $0x10] sm:$0xf] %vm266, %v264
  %272 = vst.msk [vmem:[%s3 + $0x14] sm:$0xf] %vm266, %v265
  // Predicated region
  $region14: #{model_forward.44} parent=0 // pred_check
    _
  $region15: #{model_forward.44} parent=0 // pred_check_branch
    %274 = sbr.rel (0) target = $region17
  $region16: #{model_forward.44} parent=0 // pred_region
    _
  $region17: #{model_forward.44} parent=0 // pred_fallthru
    _
  // Predicated region
  $region18: #{model_forward.44} parent=0 // pred_check
    _
  $region19: #{model_forward.44} parent=0 // pred_check_branch
    %276 = sbr.rel (0) target = $region21
  $region20: #{model_forward.44} parent=0 // pred_region
    _
  $region21: #{model_forward.44} parent=0 // pred_fallthru
    _

// kernel: model_forward.45
$region0: #{model_forward.45}
  #allocation0 [shape = 'u32[]', space=smem, size = 0x4, offset = 0x4, fixed_abs, tag = 'smem constant byte address 0x4 - core index']
  #allocation1 [shape = 'u32[72,128]{1,0:T(1,128)}', space=vmem, size = 0x9000, scoped, tag = 'internal scratch']
  %s0 = inlined_call_operand.vmem [shape: bf16[8,48], index: 0, kind: input, shape index: {}]
  %s1 = inlined_call_operand.vmem [shape: bf16[48,64], index: 1, kind: input, shape index: {}]
  %s2 = inlined_call_operand.vmem [shape: f32[8,1], index: 2, kind: input, shape index: {}]
  %s3 = inlined_call_operand.vmem [shape: f32[8,64], index: 3, kind: output, shape index: {}]
  %s4 = sld [smem:[#allocation0]]
  $region22: #{model_forward.45} parent=0
    _
  %s6 = ssub.s32 1, %s4
  %s7 = scalar_select 0, %s6, %s4
  // Predicated region
  $region2: #{model_forward.45} parent=0 // pred_check
    _
  $region3: #{model_forward.45} parent=0 // pred_check_branch
    %9 = sbr.rel (0) target = $region5
  $region4: #{model_forward.45} parent=0 // pred_region
    _
  $region5: #{model_forward.45} parent=0 // pred_fallthru
    _
  // Predicated region
  $region6: #{model_forward.45} parent=0 // pred_check
    _
  $region7: #{model_forward.45} parent=0 // pred_check_branch
    %11 = sbr.rel (0) target = $region9
  $region8: #{model_forward.45} parent=0 // pred_region
    _
  $region9: #{model_forward.45} parent=0 // pred_fallthru
    _
  // Predicated region
  $region10: #{model_forward.45} parent=0 // pred_check
    _
  $region11: #{model_forward.45} parent=0 // pred_check_branch
    %13 = sbr.rel (0) target = $region13
  $region12: #{model_forward.45} parent=0 // pred_region
    _
  $region13: #{model_forward.45} parent=0 // pred_fallthru
    _
  %v15 = vld [vmem:[%s0] sm:$0xf]
  %v16 = vld [vmem:[%s1] sm:$0xf]
  %v17 = vld [vmem:[%s1 + $0x4] sm:$0xf]
  %v18 = vld [vmem:[%s1 + $0x8] sm:$0xf]
  %v19 = vld [vmem:[%s1 + $0xc] sm:$0xf]
  %v20 = vld [vmem:[%s1 + $0x10] sm:$0xf]
  %v21 = vld [vmem:[%s1 + $0x14] sm:$0xf]
  %v22 = vld [vmem:[%s2] sm:$0xff]
  %24 = vset.pattern.permute.xlu0 0
  %25 = vperm.xlu0 %24, %v22
  %v26 = vpop.permute.xlu0 %25
  %v34 = vunpack.c.l.b16 %v16
  %v35 = vunpack.c.l.b16 %v17
  %v36 = vunpack.c.l.b16 %v18
  %v37 = vunpack.c.l.b16 %v19
  %v38 = vunpack.c.l.b16 %v20
  %v39 = vunpack.c.l.b16 %v21
  %v40 = vpack.c.b16 %v35, %v34
  %v41 = vpack.c.b16 %v37, %v36
  %v42 = vpack.c.b16 %v39, %v38
  %vm46 = vcmask 392192
  %v48 = vsel %vm46, %v15, 0
  %50 = vmatpush.bf16.msra.mxu0 0
  %51 = vmatpush.bf16.msra.mxu0 0
  %52 = vmatpush.bf16.msra.mxu0 0
  %53 = vmatpush.bf16.msra.mxu0 0
  %54 = vmatpush.bf16.msra.mxu0 0
  %55 = vmatpush.bf16.msra.mxu0 %v42
  %56 = vmatpush.bf16.msra.mxu0 %v41
  %57 = vmatpush.bf16.msra.mxu0 %v40
  %58 = vmatmul.bf16.gmra.mxu0 %v48
  %v59 = vpop.f32.mrf.mxu0
  %v60 = vadd.f32 %v26, %v59
  %v61 = vpop.f32.mrf.mxu0
  %62 = vdwg.mxu0
  %v63 = vlaneseq
  %v64 = vshrl.u32 %v63, 7
  %vm65 = vcmp.lt.s32.totalorder %v64, 4
  %v66 = vxor.u32 %v60, 2147483648
  %v67 = vmul.f32 %v66, 1.442695
  %v68 = vpow.pop %v67
  %v69 = vadd.f32 %v68, 1.0
  %v70 = vrcp.pop %v69
  %v71 = vmul.f32 %v69, %v70
  %v72 = vsub.f32 1.0, %v71
  %v73 = vmul.f32 %v70, %v72
  %v74 = vadd.f32 %v70, %v73
  %vm75 = vweird.f32 %v69
  %vm76 = vweird.f32 %v70
  %vm77 = vmor %vm75, %vm76
  %v78 = vsel %vm77, %v70, %v74
  %v79 = vand.u32 2147483647, %v69
  %vm80 = vcmp.eq.f32.partialorder %v79, 8.507059e+37
  %v81 = vand.u32 %v69, 2147483648
  %v82 = vor.u32 1.1754944e-38, %v81
  %v83 = vsel %vm80, %v82, %v78
  %v84 = vmul.f32 1.0, %v83
  %v85 = vsel %vm65, %v84, %v60
  %vm86 = vcmask 523264
  %87 = vst.msk [vmem:[%s3] sm:$0xff] %vm86, %v85
  // Predicated region
  $region14: #{model_forward.45} parent=0 // pred_check
    _
  $region15: #{model_forward.45} parent=0 // pred_check_branch
    %89 = sbr.rel (0) target = $region17
  $region16: #{model_forward.45} parent=0 // pred_region
    _
  $region17: #{model_forward.45} parent=0 // pred_fallthru
    _
  // Predicated region
  $region18: #{model_forward.45} parent=0 // pred_check
    _
  $region19: #{model_forward.45} parent=0 // pred_check_branch
    %91 = sbr.rel (0) target = $region21
  $region20: #{model_forward.45} parent=0 // pred_region
    _
  $region21: #{model_forward.45} parent=0 // pred_fallthru
    _

// kernel: model_forward.39
$region0: #{model_forward.39}
  #allocation0 [shape = 'u32[]', space=smem, size = 0x4, offset = 0x4, fixed_abs, tag = 'smem constant byte address 0x4 - core index']
  #allocation1 [shape = 'u32[72,128]{1,0:T(1,128)}', space=vmem, size = 0x9000, scoped, tag = 'internal scratch']
  %s0 = inlined_call_operand.vmem [shape: bf16[24,216], index: 0, kind: input, shape index: {}]
  %s1 = inlined_call_operand.vmem [shape: bf16[216,16], index: 1, kind: input, shape index: {}]
  %s2 = inlined_call_operand.vmem [shape: f32[24,1], index: 2, kind: input, shape index: {}]
  %s3 = inlined_call_operand.vmem [shape: bf16[24,16], index: 3, kind: output, shape index: {}]
  %s4 = sld [smem:[#allocation0]]
  $region22: #{model_forward.39} parent=0
    _
  %s6 = ssub.s32 1, %s4
  %s7 = scalar_select 0, %s6, %s4
  // Predicated region
  $region2: #{model_forward.39} parent=0 // pred_check
    _
  $region3: #{model_forward.39} parent=0 // pred_check_branch
    %9 = sbr.rel (0) target = $region5
  $region4: #{model_forward.39} parent=0 // pred_region
    _
  $region5: #{model_forward.39} parent=0 // pred_fallthru
    _
  // Predicated region
  $region6: #{model_forward.39} parent=0 // pred_check
    _
  $region7: #{model_forward.39} parent=0 // pred_check_branch
    %11 = sbr.rel (0) target = $region9
  $region8: #{model_forward.39} parent=0 // pred_region
    _
  $region9: #{model_forward.39} parent=0 // pred_fallthru
    _
  // Predicated region
  $region10: #{model_forward.39} parent=0 // pred_check
    _
  $region11: #{model_forward.39} parent=0 // pred_check_branch
    %13 = sbr.rel (0) target = $region13
  $region12: #{model_forward.39} parent=0 // pred_region
    _
  $region13: #{model_forward.39} parent=0 // pred_fallthru
    _
  %v15 = vld [vmem:[%s0] sm:$0xff]
  %v16 = vld [vmem:[%s0 + $0x8] sm:$0xff]
  %v17 = vld [vmem:[%s0 + $0x10] sm:$0xff]
  %v18 = vld [vmem:[%s1] sm:$0xf]
  %v19 = vld [vmem:[%s1 + $0x4] sm:$0xf]
  %v20 = vld [vmem:[%s1 + $0x8] sm:$0xf]
  %v21 = vld [vmem:[%s1 + $0xc] sm:$0xf]
  %v22 = vld [vmem:[%s1 + $0x10] sm:$0xf]
  %v23 = vld [vmem:[%s1 + $0x14] sm:$0xf]
  %v24 = vld [vmem:[%s1 + $0x18] sm:$0xf]
  %v25 = vld [vmem:[%s1 + $0x1c] sm:$0xf]
  %v26 = vld [vmem:[%s1 + $0x20] sm:$0xf]
  %v27 = vld [vmem:[%s1 + $0x24] sm:$0xf]
  %v28 = vld [vmem:[%s1 + $0x28] sm:$0xf]
  %v29 = vld [vmem:[%s1 + $0x2c] sm:$0xf]
  %v30 = vld [vmem:[%s1 + $0x30] sm:$0xf]
  %v31 = vld [vmem:[%s1 + $0x34] sm:$0xf]
  %v32 = vld [vmem:[%s1 + $0x38] sm:$0xf]
  %v33 = vld [vmem:[%s1 + $0x3c] sm:$0xf]
  %v34 = vld [vmem:[%s1 + $0x40] sm:$0xf]
  %v35 = vld [vmem:[%s1 + $0x44] sm:$0xf]
  %v36 = vld [vmem:[%s1 + $0x48] sm:$0xf]
  %v37 = vld [vmem:[%s1 + $0x4c] sm:$0xf]
  %v38 = vld [vmem:[%s1 + $0x50] sm:$0xf]
  %v39 = vld [vmem:[%s1 + $0x54] sm:$0xf]
  %v40 = vld [vmem:[%s1 + $0x58] sm:$0xf]
  %v41 = vld [vmem:[%s1 + $0x5c] sm:$0xf]
  %v42 = vld [vmem:[%s1 + $0x60] sm:$0xf]
  %v43 = vld [vmem:[%s1 + $0x64] sm:$0xf]
  %v44 = vld [vmem:[%s1 + $0x68] sm:$0xf]
  %v45 = vld [vmem:[%s2] sm:$0xff]
  %v46 = vld [vmem:[%s2 + $0x8] sm:$0xff]
  %v47 = vld [vmem:[%s2 + $0x10] sm:$0xff]
  %49 = vset.pattern.permute.xlu0 0
  %50 = vperm.xlu0 %49, %v45
  %v51 = vpop.permute.xlu0 %50
  %54 = vset.pattern.permute.xlu0 0
  %55 = vperm.xlu0 %54, %v46
  %v56 = vpop.permute.xlu0 %55
  %59 = vset.pattern.permute.xlu0 0
  %60 = vperm.xlu0 %59, %v47
  %v61 = vpop.permute.xlu0 %60
  %v66 = vunpack.c.l.b16 %v15
  %v67 = vunpack.c.h.b16 %v15
  %v68 = vunpack.c.l.b16 %v16
  %v69 = vunpack.c.h.b16 %v16
  %v70 = vunpack.c.l.b16 %v17
  %v71 = vunpack.c.h.b16 %v17
  %v72 = vpack.c.b16 %v68, %v66
  %v73 = vpack.c.b16 %v69, %v67
  %v74 = vpack.c.b16 %v70, %v70
  %v75 = vpack.c.b16 %v71, %v71
  %v105 = vunpack.c.l.b16 %v18
  %v106 = vunpack.c.l.b16 %v19
  %v107 = vunpack.c.l.b16 %v20
  %v108 = vunpack.c.l.b16 %v21
  %v109 = vunpack.c.l.b16 %v22
  %v110 = vunpack.c.l.b16 %v23
  %v111 = vunpack.c.l.b16 %v24
  %v112 = vunpack.c.l.b16 %v25
  %v113 = vunpack.c.l.b16 %v26
  %v114 = vunpack.c.l.b16 %v27
  %v115 = vunpack.c.l.b16 %v28
  %v116 = vunpack.c.l.b16 %v29
  %v117 = vunpack.c.l.b16 %v30
  %v118 = vunpack.c.l.b16 %v31
  %v119 = vunpack.c.l.b16 %v32
  %v120 = vunpack.c.l.b16 %v33
  %v121 = vunpack.c.l.b16 %v34
  %v122 = vunpack.c.l.b16 %v35
  %v123 = vunpack.c.l.b16 %v36
  %v124 = vunpack.c.l.b16 %v37
  %v125 = vunpack.c.l.b16 %v38
  %v126 = vunpack.c.l.b16 %v39
  %v127 = vunpack.c.l.b16 %v40
  %v128 = vunpack.c.l.b16 %v41
  %v129 = vunpack.c.l.b16 %v42
  %v130 = vunpack.c.l.b16 %v43
  %v131 = vunpack.c.l.b16 %v44
  %v132 = vpack.c.b16 %v106, %v105
  %v133 = vpack.c.b16 %v108, %v107
  %v134 = vpack.c.b16 %v110, %v109
  %v135 = vpack.c.b16 %v112, %v111
  %v136 = vpack.c.b16 %v114, %v113
  %v137 = vpack.c.b16 %v116, %v115
  %v138 = vpack.c.b16 %v118, %v117
  %v139 = vpack.c.b16 %v120, %v119
  %v140 = vpack.c.b16 %v122, %v121
  %v141 = vpack.c.b16 %v124, %v123
  %v142 = vpack.c.b16 %v126, %v125
  %v143 = vpack.c.b16 %v128, %v127
  %v144 = vpack.c.b16 %v130, %v129
  %v145 = vpack.c.b16 %v131, %v131
  %vm159 = vcmask 719872
  %v161 = vsel %vm159, %v73, 0
  %v164 = vsel %vm159, %v75, 0
  %vm166 = vcmask 1043456
  %v168 = vsel %vm166, %v145, 0
  %170 = vmatpush.bf16.msra.mxu0 %v139
  %171 = vmatpush.bf16.msra.mxu0 %v138
  %172 = vmatpush.bf16.msra.mxu0 %v137
  %173 = vmatpush.bf16.msra.mxu0 %v136
  %174 = vmatpush.bf16.msra.mxu0 %v135
  %175 = vmatpush.bf16.msra.mxu0 %v134
  %176 = vmatpush.bf16.msra.mxu0 %v133
  %177 = vmatpush.bf16.msra.mxu0 %v132
  %178 = vmatmul.bf16.gmra.mxu0 %v72
  %v179 = vpop.f32.mrf.mxu0
  %v180 = vadd.f32 %v51, %v179
  %v181 = vpop.f32.mrf.mxu0
  %v182 = vadd.f32 %v56, %v181
  %183 = vmatmul.bf16.gmra.mxu0 %v74
  %v184 = vpop.f32.mrf.mxu0
  %v185 = vadd.f32 %v61, %v184
  %v186 = vpop.f32.mrf.mxu0
  %187 = vdwg.mxu0
  %188 = vmatpush.bf16.msra.mxu0 0
  %189 = vmatpush.bf16.msra.mxu0 0
  %190 = vmatpush.bf16.msra.mxu0 %v168
  %191 = vmatpush.bf16.msra.mxu0 %v144
  %192 = vmatpush.bf16.msra.mxu0 %v143
  %193 = vmatpush.bf16.msra.mxu0 %v142
  %194 = vmatpush.bf16.msra.mxu0 %v141
  %195 = vmatpush.bf16.msra.mxu0 %v140
  %196 = vmatmul.bf16.gmra.mxu0 %v161
  %v197 = vpop.f32.mrf.mxu0
  %v198 = vadd.f32 %v180, %v197
  %v199 = vpop.f32.mrf.mxu0
  %v200 = vadd.f32 %v182, %v199
  %201 = vmatmul.bf16.gmra.mxu0 %v164
  %v202 = vpop.f32.mrf.mxu0
  %v203 = vadd.f32 %v185, %v202
  %v204 = vpop.f32.mrf.mxu0
  %205 = vdwg.mxu0
  %v206 = vmax.f32 %v198, 0.0
  %v207 = vmax.f32 %v200, 0.0
  %v208 = vmax.f32 %v203, 0.0
  %v209 = vpack.c.bf16 %v206, %v206
  %v210 = vpack.c.bf16 %v207, %v207
  %v211 = vpack.c.bf16 %v208, %v208
  %vm212 = vcmask 125952
  %213 = vst.msk [vmem:[%s3] sm:$0xf] %vm212, %v209
  %214 = vst.msk [vmem:[%s3 + $0x4] sm:$0xf] %vm212, %v210
  %215 = vst.msk [vmem:[%s3 + $0x8] sm:$0xf] %vm212, %v211
  // Predicated region
  $region14: #{model_forward.39} parent=0 // pred_check
    _
  $region15: #{model_forward.39} parent=0 // pred_check_branch
    %217 = sbr.rel (0) target = $region17
  $region16: #{model_forward.39} parent=0 // pred_region
    _
  $region17: #{model_forward.39} parent=0 // pred_fallthru
    _
  // Predicated region
  $region18: #{model_forward.39} parent=0 // pred_check
    _
  $region19: #{model_forward.39} parent=0 // pred_check_branch
    %219 = sbr.rel (0) target = $region21
  $region20: #{model_forward.39} parent=0 // pred_region
    _
  $region21: #{model_forward.39} parent=0 // pred_fallthru
    _

// kernel: model_forward.46
$region0: #{model_forward.46}
  #allocation0 [shape = 'u32[]', space=smem, size = 0x4, offset = 0x4, fixed_abs, tag = 'smem constant byte address 0x4 - core index']
  #allocation1 [shape = 'u32[72,128]{1,0:T(1,128)}', space=vmem, size = 0x9000, scoped, tag = 'internal scratch']
  %s0 = inlined_call_operand.vmem [shape: bf16[32,32], index: 0, kind: input, shape index: {}]
  %s1 = inlined_call_operand.vmem [shape: bf16[32,16], index: 1, kind: input, shape index: {}]
  %s2 = inlined_call_operand.vmem [shape: f32[32,1], index: 2, kind: input, shape index: {}]
  %s3 = inlined_call_operand.vmem [shape: bf16[32,16], index: 3, kind: output, shape index: {}]
  %s4 = sld [smem:[#allocation0]]
  $region22: #{model_forward.46} parent=0
    _
  %s6 = ssub.s32 1, %s4
  %s7 = scalar_select 0, %s6, %s4
  // Predicated region
  $region2: #{model_forward.46} parent=0 // pred_check
    _
  $region3: #{model_forward.46} parent=0 // pred_check_branch
    %9 = sbr.rel (0) target = $region5
  $region4: #{model_forward.46} parent=0 // pred_region
    _
  $region5: #{model_forward.46} parent=0 // pred_fallthru
    _
  // Predicated region
  $region6: #{model_forward.46} parent=0 // pred_check
    _
  $region7: #{model_forward.46} parent=0 // pred_check_branch
    %11 = sbr.rel (0) target = $region9
  $region8: #{model_forward.46} parent=0 // pred_region
    _
  $region9: #{model_forward.46} parent=0 // pred_fallthru
    _
  // Predicated region
  $region10: #{model_forward.46} parent=0 // pred_check
    _
  $region11: #{model_forward.46} parent=0 // pred_check_branch
    %13 = sbr.rel (0) target = $region13
  $region12: #{model_forward.46} parent=0 // pred_region
    _
  $region13: #{model_forward.46} parent=0 // pred_fallthru
    _
  %v15 = vld [vmem:[%s0] sm:$0xf]
  %v16 = vld [vmem:[%s0 + $0x4] sm:$0xf]
  %v17 = vld [vmem:[%s0 + $0x8] sm:$0xf]
  %v18 = vld [vmem:[%s0 + $0xc] sm:$0xf]
  %v19 = vld [vmem:[%s1] sm:$0xf]
  %v20 = vld [vmem:[%s1 + $0x4] sm:$0xf]
  %v21 = vld [vmem:[%s1 + $0x8] sm:$0xf]
  %v22 = vld [vmem:[%s1 + $0xc] sm:$0xf]
  %v23 = vld [vmem:[%s2] sm:$0xff]
  %v24 = vld [vmem:[%s2 + $0x8] sm:$0xff]
  %v25 = vld [vmem:[%s2 + $0x10] sm:$0xff]
  %v26 = vld [vmem:[%s2 + $0x18] sm:$0xff]
  %28 = vset.pattern.permute.xlu0 0
  %29 = vperm.xlu0 %28, %v23
  %v30 = vpop.permute.xlu0 %29
  %33 = vset.pattern.permute.xlu0 0
  %34 = vperm.xlu0 %33, %v24
  %v35 = vpop.permute.xlu0 %34
  %38 = vset.pattern.permute.xlu0 0
  %39 = vperm.xlu0 %38, %v25
  %v40 = vpop.permute.xlu0 %39
  %43 = vset.pattern.permute.xlu0 0
  %44 = vperm.xlu0 %43, %v26
  %v45 = vpop.permute.xlu0 %44
  %v51 = vunpack.c.l.b16 %v15
  %v52 = vunpack.c.l.b16 %v16
  %v53 = vunpack.c.l.b16 %v17
  %v54 = vunpack.c.l.b16 %v18
  %v55 = vpack.c.b16 %v52, %v51
  %v56 = vpack.c.b16 %v54, %v53
  %v61 = vunpack.c.l.b16 %v19
  %v62 = vunpack.c.l.b16 %v20
  %v63 = vunpack.c.l.b16 %v21
  %v64 = vunpack.c.l.b16 %v22
  %v65 = vpack.c.b16 %v62, %v61
  %v66 = vpack.c.b16 %v64, %v63
  %vm69 = vcmask 261120
  %v71 = vsel %vm69, %v55, 0
  %v74 = vsel %vm69, %v56, 0
  %76 = vmatpush.bf16.msra.mxu0 0
  %77 = vmatpush.bf16.msra.mxu0 0
  %78 = vmatpush.bf16.msra.mxu0 0
  %79 = vmatpush.bf16.msra.mxu0 0
  %80 = vmatpush.bf16.msra.mxu0 0
  %81 = vmatpush.bf16.msra.mxu0 0
  %82 = vmatpush.bf16.msra.mxu0 %v66
  %83 = vmatpush.bf16.msra.mxu0 %v65
  %84 = vmatmul.bf16.gmra.mxu0 %v71
  %v85 = vpop.f32.mrf.mxu0
  %v86 = vadd.f32 %v30, %v85
  %v87 = vpop.f32.mrf.mxu0
  %v88 = vadd.f32 %v35, %v87
  %89 = vmatmul.bf16.gmra.mxu0 %v74
  %v90 = vpop.f32.mrf.mxu0
  %v91 = vadd.f32 %v40, %v90
  %v92 = vpop.f32.mrf.mxu0
  %v93 = vadd.f32 %v45, %v92
  %94 = vdwg.mxu0
  %v95 = vmax.f32 %v86, 0.0
  %v96 = vmax.f32 %v88, 0.0
  %v97 = vmax.f32 %v91, 0.0
  %v98 = vmax.f32 %v93, 0.0
  %v99 = vpack.c.bf16 %v95, %v95
  %v100 = vpack.c.bf16 %v96, %v96
  %v101 = vpack.c.bf16 %v97, %v97
  %v102 = vpack.c.bf16 %v98, %v98
  %vm103 = vcmask 125952
  %104 = vst.msk [vmem:[%s3] sm:$0xf] %vm103, %v99
  %105 = vst.msk [vmem:[%s3 + $0x4] sm:$0xf] %vm103, %v100
  %106 = vst.msk [vmem:[%s3 + $0x8] sm:$0xf] %vm103, %v101
  %107 = vst.msk [vmem:[%s3 + $0xc] sm:$0xf] %vm103, %v102
  // Predicated region
  $region14: #{model_forward.46} parent=0 // pred_check
    _
  $region15: #{model_forward.46} parent=0 // pred_check_branch
    %109 = sbr.rel (0) target = $region17
  $region16: #{model_forward.46} parent=0 // pred_region
    _
  $region17: #{model_forward.46} parent=0 // pred_fallthru
    _
  // Predicated region
  $region18: #{model_forward.46} parent=0 // pred_check
    _
  $region19: #{model_forward.46} parent=0 // pred_check_branch
    %111 = sbr.rel (0) target = $region21
  $region20: #{model_forward.46} parent=0 // pred_region
    _
  $region21: #{model_forward.46} parent=0 // pred_fallthru
    _

// kernel: model_forward.40
$region0: #{model_forward.40}
  #allocation0 [shape = 'u32[]', space=smem, size = 0x4, offset = 0x4, fixed_abs, tag = 'smem constant byte address 0x4 - core index']
  #allocation1 [shape = 'u32[72,128]{1,0:T(1,128)}', space=vmem, size = 0x9000, scoped, tag = 'internal scratch']
  %s0 = inlined_call_operand.vmem [shape: bf16[32,432], index: 0, kind: input, shape index: {}]
  %s1 = inlined_call_operand.vmem [shape: bf16[432,16], index: 1, kind: input, shape index: {}]
  %s2 = inlined_call_operand.vmem [shape: f32[32,1], index: 2, kind: input, shape index: {}]
  %s3 = inlined_call_operand.vmem [shape: bf16[32,16], index: 3, kind: output, shape index: {}]
  %s4 = sld [smem:[#allocation0]]
  $region22: #{model_forward.40} parent=0
    _
  %s6 = ssub.s32 1, %s4
  %s7 = scalar_select 0, %s6, %s4
  // Predicated region
  $region2: #{model_forward.40} parent=0 // pred_check
    _
  $region3: #{model_forward.40} parent=0 // pred_check_branch
    %9 = sbr.rel (0) target = $region5
  $region4: #{model_forward.40} parent=0 // pred_region
    _
  $region5: #{model_forward.40} parent=0 // pred_fallthru
    _
  // Predicated region
  $region6: #{model_forward.40} parent=0 // pred_check
    _
  $region7: #{model_forward.40} parent=0 // pred_check_branch
    %11 = sbr.rel (0) target = $region9
  $region8: #{model_forward.40} parent=0 // pred_region
    _
  $region9: #{model_forward.40} parent=0 // pred_fallthru
    _
  // Predicated region
  $region10: #{model_forward.40} parent=0 // pred_check
    _
  $region11: #{model_forward.40} parent=0 // pred_check_branch
    %13 = sbr.rel (0) target = $region13
  $region12: #{model_forward.40} parent=0 // pred_region
    _
  $region13: #{model_forward.40} parent=0 // pred_fallthru
    _
  %v15 = vld [vmem:[%s0] sm:$0xff]
  %v16 = vld [vmem:[%s0 + $0x8] sm:$0xff]
  %v17 = vld [vmem:[%s0 + $0x10] sm:$0xff]
  %v18 = vld [vmem:[%s0 + $0x18] sm:$0xff]
  %v19 = vld [vmem:[%s0 + $0x20] sm:$0xff]
  %v20 = vld [vmem:[%s0 + $0x28] sm:$0xff]
  %v21 = vld [vmem:[%s0 + $0x30] sm:$0xff]
  %v22 = vld [vmem:[%s0 + $0x38] sm:$0xff]
  %v23 = vld [vmem:[%s1] sm:$0xf]
  %v24 = vld [vmem:[%s1 + $0x4] sm:$0xf]
  %v25 = vld [vmem:[%s1 + $0x8] sm:$0xf]
  %v26 = vld [vmem:[%s1 + $0xc] sm:$0xf]
  %v27 = vld [vmem:[%s1 + $0x10] sm:$0xf]
  %v28 = vld [vmem:[%s1 + $0x14] sm:$0xf]
  %v29 = vld [vmem:[%s1 + $0x18] sm:$0xf]
  %v30 = vld [vmem:[%s1 + $0x1c] sm:$0xf]
  %v31 = vld [vmem:[%s1 + $0x20] sm:$0xf]
  %v32 = vld [vmem:[%s1 + $0x24] sm:$0xf]
  %v33 = vld [vmem:[%s1 + $0x28] sm:$0xf]
  %v34 = vld [vmem:[%s1 + $0x2c] sm:$0xf]
  %v35 = vld [vmem:[%s1 + $0x30] sm:$0xf]
  %v36 = vld [vmem:[%s1 + $0x34] sm:$0xf]
  %v37 = vld [vmem:[%s1 + $0x38] sm:$0xf]
  %v38 = vld [vmem:[%s1 + $0x3c] sm:$0xf]
  %v39 = vld [vmem:[%s1 + $0x40] sm:$0xf]
  %v40 = vld [vmem:[%s1 + $0x44] sm:$0xf]
  %v41 = vld [vmem:[%s1 + $0x48] sm:$0xf]
  %v42 = vld [vmem:[%s1 + $0x4c] sm:$0xf]
  %v43 = vld [vmem:[%s1 + $0x50] sm:$0xf]
  %v44 = vld [vmem:[%s1 + $0x54] sm:$0xf]
  %v45 = vld [vmem:[%s1 + $0x58] sm:$0xf]
  %v46 = vld [vmem:[%s1 + $0x5c] sm:$0xf]
  %v47 = vld [vmem:[%s1 + $0x60] sm:$0xf]
  %v48 = vld [vmem:[%s1 + $0x64] sm:$0xf]
  %v49 = vld [vmem:[%s1 + $0x68] sm:$0xf]
  %v50 = vld [vmem:[%s1 + $0x6c] sm:$0xf]
  %v51 = vld [vmem:[%s1 + $0x70] sm:$0xf]
  %v52 = vld [vmem:[%s1 + $0x74] sm:$0xf]
  %v53 = vld [vmem:[%s1 + $0x78] sm:$0xf]
  %v54 = vld [vmem:[%s1 + $0x7c] sm:$0xf]
  %v55 = vld [vmem:[%s1 + $0x80] sm:$0xf]
  %v56 = vld [vmem:[%s1 + $0x84] sm:$0xf]
  %v57 = vld [vmem:[%s1 + $0x88] sm:$0xf]
  %v58 = vld [vmem:[%s1 + $0x8c] sm:$0xf]
  %v59 = vld [vmem:[%s1 + $0x90] sm:$0xf]
  %v60 = vld [vmem:[%s1 + $0x94] sm:$0xf]
  %v61 = vld [vmem:[%s1 + $0x98] sm:$0xf]
  %v62 = vld [vmem:[%s1 + $0x9c] sm:$0xf]
  %v63 = vld [vmem:[%s1 + $0xa0] sm:$0xf]
  %v64 = vld [vmem:[%s1 + $0xa4] sm:$0xf]
  %v65 = vld [vmem:[%s1 + $0xa8] sm:$0xf]
  %v66 = vld [vmem:[%s1 + $0xac] sm:$0xf]
  %v67 = vld [vmem:[%s1 + $0xb0] sm:$0xf]
  %v68 = vld [vmem:[%s1 + $0xb4] sm:$0xf]
  %v69 = vld [vmem:[%s1 + $0xb8] sm:$0xf]
  %v70 = vld [vmem:[%s1 + $0xbc] sm:$0xf]
  %v71 = vld [vmem:[%s1 + $0xc0] sm:$0xf]
  %v72 = vld [vmem:[%s1 + $0xc4] sm:$0xf]
  %v73 = vld [vmem:[%s1 + $0xc8] sm:$0xf]
  %v74 = vld [vmem:[%s1 + $0xcc] sm:$0xf]
  %v75 = vld [vmem:[%s1 + $0xd0] sm:$0xf]
  %v76 = vld [vmem:[%s1 + $0xd4] sm:$0xf]
  %v77 = vld [vmem:[%s2] sm:$0xff]
  %v78 = vld [vmem:[%s2 + $0x8] sm:$0xff]
  %v79 = vld [vmem:[%s2 + $0x10] sm:$0xff]
  %v80 = vld [vmem:[%s2 + $0x18] sm:$0xff]
  %82 = vset.pattern.permute.xlu0 0
  %83 = vperm.xlu0 %82, %v77
  %v84 = vpop.permute.xlu0 %83
  %87 = vset.pattern.permute.xlu0 0
  %88 = vperm.xlu0 %87, %v78
  %v89 = vpop.permute.xlu0 %88
  %92 = vset.pattern.permute.xlu0 0
  %93 = vperm.xlu0 %92, %v79
  %v94 = vpop.permute.xlu0 %93
  %97 = vset.pattern.permute.xlu0 0
  %98 = vperm.xlu0 %97, %v80
  %v99 = vpop.permute.xlu0 %98
  %v109 = vunpack.c.l.b16 %v15
  %v110 = vunpack.c.h.b16 %v15
  %v111 = vunpack.c.l.b16 %v16
  %v112 = vunpack.c.h.b16 %v16
  %v113 = vunpack.c.l.b16 %v17
  %v114 = vunpack.c.h.b16 %v17
  %v115 = vunpack.c.l.b16 %v18
  %v116 = vunpack.c.h.b16 %v18
  %v117 = vunpack.c.l.b16 %v19
  %v118 = vunpack.c.h.b16 %v19
  %v119 = vunpack.c.l.b16 %v20
  %v120 = vunpack.c.h.b16 %v20
  %v121 = vunpack.c.l.b16 %v21
  %v122 = vunpack.c.h.b16 %v21
  %v123 = vunpack.c.l.b16 %v22
  %v124 = vunpack.c.h.b16 %v22
  %v125 = vpack.c.b16 %v113, %v109
  %v126 = vpack.c.b16 %v114, %v110
  %v127 = vpack.c.b16 %v115, %v111
  %v128 = vpack.c.b16 %v116, %v112
  %v129 = vpack.c.b16 %v121, %v117
  %v130 = vpack.c.b16 %v122, %v118
  %v131 = vpack.c.b16 %v123, %v119
  %v132 = vpack.c.b16 %v124, %v120
  %v193 = vunpack.c.l.b16 %v23
  %v194 = vunpack.c.l.b16 %v24
  %v195 = vunpack.c.l.b16 %v25
  %v196 = vunpack.c.l.b16 %v26
  %v197 = vunpack.c.l.b16 %v27
  %v198 = vunpack.c.l.b16 %v28
  %v199 = vunpack.c.l.b16 %v29
  %v200 = vunpack.c.l.b16 %v30
  %v201 = vunpack.c.l.b16 %v31
  %v202 = vunpack.c.l.b16 %v32
  %v203 = vunpack.c.l.b16 %v33
  %v204 = vunpack.c.l.b16 %v34
  %v205 = vunpack.c.l.b16 %v35
  %v206 = vunpack.c.l.b16 %v36
  %v207 = vunpack.c.l.b16 %v37
  %v208 = vunpack.c.l.b16 %v38
  %v209 = vunpack.c.l.b16 %v39
  %v210 = vunpack.c.l.b16 %v40
  %v211 = vunpack.c.l.b16 %v41
  %v212 = vunpack.c.l.b16 %v42
  %v213 = vunpack.c.l.b16 %v43
  %v214 = vunpack.c.l.b16 %v44
  %v215 = vunpack.c.l.b16 %v45
  %v216 = vunpack.c.l.b16 %v46
  %v217 = vunpack.c.l.b16 %v47
  %v218 = vunpack.c.l.b16 %v48
  %v219 = vunpack.c.l.b16 %v49
  %v220 = vunpack.c.l.b16 %v50
  %v221 = vunpack.c.l.b16 %v51
  %v222 = vunpack.c.l.b16 %v52
  %v223 = vunpack.c.l.b16 %v53
  %v224 = vunpack.c.l.b16 %v54
  %v225 = vunpack.c.l.b16 %v55
  %v226 = vunpack.c.l.b16 %v56
  %v227 = vunpack.c.l.b16 %v57
  %v228 = vunpack.c.l.b16 %v58
  %v229 = vunpack.c.l.b16 %v59
  %v230 = vunpack.c.l.b16 %v60
  %v231 = vunpack.c.l.b16 %v61
  %v232 = vunpack.c.l.b16 %v62
  %v233 = vunpack.c.l.b16 %v63
  %v234 = vunpack.c.l.b16 %v64
  %v235 = vunpack.c.l.b16 %v65
  %v236 = vunpack.c.l.b16 %v66
  %v237 = vunpack.c.l.b16 %v67
  %v238 = vunpack.c.l.b16 %v68
  %v239 = vunpack.c.l.b16 %v69
  %v240 = vunpack.c.l.b16 %v70
  %v241 = vunpack.c.l.b16 %v71
  %v242 = vunpack.c.l.b16 %v72
  %v243 = vunpack.c.l.b16 %v73
  %v244 = vunpack.c.l.b16 %v74
  %v245 = vunpack.c.l.b16 %v75
  %v246 = vunpack.c.l.b16 %v76
  %v247 = vpack.c.b16 %v194, %v193
  %v248 = vpack.c.b16 %v196, %v195
  %v249 = vpack.c.b16 %v198, %v197
  %v250 = vpack.c.b16 %v200, %v199
  %v251 = vpack.c.b16 %v202, %v201
  %v252 = vpack.c.b16 %v204, %v203
  %v253 = vpack.c.b16 %v206, %v205
  %v254 = vpack.c.b16 %v208, %v207
  %v255 = vpack.c.b16 %v210, %v209
  %v256 = vpack.c.b16 %v212, %v211
  %v257 = vpack.c.b16 %v214, %v213
  %v258 = vpack.c.b16 %v216, %v215
  %v259 = vpack.c.b16 %v218, %v217
  %v260 = vpack.c.b16 %v220, %v219
  %v261 = vpack.c.b16 %v222, %v221
  %v262 = vpack.c.b16 %v224, %v223
  %v263 = vpack.c.b16 %v226, %v225
  %v264 = vpack.c.b16 %v228, %v227
  %v265 = vpack.c.b16 %v230, %v229
  %v266 = vpack.c.b16 %v232, %v231
  %v267 = vpack.c.b16 %v234, %v233
  %v268 = vpack.c.b16 %v236, %v235
  %v269 = vpack.c.b16 %v238, %v237
  %v270 = vpack.c.b16 %v240, %v239
  %v271 = vpack.c.b16 %v242, %v241
  %v272 = vpack.c.b16 %v244, %v243
  %v273 = vpack.c.b16 %v246, %v245
  %vm301 = vcmask 392192
  %v303 = vsel %vm301, %v128, 0
  %v306 = vsel %vm301, %v132, 0
  %308 = vmatpush.bf16.msra.mxu0 %v254
  %309 = vmatpush.bf16.msra.mxu0 %v253
  %310 = vmatpush.bf16.msra.mxu0 %v252
  %311 = vmatpush.bf16.msra.mxu0 %v251
  %312 = vmatpush.bf16.msra.mxu0 %v250
  %313 = vmatpush.bf16.msra.mxu0 %v249
  %314 = vmatpush.bf16.msra.mxu0 %v248
  %315 = vmatpush.bf16.msra.mxu0 %v247
  %316 = vmatmul.bf16.gmra.mxu0 %v125
  %v317 = vpop.f32.mrf.mxu0
  %v318 = vadd.f32 %v84, %v317
  %v319 = vpop.f32.mrf.mxu0
  %v320 = vadd.f32 %v89, %v319
  %321 = vmatmul.bf16.gmra.mxu0 %v129
  %v322 = vpop.f32.mrf.mxu0
  %v323 = vadd.f32 %v94, %v322
  %v324 = vpop.f32.mrf.mxu0
  %v325 = vadd.f32 %v99, %v324
  %326 = vdwg.mxu0
  %327 = vmatpush.bf16.msra.mxu0 %v262
  %328 = vmatpush.bf16.msra.mxu0 %v261
  %329 = vmatpush.bf16.msra.mxu0 %v260
  %330 = vmatpush.bf16.msra.mxu0 %v259
  %331 = vmatpush.bf16.msra.mxu0 %v258
  %332 = vmatpush.bf16.msra.mxu0 %v257
  %333 = vmatpush.bf16.msra.mxu0 %v256
  %334 = vmatpush.bf16.msra.mxu0 %v255
  %335 = vmatmul.bf16.gmra.mxu0 %v126
  %v336 = vpop.f32.mrf.mxu0
  %v337 = vadd.f32 %v318, %v336
  %v338 = vpop.f32.mrf.mxu0
  %v339 = vadd.f32 %v320, %v338
  %340 = vmatmul.bf16.gmra.mxu0 %v130
  %v341 = vpop.f32.mrf.mxu0
  %v342 = vadd.f32 %v323, %v341
  %v343 = vpop.f32.mrf.mxu0
  %v344 = vadd.f32 %v325, %v343
  %345 = vdwg.mxu0
  %346 = vmatpush.bf16.msra.mxu0 %v270
  %347 = vmatpush.bf16.msra.mxu0 %v269
  %348 = vmatpush.bf16.msra.mxu0 %v268
  %349 = vmatpush.bf16.msra.mxu0 %v267
  %350 = vmatpush.bf16.msra.mxu0 %v266
  %351 = vmatpush.bf16.msra.mxu0 %v265
  %352 = vmatpush.bf16.msra.mxu0 %v264
  %353 = vmatpush.bf16.msra.mxu0 %v263
  %354 = vmatmul.bf16.gmra.mxu0 %v127
  %v355 = vpop.f32.mrf.mxu0
  %v356 = vadd.f32 %v337, %v355
  %v357 = vpop.f32.mrf.mxu0
  %v358 = vadd.f32 %v339, %v357
  %359 = vmatmul.bf16.gmra.mxu0 %v131
  %v360 = vpop.f32.mrf.mxu0
  %v361 = vadd.f32 %v342, %v360
  %v362 = vpop.f32.mrf.mxu0
  %v363 = vadd.f32 %v344, %v362
  %364 = vdwg.mxu0
  %365 = vmatpush.bf16.msra.mxu0 0
  %366 = vmatpush.bf16.msra.mxu0 0
  %367 = vmatpush.bf16.msra.mxu0 0
  %368 = vmatpush.bf16.msra.mxu0 0
  %369 = vmatpush.bf16.msra.mxu0 0
  %370 = vmatpush.bf16.msra.mxu0 %v273
  %371 = vmatpush.bf16.msra.mxu0 %v272
  %372 = vmatpush.bf16.msra.mxu0 %v271
  %373 = vmatmul.bf16.gmra.mxu0 %v303
  %v374 = vpop.f32.mrf.mxu0
  %v375 = vadd.f32 %v356, %v374
  %v376 = vpop.f32.mrf.mxu0
  %v377 = vadd.f32 %v358, %v376
  %378 = vmatmul.bf16.gmra.mxu0 %v306
  %v379 = vpop.f32.mrf.mxu0
  %v380 = vadd.f32 %v361, %v379
  %v381 = vpop.f32.mrf.mxu0
  %v382 = vadd.f32 %v363, %v381
  %383 = vdwg.mxu0
  %v384 = vmax.f32 %v375, 0.0
  %v385 = vmax.f32 %v377, 0.0
  %v386 = vmax.f32 %v380, 0.0
  %v387 = vmax.f32 %v382, 0.0
  %v388 = vpack.c.bf16 %v384, %v384
  %v389 = vpack.c.bf16 %v385, %v385
  %v390 = vpack.c.bf16 %v386, %v386
  %v391 = vpack.c.bf16 %v387, %v387
  %vm392 = vcmask 125952
  %393 = vst.msk [vmem:[%s3] sm:$0xf] %vm392, %v388
  %394 = vst.msk [vmem:[%s3 + $0x4] sm:$0xf] %vm392, %v389
  %395 = vst.msk [vmem:[%s3 + $0x8] sm:$0xf] %vm392, %v390
  %396 = vst.msk [vmem:[%s3 + $0xc] sm:$0xf] %vm392, %v391
  // Predicated region
  $region14: #{model_forward.40} parent=0 // pred_check
    _
  $region15: #{model_forward.40} parent=0 // pred_check_branch
    %398 = sbr.rel (0) target = $region17
  $region16: #{model_forward.40} parent=0 // pred_region
    _
  $region17: #{model_forward.40} parent=0 // pred_fallthru
    _
  // Predicated region
  $region18: #{model_forward.40} parent=0 // pred_check
    _
  $region19: #{model_forward.40} parent=0 // pred_check_branch
    %400 = sbr.rel (0) target = $region21
  $region20: #{model_forward.40} parent=0 // pred_region
    _
  $region21: #{model_forward.40} parent=0 // pred_fallthru
    _

// kernel: model_forward.48
$region0: #{model_forward.48}
  #allocation0 [shape = 'u32[]', space=smem, size = 0x4, offset = 0x4, fixed_abs, tag = 'smem constant byte address 0x4 - core index']
  #allocation1 [shape = 'u32[72,128]{1,0:T(1,128)}', space=vmem, size = 0x9000, scoped, tag = 'internal scratch']
  %s0 = inlined_call_operand.vmem [shape: bf16[8,64], index: 0, kind: input, shape index: {}]
  %s1 = inlined_call_operand.vmem [shape: bf16[64,16], index: 1, kind: input, shape index: {}]
  %s2 = inlined_call_operand.vmem [shape: f32[8,1], index: 2, kind: input, shape index: {}]
  %s3 = inlined_call_operand.vmem [shape: f32[8,16], index: 3, kind: output, shape index: {}]
  %s4 = sld [smem:[#allocation0]]
  $region22: #{model_forward.48} parent=0
    _
  %s6 = ssub.s32 1, %s4
  %s7 = scalar_select 0, %s6, %s4
  // Predicated region
  $region2: #{model_forward.48} parent=0 // pred_check
    _
  $region3: #{model_forward.48} parent=0 // pred_check_branch
    %9 = sbr.rel (0) target = $region5
  $region4: #{model_forward.48} parent=0 // pred_region
    _
  $region5: #{model_forward.48} parent=0 // pred_fallthru
    _
  // Predicated region
  $region6: #{model_forward.48} parent=0 // pred_check
    _
  $region7: #{model_forward.48} parent=0 // pred_check_branch
    %11 = sbr.rel (0) target = $region9
  $region8: #{model_forward.48} parent=0 // pred_region
    _
  $region9: #{model_forward.48} parent=0 // pred_fallthru
    _
  // Predicated region
  $region10: #{model_forward.48} parent=0 // pred_check
    _
  $region11: #{model_forward.48} parent=0 // pred_check_branch
    %13 = sbr.rel (0) target = $region13
  $region12: #{model_forward.48} parent=0 // pred_region
    _
  $region13: #{model_forward.48} parent=0 // pred_fallthru
    _
  %v15 = vld [vmem:[%s0] sm:$0xf]
  %v16 = vld [vmem:[%s1] sm:$0xf]
  %v17 = vld [vmem:[%s1 + $0x4] sm:$0xf]
  %v18 = vld [vmem:[%s1 + $0x8] sm:$0xf]
  %v19 = vld [vmem:[%s1 + $0xc] sm:$0xf]
  %v20 = vld [vmem:[%s1 + $0x10] sm:$0xf]
  %v21 = vld [vmem:[%s1 + $0x14] sm:$0xf]
  %v22 = vld [vmem:[%s1 + $0x18] sm:$0xf]
  %v23 = vld [vmem:[%s1 + $0x1c] sm:$0xf]
  %v24 = vld [vmem:[%s2] sm:$0xff]
  %26 = vset.pattern.permute.xlu0 0
  %27 = vperm.xlu0 %26, %v24
  %v28 = vpop.permute.xlu0 %27
  %v38 = vunpack.c.l.b16 %v16
  %v39 = vunpack.c.l.b16 %v17
  %v40 = vunpack.c.l.b16 %v18
  %v41 = vunpack.c.l.b16 %v19
  %v42 = vunpack.c.l.b16 %v20
  %v43 = vunpack.c.l.b16 %v21
  %v44 = vunpack.c.l.b16 %v22
  %v45 = vunpack.c.l.b16 %v23
  %v46 = vpack.c.b16 %v39, %v38
  %v47 = vpack.c.b16 %v41, %v40
  %v48 = vpack.c.b16 %v43, %v42
  %v49 = vpack.c.b16 %v45, %v44
  %vm54 = vcmask 523264
  %v56 = vsel %vm54, %v15, 0
  %58 = vmatpush.bf16.msra.mxu0 0
  %59 = vmatpush.bf16.msra.mxu0 0
  %60 = vmatpush.bf16.msra.mxu0 0
  %61 = vmatpush.bf16.msra.mxu0 0
  %62 = vmatpush.bf16.msra.mxu0 %v49
  %63 = vmatpush.bf16.msra.mxu0 %v48
  %64 = vmatpush.bf16.msra.mxu0 %v47
  %65 = vmatpush.bf16.msra.mxu0 %v46
  %66 = vmatmul.bf16.gmra.mxu0 %v56
  %v67 = vpop.f32.mrf.mxu0
  %v68 = vadd.f32 %v28, %v67
  %v69 = vpop.f32.mrf.mxu0
  %70 = vdwg.mxu0
  %v71 = vlaneseq
  %v72 = vshrl.u32 %v71, 7
  %vm73 = vcmp.lt.s32.totalorder %v72, 4
  %v74 = vxor.u32 %v68, 2147483648
  %v75 = vmul.f32 %v74, 1.442695
  %v76 = vpow.pop %v75
  %v77 = vadd.f32 %v76, 1.0
  %v78 = vrcp.pop %v77
  %v79 = vmul.f32 %v77, %v78
  %v80 = vsub.f32 1.0, %v79
  %v81 = vmul.f32 %v78, %v80
  %v82 = vadd.f32 %v78, %v81
  %vm83 = vweird.f32 %v77
  %vm84 = vweird.f32 %v78
  %vm85 = vmor %vm83, %vm84
  %v86 = vsel %vm85, %v78, %v82
  %v87 = vand.u32 2147483647, %v77
  %vm88 = vcmp.eq.f32.partialorder %v87, 8.507059e+37
  %v89 = vand.u32 %v77, 2147483648
  %v90 = vor.u32 1.1754944e-38, %v89
  %v91 = vsel %vm88, %v90, %v86
  %v92 = vmul.f32 1.0, %v91
  %v93 = vsel %vm73, %v92, %v68
  %vm94 = vcmask 130048
  %95 = vst.msk [vmem:[%s3] sm:$0xff] %vm94, %v93
  // Predicated region
  $region14: #{model_forward.48} parent=0 // pred_check
    _
  $region15: #{model_forward.48} parent=0 // pred_check_branch
    %97 = sbr.rel (0) target = $region17
  $region16: #{model_forward.48} parent=0 // pred_region
    _
  $region17: #{model_forward.48} parent=0 // pred_fallthru
    _
  // Predicated region
  $region18: #{model_forward.48} parent=0 // pred_check
    _
  $region19: #{model_forward.48} parent=0 // pred_check_branch
    %99 = sbr.rel (0) target = $region21
  $region20: #{model_forward.48} parent=0 // pred_region
    _
  $region21: #{model_forward.48} parent=0 // pred_fallthru
    _

// kernel: model_forward.41
$region0: #{model_forward.41}
  #allocation0 [shape = 'u32[]', space=smem, size = 0x4, offset = 0x4, fixed_abs, tag = 'smem constant byte address 0x4 - core index']
  #allocation1 [shape = 'u32[72,128]{1,0:T(1,128)}', space=vmem, size = 0x9000, scoped, tag = 'internal scratch']
  %s0 = inlined_call_operand.vmem [shape: bf16[32,288], index: 0, kind: input, shape index: {}]
  %s1 = inlined_call_operand.vmem [shape: bf16[288,4], index: 1, kind: input, shape index: {}]
  %s2 = inlined_call_operand.vmem [shape: f32[32,1], index: 2, kind: input, shape index: {}]
  %s3 = inlined_call_operand.vmem [shape: bf16[32,4], index: 3, kind: output, shape index: {}]
  %s4 = sld [smem:[#allocation0]]
  $region22: #{model_forward.41} parent=0
    _
  %s6 = ssub.s32 1, %s4
  %s7 = scalar_select 0, %s6, %s4
  // Predicated region
  $region2: #{model_forward.41} parent=0 // pred_check
    _
  $region3: #{model_forward.41} parent=0 // pred_check_branch
    %9 = sbr.rel (0) target = $region5
  $region4: #{model_forward.41} parent=0 // pred_region
    _
  $region5: #{model_forward.41} parent=0 // pred_fallthru
    _
  // Predicated region
  $region6: #{model_forward.41} parent=0 // pred_check
    _
  $region7: #{model_forward.41} parent=0 // pred_check_branch
    %11 = sbr.rel (0) target = $region9
  $region8: #{model_forward.41} parent=0 // pred_region
    _
  $region9: #{model_forward.41} parent=0 // pred_fallthru
    _
  // Predicated region
  $region10: #{model_forward.41} parent=0 // pred_check
    _
  $region11: #{model_forward.41} parent=0 // pred_check_branch
    %13 = sbr.rel (0) target = $region13
  $region12: #{model_forward.41} parent=0 // pred_region
    _
  $region13: #{model_forward.41} parent=0 // pred_fallthru
    _
  %v15 = vld [vmem:[%s0] sm:$0xff]
  %v16 = vld [vmem:[%s0 + $0x8] sm:$0xf]
  %v17 = vld [vmem:[%s0 + $0xc] sm:$0xff]
  %v18 = vld [vmem:[%s0 + $0x14] sm:$0xf]
  %v19 = vld [vmem:[%s0 + $0x18] sm:$0xff]
  %v20 = vld [vmem:[%s0 + $0x20] sm:$0xf]
  %v21 = vld [vmem:[%s0 + $0x24] sm:$0xff]
  %v22 = vld [vmem:[%s0 + $0x2c] sm:$0xf]
  %v23 = vld [vmem:[%s1] sm:$0xf]
  %v24 = vld [vmem:[%s1 + $0x4] sm:$0xf]
  %v25 = vld [vmem:[%s1 + $0x8] sm:$0xf]
  %v26 = vld [vmem:[%s1 + $0xc] sm:$0xf]
  %v27 = vld [vmem:[%s1 + $0x10] sm:$0xf]
  %v28 = vld [vmem:[%s1 + $0x14] sm:$0xf]
  %v29 = vld [vmem:[%s1 + $0x18] sm:$0xf]
  %v30 = vld [vmem:[%s1 + $0x1c] sm:$0xf]
  %v31 = vld [vmem:[%s1 + $0x20] sm:$0xf]
  %v32 = vld [vmem:[%s1 + $0x24] sm:$0xf]
  %v33 = vld [vmem:[%s1 + $0x28] sm:$0xf]
  %v34 = vld [vmem:[%s1 + $0x2c] sm:$0xf]
  %v35 = vld [vmem:[%s1 + $0x30] sm:$0xf]
  %v36 = vld [vmem:[%s1 + $0x34] sm:$0xf]
  %v37 = vld [vmem:[%s1 + $0x38] sm:$0xf]
  %v38 = vld [vmem:[%s1 + $0x3c] sm:$0xf]
  %v39 = vld [vmem:[%s1 + $0x40] sm:$0xf]
  %v40 = vld [vmem:[%s1 + $0x44] sm:$0xf]
  %v41 = vld [vmem:[%s1 + $0x48] sm:$0xf]
  %v42 = vld [vmem:[%s1 + $0x4c] sm:$0xf]
  %v43 = vld [vmem:[%s1 + $0x50] sm:$0xf]
  %v44 = vld [vmem:[%s1 + $0x54] sm:$0xf]
  %v45 = vld [vmem:[%s1 + $0x58] sm:$0xf]
  %v46 = vld [vmem:[%s1 + $0x5c] sm:$0xf]
  %v47 = vld [vmem:[%s1 + $0x60] sm:$0xf]
  %v48 = vld [vmem:[%s1 + $0x64] sm:$0xf]
  %v49 = vld [vmem:[%s1 + $0x68] sm:$0xf]
  %v50 = vld [vmem:[%s1 + $0x6c] sm:$0xf]
  %v51 = vld [vmem:[%s1 + $0x70] sm:$0xf]
  %v52 = vld [vmem:[%s1 + $0x74] sm:$0xf]
  %v53 = vld [vmem:[%s1 + $0x78] sm:$0xf]
  %v54 = vld [vmem:[%s1 + $0x7c] sm:$0xf]
  %v55 = vld [vmem:[%s1 + $0x80] sm:$0xf]
  %v56 = vld [vmem:[%s1 + $0x84] sm:$0xf]
  %v57 = vld [vmem:[%s1 + $0x88] sm:$0xf]
  %v58 = vld [vmem:[%s1 + $0x8c] sm:$0xf]
  %v59 = vld [vmem:[%s2] sm:$0xff]
  %v60 = vld [vmem:[%s2 + $0x8] sm:$0xff]
  %v61 = vld [vmem:[%s2 + $0x10] sm:$0xff]
  %v62 = vld [vmem:[%s2 + $0x18] sm:$0xff]
  %64 = vset.pattern.permute.xlu0 0
  %65 = vperm.xlu0 %64, %v59
  %v66 = vpop.permute.xlu0 %65
  %69 = vset.pattern.permute.xlu0 0
  %70 = vperm.xlu0 %69, %v60
  %v71 = vpop.permute.xlu0 %70
  %74 = vset.pattern.permute.xlu0 0
  %75 = vperm.xlu0 %74, %v61
  %v76 = vpop.permute.xlu0 %75
  %79 = vset.pattern.permute.xlu0 0
  %80 = vperm.xlu0 %79, %v62
  %v81 = vpop.permute.xlu0 %80
  %v91 = vunpack.c.l.b16 %v15
  %v92 = vunpack.c.h.b16 %v15
  %v93 = vunpack.c.l.b16 %v16
  %v94 = vunpack.c.l.b16 %v17
  %v95 = vunpack.c.h.b16 %v17
  %v96 = vunpack.c.l.b16 %v18
  %v97 = vunpack.c.l.b16 %v19
  %v98 = vunpack.c.h.b16 %v19
  %v99 = vunpack.c.l.b16 %v20
  %v100 = vunpack.c.l.b16 %v21
  %v101 = vunpack.c.h.b16 %v21
  %v102 = vunpack.c.l.b16 %v22
  %v103 = vpack.c.b16 %v94, %v91
  %v104 = vpack.c.b16 %v95, %v92
  %v105 = vpack.c.b16 %v96, %v93
  %v106 = vpack.c.b16 %v100, %v97
  %v107 = vpack.c.b16 %v101, %v98
  %v108 = vpack.c.b16 %v102, %v99
  %v149 = vunpack.c.l.b16 %v23
  %v150 = vunpack.c.l.b16 %v24
  %v151 = vunpack.c.l.b16 %v25
  %v152 = vunpack.c.l.b16 %v26
  %v153 = vunpack.c.l.b16 %v27
  %v154 = vunpack.c.l.b16 %v28
  %v155 = vunpack.c.l.b16 %v29
  %v156 = vunpack.c.l.b16 %v30
  %v157 = vunpack.c.l.b16 %v31
  %v158 = vunpack.c.l.b16 %v32
  %v159 = vunpack.c.l.b16 %v33
  %v160 = vunpack.c.l.b16 %v34
  %v161 = vunpack.c.l.b16 %v35
  %v162 = vunpack.c.l.b16 %v36
  %v163 = vunpack.c.l.b16 %v37
  %v164 = vunpack.c.l.b16 %v38
  %v165 = vunpack.c.l.b16 %v39
  %v166 = vunpack.c.l.b16 %v40
  %v167 = vunpack.c.l.b16 %v41
  %v168 = vunpack.c.l.b16 %v42
  %v169 = vunpack.c.l.b16 %v43
  %v170 = vunpack.c.l.b16 %v44
  %v171 = vunpack.c.l.b16 %v45
  %v172 = vunpack.c.l.b16 %v46
  %v173 = vunpack.c.l.b16 %v47
  %v174 = vunpack.c.l.b16 %v48
  %v175 = vunpack.c.l.b16 %v49
  %v176 = vunpack.c.l.b16 %v50
  %v177 = vunpack.c.l.b16 %v51
  %v178 = vunpack.c.l.b16 %v52
  %v179 = vunpack.c.l.b16 %v53
  %v180 = vunpack.c.l.b16 %v54
  %v181 = vunpack.c.l.b16 %v55
  %v182 = vunpack.c.l.b16 %v56
  %v183 = vunpack.c.l.b16 %v57
  %v184 = vunpack.c.l.b16 %v58
  %v185 = vpack.c.b16 %v150, %v149
  %v186 = vpack.c.b16 %v152, %v151
  %v187 = vpack.c.b16 %v154, %v153
  %v188 = vpack.c.b16 %v156, %v155
  %v189 = vpack.c.b16 %v158, %v157
  %v190 = vpack.c.b16 %v160, %v159
  %v191 = vpack.c.b16 %v162, %v161
  %v192 = vpack.c.b16 %v164, %v163
  %v193 = vpack.c.b16 %v166, %v165
  %v194 = vpack.c.b16 %v168, %v167
  %v195 = vpack.c.b16 %v170, %v169
  %v196 = vpack.c.b16 %v172, %v171
  %v197 = vpack.c.b16 %v174, %v173
  %v198 = vpack.c.b16 %v176, %v175
  %v199 = vpack.c.b16 %v178, %v177
  %v200 = vpack.c.b16 %v180, %v179
  %v201 = vpack.c.b16 %v182, %v181
  %v202 = vpack.c.b16 %v184, %v183
  %vm221 = vcmask 261120
  %v223 = vsel %vm221, %v105, 0
  %v226 = vsel %vm221, %v108, 0
  %228 = vmatpush.bf16.msra.mxu0 %v192
  %229 = vmatpush.bf16.msra.mxu0 %v191
  %230 = vmatpush.bf16.msra.mxu0 %v190
  %231 = vmatpush.bf16.msra.mxu0 %v189
  %232 = vmatpush.bf16.msra.mxu0 %v188
  %233 = vmatpush.bf16.msra.mxu0 %v187
  %234 = vmatpush.bf16.msra.mxu0 %v186
  %235 = vmatpush.bf16.msra.mxu0 %v185
  %236 = vmatmul.bf16.gmra.mxu0 %v103
  %v237 = vpop.f32.mrf.mxu0
  %v238 = vadd.f32 %v66, %v237
  %v239 = vpop.f32.mrf.mxu0
  %v240 = vadd.f32 %v71, %v239
  %241 = vmatmul.bf16.gmra.mxu0 %v106
  %v242 = vpop.f32.mrf.mxu0
  %v243 = vadd.f32 %v76, %v242
  %v244 = vpop.f32.mrf.mxu0
  %v245 = vadd.f32 %v81, %v244
  %246 = vdwg.mxu0
  %247 = vmatpush.bf16.msra.mxu0 %v200
  %248 = vmatpush.bf16.msra.mxu0 %v199
  %249 = vmatpush.bf16.msra.mxu0 %v198
  %250 = vmatpush.bf16.msra.mxu0 %v197
  %251 = vmatpush.bf16.msra.mxu0 %v196
  %252 = vmatpush.bf16.msra.mxu0 %v195
  %253 = vmatpush.bf16.msra.mxu0 %v194
  %254 = vmatpush.bf16.msra.mxu0 %v193
  %255 = vmatmul.bf16.gmra.mxu0 %v104
  %v256 = vpop.f32.mrf.mxu0
  %v257 = vadd.f32 %v238, %v256
  %v258 = vpop.f32.mrf.mxu0
  %v259 = vadd.f32 %v240, %v258
  %260 = vmatmul.bf16.gmra.mxu0 %v107
  %v261 = vpop.f32.mrf.mxu0
  %v262 = vadd.f32 %v243, %v261
  %v263 = vpop.f32.mrf.mxu0
  %v264 = vadd.f32 %v245, %v263
  %265 = vdwg.mxu0
  %266 = vmatpush.bf16.msra.mxu0 0
  %267 = vmatpush.bf16.msra.mxu0 0
  %268 = vmatpush.bf16.msra.mxu0 0
  %269 = vmatpush.bf16.msra.mxu0 0
  %270 = vmatpush.bf16.msra.mxu0 0
  %271 = vmatpush.bf16.msra.mxu0 0
  %272 = vmatpush.bf16.msra.mxu0 %v202
  %273 = vmatpush.bf16.msra.mxu0 %v201
  %274 = vmatmul.bf16.gmra.mxu0 %v223
  %v275 = vpop.f32.mrf.mxu0
  %v276 = vadd.f32 %v257, %v275
  %v277 = vpop.f32.mrf.mxu0
  %v278 = vadd.f32 %v259, %v277
  %279 = vmatmul.bf16.gmra.mxu0 %v226
  %v280 = vpop.f32.mrf.mxu0
  %v281 = vadd.f32 %v262, %v280
  %v282 = vpop.f32.mrf.mxu0
  %v283 = vadd.f32 %v264, %v282
  %284 = vdwg.mxu0
  %v285 = vmax.f32 %v276, 0.0
  %v286 = vmax.f32 %v278, 0.0
  %v287 = vmax.f32 %v281, 0.0
  %v288 = vmax.f32 %v283, 0.0
  %v289 = vpack.c.bf16 %v285, %v285
  %v290 = vpack.c.bf16 %v286, %v286
  %v291 = vpack.c.bf16 %v287, %v287
  %v292 = vpack.c.bf16 %v288, %v288
  %vm293 = vcmask 27648
  %294 = vst.msk [vmem:[%s3] sm:$0xf] %vm293, %v289
  %295 = vst.msk [vmem:[%s3 + $0x4] sm:$0xf] %vm293, %v290
  %296 = vst.msk [vmem:[%s3 + $0x8] sm:$0xf] %vm293, %v291
  %297 = vst.msk [vmem:[%s3 + $0xc] sm:$0xf] %vm293, %v292
  // Predicated region
  $region14: #{model_forward.41} parent=0 // pred_check
    _
  $region15: #{model_forward.41} parent=0 // pred_check_branch
    %299 = sbr.rel (0) target = $region17
  $region16: #{model_forward.41} parent=0 // pred_region
    _
  $region17: #{model_forward.41} parent=0 // pred_fallthru
    _
  // Predicated region
  $region18: #{model_forward.41} parent=0 // pred_check
    _
  $region19: #{model_forward.41} parent=0 // pred_check_branch
    %301 = sbr.rel (0) target = $region21
  $region20: #{model_forward.41} parent=0 // pred_region
    _
  $region21: #{model_forward.41} parent=0 // pred_fallthru
    _

// kernel: model_forward.47
$region0: #{model_forward.47}
  #allocation0 [shape = 'u32[]', space=smem, size = 0x4, offset = 0x4, fixed_abs, tag = 'smem constant byte address 0x4 - core index']
  #allocation1 [shape = 'u32[72,128]{1,0:T(1,128)}', space=vmem, size = 0x9000, scoped, tag = 'internal scratch']
  %s0 = inlined_call_operand.vmem [shape: bf16[64,288], index: 0, kind: input, shape index: {}]
  %s1 = inlined_call_operand.vmem [shape: bf16[288,16], index: 1, kind: input, shape index: {}]
  %s2 = inlined_call_operand.vmem [shape: f32[64,1], index: 2, kind: input, shape index: {}]
  %s3 = inlined_call_operand.vmem [shape: bf16[64,16], index: 3, kind: output, shape index: {}]
  %s4 = sld [smem:[#allocation0]]
  $region22: #{model_forward.47} parent=0
    _
  %s6 = ssub.s32 1, %s4
  %s7 = scalar_select 0, %s6, %s4
  // Predicated region
  $region2: #{model_forward.47} parent=0 // pred_check
    _
  $region3: #{model_forward.47} parent=0 // pred_check_branch
    %9 = sbr.rel (0) target = $region5
  $region4: #{model_forward.47} parent=0 // pred_region
    _
  $region5: #{model_forward.47} parent=0 // pred_fallthru
    _
  // Predicated region
  $region6: #{model_forward.47} parent=0 // pred_check
    _
  $region7: #{model_forward.47} parent=0 // pred_check_branch
    %11 = sbr.rel (0) target = $region9
  $region8: #{model_forward.47} parent=0 // pred_region
    _
  $region9: #{model_forward.47} parent=0 // pred_fallthru
    _
  // Predicated region
  $region10: #{model_forward.47} parent=0 // pred_check
    _
  $region11: #{model_forward.47} parent=0 // pred_check_branch
    %13 = sbr.rel (0) target = $region13
  $region12: #{model_forward.47} parent=0 // pred_region
    _
  $region13: #{model_forward.47} parent=0 // pred_fallthru
    _
  %v15 = vld [vmem:[%s0] sm:$0xff]
  %v16 = vld [vmem:[%s0 + $0x8] sm:$0xf]
  %v17 = vld [vmem:[%s0 + $0xc] sm:$0xff]
  %v18 = vld [vmem:[%s0 + $0x14] sm:$0xf]
  %v19 = vld [vmem:[%s0 + $0x18] sm:$0xff]
  %v20 = vld [vmem:[%s0 + $0x20] sm:$0xf]
  %v21 = vld [vmem:[%s0 + $0x24] sm:$0xff]
  %v22 = vld [vmem:[%s0 + $0x2c] sm:$0xf]
  %v23 = vld [vmem:[%s0 + $0x30] sm:$0xff]
  %v24 = vld [vmem:[%s0 + $0x38] sm:$0xf]
  %v25 = vld [vmem:[%s0 + $0x3c] sm:$0xff]
  %v26 = vld [vmem:[%s0 + $0x44] sm:$0xf]
  %v27 = vld [vmem:[%s0 + $0x48] sm:$0xff]
  %v28 = vld [vmem:[%s0 + $0x50] sm:$0xf]
  %v29 = vld [vmem:[%s0 + $0x54] sm:$0xff]
  %v30 = vld [vmem:[%s0 + $0x5c] sm:$0xf]
  %v31 = vld [vmem:[%s1] sm:$0xf]
  %v32 = vld [vmem:[%s1 + $0x4] sm:$0xf]
  %v33 = vld [vmem:[%s1 + $0x8] sm:$0xf]
  %v34 = vld [vmem:[%s1 + $0xc] sm:$0xf]
  %v35 = vld [vmem:[%s1 + $0x10] sm:$0xf]
  %v36 = vld [vmem:[%s1 + $0x14] sm:$0xf]
  %v37 = vld [vmem:[%s1 + $0x18] sm:$0xf]
  %v38 = vld [vmem:[%s1 + $0x1c] sm:$0xf]
  %v39 = vld [vmem:[%s1 + $0x20] sm:$0xf]
  %v40 = vld [vmem:[%s1 + $0x24] sm:$0xf]
  %v41 = vld [vmem:[%s1 + $0x28] sm:$0xf]
  %v42 = vld [vmem:[%s1 + $0x2c] sm:$0xf]
  %v43 = vld [vmem:[%s1 + $0x30] sm:$0xf]
  %v44 = vld [vmem:[%s1 + $0x34] sm:$0xf]
  %v45 = vld [vmem:[%s1 + $0x38] sm:$0xf]
  %v46 = vld [vmem:[%s1 + $0x3c] sm:$0xf]
  %v47 = vld [vmem:[%s1 + $0x40] sm:$0xf]
  %v48 = vld [vmem:[%s1 + $0x44] sm:$0xf]
  %v49 = vld [vmem:[%s1 + $0x48] sm:$0xf]
  %v50 = vld [vmem:[%s1 + $0x4c] sm:$0xf]
  %v51 = vld [vmem:[%s1 + $0x50] sm:$0xf]
  %v52 = vld [vmem:[%s1 + $0x54] sm:$0xf]
  %v53 = vld [vmem:[%s1 + $0x58] sm:$0xf]
  %v54 = vld [vmem:[%s1 + $0x5c] sm:$0xf]
  %v55 = vld [vmem:[%s1 + $0x60] sm:$0xf]
  %v56 = vld [vmem:[%s1 + $0x64] sm:$0xf]
  %v57 = vld [vmem:[%s1 + $0x68] sm:$0xf]
  %v58 = vld [vmem:[%s1 + $0x6c] sm:$0xf]
  %v59 = vld [vmem:[%s1 + $0x70] sm:$0xf]
  %v60 = vld [vmem:[%s1 + $0x74] sm:$0xf]
  %v61 = vld [vmem:[%s1 + $0x78] sm:$0xf]
  %v62 = vld [vmem:[%s1 + $0x7c] sm:$0xf]
  %v63 = vld [vmem:[%s1 + $0x80] sm:$0xf]
  %v64 = vld [vmem:[%s1 + $0x84] sm:$0xf]
  %v65 = vld [vmem:[%s1 + $0x88] sm:$0xf]
  %v66 = vld [vmem:[%s1 + $0x8c] sm:$0xf]
  %v67 = vld [vmem:[%s2] sm:$0xff]
  %v68 = vld [vmem:[%s2 + $0x8] sm:$0xff]
  %v69 = vld [vmem:[%s2 + $0x10] sm:$0xff]
  %v70 = vld [vmem:[%s2 + $0x18] sm:$0xff]
  %v71 = vld [vmem:[%s2 + $0x20] sm:$0xff]
  %v72 = vld [vmem:[%s2 + $0x28] sm:$0xff]
  %v73 = vld [vmem:[%s2 + $0x30] sm:$0xff]
  %v74 = vld [vmem:[%s2 + $0x38] sm:$0xff]
  %76 = vset.pattern.permute.xlu0 0
  %77 = vperm.xlu0 %76, %v67
  %v78 = vpop.permute.xlu0 %77
  %81 = vset.pattern.permute.xlu0 0
  %82 = vperm.xlu0 %81, %v68
  %v83 = vpop.permute.xlu0 %82
  %86 = vset.pattern.permute.xlu0 0
  %87 = vperm.xlu0 %86, %v69
  %v88 = vpop.permute.xlu0 %87
  %91 = vset.pattern.permute.xlu0 0
  %92 = vperm.xlu0 %91, %v70
  %v93 = vpop.permute.xlu0 %92
  %96 = vset.pattern.permute.xlu0 0
  %97 = vperm.xlu0 %96, %v71
  %v98 = vpop.permute.xlu0 %97
  %101 = vset.pattern.permute.xlu0 0
  %102 = vperm.xlu0 %101, %v72
  %v103 = vpop.permute.xlu0 %102
  %106 = vset.pattern.permute.xlu0 0
  %107 = vperm.xlu0 %106, %v73
  %v108 = vpop.permute.xlu0 %107
  %111 = vset.pattern.permute.xlu0 0
  %112 = vperm.xlu0 %111, %v74
  %v113 = vpop.permute.xlu0 %112
  %v131 = vunpack.c.l.b16 %v15
  %v132 = vunpack.c.h.b16 %v15
  %v133 = vunpack.c.l.b16 %v16
  %v134 = vunpack.c.l.b16 %v17
  %v135 = vunpack.c.h.b16 %v17
  %v136 = vunpack.c.l.b16 %v18
  %v137 = vunpack.c.l.b16 %v19
  %v138 = vunpack.c.h.b16 %v19
  %v139 = vunpack.c.l.b16 %v20
  %v140 = vunpack.c.l.b16 %v21
  %v141 = vunpack.c.h.b16 %v21
  %v142 = vunpack.c.l.b16 %v22
  %v143 = vunpack.c.l.b16 %v23
  %v144 = vunpack.c.h.b16 %v23
  %v145 = vunpack.c.l.b16 %v24
  %v146 = vunpack.c.l.b16 %v25
  %v147 = vunpack.c.h.b16 %v25
  %v148 = vunpack.c.l.b16 %v26
  %v149 = vunpack.c.l.b16 %v27
  %v150 = vunpack.c.h.b16 %v27
  %v151 = vunpack.c.l.b16 %v28
  %v152 = vunpack.c.l.b16 %v29
  %v153 = vunpack.c.h.b16 %v29
  %v154 = vunpack.c.l.b16 %v30
  %v155 = vpack.c.b16 %v134, %v131
  %v156 = vpack.c.b16 %v135, %v132
  %v157 = vpack.c.b16 %v136, %v133
  %v158 = vpack.c.b16 %v140, %v137
  %v159 = vpack.c.b16 %v141, %v138
  %v160 = vpack.c.b16 %v142, %v139
  %v161 = vpack.c.b16 %v146, %v143
  %v162 = vpack.c.b16 %v147, %v144
  %v163 = vpack.c.b16 %v148, %v145
  %v164 = vpack.c.b16 %v152, %v149
  %v165 = vpack.c.b16 %v153, %v150
  %v166 = vpack.c.b16 %v154, %v151
  %v211 = vunpack.c.l.b16 %v31
  %v212 = vunpack.c.l.b16 %v32
  %v213 = vunpack.c.l.b16 %v33
  %v214 = vunpack.c.l.b16 %v34
  %v215 = vunpack.c.l.b16 %v35
  %v216 = vunpack.c.l.b16 %v36
  %v217 = vunpack.c.l.b16 %v37
  %v218 = vunpack.c.l.b16 %v38
  %v219 = vunpack.c.l.b16 %v39
  %v220 = vunpack.c.l.b16 %v40
  %v221 = vunpack.c.l.b16 %v41
  %v222 = vunpack.c.l.b16 %v42
  %v223 = vunpack.c.l.b16 %v43
  %v224 = vunpack.c.l.b16 %v44
  %v225 = vunpack.c.l.b16 %v45
  %v226 = vunpack.c.l.b16 %v46
  %v227 = vunpack.c.l.b16 %v47
  %v228 = vunpack.c.l.b16 %v48
  %v229 = vunpack.c.l.b16 %v49
  %v230 = vunpack.c.l.b16 %v50
  %v231 = vunpack.c.l.b16 %v51
  %v232 = vunpack.c.l.b16 %v52
  %v233 = vunpack.c.l.b16 %v53
  %v234 = vunpack.c.l.b16 %v54
  %v235 = vunpack.c.l.b16 %v55
  %v236 = vunpack.c.l.b16 %v56
  %v237 = vunpack.c.l.b16 %v57
  %v238 = vunpack.c.l.b16 %v58
  %v239 = vunpack.c.l.b16 %v59
  %v240 = vunpack.c.l.b16 %v60
  %v241 = vunpack.c.l.b16 %v61
  %v242 = vunpack.c.l.b16 %v62
  %v243 = vunpack.c.l.b16 %v63
  %v244 = vunpack.c.l.b16 %v64
  %v245 = vunpack.c.l.b16 %v65
  %v246 = vunpack.c.l.b16 %v66
  %v247 = vpack.c.b16 %v212, %v211
  %v248 = vpack.c.b16 %v214, %v213
  %v249 = vpack.c.b16 %v216, %v215
  %v250 = vpack.c.b16 %v218, %v217
  %v251 = vpack.c.b16 %v220, %v219
  %v252 = vpack.c.b16 %v222, %v221
  %v253 = vpack.c.b16 %v224, %v223
  %v254 = vpack.c.b16 %v226, %v225
  %v255 = vpack.c.b16 %v228, %v227
  %v256 = vpack.c.b16 %v230, %v229
  %v257 = vpack.c.b16 %v232, %v231
  %v258 = vpack.c.b16 %v234, %v233
  %v259 = vpack.c.b16 %v236, %v235
  %v260 = vpack.c.b16 %v238, %v237
  %v261 = vpack.c.b16 %v240, %v239
  %v262 = vpack.c.b16 %v242, %v241
  %v263 = vpack.c.b16 %v244, %v243
  %v264 = vpack.c.b16 %v246, %v245
  %vm283 = vcmask 261120
  %v285 = vsel %vm283, %v157, 0
  %v288 = vsel %vm283, %v160, 0
  %v291 = vsel %vm283, %v163, 0
  %v294 = vsel %vm283, %v166, 0
  %296 = vmatpush.bf16.msra.mxu0 %v254
  %297 = vmatpush.bf16.msra.mxu0 %v253
  %298 = vmatpush.bf16.msra.mxu0 %v252
  %299 = vmatpush.bf16.msra.mxu0 %v251
  %300 = vmatpush.bf16.msra.mxu0 %v250
  %301 = vmatpush.bf16.msra.mxu0 %v249
  %302 = vmatpush.bf16.msra.mxu0 %v248
  %303 = vmatpush.bf16.msra.mxu0 %v247
  %304 = vmatmul.bf16.gmra.mxu0 %v155
  %v305 = vpop.f32.mrf.mxu0
  %v306 = vadd.f32 %v78, %v305
  %v307 = vpop.f32.mrf.mxu0
  %v308 = vadd.f32 %v83, %v307
  %309 = vmatmul.bf16.gmra.mxu0 %v158
  %v310 = vpop.f32.mrf.mxu0
  %v311 = vadd.f32 %v88, %v310
  %v312 = vpop.f32.mrf.mxu0
  %v313 = vadd.f32 %v93, %v312
  %314 = vmatmul.bf16.gmra.mxu0 %v161
  %v315 = vpop.f32.mrf.mxu0
  %v316 = vadd.f32 %v98, %v315
  %v317 = vpop.f32.mrf.mxu0
  %v318 = vadd.f32 %v103, %v317
  %319 = vmatmul.bf16.gmra.mxu0 %v164
  %v320 = vpop.f32.mrf.mxu0
  %v321 = vadd.f32 %v108, %v320
  %v322 = vpop.f32.mrf.mxu0
  %v323 = vadd.f32 %v113, %v322
  %324 = vdwg.mxu0
  %325 = vmatpush.bf16.msra.mxu0 %v262
  %326 = vmatpush.bf16.msra.mxu0 %v261
  %327 = vmatpush.bf16.msra.mxu0 %v260
  %328 = vmatpush.bf16.msra.mxu0 %v259
  %329 = vmatpush.bf16.msra.mxu0 %v258
  %330 = vmatpush.bf16.msra.mxu0 %v257
  %331 = vmatpush.bf16.msra.mxu0 %v256
  %332 = vmatpush.bf16.msra.mxu0 %v255
  %333 = vmatmul.bf16.gmra.mxu0 %v156
  %v334 = vpop.f32.mrf.mxu0
  %v335 = vadd.f32 %v306, %v334
  %v336 = vpop.f32.mrf.mxu0
  %v337 = vadd.f32 %v308, %v336
  %338 = vmatmul.bf16.gmra.mxu0 %v159
  %v339 = vpop.f32.mrf.mxu0
  %v340 = vadd.f32 %v311, %v339
  %v341 = vpop.f32.mrf.mxu0
  %v342 = vadd.f32 %v313, %v341
  %343 = vmatmul.bf16.gmra.mxu0 %v162
  %v344 = vpop.f32.mrf.mxu0
  %v345 = vadd.f32 %v316, %v344
  %v346 = vpop.f32.mrf.mxu0
  %v347 = vadd.f32 %v318, %v346
  %348 = vmatmul.bf16.gmra.mxu0 %v165
  %v349 = vpop.f32.mrf.mxu0
  %v350 = vadd.f32 %v321, %v349
  %v351 = vpop.f32.mrf.mxu0
  %v352 = vadd.f32 %v323, %v351
  %353 = vdwg.mxu0
  %354 = vmatpush.bf16.msra.mxu0 0
  %355 = vmatpush.bf16.msra.mxu0 0
  %356 = vmatpush.bf16.msra.mxu0 0
  %357 = vmatpush.bf16.msra.mxu0 0
  %358 = vmatpush.bf16.msra.mxu0 0
  %359 = vmatpush.bf16.msra.mxu0 0
  %360 = vmatpush.bf16.msra.mxu0 %v264
  %361 = vmatpush.bf16.msra.mxu0 %v263
  %362 = vmatmul.bf16.gmra.mxu0 %v285
  %v363 = vpop.f32.mrf.mxu0
  %v364 = vadd.f32 %v335, %v363
  %v365 = vpop.f32.mrf.mxu0
  %v366 = vadd.f32 %v337, %v365
  %367 = vmatmul.bf16.gmra.mxu0 %v288
  %v368 = vpop.f32.mrf.mxu0
  %v369 = vadd.f32 %v340, %v368
  %v370 = vpop.f32.mrf.mxu0
  %v371 = vadd.f32 %v342, %v370
  %372 = vmatmul.bf16.gmra.mxu0 %v291
  %v373 = vpop.f32.mrf.mxu0
  %v374 = vadd.f32 %v345, %v373
  %v375 = vpop.f32.mrf.mxu0
  %v376 = vadd.f32 %v347, %v375
  %377 = vmatmul.bf16.gmra.mxu0 %v294
  %v378 = vpop.f32.mrf.mxu0
  %v379 = vadd.f32 %v350, %v378
  %v380 = vpop.f32.mrf.mxu0
  %v381 = vadd.f32 %v352, %v380
  %382 = vdwg.mxu0
  %v383 = vmax.f32 %v364, 0.0
  %v384 = vmax.f32 %v366, 0.0
  %v385 = vmax.f32 %v369, 0.0
  %v386 = vmax.f32 %v371, 0.0
  %v387 = vmax.f32 %v374, 0.0
  %v388 = vmax.f32 %v376, 0.0
  %v389 = vmax.f32 %v379, 0.0
  %v390 = vmax.f32 %v381, 0.0
  %v391 = vpack.c.bf16 %v383, %v383
  %v392 = vpack.c.bf16 %v384, %v384
  %v393 = vpack.c.bf16 %v385, %v385
  %v394 = vpack.c.bf16 %v386, %v386
  %v395 = vpack.c.bf16 %v387, %v387
  %v396 = vpack.c.bf16 %v388, %v388
  %v397 = vpack.c.bf16 %v389, %v389
  %v398 = vpack.c.bf16 %v390, %v390
  %vm399 = vcmask 125952
  %400 = vst.msk [vmem:[%s3] sm:$0xf] %vm399, %v391
  %401 = vst.msk [vmem:[%s3 + $0x4] sm:$0xf] %vm399, %v392
  %402 = vst.msk [vmem:[%s3 + $0x8] sm:$0xf] %vm399, %v393
  %403 = vst.msk [vmem:[%s3 + $0xc] sm:$0xf] %vm399, %v394
  %404 = vst.msk [vmem:[%s3 + $0x10] sm:$0xf] %vm399, %v395
  %405 = vst.msk [vmem:[%s3 + $0x14] sm:$0xf] %vm399, %v396
  %406 = vst.msk [vmem:[%s3 + $0x18] sm:$0xf] %vm399, %v397
  %407 = vst.msk [vmem:[%s3 + $0x1c] sm:$0xf] %vm399, %v398
  // Predicated region
  $region14: #{model_forward.47} parent=0 // pred_check
    _
  $region15: #{model_forward.47} parent=0 // pred_check_branch
    %409 = sbr.rel (0) target = $region17
  $region16: #{model_forward.47} parent=0 // pred_region
    _
  $region17: #{model_forward.47} parent=0 // pred_fallthru
    _
  // Predicated region
  $region18: #{model_forward.47} parent=0 // pred_check
    _
  $region19: #{model_forward.47} parent=0 // pred_check_branch
    %411 = sbr.rel (0) target = $region21
  $region20: #{model_forward.47} parent=0 // pred_region
    _
  $region21: #{model_forward.47} parent=0 // pred_fallthru
    _

// kernel: model_forward.49
$region0: #{model_forward.49}
  #allocation0 [shape = 'u32[]', space=smem, size = 0x4, offset = 0x4, fixed_abs, tag = 'smem constant byte address 0x4 - core index']
  #allocation1 [shape = 'u32[72,128]{1,0:T(1,128)}', space=vmem, size = 0x9000, scoped, tag = 'internal scratch']
  %s0 = inlined_call_operand.vmem [shape: bf16[40,40], index: 0, kind: input, shape index: {}]
  %s1 = inlined_call_operand.vmem [shape: bf16[40,4], index: 1, kind: input, shape index: {}]
  %s2 = inlined_call_operand.vmem [shape: f32[40,1], index: 2, kind: input, shape index: {}]
  %s3 = inlined_call_operand.vmem [shape: bf16[40,4], index: 3, kind: output, shape index: {}]
  %s4 = sld [smem:[#allocation0]]
  $region22: #{model_forward.49} parent=0
    _
  %s6 = ssub.s32 1, %s4
  %s7 = scalar_select 0, %s6, %s4
  // Predicated region
  $region2: #{model_forward.49} parent=0 // pred_check
    _
  $region3: #{model_forward.49} parent=0 // pred_check_branch
    %9 = sbr.rel (0) target = $region5
  $region4: #{model_forward.49} parent=0 // pred_region
    _
  $region5: #{model_forward.49} parent=0 // pred_fallthru
    _
  // Predicated region
  $region6: #{model_forward.49} parent=0 // pred_check
    _
  $region7: #{model_forward.49} parent=0 // pred_check_branch
    %11 = sbr.rel (0) target = $region9
  $region8: #{model_forward.49} parent=0 // pred_region
    _
  $region9: #{model_forward.49} parent=0 // pred_fallthru
    _
  // Predicated region
  $region10: #{model_forward.49} parent=0 // pred_check
    _
  $region11: #{model_forward.49} parent=0 // pred_check_branch
    %13 = sbr.rel (0) target = $region13
  $region12: #{model_forward.49} parent=0 // pred_region
    _
  $region13: #{model_forward.49} parent=0 // pred_fallthru
    _
  %v15 = vld [vmem:[%s0] sm:$0xf]
  %v16 = vld [vmem:[%s0 + $0x4] sm:$0xf]
  %v17 = vld [vmem:[%s0 + $0x8] sm:$0xf]
  %v18 = vld [vmem:[%s0 + $0xc] sm:$0xf]
  %v19 = vld [vmem:[%s0 + $0x10] sm:$0xf]
  %v20 = vld [vmem:[%s1] sm:$0xf]
  %v21 = vld [vmem:[%s1 + $0x4] sm:$0xf]
  %v22 = vld [vmem:[%s1 + $0x8] sm:$0xf]
  %v23 = vld [vmem:[%s1 + $0xc] sm:$0xf]
  %v24 = vld [vmem:[%s1 + $0x10] sm:$0xf]
  %v25 = vld [vmem:[%s2] sm:$0xff]
  %v26 = vld [vmem:[%s2 + $0x8] sm:$0xff]
  %v27 = vld [vmem:[%s2 + $0x10] sm:$0xff]
  %v28 = vld [vmem:[%s2 + $0x18] sm:$0xff]
  %v29 = vld [vmem:[%s2 + $0x20] sm:$0xff]
  %31 = vset.pattern.permute.xlu0 0
  %32 = vperm.xlu0 %31, %v25
  %v33 = vpop.permute.xlu0 %32
  %36 = vset.pattern.permute.xlu0 0
  %37 = vperm.xlu0 %36, %v26
  %v38 = vpop.permute.xlu0 %37
  %41 = vset.pattern.permute.xlu0 0
  %42 = vperm.xlu0 %41, %v27
  %v43 = vpop.permute.xlu0 %42
  %46 = vset.pattern.permute.xlu0 0
  %47 = vperm.xlu0 %46, %v28
  %v48 = vpop.permute.xlu0 %47
  %51 = vset.pattern.permute.xlu0 0
  %52 = vperm.xlu0 %51, %v29
  %v53 = vpop.permute.xlu0 %52
  %v60 = vunpack.c.l.b16 %v15
  %v61 = vunpack.c.l.b16 %v16
  %v62 = vunpack.c.l.b16 %v17
  %v63 = vunpack.c.l.b16 %v18
  %v64 = vunpack.c.l.b16 %v19
  %v65 = vpack.c.b16 %v61, %v60
  %v66 = vpack.c.b16 %v63, %v62
  %v67 = vpack.c.b16 %v64, %v64
  %v73 = vunpack.c.l.b16 %v20
  %v74 = vunpack.c.l.b16 %v21
  %v75 = vunpack.c.l.b16 %v22
  %v76 = vunpack.c.l.b16 %v23
  %v77 = vunpack.c.l.b16 %v24
  %v78 = vpack.c.b16 %v74, %v73
  %v79 = vpack.c.b16 %v76, %v75
  %v80 = vpack.c.b16 %v77, %v77
  %vm83 = vcmask 326656
  %v85 = vsel %vm83, %v65, 0
  %v88 = vsel %vm83, %v66, 0
  %v91 = vsel %vm83, %v67, 0
  %vm93 = vcmask 1043456
  %v95 = vsel %vm93, %v80, 0
  %97 = vmatpush.bf16.msra.mxu0 0
  %98 = vmatpush.bf16.msra.mxu0 0
  %99 = vmatpush.bf16.msra.mxu0 0
  %100 = vmatpush.bf16.msra.mxu0 0
  %101 = vmatpush.bf16.msra.mxu0 0
  %102 = vmatpush.bf16.msra.mxu0 %v95
  %103 = vmatpush.bf16.msra.mxu0 %v79
  %104 = vmatpush.bf16.msra.mxu0 %v78
  %105 = vmatmul.bf16.gmra.mxu0 %v85
  %v106 = vpop.f32.mrf.mxu0
  %v107 = vadd.f32 %v33, %v106
  %v108 = vpop.f32.mrf.mxu0
  %v109 = vadd.f32 %v38, %v108
  %110 = vmatmul.bf16.gmra.mxu0 %v88
  %v111 = vpop.f32.mrf.mxu0
  %v112 = vadd.f32 %v43, %v111
  %v113 = vpop.f32.mrf.mxu0
  %v114 = vadd.f32 %v48, %v113
  %115 = vmatmul.bf16.gmra.mxu0 %v91
  %v116 = vpop.f32.mrf.mxu0
  %v117 = vadd.f32 %v53, %v116
  %v118 = vpop.f32.mrf.mxu0
  %119 = vdwg.mxu0
  %v120 = vmax.f32 %v107, 0.0
  %v121 = vmax.f32 %v109, 0.0
  %v122 = vmax.f32 %v112, 0.0
  %v123 = vmax.f32 %v114, 0.0
  %v124 = vmax.f32 %v117, 0.0
  %v125 = vpack.c.bf16 %v120, %v120
  %v126 = vpack.c.bf16 %v121, %v121
  %v127 = vpack.c.bf16 %v122, %v122
  %v128 = vpack.c.bf16 %v123, %v123
  %v129 = vpack.c.bf16 %v124, %v124
  %vm130 = vcmask 27648
  %131 = vst.msk [vmem:[%s3] sm:$0xf] %vm130, %v125
  %132 = vst.msk [vmem:[%s3 + $0x4] sm:$0xf] %vm130, %v126
  %133 = vst.msk [vmem:[%s3 + $0x8] sm:$0xf] %vm130, %v127
  %134 = vst.msk [vmem:[%s3 + $0xc] sm:$0xf] %vm130, %v128
  %135 = vst.msk [vmem:[%s3 + $0x10] sm:$0xf] %vm130, %v129
  // Predicated region
  $region14: #{model_forward.49} parent=0 // pred_check
    _
  $region15: #{model_forward.49} parent=0 // pred_check_branch
    %137 = sbr.rel (0) target = $region17
  $region16: #{model_forward.49} parent=0 // pred_region
    _
  $region17: #{model_forward.49} parent=0 // pred_fallthru
    _
  // Predicated region
  $region18: #{model_forward.49} parent=0 // pred_check
    _
  $region19: #{model_forward.49} parent=0 // pred_check_branch
    %139 = sbr.rel (0) target = $region21
  $region20: #{model_forward.49} parent=0 // pred_region
    _
  $region21: #{model_forward.49} parent=0 // pred_fallthru
    _

// kernel: model_forward.42
$region0: #{model_forward.42}
  #allocation0 [shape = 'u32[]', space=smem, size = 0x4, offset = 0x4, fixed_abs, tag = 'smem constant byte address 0x4 - core index']
  #allocation1 [shape = 'u32[72,128]{1,0:T(1,128)}', space=vmem, size = 0x9000, scoped, tag = 'internal scratch']
  %s0 = inlined_call_operand.vmem [shape: bf16[40,576], index: 0, kind: input, shape index: {}]
  %s1 = inlined_call_operand.vmem [shape: bf16[576,4], index: 1, kind: input, shape index: {}]
  %s2 = inlined_call_operand.vmem [shape: f32[40,1], index: 2, kind: input, shape index: {}]
  %s3 = inlined_call_operand.vmem [shape: bf16[40,4], index: 3, kind: output, shape index: {}]
  %s4 = sld [smem:[#allocation0]]
  $region22: #{model_forward.42} parent=0
    _
  %s6 = ssub.s32 1, %s4
  %s7 = scalar_select 0, %s6, %s4
  // Predicated region
  $region2: #{model_forward.42} parent=0 // pred_check
    _
  $region3: #{model_forward.42} parent=0 // pred_check_branch
    %9 = sbr.rel (0) target = $region5
  $region4: #{model_forward.42} parent=0 // pred_region
    _
  $region5: #{model_forward.42} parent=0 // pred_fallthru
    _
  // Predicated region
  $region6: #{model_forward.42} parent=0 // pred_check
    _
  $region7: #{model_forward.42} parent=0 // pred_check_branch
    %11 = sbr.rel (0) target = $region9
  $region8: #{model_forward.42} parent=0 // pred_region
    _
  $region9: #{model_forward.42} parent=0 // pred_fallthru
    _
  // Predicated region
  $region10: #{model_forward.42} parent=0 // pred_check
    _
  $region11: #{model_forward.42} parent=0 // pred_check_branch
    %13 = sbr.rel (0) target = $region13
  $region12: #{model_forward.42} parent=0 // pred_region
    _
  $region13: #{model_forward.42} parent=0 // pred_fallthru
    _
  %v15 = vld [vmem:[%s0] sm:$0xff]
  %v16 = vld [vmem:[%s0 + $0x8] sm:$0xff]
  %v17 = vld [vmem:[%s0 + $0x10] sm:$0xf]
  %v18 = vld [vmem:[%s0 + $0x14] sm:$0xff]
  %v19 = vld [vmem:[%s0 + $0x1c] sm:$0xff]
  %v20 = vld [vmem:[%s0 + $0x24] sm:$0xf]
  %v21 = vld [vmem:[%s0 + $0x28] sm:$0xff]
  %v22 = vld [vmem:[%s0 + $0x30] sm:$0xff]
  %v23 = vld [vmem:[%s0 + $0x38] sm:$0xf]
  %v24 = vld [vmem:[%s0 + $0x3c] sm:$0xff]
  %v25 = vld [vmem:[%s0 + $0x44] sm:$0xff]
  %v26 = vld [vmem:[%s0 + $0x4c] sm:$0xf]
  %v27 = vld [vmem:[%s0 + $0x50] sm:$0xff]
  %v28 = vld [vmem:[%s0 + $0x58] sm:$0xff]
  %v29 = vld [vmem:[%s0 + $0x60] sm:$0xf]
  %v30 = vld [vmem:[%s1] sm:$0xf]
  %v31 = vld [vmem:[%s1 + $0x4] sm:$0xf]
  %v32 = vld [vmem:[%s1 + $0x8] sm:$0xf]
  %v33 = vld [vmem:[%s1 + $0xc] sm:$0xf]
  %v34 = vld [vmem:[%s1 + $0x10] sm:$0xf]
  %v35 = vld [vmem:[%s1 + $0x14] sm:$0xf]
  %v36 = vld [vmem:[%s1 + $0x18] sm:$0xf]
  %v37 = vld [vmem:[%s1 + $0x1c] sm:$0xf]
  %v38 = vld [vmem:[%s1 + $0x20] sm:$0xf]
  %v39 = vld [vmem:[%s1 + $0x24] sm:$0xf]
  %v40 = vld [vmem:[%s1 + $0x28] sm:$0xf]
  %v41 = vld [vmem:[%s1 + $0x2c] sm:$0xf]
  %v42 = vld [vmem:[%s1 + $0x30] sm:$0xf]
  %v43 = vld [vmem:[%s1 + $0x34] sm:$0xf]
  %v44 = vld [vmem:[%s1 + $0x38] sm:$0xf]
  %v45 = vld [vmem:[%s1 + $0x3c] sm:$0xf]
  %v46 = vld [vmem:[%s1 + $0x40] sm:$0xf]
  %v47 = vld [vmem:[%s1 + $0x44] sm:$0xf]
  %v48 = vld [vmem:[%s1 + $0x48] sm:$0xf]
  %v49 = vld [vmem:[%s1 + $0x4c] sm:$0xf]
  %v50 = vld [vmem:[%s1 + $0x50] sm:$0xf]
  %v51 = vld [vmem:[%s1 + $0x54] sm:$0xf]
  %v52 = vld [vmem:[%s1 + $0x58] sm:$0xf]
  %v53 = vld [vmem:[%s1 + $0x5c] sm:$0xf]
  %v54 = vld [vmem:[%s1 + $0x60] sm:$0xf]
  %v55 = vld [vmem:[%s1 + $0x64] sm:$0xf]
  %v56 = vld [vmem:[%s1 + $0x68] sm:$0xf]
  %v57 = vld [vmem:[%s1 + $0x6c] sm:$0xf]
  %v58 = vld [vmem:[%s1 + $0x70] sm:$0xf]
  %v59 = vld [vmem:[%s1 + $0x74] sm:$0xf]
  %v60 = vld [vmem:[%s1 + $0x78] sm:$0xf]
  %v61 = vld [vmem:[%s1 + $0x7c] sm:$0xf]
  %v62 = vld [vmem:[%s1 + $0x80] sm:$0xf]
  %v63 = vld [vmem:[%s1 + $0x84] sm:$0xf]
  %v64 = vld [vmem:[%s1 + $0x88] sm:$0xf]
  %v65 = vld [vmem:[%s1 + $0x8c] sm:$0xf]
  %v66 = vld [vmem:[%s1 + $0x90] sm:$0xf]
  %v67 = vld [vmem:[%s1 + $0x94] sm:$0xf]
  %v68 = vld [vmem:[%s1 + $0x98] sm:$0xf]
  %v69 = vld [vmem:[%s1 + $0x9c] sm:$0xf]
  %v70 = vld [vmem:[%s1 + $0xa0] sm:$0xf]
  %v71 = vld [vmem:[%s1 + $0xa4] sm:$0xf]
  %v72 = vld [vmem:[%s1 + $0xa8] sm:$0xf]
  %v73 = vld [vmem:[%s1 + $0xac] sm:$0xf]
  %v74 = vld [vmem:[%s1 + $0xb0] sm:$0xf]
  %v75 = vld [vmem:[%s1 + $0xb4] sm:$0xf]
  %v76 = vld [vmem:[%s1 + $0xb8] sm:$0xf]
  %v77 = vld [vmem:[%s1 + $0xbc] sm:$0xf]
  %v78 = vld [vmem:[%s1 + $0xc0] sm:$0xf]
  %v79 = vld [vmem:[%s1 + $0xc4] sm:$0xf]
  %v80 = vld [vmem:[%s1 + $0xc8] sm:$0xf]
  %v81 = vld [vmem:[%s1 + $0xcc] sm:$0xf]
  %v82 = vld [vmem:[%s1 + $0xd0] sm:$0xf]
  %v83 = vld [vmem:[%s1 + $0xd4] sm:$0xf]
  %v84 = vld [vmem:[%s1 + $0xd8] sm:$0xf]
  %v85 = vld [vmem:[%s1 + $0xdc] sm:$0xf]
  %v86 = vld [vmem:[%s1 + $0xe0] sm:$0xf]
  %v87 = vld [vmem:[%s1 + $0xe4] sm:$0xf]
  %v88 = vld [vmem:[%s1 + $0xe8] sm:$0xf]
  %v89 = vld [vmem:[%s1 + $0xec] sm:$0xf]
  %v90 = vld [vmem:[%s1 + $0xf0] sm:$0xf]
  %v91 = vld [vmem:[%s1 + $0xf4] sm:$0xf]
  %v92 = vld [vmem:[%s1 + $0xf8] sm:$0xf]
  %v93 = vld [vmem:[%s1 + $0xfc] sm:$0xf]
  %v94 = vld [vmem:[%s1 + $0x100] sm:$0xf]
  %v95 = vld [vmem:[%s1 + $0x104] sm:$0xf]
  %v96 = vld [vmem:[%s1 + $0x108] sm:$0xf]
  %v97 = vld [vmem:[%s1 + $0x10c] sm:$0xf]
  %v98 = vld [vmem:[%s1 + $0x110] sm:$0xf]
  %v99 = vld [vmem:[%s1 + $0x114] sm:$0xf]
  %v100 = vld [vmem:[%s1 + $0x118] sm:$0xf]
  %v101 = vld [vmem:[%s1 + $0x11c] sm:$0xf]
  %v102 = vld [vmem:[%s2] sm:$0xff]
  %v103 = vld [vmem:[%s2 + $0x8] sm:$0xff]
  %v104 = vld [vmem:[%s2 + $0x10] sm:$0xff]
  %v105 = vld [vmem:[%s2 + $0x18] sm:$0xff]
  %v106 = vld [vmem:[%s2 + $0x20] sm:$0xff]
  %108 = vset.pattern.permute.xlu0 0
  %109 = vperm.xlu0 %108, %v102
  %v110 = vpop.permute.xlu0 %109
  %113 = vset.pattern.permute.xlu0 0
  %114 = vperm.xlu0 %113, %v103
  %v115 = vpop.permute.xlu0 %114
  %118 = vset.pattern.permute.xlu0 0
  %119 = vperm.xlu0 %118, %v104
  %v120 = vpop.permute.xlu0 %119
  %123 = vset.pattern.permute.xlu0 0
  %124 = vperm.xlu0 %123, %v105
  %v125 = vpop.permute.xlu0 %124
  %128 = vset.pattern.permute.xlu0 0
  %129 = vperm.xlu0 %128, %v106
  %v130 = vpop.permute.xlu0 %129
  %v147 = vunpack.c.l.b16 %v15
  %v148 = vunpack.c.h.b16 %v15
  %v149 = vunpack.c.l.b16 %v16
  %v150 = vunpack.c.h.b16 %v16
  %v151 = vunpack.c.l.b16 %v17
  %v152 = vunpack.c.l.b16 %v18
  %v153 = vunpack.c.h.b16 %v18
  %v154 = vunpack.c.l.b16 %v19
  %v155 = vunpack.c.h.b16 %v19
  %v156 = vunpack.c.l.b16 %v20
  %v157 = vunpack.c.l.b16 %v21
  %v158 = vunpack.c.h.b16 %v21
  %v159 = vunpack.c.l.b16 %v22
  %v160 = vunpack.c.h.b16 %v22
  %v161 = vunpack.c.l.b16 %v23
  %v162 = vunpack.c.l.b16 %v24
  %v163 = vunpack.c.h.b16 %v24
  %v164 = vunpack.c.l.b16 %v25
  %v165 = vunpack.c.h.b16 %v25
  %v166 = vunpack.c.l.b16 %v26
  %v167 = vunpack.c.l.b16 %v27
  %v168 = vunpack.c.h.b16 %v27
  %v169 = vunpack.c.l.b16 %v28
  %v170 = vunpack.c.h.b16 %v28
  %v171 = vunpack.c.l.b16 %v29
  %v172 = vpack.c.b16 %v152, %v147
  %v173 = vpack.c.b16 %v153, %v148
  %v174 = vpack.c.b16 %v154, %v149
  %v175 = vpack.c.b16 %v155, %v150
  %v176 = vpack.c.b16 %v156, %v151
  %v177 = vpack.c.b16 %v162, %v157
  %v178 = vpack.c.b16 %v163, %v158
  %v179 = vpack.c.b16 %v164, %v159
  %v180 = vpack.c.b16 %v165, %v160
  %v181 = vpack.c.b16 %v166, %v161
  %v182 = vpack.c.b16 %v167, %v167
  %v183 = vpack.c.b16 %v168, %v168
  %v184 = vpack.c.b16 %v169, %v169
  %v185 = vpack.c.b16 %v170, %v170
  %v186 = vpack.c.b16 %v171, %v171
  %v271 = vunpack.c.l.b16 %v30
  %v272 = vunpack.c.l.b16 %v31
  %v273 = vunpack.c.l.b16 %v32
  %v274 = vunpack.c.l.b16 %v33
  %v275 = vunpack.c.l.b16 %v34
  %v276 = vunpack.c.l.b16 %v35
  %v277 = vunpack.c.l.b16 %v36
  %v278 = vunpack.c.l.b16 %v37
  %v279 = vunpack.c.l.b16 %v38
  %v280 = vunpack.c.l.b16 %v39
  %v281 = vunpack.c.l.b16 %v40
  %v282 = vunpack.c.l.b16 %v41
  %v283 = vunpack.c.l.b16 %v42
  %v284 = vunpack.c.l.b16 %v43
  %v285 = vunpack.c.l.b16 %v44
  %v286 = vunpack.c.l.b16 %v45
  %v287 = vunpack.c.l.b16 %v46
  %v288 = vunpack.c.l.b16 %v47
  %v289 = vunpack.c.l.b16 %v48
  %v290 = vunpack.c.l.b16 %v49
  %v291 = vunpack.c.l.b16 %v50
  %v292 = vunpack.c.l.b16 %v51
  %v293 = vunpack.c.l.b16 %v52
  %v294 = vunpack.c.l.b16 %v53
  %v295 = vunpack.c.l.b16 %v54
  %v296 = vunpack.c.l.b16 %v55
  %v297 = vunpack.c.l.b16 %v56
  %v298 = vunpack.c.l.b16 %v57
  %v299 = vunpack.c.l.b16 %v58
  %v300 = vunpack.c.l.b16 %v59
  %v301 = vunpack.c.l.b16 %v60
  %v302 = vunpack.c.l.b16 %v61
  %v303 = vunpack.c.l.b16 %v62
  %v304 = vunpack.c.l.b16 %v63
  %v305 = vunpack.c.l.b16 %v64
  %v306 = vunpack.c.l.b16 %v65
  %v307 = vunpack.c.l.b16 %v66
  %v308 = vunpack.c.l.b16 %v67
  %v309 = vunpack.c.l.b16 %v68
  %v310 = vunpack.c.l.b16 %v69
  %v311 = vunpack.c.l.b16 %v70
  %v312 = vunpack.c.l.b16 %v71
  %v313 = vunpack.c.l.b16 %v72
  %v314 = vunpack.c.l.b16 %v73
  %v315 = vunpack.c.l.b16 %v74
  %v316 = vunpack.c.l.b16 %v75
  %v317 = vunpack.c.l.b16 %v76
  %v318 = vunpack.c.l.b16 %v77
  %v319 = vunpack.c.l.b16 %v78
  %v320 = vunpack.c.l.b16 %v79
  %v321 = vunpack.c.l.b16 %v80
  %v322 = vunpack.c.l.b16 %v81
  %v323 = vunpack.c.l.b16 %v82
  %v324 = vunpack.c.l.b16 %v83
  %v325 = vunpack.c.l.b16 %v84
  %v326 = vunpack.c.l.b16 %v85
  %v327 = vunpack.c.l.b16 %v86
  %v328 = vunpack.c.l.b16 %v87
  %v329 = vunpack.c.l.b16 %v88
  %v330 = vunpack.c.l.b16 %v89
  %v331 = vunpack.c.l.b16 %v90
  %v332 = vunpack.c.l.b16 %v91
  %v333 = vunpack.c.l.b16 %v92
  %v334 = vunpack.c.l.b16 %v93
  %v335 = vunpack.c.l.b16 %v94
  %v336 = vunpack.c.l.b16 %v95
  %v337 = vunpack.c.l.b16 %v96
  %v338 = vunpack.c.l.b16 %v97
  %v339 = vunpack.c.l.b16 %v98
  %v340 = vunpack.c.l.b16 %v99
  %v341 = vunpack.c.l.b16 %v100
  %v342 = vunpack.c.l.b16 %v101
  %v343 = vpack.c.b16 %v272, %v271
  %v344 = vpack.c.b16 %v274, %v273
  %v345 = vpack.c.b16 %v276, %v275
  %v346 = vpack.c.b16 %v278, %v277
  %v347 = vpack.c.b16 %v280, %v279
  %v348 = vpack.c.b16 %v282, %v281
  %v349 = vpack.c.b16 %v284, %v283
  %v350 = vpack.c.b16 %v286, %v285
  %v351 = vpack.c.b16 %v288, %v287
  %v352 = vpack.c.b16 %v290, %v289
  %v353 = vpack.c.b16 %v292, %v291
  %v354 = vpack.c.b16 %v294, %v293
  %v355 = vpack.c.b16 %v296, %v295
  %v356 = vpack.c.b16 %v298, %v297
  %v357 = vpack.c.b16 %v300, %v299
  %v358 = vpack.c.b16 %v302, %v301
  %v359 = vpack.c.b16 %v304, %v303
  %v360 = vpack.c.b16 %v306, %v305
  %v361 = vpack.c.b16 %v308, %v307
  %v362 = vpack.c.b16 %v310, %v309
  %v363 = vpack.c.b16 %v312, %v311
  %v364 = vpack.c.b16 %v314, %v313
  %v365 = vpack.c.b16 %v316, %v315
  %v366 = vpack.c.b16 %v318, %v317
  %v367 = vpack.c.b16 %v320, %v319
  %v368 = vpack.c.b16 %v322, %v321
  %v369 = vpack.c.b16 %v324, %v323
  %v370 = vpack.c.b16 %v326, %v325
  %v371 = vpack.c.b16 %v328, %v327
  %v372 = vpack.c.b16 %v330, %v329
  %v373 = vpack.c.b16 %v332, %v331
  %v374 = vpack.c.b16 %v334, %v333
  %v375 = vpack.c.b16 %v336, %v335
  %v376 = vpack.c.b16 %v338, %v337
  %v377 = vpack.c.b16 %v340, %v339
  %v378 = vpack.c.b16 %v342, %v341
  %vm415 = vcmask 523264
  %v417 = vsel %vm415, %v176, 0
  %v420 = vsel %vm415, %v181, 0
  %v423 = vsel %vm415, %v186, 0
  %425 = vmatpush.bf16.msra.mxu0 %v350
  %426 = vmatpush.bf16.msra.mxu0 %v349
  %427 = vmatpush.bf16.msra.mxu0 %v348
  %428 = vmatpush.bf16.msra.mxu0 %v347
  %429 = vmatpush.bf16.msra.mxu0 %v346
  %430 = vmatpush.bf16.msra.mxu0 %v345
  %431 = vmatpush.bf16.msra.mxu0 %v344
  %432 = vmatpush.bf16.msra.mxu0 %v343
  %433 = vmatmul.bf16.gmra.mxu0 %v172
  %v434 = vpop.f32.mrf.mxu0
  %v435 = vadd.f32 %v110, %v434
  %v436 = vpop.f32.mrf.mxu0
  %v437 = vadd.f32 %v115, %v436
  %438 = vmatmul.bf16.gmra.mxu0 %v177
  %v439 = vpop.f32.mrf.mxu0
  %v440 = vadd.f32 %v120, %v439
  %v441 = vpop.f32.mrf.mxu0
  %v442 = vadd.f32 %v125, %v441
  %443 = vmatmul.bf16.gmra.mxu0 %v182
  %v444 = vpop.f32.mrf.mxu0
  %v445 = vadd.f32 %v130, %v444
  %v446 = vpop.f32.mrf.mxu0
  %447 = vdwg.mxu0
  %448 = vmatpush.bf16.msra.mxu0 %v358
  %449 = vmatpush.bf16.msra.mxu0 %v357
  %450 = vmatpush.bf16.msra.mxu0 %v356
  %451 = vmatpush.bf16.msra.mxu0 %v355
  %452 = vmatpush.bf16.msra.mxu0 %v354
  %453 = vmatpush.bf16.msra.mxu0 %v353
  %454 = vmatpush.bf16.msra.mxu0 %v352
  %455 = vmatpush.bf16.msra.mxu0 %v351
  %456 = vmatmul.bf16.gmra.mxu0 %v173
  %v457 = vpop.f32.mrf.mxu0
  %v458 = vadd.f32 %v435, %v457
  %v459 = vpop.f32.mrf.mxu0
  %v460 = vadd.f32 %v437, %v459
  %461 = vmatmul.bf16.gmra.mxu0 %v178
  %v462 = vpop.f32.mrf.mxu0
  %v463 = vadd.f32 %v440, %v462
  %v464 = vpop.f32.mrf.mxu0
  %v465 = vadd.f32 %v442, %v464
  %466 = vmatmul.bf16.gmra.mxu0 %v183
  %v467 = vpop.f32.mrf.mxu0
  %v468 = vadd.f32 %v445, %v467
  %v469 = vpop.f32.mrf.mxu0
  %470 = vdwg.mxu0
  %471 = vmatpush.bf16.msra.mxu0 %v366
  %472 = vmatpush.bf16.msra.mxu0 %v365
  %473 = vmatpush.bf16.msra.mxu0 %v364
  %474 = vmatpush.bf16.msra.mxu0 %v363
  %475 = vmatpush.bf16.msra.mxu0 %v362
  %476 = vmatpush.bf16.msra.mxu0 %v361
  %477 = vmatpush.bf16.msra.mxu0 %v360
  %478 = vmatpush.bf16.msra.mxu0 %v359
  %479 = vmatmul.bf16.gmra.mxu0 %v174
  %v480 = vpop.f32.mrf.mxu0
  %v481 = vadd.f32 %v458, %v480
  %v482 = vpop.f32.mrf.mxu0
  %v483 = vadd.f32 %v460, %v482
  %484 = vmatmul.bf16.gmra.mxu0 %v179
  %v485 = vpop.f32.mrf.mxu0
  %v486 = vadd.f32 %v463, %v485
  %v487 = vpop.f32.mrf.mxu0
  %v488 = vadd.f32 %v465, %v487
  %489 = vmatmul.bf16.gmra.mxu0 %v184
  %v490 = vpop.f32.mrf.mxu0
  %v491 = vadd.f32 %v468, %v490
  %v492 = vpop.f32.mrf.mxu0
  %493 = vdwg.mxu0
  %494 = vmatpush.bf16.msra.mxu0 %v374
  %495 = vmatpush.bf16.msra.mxu0 %v373
  %496 = vmatpush.bf16.msra.mxu0 %v372
  %497 = vmatpush.bf16.msra.mxu0 %v371
  %498 = vmatpush.bf16.msra.mxu0 %v370
  %499 = vmatpush.bf16.msra.mxu0 %v369
  %500 = vmatpush.bf16.msra.mxu0 %v368
  %501 = vmatpush.bf16.msra.mxu0 %v367
  %502 = vmatmul.bf16.gmra.mxu0 %v175
  %v503 = vpop.f32.mrf.mxu0
  %v504 = vadd.f32 %v481, %v503
  %v505 = vpop.f32.mrf.mxu0
  %v506 = vadd.f32 %v483, %v505
  %507 = vmatmul.bf16.gmra.mxu0 %v180
  %v508 = vpop.f32.mrf.mxu0
  %v509 = vadd.f32 %v486, %v508
  %v510 = vpop.f32.mrf.mxu0
  %v511 = vadd.f32 %v488, %v510
  %512 = vmatmul.bf16.gmra.mxu0 %v185
  %v513 = vpop.f32.mrf.mxu0
  %v514 = vadd.f32 %v491, %v513
  %v515 = vpop.f32.mrf.mxu0
  %516 = vdwg.mxu0
  %517 = vmatpush.bf16.msra.mxu0 0
  %518 = vmatpush.bf16.msra.mxu0 0
  %519 = vmatpush.bf16.msra.mxu0 0
  %520 = vmatpush.bf16.msra.mxu0 0
  %521 = vmatpush.bf16.msra.mxu0 %v378
  %522 = vmatpush.bf16.msra.mxu0 %v377
  %523 = vmatpush.bf16.msra.mxu0 %v376
  %524 = vmatpush.bf16.msra.mxu0 %v375
  %525 = vmatmul.bf16.gmra.mxu0 %v417
  %v526 = vpop.f32.mrf.mxu0
  %v527 = vadd.f32 %v504, %v526
  %v528 = vpop.f32.mrf.mxu0
  %v529 = vadd.f32 %v506, %v528
  %530 = vmatmul.bf16.gmra.mxu0 %v420
  %v531 = vpop.f32.mrf.mxu0
  %v532 = vadd.f32 %v509, %v531
  %v533 = vpop.f32.mrf.mxu0
  %v534 = vadd.f32 %v511, %v533
  %535 = vmatmul.bf16.gmra.mxu0 %v423
  %v536 = vpop.f32.mrf.mxu0
  %v537 = vadd.f32 %v514, %v536
  %v538 = vpop.f32.mrf.mxu0
  %539 = vdwg.mxu0
  %v540 = vmax.f32 %v527, 0.0
  %v541 = vmax.f32 %v529, 0.0
  %v542 = vmax.f32 %v532, 0.0
  %v543 = vmax.f32 %v534, 0.0
  %v544 = vmax.f32 %v537, 0.0
  %v545 = vpack.c.bf16 %v540, %v540
  %v546 = vpack.c.bf16 %v541, %v541
  %v547 = vpack.c.bf16 %v542, %v542
  %v548 = vpack.c.bf16 %v543, %v543
  %v549 = vpack.c.bf16 %v544, %v544
  %vm550 = vcmask 27648
  %551 = vst.msk [vmem:[%s3] sm:$0xf] %vm550, %v545
  %552 = vst.msk [vmem:[%s3 + $0x4] sm:$0xf] %vm550, %v546
  %553 = vst.msk [vmem:[%s3 + $0x8] sm:$0xf] %vm550, %v547
  %554 = vst.msk [vmem:[%s3 + $0xc] sm:$0xf] %vm550, %v548
  %555 = vst.msk [vmem:[%s3 + $0x10] sm:$0xf] %vm550, %v549
  // Predicated region
  $region14: #{model_forward.42} parent=0 // pred_check
    _
  $region15: #{model_forward.42} parent=0 // pred_check_branch
    %557 = sbr.rel (0) target = $region17
  $region16: #{model_forward.42} parent=0 // pred_region
    _
  $region17: #{model_forward.42} parent=0 // pred_fallthru
    _
  // Predicated region
  $region18: #{model_forward.42} parent=0 // pred_check
    _
  $region19: #{model_forward.42} parent=0 // pred_check_branch
    %559 = sbr.rel (0) target = $region21
  $region20: #{model_forward.42} parent=0 // pred_region
    _
  $region21: #{model_forward.42} parent=0 // pred_fallthru
    _

// kernel: model_forward.51
$region0: #{model_forward.51}
  #allocation0 [shape = 'u32[]', space=smem, size = 0x4, offset = 0x4, fixed_abs, tag = 'smem constant byte address 0x4 - core index']
  #allocation1 [shape = 'u32[72,128]{1,0:T(1,128)}', space=vmem, size = 0x9000, scoped, tag = 'internal scratch']
  %s0 = inlined_call_operand.vmem [shape: bf16[8,80], index: 0, kind: input, shape index: {}]
  %s1 = inlined_call_operand.vmem [shape: bf16[80,4], index: 1, kind: input, shape index: {}]
  %s2 = inlined_call_operand.vmem [shape: f32[8,1], index: 2, kind: input, shape index: {}]
  %s3 = inlined_call_operand.vmem [shape: f32[8,4], index: 3, kind: output, shape index: {}]
  %s4 = sld [smem:[#allocation0]]
  $region22: #{model_forward.51} parent=0
    _
  %s6 = ssub.s32 1, %s4
  %s7 = scalar_select 0, %s6, %s4
  // Predicated region
  $region2: #{model_forward.51} parent=0 // pred_check
    _
  $region3: #{model_forward.51} parent=0 // pred_check_branch
    %9 = sbr.rel (0) target = $region5
  $region4: #{model_forward.51} parent=0 // pred_region
    _
  $region5: #{model_forward.51} parent=0 // pred_fallthru
    _
  // Predicated region
  $region6: #{model_forward.51} parent=0 // pred_check
    _
  $region7: #{model_forward.51} parent=0 // pred_check_branch
    %11 = sbr.rel (0) target = $region9
  $region8: #{model_forward.51} parent=0 // pred_region
    _
  $region9: #{model_forward.51} parent=0 // pred_fallthru
    _
  // Predicated region
  $region10: #{model_forward.51} parent=0 // pred_check
    _
  $region11: #{model_forward.51} parent=0 // pred_check_branch
    %13 = sbr.rel (0) target = $region13
  $region12: #{model_forward.51} parent=0 // pred_region
    _
  $region13: #{model_forward.51} parent=0 // pred_fallthru
    _
  %v15 = vld [vmem:[%s0] sm:$0xf]
  %v16 = vld [vmem:[%s1] sm:$0xf]
  %v17 = vld [vmem:[%s1 + $0x4] sm:$0xf]
  %v18 = vld [vmem:[%s1 + $0x8] sm:$0xf]
  %v19 = vld [vmem:[%s1 + $0xc] sm:$0xf]
  %v20 = vld [vmem:[%s1 + $0x10] sm:$0xf]
  %v21 = vld [vmem:[%s1 + $0x14] sm:$0xf]
  %v22 = vld [vmem:[%s1 + $0x18] sm:$0xf]
  %v23 = vld [vmem:[%s1 + $0x1c] sm:$0xf]
  %v24 = vld [vmem:[%s1 + $0x20] sm:$0xf]
  %v25 = vld [vmem:[%s1 + $0x24] sm:$0xf]
  %v26 = vld [vmem:[%s2] sm:$0xff]
  %28 = vset.pattern.permute.xlu0 0
  %29 = vperm.xlu0 %28, %v26
  %v30 = vpop.permute.xlu0 %29
  %v42 = vunpack.c.l.b16 %v16
  %v43 = vunpack.c.l.b16 %v17
  %v44 = vunpack.c.l.b16 %v18
  %v45 = vunpack.c.l.b16 %v19
  %v46 = vunpack.c.l.b16 %v20
  %v47 = vunpack.c.l.b16 %v21
  %v48 = vunpack.c.l.b16 %v22
  %v49 = vunpack.c.l.b16 %v23
  %v50 = vunpack.c.l.b16 %v24
  %v51 = vunpack.c.l.b16 %v25
  %v52 = vpack.c.b16 %v43, %v42
  %v53 = vpack.c.b16 %v45, %v44
  %v54 = vpack.c.b16 %v47, %v46
  %v55 = vpack.c.b16 %v49, %v48
  %v56 = vpack.c.b16 %v51, %v50
  %vm62 = vcmask 654336
  %v64 = vsel %vm62, %v15, 0
  %66 = vmatpush.bf16.msra.mxu0 0
  %67 = vmatpush.bf16.msra.mxu0 0
  %68 = vmatpush.bf16.msra.mxu0 0
  %69 = vmatpush.bf16.msra.mxu0 %v56
  %70 = vmatpush.bf16.msra.mxu0 %v55
  %71 = vmatpush.bf16.msra.mxu0 %v54
  %72 = vmatpush.bf16.msra.mxu0 %v53
  %73 = vmatpush.bf16.msra.mxu0 %v52
  %74 = vmatmul.bf16.gmra.mxu0 %v64
  %v75 = vpop.f32.mrf.mxu0
  %v76 = vadd.f32 %v30, %v75
  %v77 = vpop.f32.mrf.mxu0
  %78 = vdwg.mxu0
  %v79 = vlaneseq
  %v80 = vshrl.u32 %v79, 7
  %vm81 = vcmp.lt.s32.totalorder %v80, 4
  %v82 = vxor.u32 %v76, 2147483648
  %v83 = vmul.f32 %v82, 1.442695
  %v84 = vpow.pop %v83
  %v85 = vadd.f32 %v84, 1.0
  %v86 = vrcp.pop %v85
  %v87 = vmul.f32 %v85, %v86
  %v88 = vsub.f32 1.0, %v87
  %v89 = vmul.f32 %v86, %v88
  %v90 = vadd.f32 %v86, %v89
  %vm91 = vweird.f32 %v85
  %vm92 = vweird.f32 %v86
  %vm93 = vmor %vm91, %vm92
  %v94 = vsel %vm93, %v86, %v90
  %v95 = vand.u32 2147483647, %v85
  %vm96 = vcmp.eq.f32.partialorder %v95, 8.507059e+37
  %v97 = vand.u32 %v85, 2147483648
  %v98 = vor.u32 1.1754944e-38, %v97
  %v99 = vsel %vm96, %v98, %v94
  %v100 = vmul.f32 1.0, %v99
  %v101 = vsel %vm81, %v100, %v76
  %vm102 = vcmask 31744
  %103 = vst.msk [vmem:[%s3] sm:$0xff] %vm102, %v101
  // Predicated region
  $region14: #{model_forward.51} parent=0 // pred_check
    _
  $region15: #{model_forward.51} parent=0 // pred_check_branch
    %105 = sbr.rel (0) target = $region17
  $region16: #{model_forward.51} parent=0 // pred_region
    _
  $region17: #{model_forward.51} parent=0 // pred_fallthru
    _
  // Predicated region
  $region18: #{model_forward.51} parent=0 // pred_check
    _
  $region19: #{model_forward.51} parent=0 // pred_check_branch
    %107 = sbr.rel (0) target = $region21
  $region20: #{model_forward.51} parent=0 // pred_region
    _
  $region21: #{model_forward.51} parent=0 // pred_fallthru
    _

// kernel: model_forward.50
$region0: #{model_forward.50}
  #allocation0 [shape = 'u32[]', space=smem, size = 0x4, offset = 0x4, fixed_abs, tag = 'smem constant byte address 0x4 - core index']
  #allocation1 [shape = 'u32[72,128]{1,0:T(1,128)}', space=vmem, size = 0x9000, scoped, tag = 'internal scratch']
  %s0 = inlined_call_operand.vmem [shape: bf16[80,360], index: 0, kind: input, shape index: {}]
  %s1 = inlined_call_operand.vmem [shape: bf16[360,4], index: 1, kind: input, shape index: {}]
  %s2 = inlined_call_operand.vmem [shape: f32[80,1], index: 2, kind: input, shape index: {}]
  %s3 = inlined_call_operand.vmem [shape: bf16[80,4], index: 3, kind: output, shape index: {}]
  %s4 = sld [smem:[#allocation0]]
  $region22: #{model_forward.50} parent=0
    _
  %s6 = ssub.s32 1, %s4
  %s7 = scalar_select 0, %s6, %s4
  // Predicated region
  $region2: #{model_forward.50} parent=0 // pred_check
    _
  $region3: #{model_forward.50} parent=0 // pred_check_branch
    %9 = sbr.rel (0) target = $region5
  $region4: #{model_forward.50} parent=0 // pred_region
    _
  $region5: #{model_forward.50} parent=0 // pred_fallthru
    _
  // Predicated region
  $region6: #{model_forward.50} parent=0 // pred_check
    _
  $region7: #{model_forward.50} parent=0 // pred_check_branch
    %11 = sbr.rel (0) target = $region9
  $region8: #{model_forward.50} parent=0 // pred_region
    _
  $region9: #{model_forward.50} parent=0 // pred_fallthru
    _
  // Predicated region
  $region10: #{model_forward.50} parent=0 // pred_check
    _
  $region11: #{model_forward.50} parent=0 // pred_check_branch
    %13 = sbr.rel (0) target = $region13
  $region12: #{model_forward.50} parent=0 // pred_region
    _
  $region13: #{model_forward.50} parent=0 // pred_fallthru
    _
  %v15 = vld [vmem:[%s0] sm:$0xff]
  %v16 = vld [vmem:[%s0 + $0x8] sm:$0xf]
  %v17 = vld [vmem:[%s0 + $0xc] sm:$0xff]
  %v18 = vld [vmem:[%s0 + $0x14] sm:$0xf]
  %v19 = vld [vmem:[%s0 + $0x18] sm:$0xff]
  %v20 = vld [vmem:[%s0 + $0x20] sm:$0xf]
  %v21 = vld [vmem:[%s0 + $0x24] sm:$0xff]
  %v22 = vld [vmem:[%s0 + $0x2c] sm:$0xf]
  %v23 = vld [vmem:[%s0 + $0x30] sm:$0xff]
  %v24 = vld [vmem:[%s0 + $0x38] sm:$0xf]
  %v25 = vld [vmem:[%s0 + $0x3c] sm:$0xff]
  %v26 = vld [vmem:[%s0 + $0x44] sm:$0xf]
  %v27 = vld [vmem:[%s0 + $0x48] sm:$0xff]
  %v28 = vld [vmem:[%s0 + $0x50] sm:$0xf]
  %v29 = vld [vmem:[%s0 + $0x54] sm:$0xff]
  %v30 = vld [vmem:[%s0 + $0x5c] sm:$0xf]
  %v31 = vld [vmem:[%s0 + $0x60] sm:$0xff]
  %v32 = vld [vmem:[%s0 + $0x68] sm:$0xf]
  %v33 = vld [vmem:[%s0 + $0x6c] sm:$0xff]
  %v34 = vld [vmem:[%s0 + $0x74] sm:$0xf]
  %v35 = vld [vmem:[%s1] sm:$0xf]
  %v36 = vld [vmem:[%s1 + $0x4] sm:$0xf]
  %v37 = vld [vmem:[%s1 + $0x8] sm:$0xf]
  %v38 = vld [vmem:[%s1 + $0xc] sm:$0xf]
  %v39 = vld [vmem:[%s1 + $0x10] sm:$0xf]
  %v40 = vld [vmem:[%s1 + $0x14] sm:$0xf]
  %v41 = vld [vmem:[%s1 + $0x18] sm:$0xf]
  %v42 = vld [vmem:[%s1 + $0x1c] sm:$0xf]
  %v43 = vld [vmem:[%s1 + $0x20] sm:$0xf]
  %v44 = vld [vmem:[%s1 + $0x24] sm:$0xf]
  %v45 = vld [vmem:[%s1 + $0x28] sm:$0xf]
  %v46 = vld [vmem:[%s1 + $0x2c] sm:$0xf]
  %v47 = vld [vmem:[%s1 + $0x30] sm:$0xf]
  %v48 = vld [vmem:[%s1 + $0x34] sm:$0xf]
  %v49 = vld [vmem:[%s1 + $0x38] sm:$0xf]
  %v50 = vld [vmem:[%s1 + $0x3c] sm:$0xf]
  %v51 = vld [vmem:[%s1 + $0x40] sm:$0xf]
  %v52 = vld [vmem:[%s1 + $0x44] sm:$0xf]
  %v53 = vld [vmem:[%s1 + $0x48] sm:$0xf]
  %v54 = vld [vmem:[%s1 + $0x4c] sm:$0xf]
  %v55 = vld [vmem:[%s1 + $0x50] sm:$0xf]
  %v56 = vld [vmem:[%s1 + $0x54] sm:$0xf]
  %v57 = vld [vmem:[%s1 + $0x58] sm:$0xf]
  %v58 = vld [vmem:[%s1 + $0x5c] sm:$0xf]
  %v59 = vld [vmem:[%s1 + $0x60] sm:$0xf]
  %v60 = vld [vmem:[%s1 + $0x64] sm:$0xf]
  %v61 = vld [vmem:[%s1 + $0x68] sm:$0xf]
  %v62 = vld [vmem:[%s1 + $0x6c] sm:$0xf]
  %v63 = vld [vmem:[%s1 + $0x70] sm:$0xf]
  %v64 = vld [vmem:[%s1 + $0x74] sm:$0xf]
  %v65 = vld [vmem:[%s1 + $0x78] sm:$0xf]
  %v66 = vld [vmem:[%s1 + $0x7c] sm:$0xf]
  %v67 = vld [vmem:[%s1 + $0x80] sm:$0xf]
  %v68 = vld [vmem:[%s1 + $0x84] sm:$0xf]
  %v69 = vld [vmem:[%s1 + $0x88] sm:$0xf]
  %v70 = vld [vmem:[%s1 + $0x8c] sm:$0xf]
  %v71 = vld [vmem:[%s1 + $0x90] sm:$0xf]
  %v72 = vld [vmem:[%s1 + $0x94] sm:$0xf]
  %v73 = vld [vmem:[%s1 + $0x98] sm:$0xf]
  %v74 = vld [vmem:[%s1 + $0x9c] sm:$0xf]
  %v75 = vld [vmem:[%s1 + $0xa0] sm:$0xf]
  %v76 = vld [vmem:[%s1 + $0xa4] sm:$0xf]
  %v77 = vld [vmem:[%s1 + $0xa8] sm:$0xf]
  %v78 = vld [vmem:[%s1 + $0xac] sm:$0xf]
  %v79 = vld [vmem:[%s1 + $0xb0] sm:$0xf]
  %v80 = vld [vmem:[%s2] sm:$0xff]
  %v81 = vld [vmem:[%s2 + $0x8] sm:$0xff]
  %v82 = vld [vmem:[%s2 + $0x10] sm:$0xff]
  %v83 = vld [vmem:[%s2 + $0x18] sm:$0xff]
  %v84 = vld [vmem:[%s2 + $0x20] sm:$0xff]
  %v85 = vld [vmem:[%s2 + $0x28] sm:$0xff]
  %v86 = vld [vmem:[%s2 + $0x30] sm:$0xff]
  %v87 = vld [vmem:[%s2 + $0x38] sm:$0xff]
  %v88 = vld [vmem:[%s2 + $0x40] sm:$0xff]
  %v89 = vld [vmem:[%s2 + $0x48] sm:$0xff]
  %91 = vset.pattern.permute.xlu0 0
  %92 = vperm.xlu0 %91, %v80
  %v93 = vpop.permute.xlu0 %92
  %96 = vset.pattern.permute.xlu0 0
  %97 = vperm.xlu0 %96, %v81
  %v98 = vpop.permute.xlu0 %97
  %101 = vset.pattern.permute.xlu0 0
  %102 = vperm.xlu0 %101, %v82
  %v103 = vpop.permute.xlu0 %102
  %106 = vset.pattern.permute.xlu0 0
  %107 = vperm.xlu0 %106, %v83
  %v108 = vpop.permute.xlu0 %107
  %111 = vset.pattern.permute.xlu0 0
  %112 = vperm.xlu0 %111, %v84
  %v113 = vpop.permute.xlu0 %112
  %116 = vset.pattern.permute.xlu0 0
  %117 = vperm.xlu0 %116, %v85
  %v118 = vpop.permute.xlu0 %117
  %121 = vset.pattern.permute.xlu0 0
  %122 = vperm.xlu0 %121, %v86
  %v123 = vpop.permute.xlu0 %122
  %126 = vset.pattern.permute.xlu0 0
  %127 = vperm.xlu0 %126, %v87
  %v128 = vpop.permute.xlu0 %127
  %131 = vset.pattern.permute.xlu0 0
  %132 = vperm.xlu0 %131, %v88
  %v133 = vpop.permute.xlu0 %132
  %136 = vset.pattern.permute.xlu0 0
  %137 = vperm.xlu0 %136, %v89
  %v138 = vpop.permute.xlu0 %137
  %v160 = vunpack.c.l.b16 %v15
  %v161 = vunpack.c.h.b16 %v15
  %v162 = vunpack.c.l.b16 %v16
  %v163 = vunpack.c.l.b16 %v17
  %v164 = vunpack.c.h.b16 %v17
  %v165 = vunpack.c.l.b16 %v18
  %v166 = vunpack.c.l.b16 %v19
  %v167 = vunpack.c.h.b16 %v19
  %v168 = vunpack.c.l.b16 %v20
  %v169 = vunpack.c.l.b16 %v21
  %v170 = vunpack.c.h.b16 %v21
  %v171 = vunpack.c.l.b16 %v22
  %v172 = vunpack.c.l.b16 %v23
  %v173 = vunpack.c.h.b16 %v23
  %v174 = vunpack.c.l.b16 %v24
  %v175 = vunpack.c.l.b16 %v25
  %v176 = vunpack.c.h.b16 %v25
  %v177 = vunpack.c.l.b16 %v26
  %v178 = vunpack.c.l.b16 %v27
  %v179 = vunpack.c.h.b16 %v27
  %v180 = vunpack.c.l.b16 %v28
  %v181 = vunpack.c.l.b16 %v29
  %v182 = vunpack.c.h.b16 %v29
  %v183 = vunpack.c.l.b16 %v30
  %v184 = vunpack.c.l.b16 %v31
  %v185 = vunpack.c.h.b16 %v31
  %v186 = vunpack.c.l.b16 %v32
  %v187 = vunpack.c.l.b16 %v33
  %v188 = vunpack.c.h.b16 %v33
  %v189 = vunpack.c.l.b16 %v34
  %v190 = vpack.c.b16 %v163, %v160
  %v191 = vpack.c.b16 %v164, %v161
  %v192 = vpack.c.b16 %v165, %v162
  %v193 = vpack.c.b16 %v169, %v166
  %v194 = vpack.c.b16 %v170, %v167
  %v195 = vpack.c.b16 %v171, %v168
  %v196 = vpack.c.b16 %v175, %v172
  %v197 = vpack.c.b16 %v176, %v173
  %v198 = vpack.c.b16 %v177, %v174
  %v199 = vpack.c.b16 %v181, %v178
  %v200 = vpack.c.b16 %v182, %v179
  %v201 = vpack.c.b16 %v183, %v180
  %v202 = vpack.c.b16 %v187, %v184
  %v203 = vpack.c.b16 %v188, %v185
  %v204 = vpack.c.b16 %v189, %v186
  %v260 = vunpack.c.l.b16 %v35
  %v261 = vunpack.c.l.b16 %v36
  %v262 = vunpack.c.l.b16 %v37
  %v263 = vunpack.c.l.b16 %v38
  %v264 = vunpack.c.l.b16 %v39
  %v265 = vunpack.c.l.b16 %v40
  %v266 = vunpack.c.l.b16 %v41
  %v267 = vunpack.c.l.b16 %v42
  %v268 = vunpack.c.l.b16 %v43
  %v269 = vunpack.c.l.b16 %v44
  %v270 = vunpack.c.l.b16 %v45
  %v271 = vunpack.c.l.b16 %v46
  %v272 = vunpack.c.l.b16 %v47
  %v273 = vunpack.c.l.b16 %v48
  %v274 = vunpack.c.l.b16 %v49
  %v275 = vunpack.c.l.b16 %v50
  %v276 = vunpack.c.l.b16 %v51
  %v277 = vunpack.c.l.b16 %v52
  %v278 = vunpack.c.l.b16 %v53
  %v279 = vunpack.c.l.b16 %v54
  %v280 = vunpack.c.l.b16 %v55
  %v281 = vunpack.c.l.b16 %v56
  %v282 = vunpack.c.l.b16 %v57
  %v283 = vunpack.c.l.b16 %v58
  %v284 = vunpack.c.l.b16 %v59
  %v285 = vunpack.c.l.b16 %v60
  %v286 = vunpack.c.l.b16 %v61
  %v287 = vunpack.c.l.b16 %v62
  %v288 = vunpack.c.l.b16 %v63
  %v289 = vunpack.c.l.b16 %v64
  %v290 = vunpack.c.l.b16 %v65
  %v291 = vunpack.c.l.b16 %v66
  %v292 = vunpack.c.l.b16 %v67
  %v293 = vunpack.c.l.b16 %v68
  %v294 = vunpack.c.l.b16 %v69
  %v295 = vunpack.c.l.b16 %v70
  %v296 = vunpack.c.l.b16 %v71
  %v297 = vunpack.c.l.b16 %v72
  %v298 = vunpack.c.l.b16 %v73
  %v299 = vunpack.c.l.b16 %v74
  %v300 = vunpack.c.l.b16 %v75
  %v301 = vunpack.c.l.b16 %v76
  %v302 = vunpack.c.l.b16 %v77
  %v303 = vunpack.c.l.b16 %v78
  %v304 = vunpack.c.l.b16 %v79
  %v305 = vpack.c.b16 %v261, %v260
  %v306 = vpack.c.b16 %v263, %v262
  %v307 = vpack.c.b16 %v265, %v264
  %v308 = vpack.c.b16 %v267, %v266
  %v309 = vpack.c.b16 %v269, %v268
  %v310 = vpack.c.b16 %v271, %v270
  %v311 = vpack.c.b16 %v273, %v272
  %v312 = vpack.c.b16 %v275, %v274
  %v313 = vpack.c.b16 %v277, %v276
  %v314 = vpack.c.b16 %v279, %v278
  %v315 = vpack.c.b16 %v281, %v280
  %v316 = vpack.c.b16 %v283, %v282
  %v317 = vpack.c.b16 %v285, %v284
  %v318 = vpack.c.b16 %v287, %v286
  %v319 = vpack.c.b16 %v289, %v288
  %v320 = vpack.c.b16 %v291, %v290
  %v321 = vpack.c.b16 %v293, %v292
  %v322 = vpack.c.b16 %v295, %v294
  %v323 = vpack.c.b16 %v297, %v296
  %v324 = vpack.c.b16 %v299, %v298
  %v325 = vpack.c.b16 %v301, %v300
  %v326 = vpack.c.b16 %v303, %v302
  %v327 = vpack.c.b16 %v304, %v304
  %vm350 = vcmask 850944
  %v352 = vsel %vm350, %v192, 0
  %v355 = vsel %vm350, %v195, 0
  %v358 = vsel %vm350, %v198, 0
  %v361 = vsel %vm350, %v201, 0
  %v364 = vsel %vm350, %v204, 0
  %vm366 = vcmask 1043456
  %v368 = vsel %vm366, %v327, 0
  %370 = vmatpush.bf16.msra.mxu0 %v312
  %371 = vmatpush.bf16.msra.mxu0 %v311
  %372 = vmatpush.bf16.msra.mxu0 %v310
  %373 = vmatpush.bf16.msra.mxu0 %v309
  %374 = vmatpush.bf16.msra.mxu0 %v308
  %375 = vmatpush.bf16.msra.mxu0 %v307
  %376 = vmatpush.bf16.msra.mxu0 %v306
  %377 = vmatpush.bf16.msra.mxu0 %v305
  %378 = vmatmul.bf16.gmra.mxu0 %v190
  %v379 = vpop.f32.mrf.mxu0
  %v380 = vadd.f32 %v93, %v379
  %v381 = vpop.f32.mrf.mxu0
  %v382 = vadd.f32 %v98, %v381
  %383 = vmatmul.bf16.gmra.mxu0 %v193
  %v384 = vpop.f32.mrf.mxu0
  %v385 = vadd.f32 %v103, %v384
  %v386 = vpop.f32.mrf.mxu0
  %v387 = vadd.f32 %v108, %v386
  %388 = vmatmul.bf16.gmra.mxu0 %v196
  %v389 = vpop.f32.mrf.mxu0
  %v390 = vadd.f32 %v113, %v389
  %v391 = vpop.f32.mrf.mxu0
  %v392 = vadd.f32 %v118, %v391
  %393 = vmatmul.bf16.gmra.mxu0 %v199
  %v394 = vpop.f32.mrf.mxu0
  %v395 = vadd.f32 %v123, %v394
  %v396 = vpop.f32.mrf.mxu0
  %v397 = vadd.f32 %v128, %v396
  %398 = vmatmul.bf16.gmra.mxu0 %v202
  %v399 = vpop.f32.mrf.mxu0
  %v400 = vadd.f32 %v133, %v399
  %v401 = vpop.f32.mrf.mxu0
  %v402 = vadd.f32 %v138, %v401
  %403 = vdwg.mxu0
  %404 = vmatpush.bf16.msra.mxu0 %v320
  %405 = vmatpush.bf16.msra.mxu0 %v319
  %406 = vmatpush.bf16.msra.mxu0 %v318
  %407 = vmatpush.bf16.msra.mxu0 %v317
  %408 = vmatpush.bf16.msra.mxu0 %v316
  %409 = vmatpush.bf16.msra.mxu0 %v315
  %410 = vmatpush.bf16.msra.mxu0 %v314
  %411 = vmatpush.bf16.msra.mxu0 %v313
  %412 = vmatmul.bf16.gmra.mxu0 %v191
  %v413 = vpop.f32.mrf.mxu0
  %v414 = vadd.f32 %v380, %v413
  %v415 = vpop.f32.mrf.mxu0
  %v416 = vadd.f32 %v382, %v415
  %417 = vmatmul.bf16.gmra.mxu0 %v194
  %v418 = vpop.f32.mrf.mxu0
  %v419 = vadd.f32 %v385, %v418
  %v420 = vpop.f32.mrf.mxu0
  %v421 = vadd.f32 %v387, %v420
  %422 = vmatmul.bf16.gmra.mxu0 %v197
  %v423 = vpop.f32.mrf.mxu0
  %v424 = vadd.f32 %v390, %v423
  %v425 = vpop.f32.mrf.mxu0
  %v426 = vadd.f32 %v392, %v425
  %427 = vmatmul.bf16.gmra.mxu0 %v200
  %v428 = vpop.f32.mrf.mxu0
  %v429 = vadd.f32 %v395, %v428
  %v430 = vpop.f32.mrf.mxu0
  %v431 = vadd.f32 %v397, %v430
  %432 = vmatmul.bf16.gmra.mxu0 %v203
  %v433 = vpop.f32.mrf.mxu0
  %v434 = vadd.f32 %v400, %v433
  %v435 = vpop.f32.mrf.mxu0
  %v436 = vadd.f32 %v402, %v435
  %437 = vdwg.mxu0
  %438 = vmatpush.bf16.msra.mxu0 0
  %439 = vmatpush.bf16.msra.mxu0 %v368
  %440 = vmatpush.bf16.msra.mxu0 %v326
  %441 = vmatpush.bf16.msra.mxu0 %v325
  %442 = vmatpush.bf16.msra.mxu0 %v324
  %443 = vmatpush.bf16.msra.mxu0 %v323
  %444 = vmatpush.bf16.msra.mxu0 %v322
  %445 = vmatpush.bf16.msra.mxu0 %v321
  %446 = vmatmul.bf16.gmra.mxu0 %v352
  %v447 = vpop.f32.mrf.mxu0
  %v448 = vadd.f32 %v414, %v447
  %v449 = vpop.f32.mrf.mxu0
  %v450 = vadd.f32 %v416, %v449
  %451 = vmatmul.bf16.gmra.mxu0 %v355
  %v452 = vpop.f32.mrf.mxu0
  %v453 = vadd.f32 %v419, %v452
  %v454 = vpop.f32.mrf.mxu0
  %v455 = vadd.f32 %v421, %v454
  %456 = vmatmul.bf16.gmra.mxu0 %v358
  %v457 = vpop.f32.mrf.mxu0
  %v458 = vadd.f32 %v424, %v457
  %v459 = vpop.f32.mrf.mxu0
  %v460 = vadd.f32 %v426, %v459
  %461 = vmatmul.bf16.gmra.mxu0 %v361
  %v462 = vpop.f32.mrf.mxu0
  %v463 = vadd.f32 %v429, %v462
  %v464 = vpop.f32.mrf.mxu0
  %v465 = vadd.f32 %v431, %v464
  %466 = vmatmul.bf16.gmra.mxu0 %v364
  %v467 = vpop.f32.mrf.mxu0
  %v468 = vadd.f32 %v434, %v467
  %v469 = vpop.f32.mrf.mxu0
  %v470 = vadd.f32 %v436, %v469
  %471 = vdwg.mxu0
  %v472 = vmax.f32 %v448, 0.0
  %v473 = vmax.f32 %v450, 0.0
  %v474 = vmax.f32 %v453, 0.0
  %v475 = vmax.f32 %v455, 0.0
  %v476 = vmax.f32 %v458, 0.0
  %v477 = vmax.f32 %v460, 0.0
  %v478 = vmax.f32 %v463, 0.0
  %v479 = vmax.f32 %v465, 0.0
  %v480 = vmax.f32 %v468, 0.0
  %v481 = vmax.f32 %v470, 0.0
  %v482 = vpack.c.bf16 %v472, %v472
  %v483 = vpack.c.bf16 %v473, %v473
  %v484 = vpack.c.bf16 %v474, %v474
  %v485 = vpack.c.bf16 %v475, %v475
  %v486 = vpack.c.bf16 %v476, %v476
  %v487 = vpack.c.bf16 %v477, %v477
  %v488 = vpack.c.bf16 %v478, %v478
  %v489 = vpack.c.bf16 %v479, %v479
  %v490 = vpack.c.bf16 %v480, %v480
  %v491 = vpack.c.bf16 %v481, %v481
  %vm492 = vcmask 27648
  %493 = vst.msk [vmem:[%s3] sm:$0xf] %vm492, %v482
  %494 = vst.msk [vmem:[%s3 + $0x4] sm:$0xf] %vm492, %v483
  %495 = vst.msk [vmem:[%s3 + $0x8] sm:$0xf] %vm492, %v484
  %496 = vst.msk [vmem:[%s3 + $0xc] sm:$0xf] %vm492, %v485
  %497 = vst.msk [vmem:[%s3 + $0x10] sm:$0xf] %vm492, %v486
  %498 = vst.msk [vmem:[%s3 + $0x14] sm:$0xf] %vm492, %v487
  %499 = vst.msk [vmem:[%s3 + $0x18] sm:$0xf] %vm492, %v488
  %500 = vst.msk [vmem:[%s3 + $0x1c] sm:$0xf] %vm492, %v489
  %501 = vst.msk [vmem:[%s3 + $0x20] sm:$0xf] %vm492, %v490
  %502 = vst.msk [vmem:[%s3 + $0x24] sm:$0xf] %vm492, %v491
  // Predicated region
  $region14: #{model_forward.50} parent=0 // pred_check
    _
  $region15: #{model_forward.50} parent=0 // pred_check_branch
    %504 = sbr.rel (0) target = $region17
  $region16: #{model_forward.50} parent=0 // pred_region
    _
  $region17: #{model_forward.50} parent=0 // pred_fallthru
    _
  // Predicated region
  $region18: #{model_forward.50} parent=0 // pred_check
    _
  $region19: #{model_forward.50} parent=0 // pred_check_branch
    %506 = sbr.rel (0) target = $region21
  $region20: #{model_forward.50} parent=0 // pred_region
    _
  $region21: #{model_forward.50} parent=0 // pred_fallthru
    _

</llo_original>
